<compile_context>
chip_gen: v5e
topology: v5e:2x2
jax: 0.10.0
libtpu: 0.0.40
codegen_flags: <defaults>
</compile_context>

<pallas_src>
import functools
import math

import jax
import jax.numpy as jnp
from jax.experimental import pallas as pl
from jax.experimental.pallas import tpu as pltpu

LANE = 128
# Matmul operand dtype. f32 for tight parity with the PyTorch module / v5e;
# switch to jnp.bfloat16 on v6e/v7x (accumulation stays f32 via
# preferred_element_type; h, softmax stats and biases stay f32).
MATMUL_DTYPE = jnp.float32


# ----------------------------------------------------------------------------- kernel
def match_attention_kernel(
    # data (streamed per time-chunk)
    seq1_ref,    # (bb, T, D1)
    xproj_ref,   # (bb, T, Pp+Dgp)  precomputed [x@W2x + b_att | x@Wg_x + bg]
    # loop-invariant data
    seq2_ref,    # (bb, n2p, D2)
    s2mask_ref,  # (bb, n2p)
    s2p_ref,     # (bb, n2p, Pp)    precomputed W1 @ sequence2
    # params
    v_att_ref,   # (1, Pp)
    w_h_ref,     # (Hp, Pp+3Hp)     fused [W2h | Whh]
    wg_a_ref,    # (D2, Dgp)
    wih_x_ref,   # (D1, 3Hp)        GRU weight_ih^T rows for x, cols [r|z|n] (Hp blocks)
    wih_a_ref,   # (D2, 3Hp)        GRU weight_ih^T rows for att
    b_rnn_ref,   # (2, 3Hp)         rows [bih ; bhh]
    # outputs
    out_h_ref,   # (bb, T, Hp)
    out_w_ref,   # (bb, T, n2p)
    # scratch (persists across grid steps)
    h_scr,       # (bb, Hp)  recurrent hidden-state carry
):
    bb, T, D1 = seq1_ref.shape
    D2 = seq2_ref.shape[-1]
    Pp = s2p_ref.shape[-1]
    Hp = h_scr.shape[-1]
    cd = MATMUL_DTYPE

    # reset the carry at the first time-chunk of each batch block
    @pl.when(pl.program_id(1) == 0)
    def _init():
        h_scr[...] = jnp.zeros_like(h_scr)

    # small loop-invariant loads hoisted above the time loop
    m2 = s2mask_ref[...]                       # (bb, n2p)
    valid2 = m2 > 0
    v_row = v_att_ref[...][None, :, :]         # (1, 1, Pp)
    b_all = b_rnn_ref[...]                     # (2, 3Hp)
    bih = b_all[0:1, :]
    bhh = b_all[1:2, :]
    neg = jnp.float32(-1e30)

    def dot(a, b):
        return jnp.dot(a.astype(cd), b, preferred_element_type=jnp.float32)

    def step(t, h):
        x = seq1_ref[:, pl.ds(t, 1), :][:, 0, :]          # (bb, D1)
        xp = xproj_ref[:, pl.ds(t, 1), :][:, 0, :]        # (bb, Pp+Dgp)
        xq = xp[:, :Pp]                                   # x@W2x + b_att
        xg0 = xp[:, Pp:]                                  # x@Wg_x + bg

        # single fused h-matmul: [q_h | gh0]
        hp = dot(h, w_h_ref[...])                         # (bb, Pp+3Hp)
        q = xq + hp[:, :Pp]                               # (bb, Pp)

        # ---- additive attention + masked softmax ----
        tanh_t = jnp.tanh(s2p_ref[...] + q[:, None, :])   # (bb, n2p, Pp)
        scores = jnp.sum(tanh_t * v_row, axis=-1)         # (bb, n2p)
        masked = jnp.where(valid2, scores, neg)
        smax = jnp.max(masked, axis=-1, keepdims=True)
        e = jnp.exp(masked - smax) * m2
        denom = jnp.sum(e, axis=-1, keepdims=True) + jnp.float32(1e-13)
        alpha = e / denom                                 # exact divide (parity)

        # context vector on the MXU (batched matmul)
        att = jnp.einsum('bqn,bnd->bqd',
                         alpha[:, None, :].astype(cd), seq2_ref[...],
                         preferred_element_type=jnp.float32)[:, 0, :]   # (bb, D2)

        # ---- gate: g = sigmoid(Wg [x ; att] + bg); input = g * [x ; att] ----
        g = jax.nn.sigmoid(xg0 + dot(att, wg_a_ref[...]))  # (bb, Dgp)
        xg = g[:, :D1] * x
        ag = g[:, D1:D1 + D2] * att

        # ---- GRUCell (PyTorch gate order r,z,n; per-gate blocks of width Hp) ----
        gi = dot(xg, wih_x_ref[...]) + dot(ag, wih_a_ref[...]) + bih   # (bb, 3Hp)
        gh = hp[:, Pp:] + bhh                                          # (bb, 3Hp)
        r = jax.nn.sigmoid(gi[:, :Hp] + gh[:, :Hp])
        z = jax.nn.sigmoid(gi[:, Hp:2 * Hp] + gh[:, Hp:2 * Hp])
        n = jnp.tanh(gi[:, 2 * Hp:] + r * gh[:, 2 * Hp:])
        h_new = (1.0 - z) * n + z * h                                  # (bb, Hp)

        out_h_ref[:, pl.ds(t, 1), :] = h_new[:, None, :]
        out_w_ref[:, pl.ds(t, 1), :] = alpha[:, None, :]
        return h_new

    if T <= 16:
        # small chunk: fully static unroll (static slice indices everywhere)
        h = h_scr[...]
        for t in range(T):
            h = step(t, h)
        h_final = h
    else:
        # large chunk: partial unroll to bound code size / vreg pressure
        h_final = jax.lax.fori_loop(0, T, step, h_scr[...], unroll=8)
    h_scr[...] = h_final


# ----------------------------------------------------------------------------- helpers
def _round_up(x, m):
    return ((x + m - 1) // m) * m


def _pad_last(x, target):
    pad = target - x.shape[-1]
    if pad == 0:
        return x
    cfg = [(0, 0)] * (x.ndim - 1) + [(0, pad)]
    return jnp.pad(x, cfg)


def _pad_axis(x, axis, target):
    pad = target - x.shape[axis]
    if pad == 0:
        return x
    cfg = [(0, 0)] * x.ndim
    cfg[axis] = (0, pad)
    return jnp.pad(x, cfg)


def _pad_gates(w, H, Hp):
    """(..., 3H) -> (..., 3Hp): pad each of the r/z/n column blocks to Hp."""
    parts = [_pad_last(w[..., k * H:(k + 1) * H], Hp) for k in range(3)]
    return jnp.concatenate(parts, axis=-1)


# ----------------------------------------------------------------------------- wrapper
def match_attention_forward(seq1, seq2, seq1_mask, seq2_mask, params, *,
                            time_chunk=8, batch_block=None):
    """seq1: (B, n1, D1), seq2: (B, n2, D2), masks: (B, n1), (B, n2) float32.

    params: PyTorch-layout dict (see init_params).
    batch_block: set to B//2 on v7x to shard the batch over the 2 TensorCores.
    """
    B, n1, D1 = seq1.shape
    _, n2, D2 = seq2.shape
    H = params['Whh'].shape[0]
    P = params['W1'].shape[1]
    cd = MATMUL_DTYPE

    # lane-dense padded sizes
    Pp = _round_up(P, LANE)
    Hp = _round_up(H, LANE)
    n2p = _round_up(n2, LANE)
    Dg = D1 + D2
    Dgp = _round_up(Dg, LANE)

    bb = B if batch_block is None else batch_block
    assert B % bb == 0

    # time chunking (second-minor block dim must be a multiple of 8 or full)
    T = _round_up(min(time_chunk, max(n1, 1)), 8)
    n_chunks = -(-n1 // T)
    n1p = n_chunks * T

    # ---- param prep: fuse + lane-pad (one-time XLA work under jit) ----
    W1, W2 = params['W1'], params['W2']
    b_att, v = params['b_att'], params['v']
    Wg, bg = params['Wg'], params['bg']
    Wih, Whh = params['Wih'], params['Whh']
    bih, bhh = params['bih'], params['bhh']

    w1_p = _pad_last(W1, Pp)                                        # (D2, Pp)
    w2x_p = _pad_last(W2[:D1], Pp)                                  # (D1, Pp)
    w2h_p = _pad_axis(_pad_last(W2[D1:], Pp), 0, Hp)                # (Hp, Pp)
    b_att_p = _pad_last(b_att, Pp)                                  # (Pp,)
    v_p = _pad_last(v, Pp)[None, :]                                 # (1, Pp)

    wg_x_p = _pad_last(Wg[:D1], Dgp)                                # (D1, Dgp)
    wg_a_p = _pad_last(Wg[D1:], Dgp).astype(cd)                     # (D2, Dgp)
    bg_p = _pad_last(bg, Dgp)                                       # (Dgp,)

    wih_p = _pad_gates(Wih, H, Hp)                                  # (Dg, 3Hp)
    wih_x_p = wih_p[:D1].astype(cd)                                 # (D1, 3Hp)
    wih_a_p = wih_p[D1:].astype(cd)                                 # (D2, 3Hp)
    whh_p = _pad_axis(_pad_gates(Whh, H, Hp), 0, Hp)                # (Hp, 3Hp)
    b_rnn = jnp.stack([_pad_gates(bih, H, Hp), _pad_gates(bhh, H, Hp)], 0)  # (2, 3Hp)

    # fused h-path weight [W2h | Whh]
    w_h_fused = jnp.concatenate([w2h_p, whh_p], axis=1).astype(cd)  # (Hp, Pp+3Hp)

    # ---- h-independent projections: one big GEMM over the whole sequence ----
    w_x_fused = jnp.concatenate([w2x_p, wg_x_p], axis=1)            # (D1, Pp+Dgp)
    b_x_fused = jnp.concatenate([b_att_p, bg_p], axis=0)            # (Pp+Dgp,)
    xproj = (jnp.einsum('btd,dp->btp', seq1, w_x_fused)
             + b_x_fused).astype(jnp.float32)                       # (B, n1, Pp+Dgp)

    # sequence2 side (lane-padded along n2 / P); W1 projection hoisted here
    seq2_p = _pad_axis(seq2, 1, n2p)                                # (B, n2p, D2)
    s2mask_p = _pad_last(seq2_mask, n2p).astype(jnp.float32)        # (B, n2p)
    s2p = jnp.einsum('bnd,dp->bnp', seq2_p, w1_p).astype(jnp.float32)  # (B, n2p, Pp)
    seq2_p = seq2_p.astype(cd)

    # time padding, batch-major (no transposes)
    seq1_p = _pad_axis(seq1, 1, n1p).astype(jnp.float32)            # (B, n1p, D1)
    xproj = _pad_axis(xproj, 1, n1p)                                # (B, n1p, Pp+Dgp)

    # ---- specs ----
    def fixed(a):
        nd = a.ndim
        return pl.BlockSpec(a.shape, lambda b, i, nd=nd: (0,) * nd)

    def per_batch(a):
        nd = a.ndim
        blk = (bb,) + a.shape[1:]
        return pl.BlockSpec(blk, lambda b, i, nd=nd: (b,) + (0,) * (nd - 1))

    in_specs = [
        pl.BlockSpec((bb, T, D1), lambda b, i: (b, i, 0)),          # seq1 chunk
        pl.BlockSpec((bb, T, Pp + Dgp), lambda b, i: (b, i, 0)),    # xproj chunk
        per_batch(seq2_p), per_batch(s2mask_p), per_batch(s2p),
        fixed(v_p), fixed(w_h_fused), fixed(wg_a_p),
        fixed(wih_x_p), fixed(wih_a_p), fixed(b_rnn),
    ]
    out_specs = [
        pl.BlockSpec((bb, T, Hp), lambda b, i: (b, i, 0)),
        pl.BlockSpec((bb, T, n2p), lambda b, i: (b, i, 0)),
    ]
    out_shape = [
        jax.ShapeDtypeStruct((B, n1p, Hp), jnp.float32),
        jax.ShapeDtypeStruct((B, n1p, n2p), jnp.float32),
    ]

    # vmem limit from the actual block shapes (double-buffered) + margin
    def _bytes(shape):
        return math.prod(shape) * 4
    block_shapes = [
        (bb, T, D1), (bb, T, Pp + Dgp),
        (bb, n2p, D2), (bb, n2p), (bb, n2p, Pp),
        v_p.shape, w_h_fused.shape, wg_a_p.shape,
        wih_x_p.shape, wih_a_p.shape, b_rnn.shape,
        (bb, T, Hp), (bb, T, n2p),
    ]
    est = 2 * sum(_bytes(s) for s in block_shapes) + _bytes((bb, Hp))
    vmem_limit = int(min(max(2 * est + (8 << 20), 32 << 20), 96 << 20))

    grid_spec = pltpu.PrefetchScalarGridSpec(
        num_scalar_prefetch=0,
        grid=(B // bb, n_chunks),                                   # (batch, time)
        in_specs=in_specs,
        out_specs=out_specs,
        scratch_shapes=[pltpu.VMEM((bb, Hp), jnp.float32)],         # h_t carry
    )

    out_h, out_w = pl.pallas_call(
        match_attention_kernel,
        grid_spec=grid_spec,
        out_shape=out_shape,
        compiler_params=pltpu.CompilerParams(
            # batch blocks are independent (shardable on v7x megacore);
            # the time axis is the serial recurrence.
            dimension_semantics=("parallel", "arbitrary"),
            vmem_limit_bytes=vmem_limit,
        ),
    )(seq1_p, xproj, seq2_p, s2mask_p, s2p,
      v_p, w_h_fused, wg_a_p, wih_x_p, wih_a_p, b_rnn)

    # crop lane/time padding, apply the sequence1 mask in the wrapper
    m1 = seq1_mask[:, :, None]
    out_h = out_h[:, :n1, :H] * m1
    out_w = out_w[:, :n1, :n2] * m1
    return out_h, out_w


# ----------------------------------------------------------------------------- params
def init_params(key, D1, D2, H, P):
    """PyTorch-layout parameters (W^T where PyTorch stores (out, in))."""
    Din = D1 + D2
    ks = jax.random.split(key, 10)
    s = 0.1
    return dict(
        W1=jax.random.normal(ks[0], (D2, P), jnp.float32) * s,
        W2=jax.random.normal(ks[1], (D1 + H, P), jnp.float32) * s,
        b_att=jax.random.normal(ks[2], (P,), jnp.float32) * s,
        v=jax.random.normal(ks[3], (P,), jnp.float32) * s,
        Wg=jax.random.normal(ks[4], (Din, Din), jnp.float32) * s,
        bg=jax.random.normal(ks[5], (Din,), jnp.float32) * s,
        Wih=jax.random.normal(ks[6], (Din, 3 * H), jnp.float32) * s,  # GRUCell weight_ih^T, cols [r|z|n]
        Whh=jax.random.normal(ks[7], (H, 3 * H), jnp.float32) * s,    # GRUCell weight_hh^T, cols [r|z|n]
        bih=jax.random.normal(ks[8], (3 * H,), jnp.float32) * s,
        bhh=jax.random.normal(ks[9], (3 * H,), jnp.float32) * s,
    )


# ----------------------------------------------------------------------------- reference (plain JAX)
def reference_forward(seq1, seq2, seq1_mask, seq2_mask, p):
    B, n1, D1 = seq1.shape
    H = p['Whh'].shape[0]
    W1, W2, b_att, v = p['W1'], p['W2'], p['b_att'], p['v']
    Wg, bg = p['Wg'], p['bg']
    Wih, Whh, bih, bhh = p['Wih'], p['Whh'], p['bih'], p['bhh']
    s2p = jnp.einsum('bnd,dp->bnp', seq2, W1)

    def step(h, inp):
        x, m1 = inp
        q = jnp.concatenate([x, h], 1) @ W2 + b_att
        t = jnp.tanh(s2p + q[:, None, :])
        scores = jnp.einsum('bnp,p->bn', t, v)
        masked = jnp.where(seq2_mask > 0, scores, -1e30)
        smax = masked.max(-1, keepdims=True)
        e = jnp.exp(masked - smax) * seq2_mask
        alpha = e / (e.sum(-1, keepdims=True) + 1e-13)
        att = jnp.einsum('bn,bnd->bd', alpha, seq2)
        gin = jnp.concatenate([x, att], 1)
        gin = jax.nn.sigmoid(gin @ Wg + bg) * gin
        gi = gin @ Wih + bih
        gh = h @ Whh + bhh
        r = jax.nn.sigmoid(gi[:, :H] + gh[:, :H])
        z = jax.nn.sigmoid(gi[:, H:2 * H] + gh[:, H:2 * H])
        n = jnp.tanh(gi[:, 2 * H:] + r * gh[:, 2 * H:])
        h_new = (1.0 - z) * n + z * h
        return h_new, (h_new * m1[:, None], alpha * m1[:, None])

    xs = (jnp.transpose(seq1, (1, 0, 2)), jnp.transpose(seq1_mask, (1, 0)))
    _, (hs, ws) = jax.lax.scan(step, jnp.zeros((B, H), jnp.float32), xs)
    return jnp.transpose(hs, (1, 0, 2)), jnp.transpose(ws, (1, 0, 2))


# ----------------------------------------------------------------------------- main
if __name__ == "__main__":
    B, n1, n2 = 2, 12, 8
    D1, D2, H, P = 16, 16, 32, 16   # sequence1_dim, sequence2_dim, rnn_hdim, projection_dim

    key = jax.random.PRNGKey(0)
    k1, k2, kp = jax.random.split(key, 3)
    seq1 = jax.random.normal(k1, (B, n1, D1), jnp.float32)
    seq2 = jax.random.normal(k2, (B, n2, D2), jnp.float32)

    # padding masks (1.0 = valid, 0.0 = pad)
    len1 = jnp.array([12, 9])
    len2 = jnp.array([8, 5])
    seq1_mask = (jnp.arange(n1)[None, :] < len1[:, None]).astype(jnp.float32)
    seq2_mask = (jnp.arange(n2)[None, :] < len2[:, None]).astype(jnp.float32)

    params = init_params(kp, D1, D2, H, P)

    fwd = jax.jit(functools.partial(match_attention_forward, time_chunk=8))
    out_h, out_w = fwd(seq1, seq2, seq1_mask, seq2_mask, params)
    out_h = jax.block_until_ready(out_h)
    out_w = jax.block_until_ready(out_w)

    ref_h, ref_w = reference_forward(seq1, seq2, seq1_mask, seq2_mask, params)
    ref_h = jax.block_until_ready(ref_h)
    ref_w = jax.block_until_ready(ref_w)

    assert out_h.shape == (B, n1, H) and out_w.shape == (B, n1, n2)
    assert jnp.allclose(out_h, ref_h, rtol=2e-3, atol=2e-3), "matchattn output mismatch"
    assert jnp.allclose(out_w, ref_w, rtol=2e-3, atol=2e-3), "attention weights mismatch"

    print("KERNEL_OK")
</pallas_src>

<mosaic_0001>
module attributes {stable_mosaic.version = 11 : i64} {
  func.func @match_attention_kernel(%arg0: i32, %arg1: i32, %arg2: memref<2x8x16xf32, #tpu.memory_space<vmem>>, %arg3: memref<2x8x256xf32, #tpu.memory_space<vmem>>, %arg4: memref<2x128x16xf32, #tpu.memory_space<vmem>>, %arg5: memref<2x128xf32, #tpu.memory_space<vmem>>, %arg6: memref<2x128x128xf32, #tpu.memory_space<vmem>>, %arg7: memref<1x128xf32, #tpu.memory_space<vmem>>, %arg8: memref<128x512xf32, #tpu.memory_space<vmem>>, %arg9: memref<16x128xf32, #tpu.memory_space<vmem>>, %arg10: memref<16x384xf32, #tpu.memory_space<vmem>>, %arg11: memref<16x384xf32, #tpu.memory_space<vmem>>, %arg12: memref<2x384xf32, #tpu.memory_space<vmem>>, %arg13: memref<2x8x128xf32, #tpu.memory_space<vmem>>, %arg14: memref<2x8x128xf32, #tpu.memory_space<vmem>>, %arg15: memref<2x128xf32, #tpu.memory_space<vmem>>) attributes {dimension_semantics = [#tpu.dimension_semantics<parallel>, #tpu.dimension_semantics<arbitrary>], iteration_bounds = array<i64: 1, 2>, scalar_prefetch = 0 : i64, scratch_operands = 1 : i64, tpu.core_type = #tpu.core_type<tc>, window_params = [{transform_indices = @transform_0, window_bounds = array<i64: 2, 8, 16>}, {transform_indices = @transform_1, window_bounds = array<i64: 2, 8, 256>}, {transform_indices = @transform_2, window_bounds = array<i64: 2, 128, 16>}, {transform_indices = @transform_3, window_bounds = array<i64: 2, 128>}, {transform_indices = @transform_4, window_bounds = array<i64: 2, 128, 128>}, {pipeline_mode = #tpu.pipeline_mode<synchronous>, transform_indices = @transform_5, window_bounds = array<i64: 1, 128>}, {pipeline_mode = #tpu.pipeline_mode<synchronous>, transform_indices = @transform_6, window_bounds = array<i64: 128, 512>}, {pipeline_mode = #tpu.pipeline_mode<synchronous>, transform_indices = @transform_7, window_bounds = array<i64: 16, 128>}, {pipeline_mode = #tpu.pipeline_mode<synchronous>, transform_indices = @transform_8, window_bounds = array<i64: 16, 384>}, {pipeline_mode = #tpu.pipeline_mode<synchronous>, transform_indices = @transform_9, window_bounds = array<i64: 16, 384>}, {pipeline_mode = #tpu.pipeline_mode<synchronous>, transform_indices = @transform_10, window_bounds = array<i64: 2, 384>}, {transform_indices = @transform_11, window_bounds = array<i64: 2, 8, 128>}, {transform_indices = @transform_12, window_bounds = array<i64: 2, 8, 128>}]} {
    %c0_i32 = arith.constant 0 : i32
    %0 = arith.cmpi eq, %arg1, %c0_i32 : i32
    %1 = arith.extui %0 : i1 to i32
    %c0_i32_0 = arith.constant 0 : i32
    %2 = arith.cmpi ne, %1, %c0_i32_0 : i32
    scf.if %2 {
      %cst_323 = arith.constant 0.000000e+00 : f32
      %717 = vector.broadcast %cst_323 : f32 to vector<2x128xf32>
      %c0_324 = arith.constant 0 : index
      %c0_325 = arith.constant 0 : index
      %718 = vector.load %arg15[%c0_324, %c0_325] : memref<2x128xf32, #tpu.memory_space<vmem>>, vector<2x128xf32>
      tpu.vector_store %arg15[%c0_324, %c0_325], %717 {strides = array<i32>} : memref<2x128xf32, #tpu.memory_space<vmem>>, vector<2x128xf32>,
    } else {
    }
    %c0 = arith.constant 0 : index
    %c0_1 = arith.constant 0 : index
    %3 = vector.load %arg5[%c0, %c0_1] : memref<2x128xf32, #tpu.memory_space<vmem>>, vector<2x128xf32>
    %cst = arith.constant 0.000000e+00 : f32
    %4 = vector.broadcast %cst : f32 to vector<2x128xf32>
    %5 = arith.cmpf ogt, %3, %4 : vector<2x128xf32>
    %c0_2 = arith.constant 0 : index
    %c0_3 = arith.constant 0 : index
    %6 = vector.load %arg7[%c0_2, %c0_3] : memref<1x128xf32, #tpu.memory_space<vmem>>, vector<1x128xf32>
    %7 = vector.shape_cast %6 : vector<1x128xf32> to vector<1x1x128xf32>
    %c0_4 = arith.constant 0 : index
    %c0_5 = arith.constant 0 : index
    %8 = vector.load %arg12[%c0_4, %c0_5] : memref<2x384xf32, #tpu.memory_space<vmem>>, vector<2x384xf32>
    %9 = vector.extract_strided_slice %8 {offsets = [0, 0], sizes = [1, 384], strides = [1, 1]} : vector<2x384xf32> to vector<1x384xf32>
    %10 = vector.extract_strided_slice %8 {offsets = [1, 0], sizes = [1, 384], strides = [1, 1]} : vector<2x384xf32> to vector<1x384xf32>
    %c0_6 = arith.constant 0 : index
    %c0_7 = arith.constant 0 : index
    %11 = vector.load %arg15[%c0_6, %c0_7] : memref<2x128xf32, #tpu.memory_space<vmem>>, vector<2x128xf32>
    %c0_8 = arith.constant 0 : index
    %c0_9 = arith.constant 0 : index
    %c0_10 = arith.constant 0 : index
    %12 = vector.load %arg2[%c0_8, %c0_9, %c0_10] : memref<2x8x16xf32, #tpu.memory_space<vmem>>, vector<2x1x16xf32>
    %13 = vector.shape_cast %12 : vector<2x1x16xf32> to vector<2x16xf32>
    %c0_11 = arith.constant 0 : index
    %c0_12 = arith.constant 0 : index
    %c0_13 = arith.constant 0 : index
    %14 = vector.load %arg3[%c0_11, %c0_12, %c0_13] : memref<2x8x256xf32, #tpu.memory_space<vmem>>, vector<2x1x256xf32>
    %15 = vector.shape_cast %14 : vector<2x1x256xf32> to vector<2x256xf32>
    %16 = vector.extract_strided_slice %15 {offsets = [0, 0], sizes = [2, 128], strides = [1, 1]} : vector<2x256xf32> to vector<2x128xf32>
    %17 = vector.extract_strided_slice %15 {offsets = [0, 128], sizes = [2, 128], strides = [1, 1]} : vector<2x256xf32> to vector<2x128xf32>
    %c0_14 = arith.constant 0 : index
    %c0_15 = arith.constant 0 : index
    %18 = vector.load %arg8[%c0_14, %c0_15] : memref<128x512xf32, #tpu.memory_space<vmem>>, vector<128x512xf32>
    %cst_16 = arith.constant dense<0.000000e+00> : vector<2x512xf32>
    %19 = tpu.matmul %11, %18, %cst_16 {dimension_numbers = #tpu.dot_dimension_numbers<[1], [0], [0], [1], [0, 0, 1, 1], [], []>} : vector<2x128xf32>, vector<128x512xf32>, vector<2x512xf32> -> vector<2x512xf32>
    %20 = vector.extract_strided_slice %19 {offsets = [0, 0], sizes = [2, 128], strides = [1, 1]} : vector<2x512xf32> to vector<2x128xf32>
    %21 = arith.addf %16, %20 : vector<2x128xf32>
    %c0_17 = arith.constant 0 : index
    %c0_18 = arith.constant 0 : index
    %c0_19 = arith.constant 0 : index
    %22 = vector.load %arg6[%c0_17, %c0_18, %c0_19] : memref<2x128x128xf32, #tpu.memory_space<vmem>>, vector<2x128x128xf32>
    %23 = vector.shape_cast %21 : vector<2x128xf32> to vector<2x1x128xf32>
    %24 = vector.broadcast %23 : vector<2x1x128xf32> to vector<2x128x128xf32>
    %25 = arith.addf %22, %24 : vector<2x128x128xf32>
    %26 = math.tanh %25 : vector<2x128x128xf32>
    %27 = vector.broadcast %7 : vector<1x1x128xf32> to vector<2x128x128xf32>
    %28 = arith.mulf %26, %27 : vector<2x128x128xf32>
    %cst_20 = arith.constant dense<0.000000e+00> : vector<2x128xf32>
    %29 = vector.multi_reduction <add>, %28, %cst_20 [2] : vector<2x128x128xf32> to vector<2x128xf32>
    %cst_21 = arith.constant -1.000000e+30 : f32
    %30 = vector.broadcast %cst_21 : f32 to vector<2x128xf32>
    %31 = arith.select %5, %29, %30 : vector<2x128xi1>, vector<2x128xf32>
    %cst_22 = arith.constant dense<0xFF800000> : vector<2xf32>
    %32 = vector.multi_reduction <maximumf>, %31, %cst_22 [1] : vector<2x128xf32> to vector<2xf32>
    %33 = vector.shape_cast %32 : vector<2xf32> to vector<2x1xf32>
    %34 = vector.broadcast %33 : vector<2x1xf32> to vector<2x128xf32>
    %35 = arith.subf %31, %34 : vector<2x128xf32>
    %36 = math.exp %35 : vector<2x128xf32>
    %37 = arith.mulf %36, %3 : vector<2x128xf32>
    %cst_23 = arith.constant dense<0.000000e+00> : vector<2xf32>
    %38 = vector.multi_reduction <add>, %37, %cst_23 [1] : vector<2x128xf32> to vector<2xf32>
    %39 = vector.shape_cast %38 : vector<2xf32> to vector<2x1xf32>
    %cst_24 = arith.constant 9.99999982E-14 : f32
    %40 = vector.broadcast %cst_24 : f32 to vector<2x1xf32>
    %41 = arith.addf %39, %40 : vector<2x1xf32>
    %42 = vector.broadcast %41 : vector<2x1xf32> to vector<2x128xf32>
    %43 = arith.divf %37, %42 : vector<2x128xf32>
    %44 = vector.shape_cast %43 : vector<2x128xf32> to vector<2x1x128xf32>
    %c0_25 = arith.constant 0 : index
    %c0_26 = arith.constant 0 : index
    %c0_27 = arith.constant 0 : index
    %45 = vector.load %arg4[%c0_25, %c0_26, %c0_27] : memref<2x128x16xf32, #tpu.memory_space<vmem>>, vector<2x128x16xf32>
    "tpu.trace_start"() <{level = 10 : i32, message = "bqn,bnd->bqd"}> : () -> ()
    %cst_28 = arith.constant dense<0.000000e+00> : vector<2x1x16xf32>
    %46 = tpu.matmul %44, %45, %cst_28 {dimension_numbers = #tpu.dot_dimension_numbers<[2], [1], [1], [2], [0, 0, 0, 1, 1, 2], [0], [0]>} : vector<2x1x128xf32>, vector<2x128x16xf32>, vector<2x1x16xf32> -> vector<2x1x16xf32>
    "tpu.trace_stop"() : () -> ()
    %47 = vector.shape_cast %46 : vector<2x1x16xf32> to vector<2x16xf32>
    %c0_29 = arith.constant 0 : index
    %c0_30 = arith.constant 0 : index
    %48 = vector.load %arg9[%c0_29, %c0_30] : memref<16x128xf32, #tpu.memory_space<vmem>>, vector<16x128xf32>
    %cst_31 = arith.constant dense<0.000000e+00> : vector<2x128xf32>
    %49 = tpu.matmul %47, %48, %cst_31 {dimension_numbers = #tpu.dot_dimension_numbers<[1], [0], [0], [1], [0, 0, 1, 1], [], []>} : vector<2x16xf32>, vector<16x128xf32>, vector<2x128xf32> -> vector<2x128xf32>
    %50 = arith.addf %17, %49 : vector<2x128xf32>
    %51 = arith.negf %50 : vector<2x128xf32>
    %52 = math.exp %51 : vector<2x128xf32>
    %cst_32 = arith.constant 1.000000e+00 : f32
    %53 = vector.broadcast %cst_32 : f32 to vector<2x128xf32>
    %54 = arith.addf %53, %52 : vector<2x128xf32>
    %55 = arith.divf %53, %54 : vector<2x128xf32>
    %56 = vector.extract_strided_slice %55 {offsets = [0, 0], sizes = [2, 16], strides = [1, 1]} : vector<2x128xf32> to vector<2x16xf32>
    %57 = arith.mulf %56, %13 : vector<2x16xf32>
    %58 = vector.extract_strided_slice %55 {offsets = [0, 16], sizes = [2, 16], strides = [1, 1]} : vector<2x128xf32> to vector<2x16xf32>
    %59 = arith.mulf %58, %47 : vector<2x16xf32>
    %c0_33 = arith.constant 0 : index
    %c0_34 = arith.constant 0 : index
    %60 = vector.load %arg10[%c0_33, %c0_34] : memref<16x384xf32, #tpu.memory_space<vmem>>, vector<16x384xf32>
    %cst_35 = arith.constant dense<0.000000e+00> : vector<2x384xf32>
    %61 = tpu.matmul %57, %60, %cst_35 {dimension_numbers = #tpu.dot_dimension_numbers<[1], [0], [0], [1], [0, 0, 1, 1], [], []>} : vector<2x16xf32>, vector<16x384xf32>, vector<2x384xf32> -> vector<2x384xf32>
    %c0_36 = arith.constant 0 : index
    %c0_37 = arith.constant 0 : index
    %62 = vector.load %arg11[%c0_36, %c0_37] : memref<16x384xf32, #tpu.memory_space<vmem>>, vector<16x384xf32>
    %cst_38 = arith.constant dense<0.000000e+00> : vector<2x384xf32>
    %63 = tpu.matmul %59, %62, %cst_38 {dimension_numbers = #tpu.dot_dimension_numbers<[1], [0], [0], [1], [0, 0, 1, 1], [], []>} : vector<2x16xf32>, vector<16x384xf32>, vector<2x384xf32> -> vector<2x384xf32>
    %64 = arith.addf %61, %63 : vector<2x384xf32>
    %65 = vector.broadcast %9 : vector<1x384xf32> to vector<2x384xf32>
    %66 = arith.addf %64, %65 : vector<2x384xf32>
    %67 = vector.extract_strided_slice %19 {offsets = [0, 128], sizes = [2, 384], strides = [1, 1]} : vector<2x512xf32> to vector<2x384xf32>
    %68 = vector.broadcast %10 : vector<1x384xf32> to vector<2x384xf32>
    %69 = arith.addf %67, %68 : vector<2x384xf32>
    %70 = vector.extract_strided_slice %66 {offsets = [0, 0], sizes = [2, 128], strides = [1, 1]} : vector<2x384xf32> to vector<2x128xf32>
    %71 = vector.extract_strided_slice %69 {offsets = [0, 0], sizes = [2, 128], strides = [1, 1]} : vector<2x384xf32> to vector<2x128xf32>
    %72 = arith.addf %70, %71 : vector<2x128xf32>
    %73 = arith.negf %72 : vector<2x128xf32>
    %74 = math.exp %73 : vector<2x128xf32>
    %cst_39 = arith.constant 1.000000e+00 : f32
    %75 = vector.broadcast %cst_39 : f32 to vector<2x128xf32>
    %76 = arith.addf %75, %74 : vector<2x128xf32>
    %77 = arith.divf %75, %76 : vector<2x128xf32>
    %78 = vector.extract_strided_slice %66 {offsets = [0, 128], sizes = [2, 128], strides = [1, 1]} : vector<2x384xf32> to vector<2x128xf32>
    %79 = vector.extract_strided_slice %69 {offsets = [0, 128], sizes = [2, 128], strides = [1, 1]} : vector<2x384xf32> to vector<2x128xf32>
    %80 = arith.addf %78, %79 : vector<2x128xf32>
    %81 = arith.negf %80 : vector<2x128xf32>
    %82 = math.exp %81 : vector<2x128xf32>
    %cst_40 = arith.constant 1.000000e+00 : f32
    %83 = vector.broadcast %cst_40 : f32 to vector<2x128xf32>
    %84 = arith.addf %83, %82 : vector<2x128xf32>
    %85 = arith.divf %83, %84 : vector<2x128xf32>
    %86 = vector.extract_strided_slice %66 {offsets = [0, 256], sizes = [2, 128], strides = [1, 1]} : vector<2x384xf32> to vector<2x128xf32>
    %87 = vector.extract_strided_slice %69 {offsets = [0, 256], sizes = [2, 128], strides = [1, 1]} : vector<2x384xf32> to vector<2x128xf32>
    %88 = arith.mulf %77, %87 : vector<2x128xf32>
    %89 = arith.addf %86, %88 : vector<2x128xf32>
    %90 = math.tanh %89 : vector<2x128xf32>
    %cst_41 = arith.constant 1.000000e+00 : f32
    %91 = vector.broadcast %cst_41 : f32 to vector<2x128xf32>
    %92 = arith.subf %91, %85 : vector<2x128xf32>
    %93 = arith.mulf %92, %90 : vector<2x128xf32>
    %94 = arith.mulf %85, %11 : vector<2x128xf32>
    %95 = arith.addf %93, %94 : vector<2x128xf32>
    %96 = vector.shape_cast %95 : vector<2x128xf32> to vector<2x1x128xf32>
    %c0_42 = arith.constant 0 : index
    %c0_43 = arith.constant 0 : index
    %c0_44 = arith.constant 0 : index
    %97 = vector.load %arg13[%c0_42, %c0_43, %c0_44] : memref<2x8x128xf32, #tpu.memory_space<vmem>>, vector<2x1x128xf32>
    tpu.vector_store %arg13[%c0_42, %c0_43, %c0_44], %96 {strides = array<i32>} : memref<2x8x128xf32, #tpu.memory_space<vmem>>, vector<2x1x128xf32>,
    %98 = vector.shape_cast %43 : vector<2x128xf32> to vector<2x1x128xf32>
    %c0_45 = arith.constant 0 : index
    %c0_46 = arith.constant 0 : index
    %c0_47 = arith.constant 0 : index
    %99 = vector.load %arg14[%c0_45, %c0_46, %c0_47] : memref<2x8x128xf32, #tpu.memory_space<vmem>>, vector<2x1x128xf32>
    tpu.vector_store %arg14[%c0_45, %c0_46, %c0_47], %98 {strides = array<i32>} : memref<2x8x128xf32, #tpu.memory_space<vmem>>, vector<2x1x128xf32>,
    %c0_48 = arith.constant 0 : index
    %c1 = arith.constant 1 : index
    %c0_49 = arith.constant 0 : index
    %100 = vector.load %arg2[%c0_48, %c1, %c0_49] : memref<2x8x16xf32, #tpu.memory_space<vmem>>, vector<2x1x16xf32>
    %101 = vector.shape_cast %100 : vector<2x1x16xf32> to vector<2x16xf32>
    %c0_50 = arith.constant 0 : index
    %c1_51 = arith.constant 1 : index
    %c0_52 = arith.constant 0 : index
    %102 = vector.load %arg3[%c0_50, %c1_51, %c0_52] : memref<2x8x256xf32, #tpu.memory_space<vmem>>, vector<2x1x256xf32>
    %103 = vector.shape_cast %102 : vector<2x1x256xf32> to vector<2x256xf32>
    %104 = vector.extract_strided_slice %103 {offsets = [0, 0], sizes = [2, 128], strides = [1, 1]} : vector<2x256xf32> to vector<2x128xf32>
    %105 = vector.extract_strided_slice %103 {offsets = [0, 128], sizes = [2, 128], strides = [1, 1]} : vector<2x256xf32> to vector<2x128xf32>
    %c0_53 = arith.constant 0 : index
    %c0_54 = arith.constant 0 : index
    %106 = vector.load %arg8[%c0_53, %c0_54] : memref<128x512xf32, #tpu.memory_space<vmem>>, vector<128x512xf32>
    %cst_55 = arith.constant dense<0.000000e+00> : vector<2x512xf32>
    %107 = tpu.matmul %95, %106, %cst_55 {dimension_numbers = #tpu.dot_dimension_numbers<[1], [0], [0], [1], [0, 0, 1, 1], [], []>} : vector<2x128xf32>, vector<128x512xf32>, vector<2x512xf32> -> vector<2x512xf32>
    %108 = vector.extract_strided_slice %107 {offsets = [0, 0], sizes = [2, 128], strides = [1, 1]} : vector<2x512xf32> to vector<2x128xf32>
    %109 = arith.addf %104, %108 : vector<2x128xf32>
    %c0_56 = arith.constant 0 : index
    %c0_57 = arith.constant 0 : index
    %c0_58 = arith.constant 0 : index
    %110 = vector.load %arg6[%c0_56, %c0_57, %c0_58] : memref<2x128x128xf32, #tpu.memory_space<vmem>>, vector<2x128x128xf32>
    %111 = vector.shape_cast %109 : vector<2x128xf32> to vector<2x1x128xf32>
    %112 = vector.broadcast %111 : vector<2x1x128xf32> to vector<2x128x128xf32>
    %113 = arith.addf %110, %112 : vector<2x128x128xf32>
    %114 = math.tanh %113 : vector<2x128x128xf32>
    %115 = vector.broadcast %7 : vector<1x1x128xf32> to vector<2x128x128xf32>
    %116 = arith.mulf %114, %115 : vector<2x128x128xf32>
    %cst_59 = arith.constant dense<0.000000e+00> : vector<2x128xf32>
    %117 = vector.multi_reduction <add>, %116, %cst_59 [2] : vector<2x128x128xf32> to vector<2x128xf32>
    %cst_60 = arith.constant -1.000000e+30 : f32
    %118 = vector.broadcast %cst_60 : f32 to vector<2x128xf32>
    %119 = arith.select %5, %117, %118 : vector<2x128xi1>, vector<2x128xf32>
    %cst_61 = arith.constant dense<0xFF800000> : vector<2xf32>
    %120 = vector.multi_reduction <maximumf>, %119, %cst_61 [1] : vector<2x128xf32> to vector<2xf32>
    %121 = vector.shape_cast %120 : vector<2xf32> to vector<2x1xf32>
    %122 = vector.broadcast %121 : vector<2x1xf32> to vector<2x128xf32>
    %123 = arith.subf %119, %122 : vector<2x128xf32>
    %124 = math.exp %123 : vector<2x128xf32>
    %125 = arith.mulf %124, %3 : vector<2x128xf32>
    %cst_62 = arith.constant dense<0.000000e+00> : vector<2xf32>
    %126 = vector.multi_reduction <add>, %125, %cst_62 [1] : vector<2x128xf32> to vector<2xf32>
    %127 = vector.shape_cast %126 : vector<2xf32> to vector<2x1xf32>
    %cst_63 = arith.constant 9.99999982E-14 : f32
    %128 = vector.broadcast %cst_63 : f32 to vector<2x1xf32>
    %129 = arith.addf %127, %128 : vector<2x1xf32>
    %130 = vector.broadcast %129 : vector<2x1xf32> to vector<2x128xf32>
    %131 = arith.divf %125, %130 : vector<2x128xf32>
    %132 = vector.shape_cast %131 : vector<2x128xf32> to vector<2x1x128xf32>
    %c0_64 = arith.constant 0 : index
    %c0_65 = arith.constant 0 : index
    %c0_66 = arith.constant 0 : index
    %133 = vector.load %arg4[%c0_64, %c0_65, %c0_66] : memref<2x128x16xf32, #tpu.memory_space<vmem>>, vector<2x128x16xf32>
    "tpu.trace_start"() <{level = 10 : i32, message = "bqn,bnd->bqd"}> : () -> ()
    %cst_67 = arith.constant dense<0.000000e+00> : vector<2x1x16xf32>
    %134 = tpu.matmul %132, %133, %cst_67 {dimension_numbers = #tpu.dot_dimension_numbers<[2], [1], [1], [2], [0, 0, 0, 1, 1, 2], [0], [0]>} : vector<2x1x128xf32>, vector<2x128x16xf32>, vector<2x1x16xf32> -> vector<2x1x16xf32>
    "tpu.trace_stop"() : () -> ()
    %135 = vector.shape_cast %134 : vector<2x1x16xf32> to vector<2x16xf32>
    %c0_68 = arith.constant 0 : index
    %c0_69 = arith.constant 0 : index
    %136 = vector.load %arg9[%c0_68, %c0_69] : memref<16x128xf32, #tpu.memory_space<vmem>>, vector<16x128xf32>
    %cst_70 = arith.constant dense<0.000000e+00> : vector<2x128xf32>
    %137 = tpu.matmul %135, %136, %cst_70 {dimension_numbers = #tpu.dot_dimension_numbers<[1], [0], [0], [1], [0, 0, 1, 1], [], []>} : vector<2x16xf32>, vector<16x128xf32>, vector<2x128xf32> -> vector<2x128xf32>
    %138 = arith.addf %105, %137 : vector<2x128xf32>
    %139 = arith.negf %138 : vector<2x128xf32>
    %140 = math.exp %139 : vector<2x128xf32>
    %cst_71 = arith.constant 1.000000e+00 : f32
    %141 = vector.broadcast %cst_71 : f32 to vector<2x128xf32>
    %142 = arith.addf %141, %140 : vector<2x128xf32>
    %143 = arith.divf %141, %142 : vector<2x128xf32>
    %144 = vector.extract_strided_slice %143 {offsets = [0, 0], sizes = [2, 16], strides = [1, 1]} : vector<2x128xf32> to vector<2x16xf32>
    %145 = arith.mulf %144, %101 : vector<2x16xf32>
    %146 = vector.extract_strided_slice %143 {offsets = [0, 16], sizes = [2, 16], strides = [1, 1]} : vector<2x128xf32> to vector<2x16xf32>
    %147 = arith.mulf %146, %135 : vector<2x16xf32>
    %c0_72 = arith.constant 0 : index
    %c0_73 = arith.constant 0 : index
    %148 = vector.load %arg10[%c0_72, %c0_73] : memref<16x384xf32, #tpu.memory_space<vmem>>, vector<16x384xf32>
    %cst_74 = arith.constant dense<0.000000e+00> : vector<2x384xf32>
    %149 = tpu.matmul %145, %148, %cst_74 {dimension_numbers = #tpu.dot_dimension_numbers<[1], [0], [0], [1], [0, 0, 1, 1], [], []>} : vector<2x16xf32>, vector<16x384xf32>, vector<2x384xf32> -> vector<2x384xf32>
    %c0_75 = arith.constant 0 : index
    %c0_76 = arith.constant 0 : index
    %150 = vector.load %arg11[%c0_75, %c0_76] : memref<16x384xf32, #tpu.memory_space<vmem>>, vector<16x384xf32>
    %cst_77 = arith.constant dense<0.000000e+00> : vector<2x384xf32>
    %151 = tpu.matmul %147, %150, %cst_77 {dimension_numbers = #tpu.dot_dimension_numbers<[1], [0], [0], [1], [0, 0, 1, 1], [], []>} : vector<2x16xf32>, vector<16x384xf32>, vector<2x384xf32> -> vector<2x384xf32>
    %152 = arith.addf %149, %151 : vector<2x384xf32>
    %153 = vector.broadcast %9 : vector<1x384xf32> to vector<2x384xf32>
    %154 = arith.addf %152, %153 : vector<2x384xf32>
    %155 = vector.extract_strided_slice %107 {offsets = [0, 128], sizes = [2, 384], strides = [1, 1]} : vector<2x512xf32> to vector<2x384xf32>
    %156 = vector.broadcast %10 : vector<1x384xf32> to vector<2x384xf32>
    %157 = arith.addf %155, %156 : vector<2x384xf32>
    %158 = vector.extract_strided_slice %154 {offsets = [0, 0], sizes = [2, 128], strides = [1, 1]} : vector<2x384xf32> to vector<2x128xf32>
    %159 = vector.extract_strided_slice %157 {offsets = [0, 0], sizes = [2, 128], strides = [1, 1]} : vector<2x384xf32> to vector<2x128xf32>
    %160 = arith.addf %158, %159 : vector<2x128xf32>
    %161 = arith.negf %160 : vector<2x128xf32>
    %162 = math.exp %161 : vector<2x128xf32>
    %cst_78 = arith.constant 1.000000e+00 : f32
    %163 = vector.broadcast %cst_78 : f32 to vector<2x128xf32>
    %164 = arith.addf %163, %162 : vector<2x128xf32>
    %165 = arith.divf %163, %164 : vector<2x128xf32>
    %166 = vector.extract_strided_slice %154 {offsets = [0, 128], sizes = [2, 128], strides = [1, 1]} : vector<2x384xf32> to vector<2x128xf32>
    %167 = vector.extract_strided_slice %157 {offsets = [0, 128], sizes = [2, 128], strides = [1, 1]} : vector<2x384xf32> to vector<2x128xf32>
    %168 = arith.addf %166, %167 : vector<2x128xf32>
    %169 = arith.negf %168 : vector<2x128xf32>
    %170 = math.exp %169 : vector<2x128xf32>
    %cst_79 = arith.constant 1.000000e+00 : f32
    %171 = vector.broadcast %cst_79 : f32 to vector<2x128xf32>
    %172 = arith.addf %171, %170 : vector<2x128xf32>
    %173 = arith.divf %171, %172 : vector<2x128xf32>
    %174 = vector.extract_strided_slice %154 {offsets = [0, 256], sizes = [2, 128], strides = [1, 1]} : vector<2x384xf32> to vector<2x128xf32>
    %175 = vector.extract_strided_slice %157 {offsets = [0, 256], sizes = [2, 128], strides = [1, 1]} : vector<2x384xf32> to vector<2x128xf32>
    %176 = arith.mulf %165, %175 : vector<2x128xf32>
    %177 = arith.addf %174, %176 : vector<2x128xf32>
    %178 = math.tanh %177 : vector<2x128xf32>
    %cst_80 = arith.constant 1.000000e+00 : f32
    %179 = vector.broadcast %cst_80 : f32 to vector<2x128xf32>
    %180 = arith.subf %179, %173 : vector<2x128xf32>
    %181 = arith.mulf %180, %178 : vector<2x128xf32>
    %182 = arith.mulf %173, %95 : vector<2x128xf32>
    %183 = arith.addf %181, %182 : vector<2x128xf32>
    %184 = vector.shape_cast %183 : vector<2x128xf32> to vector<2x1x128xf32>
    %c0_81 = arith.constant 0 : index
    %c1_82 = arith.constant 1 : index
    %c0_83 = arith.constant 0 : index
    %185 = vector.load %arg13[%c0_81, %c1_82, %c0_83] : memref<2x8x128xf32, #tpu.memory_space<vmem>>, vector<2x1x128xf32>
    tpu.vector_store %arg13[%c0_81, %c1_82, %c0_83], %184 {strides = array<i32>} : memref<2x8x128xf32, #tpu.memory_space<vmem>>, vector<2x1x128xf32>,
    %186 = vector.shape_cast %131 : vector<2x128xf32> to vector<2x1x128xf32>
    %c0_84 = arith.constant 0 : index
    %c1_85 = arith.constant 1 : index
    %c0_86 = arith.constant 0 : index
    %187 = vector.load %arg14[%c0_84, %c1_85, %c0_86] : memref<2x8x128xf32, #tpu.memory_space<vmem>>, vector<2x1x128xf32>
    tpu.vector_store %arg14[%c0_84, %c1_85, %c0_86], %186 {strides = array<i32>} : memref<2x8x128xf32, #tpu.memory_space<vmem>>, vector<2x1x128xf32>,
    %c0_87 = arith.constant 0 : index
    %c2 = arith.constant 2 : index
    %c0_88 = arith.constant 0 : index
    %188 = vector.load %arg2[%c0_87, %c2, %c0_88] : memref<2x8x16xf32, #tpu.memory_space<vmem>>, vector<2x1x16xf32>
    %189 = vector.shape_cast %188 : vector<2x1x16xf32> to vector<2x16xf32>
    %c0_89 = arith.constant 0 : index
    %c2_90 = arith.constant 2 : index
    %c0_91 = arith.constant 0 : index
    %190 = vector.load %arg3[%c0_89, %c2_90, %c0_91] : memref<2x8x256xf32, #tpu.memory_space<vmem>>, vector<2x1x256xf32>
    %191 = vector.shape_cast %190 : vector<2x1x256xf32> to vector<2x256xf32>
    %192 = vector.extract_strided_slice %191 {offsets = [0, 0], sizes = [2, 128], strides = [1, 1]} : vector<2x256xf32> to vector<2x128xf32>
    %193 = vector.extract_strided_slice %191 {offsets = [0, 128], sizes = [2, 128], strides = [1, 1]} : vector<2x256xf32> to vector<2x128xf32>
    %c0_92 = arith.constant 0 : index
    %c0_93 = arith.constant 0 : index
    %194 = vector.load %arg8[%c0_92, %c0_93] : memref<128x512xf32, #tpu.memory_space<vmem>>, vector<128x512xf32>
    %cst_94 = arith.constant dense<0.000000e+00> : vector<2x512xf32>
    %195 = tpu.matmul %183, %194, %cst_94 {dimension_numbers = #tpu.dot_dimension_numbers<[1], [0], [0], [1], [0, 0, 1, 1], [], []>} : vector<2x128xf32>, vector<128x512xf32>, vector<2x512xf32> -> vector<2x512xf32>
    %196 = vector.extract_strided_slice %195 {offsets = [0, 0], sizes = [2, 128], strides = [1, 1]} : vector<2x512xf32> to vector<2x128xf32>
    %197 = arith.addf %192, %196 : vector<2x128xf32>
    %c0_95 = arith.constant 0 : index
    %c0_96 = arith.constant 0 : index
    %c0_97 = arith.constant 0 : index
    %198 = vector.load %arg6[%c0_95, %c0_96, %c0_97] : memref<2x128x128xf32, #tpu.memory_space<vmem>>, vector<2x128x128xf32>
    %199 = vector.shape_cast %197 : vector<2x128xf32> to vector<2x1x128xf32>
    %200 = vector.broadcast %199 : vector<2x1x128xf32> to vector<2x128x128xf32>
    %201 = arith.addf %198, %200 : vector<2x128x128xf32>
    %202 = math.tanh %201 : vector<2x128x128xf32>
    %203 = vector.broadcast %7 : vector<1x1x128xf32> to vector<2x128x128xf32>
    %204 = arith.mulf %202, %203 : vector<2x128x128xf32>
    %cst_98 = arith.constant dense<0.000000e+00> : vector<2x128xf32>
    %205 = vector.multi_reduction <add>, %204, %cst_98 [2] : vector<2x128x128xf32> to vector<2x128xf32>
    %cst_99 = arith.constant -1.000000e+30 : f32
    %206 = vector.broadcast %cst_99 : f32 to vector<2x128xf32>
    %207 = arith.select %5, %205, %206 : vector<2x128xi1>, vector<2x128xf32>
    %cst_100 = arith.constant dense<0xFF800000> : vector<2xf32>
    %208 = vector.multi_reduction <maximumf>, %207, %cst_100 [1] : vector<2x128xf32> to vector<2xf32>
    %209 = vector.shape_cast %208 : vector<2xf32> to vector<2x1xf32>
    %210 = vector.broadcast %209 : vector<2x1xf32> to vector<2x128xf32>
    %211 = arith.subf %207, %210 : vector<2x128xf32>
    %212 = math.exp %211 : vector<2x128xf32>
    %213 = arith.mulf %212, %3 : vector<2x128xf32>
    %cst_101 = arith.constant dense<0.000000e+00> : vector<2xf32>
    %214 = vector.multi_reduction <add>, %213, %cst_101 [1] : vector<2x128xf32> to vector<2xf32>
    %215 = vector.shape_cast %214 : vector<2xf32> to vector<2x1xf32>
    %cst_102 = arith.constant 9.99999982E-14 : f32
    %216 = vector.broadcast %cst_102 : f32 to vector<2x1xf32>
    %217 = arith.addf %215, %216 : vector<2x1xf32>
    %218 = vector.broadcast %217 : vector<2x1xf32> to vector<2x128xf32>
    %219 = arith.divf %213, %218 : vector<2x128xf32>
    %220 = vector.shape_cast %219 : vector<2x128xf32> to vector<2x1x128xf32>
    %c0_103 = arith.constant 0 : index
    %c0_104 = arith.constant 0 : index
    %c0_105 = arith.constant 0 : index
    %221 = vector.load %arg4[%c0_103, %c0_104, %c0_105] : memref<2x128x16xf32, #tpu.memory_space<vmem>>, vector<2x128x16xf32>
    "tpu.trace_start"() <{level = 10 : i32, message = "bqn,bnd->bqd"}> : () -> ()
    %cst_106 = arith.constant dense<0.000000e+00> : vector<2x1x16xf32>
    %222 = tpu.matmul %220, %221, %cst_106 {dimension_numbers = #tpu.dot_dimension_numbers<[2], [1], [1], [2], [0, 0, 0, 1, 1, 2], [0], [0]>} : vector<2x1x128xf32>, vector<2x128x16xf32>, vector<2x1x16xf32> -> vector<2x1x16xf32>
    "tpu.trace_stop"() : () -> ()
    %223 = vector.shape_cast %222 : vector<2x1x16xf32> to vector<2x16xf32>
    %c0_107 = arith.constant 0 : index
    %c0_108 = arith.constant 0 : index
    %224 = vector.load %arg9[%c0_107, %c0_108] : memref<16x128xf32, #tpu.memory_space<vmem>>, vector<16x128xf32>
    %cst_109 = arith.constant dense<0.000000e+00> : vector<2x128xf32>
    %225 = tpu.matmul %223, %224, %cst_109 {dimension_numbers = #tpu.dot_dimension_numbers<[1], [0], [0], [1], [0, 0, 1, 1], [], []>} : vector<2x16xf32>, vector<16x128xf32>, vector<2x128xf32> -> vector<2x128xf32>
    %226 = arith.addf %193, %225 : vector<2x128xf32>
    %227 = arith.negf %226 : vector<2x128xf32>
    %228 = math.exp %227 : vector<2x128xf32>
    %cst_110 = arith.constant 1.000000e+00 : f32
    %229 = vector.broadcast %cst_110 : f32 to vector<2x128xf32>
    %230 = arith.addf %229, %228 : vector<2x128xf32>
    %231 = arith.divf %229, %230 : vector<2x128xf32>
    %232 = vector.extract_strided_slice %231 {offsets = [0, 0], sizes = [2, 16], strides = [1, 1]} : vector<2x128xf32> to vector<2x16xf32>
    %233 = arith.mulf %232, %189 : vector<2x16xf32>
    %234 = vector.extract_strided_slice %231 {offsets = [0, 16], sizes = [2, 16], strides = [1, 1]} : vector<2x128xf32> to vector<2x16xf32>
    %235 = arith.mulf %234, %223 : vector<2x16xf32>
    %c0_111 = arith.constant 0 : index
    %c0_112 = arith.constant 0 : index
    %236 = vector.load %arg10[%c0_111, %c0_112] : memref<16x384xf32, #tpu.memory_space<vmem>>, vector<16x384xf32>
    %cst_113 = arith.constant dense<0.000000e+00> : vector<2x384xf32>
    %237 = tpu.matmul %233, %236, %cst_113 {dimension_numbers = #tpu.dot_dimension_numbers<[1], [0], [0], [1], [0, 0, 1, 1], [], []>} : vector<2x16xf32>, vector<16x384xf32>, vector<2x384xf32> -> vector<2x384xf32>
    %c0_114 = arith.constant 0 : index
    %c0_115 = arith.constant 0 : index
    %238 = vector.load %arg11[%c0_114, %c0_115] : memref<16x384xf32, #tpu.memory_space<vmem>>, vector<16x384xf32>
    %cst_116 = arith.constant dense<0.000000e+00> : vector<2x384xf32>
    %239 = tpu.matmul %235, %238, %cst_116 {dimension_numbers = #tpu.dot_dimension_numbers<[1], [0], [0], [1], [0, 0, 1, 1], [], []>} : vector<2x16xf32>, vector<16x384xf32>, vector<2x384xf32> -> vector<2x384xf32>
    %240 = arith.addf %237, %239 : vector<2x384xf32>
    %241 = vector.broadcast %9 : vector<1x384xf32> to vector<2x384xf32>
    %242 = arith.addf %240, %241 : vector<2x384xf32>
    %243 = vector.extract_strided_slice %195 {offsets = [0, 128], sizes = [2, 384], strides = [1, 1]} : vector<2x512xf32> to vector<2x384xf32>
    %244 = vector.broadcast %10 : vector<1x384xf32> to vector<2x384xf32>
    %245 = arith.addf %243, %244 : vector<2x384xf32>
    %246 = vector.extract_strided_slice %242 {offsets = [0, 0], sizes = [2, 128], strides = [1, 1]} : vector<2x384xf32> to vector<2x128xf32>
    %247 = vector.extract_strided_slice %245 {offsets = [0, 0], sizes = [2, 128], strides = [1, 1]} : vector<2x384xf32> to vector<2x128xf32>
    %248 = arith.addf %246, %247 : vector<2x128xf32>
    %249 = arith.negf %248 : vector<2x128xf32>
    %250 = math.exp %249 : vector<2x128xf32>
    %cst_117 = arith.constant 1.000000e+00 : f32
    %251 = vector.broadcast %cst_117 : f32 to vector<2x128xf32>
    %252 = arith.addf %251, %250 : vector<2x128xf32>
    %253 = arith.divf %251, %252 : vector<2x128xf32>
    %254 = vector.extract_strided_slice %242 {offsets = [0, 128], sizes = [2, 128], strides = [1, 1]} : vector<2x384xf32> to vector<2x128xf32>
    %255 = vector.extract_strided_slice %245 {offsets = [0, 128], sizes = [2, 128], strides = [1, 1]} : vector<2x384xf32> to vector<2x128xf32>
    %256 = arith.addf %254, %255 : vector<2x128xf32>
    %257 = arith.negf %256 : vector<2x128xf32>
    %258 = math.exp %257 : vector<2x128xf32>
    %cst_118 = arith.constant 1.000000e+00 : f32
    %259 = vector.broadcast %cst_118 : f32 to vector<2x128xf32>
    %260 = arith.addf %259, %258 : vector<2x128xf32>
    %261 = arith.divf %259, %260 : vector<2x128xf32>
    %262 = vector.extract_strided_slice %242 {offsets = [0, 256], sizes = [2, 128], strides = [1, 1]} : vector<2x384xf32> to vector<2x128xf32>
    %263 = vector.extract_strided_slice %245 {offsets = [0, 256], sizes = [2, 128], strides = [1, 1]} : vector<2x384xf32> to vector<2x128xf32>
    %264 = arith.mulf %253, %263 : vector<2x128xf32>
    %265 = arith.addf %262, %264 : vector<2x128xf32>
    %266 = math.tanh %265 : vector<2x128xf32>
    %cst_119 = arith.constant 1.000000e+00 : f32
    %267 = vector.broadcast %cst_119 : f32 to vector<2x128xf32>
    %268 = arith.subf %267, %261 : vector<2x128xf32>
    %269 = arith.mulf %268, %266 : vector<2x128xf32>
    %270 = arith.mulf %261, %183 : vector<2x128xf32>
    %271 = arith.addf %269, %270 : vector<2x128xf32>
    %272 = vector.shape_cast %271 : vector<2x128xf32> to vector<2x1x128xf32>
    %c0_120 = arith.constant 0 : index
    %c2_121 = arith.constant 2 : index
    %c0_122 = arith.constant 0 : index
    %273 = vector.load %arg13[%c0_120, %c2_121, %c0_122] : memref<2x8x128xf32, #tpu.memory_space<vmem>>, vector<2x1x128xf32>
    tpu.vector_store %arg13[%c0_120, %c2_121, %c0_122], %272 {strides = array<i32>} : memref<2x8x128xf32, #tpu.memory_space<vmem>>, vector<2x1x128xf32>,
    %274 = vector.shape_cast %219 : vector<2x128xf32> to vector<2x1x128xf32>
    %c0_123 = arith.constant 0 : index
    %c2_124 = arith.constant 2 : index
    %c0_125 = arith.constant 0 : index
    %275 = vector.load %arg14[%c0_123, %c2_124, %c0_125] : memref<2x8x128xf32, #tpu.memory_space<vmem>>, vector<2x1x128xf32>
    tpu.vector_store %arg14[%c0_123, %c2_124, %c0_125], %274 {strides = array<i32>} : memref<2x8x128xf32, #tpu.memory_space<vmem>>, vector<2x1x128xf32>,
    %c0_126 = arith.constant 0 : index
    %c3 = arith.constant 3 : index
    %c0_127 = arith.constant 0 : index
    %276 = vector.load %arg2[%c0_126, %c3, %c0_127] : memref<2x8x16xf32, #tpu.memory_space<vmem>>, vector<2x1x16xf32>
    %277 = vector.shape_cast %276 : vector<2x1x16xf32> to vector<2x16xf32>
    %c0_128 = arith.constant 0 : index
    %c3_129 = arith.constant 3 : index
    %c0_130 = arith.constant 0 : index
    %278 = vector.load %arg3[%c0_128, %c3_129, %c0_130] : memref<2x8x256xf32, #tpu.memory_space<vmem>>, vector<2x1x256xf32>
    %279 = vector.shape_cast %278 : vector<2x1x256xf32> to vector<2x256xf32>
    %280 = vector.extract_strided_slice %279 {offsets = [0, 0], sizes = [2, 128], strides = [1, 1]} : vector<2x256xf32> to vector<2x128xf32>
    %281 = vector.extract_strided_slice %279 {offsets = [0, 128], sizes = [2, 128], strides = [1, 1]} : vector<2x256xf32> to vector<2x128xf32>
    %c0_131 = arith.constant 0 : index
    %c0_132 = arith.constant 0 : index
    %282 = vector.load %arg8[%c0_131, %c0_132] : memref<128x512xf32, #tpu.memory_space<vmem>>, vector<128x512xf32>
    %cst_133 = arith.constant dense<0.000000e+00> : vector<2x512xf32>
    %283 = tpu.matmul %271, %282, %cst_133 {dimension_numbers = #tpu.dot_dimension_numbers<[1], [0], [0], [1], [0, 0, 1, 1], [], []>} : vector<2x128xf32>, vector<128x512xf32>, vector<2x512xf32> -> vector<2x512xf32>
    %284 = vector.extract_strided_slice %283 {offsets = [0, 0], sizes = [2, 128], strides = [1, 1]} : vector<2x512xf32> to vector<2x128xf32>
    %285 = arith.addf %280, %284 : vector<2x128xf32>
    %c0_134 = arith.constant 0 : index
    %c0_135 = arith.constant 0 : index
    %c0_136 = arith.constant 0 : index
    %286 = vector.load %arg6[%c0_134, %c0_135, %c0_136] : memref<2x128x128xf32, #tpu.memory_space<vmem>>, vector<2x128x128xf32>
    %287 = vector.shape_cast %285 : vector<2x128xf32> to vector<2x1x128xf32>
    %288 = vector.broadcast %287 : vector<2x1x128xf32> to vector<2x128x128xf32>
    %289 = arith.addf %286, %288 : vector<2x128x128xf32>
    %290 = math.tanh %289 : vector<2x128x128xf32>
    %291 = vector.broadcast %7 : vector<1x1x128xf32> to vector<2x128x128xf32>
    %292 = arith.mulf %290, %291 : vector<2x128x128xf32>
    %cst_137 = arith.constant dense<0.000000e+00> : vector<2x128xf32>
    %293 = vector.multi_reduction <add>, %292, %cst_137 [2] : vector<2x128x128xf32> to vector<2x128xf32>
    %cst_138 = arith.constant -1.000000e+30 : f32
    %294 = vector.broadcast %cst_138 : f32 to vector<2x128xf32>
    %295 = arith.select %5, %293, %294 : vector<2x128xi1>, vector<2x128xf32>
    %cst_139 = arith.constant dense<0xFF800000> : vector<2xf32>
    %296 = vector.multi_reduction <maximumf>, %295, %cst_139 [1] : vector<2x128xf32> to vector<2xf32>
    %297 = vector.shape_cast %296 : vector<2xf32> to vector<2x1xf32>
    %298 = vector.broadcast %297 : vector<2x1xf32> to vector<2x128xf32>
    %299 = arith.subf %295, %298 : vector<2x128xf32>
    %300 = math.exp %299 : vector<2x128xf32>
    %301 = arith.mulf %300, %3 : vector<2x128xf32>
    %cst_140 = arith.constant dense<0.000000e+00> : vector<2xf32>
    %302 = vector.multi_reduction <add>, %301, %cst_140 [1] : vector<2x128xf32> to vector<2xf32>
    %303 = vector.shape_cast %302 : vector<2xf32> to vector<2x1xf32>
    %cst_141 = arith.constant 9.99999982E-14 : f32
    %304 = vector.broadcast %cst_141 : f32 to vector<2x1xf32>
    %305 = arith.addf %303, %304 : vector<2x1xf32>
    %306 = vector.broadcast %305 : vector<2x1xf32> to vector<2x128xf32>
    %307 = arith.divf %301, %306 : vector<2x128xf32>
    %308 = vector.shape_cast %307 : vector<2x128xf32> to vector<2x1x128xf32>
    %c0_142 = arith.constant 0 : index
    %c0_143 = arith.constant 0 : index
    %c0_144 = arith.constant 0 : index
    %309 = vector.load %arg4[%c0_142, %c0_143, %c0_144] : memref<2x128x16xf32, #tpu.memory_space<vmem>>, vector<2x128x16xf32>
    "tpu.trace_start"() <{level = 10 : i32, message = "bqn,bnd->bqd"}> : () -> ()
    %cst_145 = arith.constant dense<0.000000e+00> : vector<2x1x16xf32>
    %310 = tpu.matmul %308, %309, %cst_145 {dimension_numbers = #tpu.dot_dimension_numbers<[2], [1], [1], [2], [0, 0, 0, 1, 1, 2], [0], [0]>} : vector<2x1x128xf32>, vector<2x128x16xf32>, vector<2x1x16xf32> -> vector<2x1x16xf32>
    "tpu.trace_stop"() : () -> ()
    %311 = vector.shape_cast %310 : vector<2x1x16xf32> to vector<2x16xf32>
    %c0_146 = arith.constant 0 : index
    %c0_147 = arith.constant 0 : index
    %312 = vector.load %arg9[%c0_146, %c0_147] : memref<16x128xf32, #tpu.memory_space<vmem>>, vector<16x128xf32>
    %cst_148 = arith.constant dense<0.000000e+00> : vector<2x128xf32>
    %313 = tpu.matmul %311, %312, %cst_148 {dimension_numbers = #tpu.dot_dimension_numbers<[1], [0], [0], [1], [0, 0, 1, 1], [], []>} : vector<2x16xf32>, vector<16x128xf32>, vector<2x128xf32> -> vector<2x128xf32>
    %314 = arith.addf %281, %313 : vector<2x128xf32>
    %315 = arith.negf %314 : vector<2x128xf32>
    %316 = math.exp %315 : vector<2x128xf32>
    %cst_149 = arith.constant 1.000000e+00 : f32
    %317 = vector.broadcast %cst_149 : f32 to vector<2x128xf32>
    %318 = arith.addf %317, %316 : vector<2x128xf32>
    %319 = arith.divf %317, %318 : vector<2x128xf32>
    %320 = vector.extract_strided_slice %319 {offsets = [0, 0], sizes = [2, 16], strides = [1, 1]} : vector<2x128xf32> to vector<2x16xf32>
    %321 = arith.mulf %320, %277 : vector<2x16xf32>
    %322 = vector.extract_strided_slice %319 {offsets = [0, 16], sizes = [2, 16], strides = [1, 1]} : vector<2x128xf32> to vector<2x16xf32>
    %323 = arith.mulf %322, %311 : vector<2x16xf32>
    %c0_150 = arith.constant 0 : index
    %c0_151 = arith.constant 0 : index
    %324 = vector.load %arg10[%c0_150, %c0_151] : memref<16x384xf32, #tpu.memory_space<vmem>>, vector<16x384xf32>
    %cst_152 = arith.constant dense<0.000000e+00> : vector<2x384xf32>
    %325 = tpu.matmul %321, %324, %cst_152 {dimension_numbers = #tpu.dot_dimension_numbers<[1], [0], [0], [1], [0, 0, 1, 1], [], []>} : vector<2x16xf32>, vector<16x384xf32>, vector<2x384xf32> -> vector<2x384xf32>
    %c0_153 = arith.constant 0 : index
    %c0_154 = arith.constant 0 : index
    %326 = vector.load %arg11[%c0_153, %c0_154] : memref<16x384xf32, #tpu.memory_space<vmem>>, vector<16x384xf32>
    %cst_155 = arith.constant dense<0.000000e+00> : vector<2x384xf32>
    %327 = tpu.matmul %323, %326, %cst_155 {dimension_numbers = #tpu.dot_dimension_numbers<[1], [0], [0], [1], [0, 0, 1, 1], [], []>} : vector<2x16xf32>, vector<16x384xf32>, vector<2x384xf32> -> vector<2x384xf32>
    %328 = arith.addf %325, %327 : vector<2x384xf32>
    %329 = vector.broadcast %9 : vector<1x384xf32> to vector<2x384xf32>
    %330 = arith.addf %328, %329 : vector<2x384xf32>
    %331 = vector.extract_strided_slice %283 {offsets = [0, 128], sizes = [2, 384], strides = [1, 1]} : vector<2x512xf32> to vector<2x384xf32>
    %332 = vector.broadcast %10 : vector<1x384xf32> to vector<2x384xf32>
    %333 = arith.addf %331, %332 : vector<2x384xf32>
    %334 = vector.extract_strided_slice %330 {offsets = [0, 0], sizes = [2, 128], strides = [1, 1]} : vector<2x384xf32> to vector<2x128xf32>
    %335 = vector.extract_strided_slice %333 {offsets = [0, 0], sizes = [2, 128], strides = [1, 1]} : vector<2x384xf32> to vector<2x128xf32>
    %336 = arith.addf %334, %335 : vector<2x128xf32>
    %337 = arith.negf %336 : vector<2x128xf32>
    %338 = math.exp %337 : vector<2x128xf32>
    %cst_156 = arith.constant 1.000000e+00 : f32
    %339 = vector.broadcast %cst_156 : f32 to vector<2x128xf32>
    %340 = arith.addf %339, %338 : vector<2x128xf32>
    %341 = arith.divf %339, %340 : vector<2x128xf32>
    %342 = vector.extract_strided_slice %330 {offsets = [0, 128], sizes = [2, 128], strides = [1, 1]} : vector<2x384xf32> to vector<2x128xf32>
    %343 = vector.extract_strided_slice %333 {offsets = [0, 128], sizes = [2, 128], strides = [1, 1]} : vector<2x384xf32> to vector<2x128xf32>
    %344 = arith.addf %342, %343 : vector<2x128xf32>
    %345 = arith.negf %344 : vector<2x128xf32>
    %346 = math.exp %345 : vector<2x128xf32>
    %cst_157 = arith.constant 1.000000e+00 : f32
    %347 = vector.broadcast %cst_157 : f32 to vector<2x128xf32>
    %348 = arith.addf %347, %346 : vector<2x128xf32>
    %349 = arith.divf %347, %348 : vector<2x128xf32>
    %350 = vector.extract_strided_slice %330 {offsets = [0, 256], sizes = [2, 128], strides = [1, 1]} : vector<2x384xf32> to vector<2x128xf32>
    %351 = vector.extract_strided_slice %333 {offsets = [0, 256], sizes = [2, 128], strides = [1, 1]} : vector<2x384xf32> to vector<2x128xf32>
    %352 = arith.mulf %341, %351 : vector<2x128xf32>
    %353 = arith.addf %350, %352 : vector<2x128xf32>
    %354 = math.tanh %353 : vector<2x128xf32>
    %cst_158 = arith.constant 1.000000e+00 : f32
    %355 = vector.broadcast %cst_158 : f32 to vector<2x128xf32>
    %356 = arith.subf %355, %349 : vector<2x128xf32>
    %357 = arith.mulf %356, %354 : vector<2x128xf32>
    %358 = arith.mulf %349, %271 : vector<2x128xf32>
    %359 = arith.addf %357, %358 : vector<2x128xf32>
    %360 = vector.shape_cast %359 : vector<2x128xf32> to vector<2x1x128xf32>
    %c0_159 = arith.constant 0 : index
    %c3_160 = arith.constant 3 : index
    %c0_161 = arith.constant 0 : index
    %361 = vector.load %arg13[%c0_159, %c3_160, %c0_161] : memref<2x8x128xf32, #tpu.memory_space<vmem>>, vector<2x1x128xf32>
    tpu.vector_store %arg13[%c0_159, %c3_160, %c0_161], %360 {strides = array<i32>} : memref<2x8x128xf32, #tpu.memory_space<vmem>>, vector<2x1x128xf32>,
    %362 = vector.shape_cast %307 : vector<2x128xf32> to vector<2x1x128xf32>
    %c0_162 = arith.constant 0 : index
    %c3_163 = arith.constant 3 : index
    %c0_164 = arith.constant 0 : index
    %363 = vector.load %arg14[%c0_162, %c3_163, %c0_164] : memref<2x8x128xf32, #tpu.memory_space<vmem>>, vector<2x1x128xf32>
    tpu.vector_store %arg14[%c0_162, %c3_163, %c0_164], %362 {strides = array<i32>} : memref<2x8x128xf32, #tpu.memory_space<vmem>>, vector<2x1x128xf32>,
    %c0_165 = arith.constant 0 : index
    %c4 = arith.constant 4 : index
    %c0_166 = arith.constant 0 : index
    %364 = vector.load %arg2[%c0_165, %c4, %c0_166] : memref<2x8x16xf32, #tpu.memory_space<vmem>>, vector<2x1x16xf32>
    %365 = vector.shape_cast %364 : vector<2x1x16xf32> to vector<2x16xf32>
    %c0_167 = arith.constant 0 : index
    %c4_168 = arith.constant 4 : index
    %c0_169 = arith.constant 0 : index
    %366 = vector.load %arg3[%c0_167, %c4_168, %c0_169] : memref<2x8x256xf32, #tpu.memory_space<vmem>>, vector<2x1x256xf32>
    %367 = vector.shape_cast %366 : vector<2x1x256xf32> to vector<2x256xf32>
    %368 = vector.extract_strided_slice %367 {offsets = [0, 0], sizes = [2, 128], strides = [1, 1]} : vector<2x256xf32> to vector<2x128xf32>
    %369 = vector.extract_strided_slice %367 {offsets = [0, 128], sizes = [2, 128], strides = [1, 1]} : vector<2x256xf32> to vector<2x128xf32>
    %c0_170 = arith.constant 0 : index
    %c0_171 = arith.constant 0 : index
    %370 = vector.load %arg8[%c0_170, %c0_171] : memref<128x512xf32, #tpu.memory_space<vmem>>, vector<128x512xf32>
    %cst_172 = arith.constant dense<0.000000e+00> : vector<2x512xf32>
    %371 = tpu.matmul %359, %370, %cst_172 {dimension_numbers = #tpu.dot_dimension_numbers<[1], [0], [0], [1], [0, 0, 1, 1], [], []>} : vector<2x128xf32>, vector<128x512xf32>, vector<2x512xf32> -> vector<2x512xf32>
    %372 = vector.extract_strided_slice %371 {offsets = [0, 0], sizes = [2, 128], strides = [1, 1]} : vector<2x512xf32> to vector<2x128xf32>
    %373 = arith.addf %368, %372 : vector<2x128xf32>
    %c0_173 = arith.constant 0 : index
    %c0_174 = arith.constant 0 : index
    %c0_175 = arith.constant 0 : index
    %374 = vector.load %arg6[%c0_173, %c0_174, %c0_175] : memref<2x128x128xf32, #tpu.memory_space<vmem>>, vector<2x128x128xf32>
    %375 = vector.shape_cast %373 : vector<2x128xf32> to vector<2x1x128xf32>
    %376 = vector.broadcast %375 : vector<2x1x128xf32> to vector<2x128x128xf32>
    %377 = arith.addf %374, %376 : vector<2x128x128xf32>
    %378 = math.tanh %377 : vector<2x128x128xf32>
    %379 = vector.broadcast %7 : vector<1x1x128xf32> to vector<2x128x128xf32>
    %380 = arith.mulf %378, %379 : vector<2x128x128xf32>
    %cst_176 = arith.constant dense<0.000000e+00> : vector<2x128xf32>
    %381 = vector.multi_reduction <add>, %380, %cst_176 [2] : vector<2x128x128xf32> to vector<2x128xf32>
    %cst_177 = arith.constant -1.000000e+30 : f32
    %382 = vector.broadcast %cst_177 : f32 to vector<2x128xf32>
    %383 = arith.select %5, %381, %382 : vector<2x128xi1>, vector<2x128xf32>
    %cst_178 = arith.constant dense<0xFF800000> : vector<2xf32>
    %384 = vector.multi_reduction <maximumf>, %383, %cst_178 [1] : vector<2x128xf32> to vector<2xf32>
    %385 = vector.shape_cast %384 : vector<2xf32> to vector<2x1xf32>
    %386 = vector.broadcast %385 : vector<2x1xf32> to vector<2x128xf32>
    %387 = arith.subf %383, %386 : vector<2x128xf32>
    %388 = math.exp %387 : vector<2x128xf32>
    %389 = arith.mulf %388, %3 : vector<2x128xf32>
    %cst_179 = arith.constant dense<0.000000e+00> : vector<2xf32>
    %390 = vector.multi_reduction <add>, %389, %cst_179 [1] : vector<2x128xf32> to vector<2xf32>
    %391 = vector.shape_cast %390 : vector<2xf32> to vector<2x1xf32>
    %cst_180 = arith.constant 9.99999982E-14 : f32
    %392 = vector.broadcast %cst_180 : f32 to vector<2x1xf32>
    %393 = arith.addf %391, %392 : vector<2x1xf32>
    %394 = vector.broadcast %393 : vector<2x1xf32> to vector<2x128xf32>
    %395 = arith.divf %389, %394 : vector<2x128xf32>
    %396 = vector.shape_cast %395 : vector<2x128xf32> to vector<2x1x128xf32>
    %c0_181 = arith.constant 0 : index
    %c0_182 = arith.constant 0 : index
    %c0_183 = arith.constant 0 : index
    %397 = vector.load %arg4[%c0_181, %c0_182, %c0_183] : memref<2x128x16xf32, #tpu.memory_space<vmem>>, vector<2x128x16xf32>
    "tpu.trace_start"() <{level = 10 : i32, message = "bqn,bnd->bqd"}> : () -> ()
    %cst_184 = arith.constant dense<0.000000e+00> : vector<2x1x16xf32>
    %398 = tpu.matmul %396, %397, %cst_184 {dimension_numbers = #tpu.dot_dimension_numbers<[2], [1], [1], [2], [0, 0, 0, 1, 1, 2], [0], [0]>} : vector<2x1x128xf32>, vector<2x128x16xf32>, vector<2x1x16xf32> -> vector<2x1x16xf32>
    "tpu.trace_stop"() : () -> ()
    %399 = vector.shape_cast %398 : vector<2x1x16xf32> to vector<2x16xf32>
    %c0_185 = arith.constant 0 : index
    %c0_186 = arith.constant 0 : index
    %400 = vector.load %arg9[%c0_185, %c0_186] : memref<16x128xf32, #tpu.memory_space<vmem>>, vector<16x128xf32>
    %cst_187 = arith.constant dense<0.000000e+00> : vector<2x128xf32>
    %401 = tpu.matmul %399, %400, %cst_187 {dimension_numbers = #tpu.dot_dimension_numbers<[1], [0], [0], [1], [0, 0, 1, 1], [], []>} : vector<2x16xf32>, vector<16x128xf32>, vector<2x128xf32> -> vector<2x128xf32>
    %402 = arith.addf %369, %401 : vector<2x128xf32>
    %403 = arith.negf %402 : vector<2x128xf32>
    %404 = math.exp %403 : vector<2x128xf32>
    %cst_188 = arith.constant 1.000000e+00 : f32
    %405 = vector.broadcast %cst_188 : f32 to vector<2x128xf32>
    %406 = arith.addf %405, %404 : vector<2x128xf32>
    %407 = arith.divf %405, %406 : vector<2x128xf32>
    %408 = vector.extract_strided_slice %407 {offsets = [0, 0], sizes = [2, 16], strides = [1, 1]} : vector<2x128xf32> to vector<2x16xf32>
    %409 = arith.mulf %408, %365 : vector<2x16xf32>
    %410 = vector.extract_strided_slice %407 {offsets = [0, 16], sizes = [2, 16], strides = [1, 1]} : vector<2x128xf32> to vector<2x16xf32>
    %411 = arith.mulf %410, %399 : vector<2x16xf32>
    %c0_189 = arith.constant 0 : index
    %c0_190 = arith.constant 0 : index
    %412 = vector.load %arg10[%c0_189, %c0_190] : memref<16x384xf32, #tpu.memory_space<vmem>>, vector<16x384xf32>
    %cst_191 = arith.constant dense<0.000000e+00> : vector<2x384xf32>
    %413 = tpu.matmul %409, %412, %cst_191 {dimension_numbers = #tpu.dot_dimension_numbers<[1], [0], [0], [1], [0, 0, 1, 1], [], []>} : vector<2x16xf32>, vector<16x384xf32>, vector<2x384xf32> -> vector<2x384xf32>
    %c0_192 = arith.constant 0 : index
    %c0_193 = arith.constant 0 : index
    %414 = vector.load %arg11[%c0_192, %c0_193] : memref<16x384xf32, #tpu.memory_space<vmem>>, vector<16x384xf32>
    %cst_194 = arith.constant dense<0.000000e+00> : vector<2x384xf32>
    %415 = tpu.matmul %411, %414, %cst_194 {dimension_numbers = #tpu.dot_dimension_numbers<[1], [0], [0], [1], [0, 0, 1, 1], [], []>} : vector<2x16xf32>, vector<16x384xf32>, vector<2x384xf32> -> vector<2x384xf32>
    %416 = arith.addf %413, %415 : vector<2x384xf32>
    %417 = vector.broadcast %9 : vector<1x384xf32> to vector<2x384xf32>
    %418 = arith.addf %416, %417 : vector<2x384xf32>
    %419 = vector.extract_strided_slice %371 {offsets = [0, 128], sizes = [2, 384], strides = [1, 1]} : vector<2x512xf32> to vector<2x384xf32>
    %420 = vector.broadcast %10 : vector<1x384xf32> to vector<2x384xf32>
    %421 = arith.addf %419, %420 : vector<2x384xf32>
    %422 = vector.extract_strided_slice %418 {offsets = [0, 0], sizes = [2, 128], strides = [1, 1]} : vector<2x384xf32> to vector<2x128xf32>
    %423 = vector.extract_strided_slice %421 {offsets = [0, 0], sizes = [2, 128], strides = [1, 1]} : vector<2x384xf32> to vector<2x128xf32>
    %424 = arith.addf %422, %423 : vector<2x128xf32>
    %425 = arith.negf %424 : vector<2x128xf32>
    %426 = math.exp %425 : vector<2x128xf32>
    %cst_195 = arith.constant 1.000000e+00 : f32
    %427 = vector.broadcast %cst_195 : f32 to vector<2x128xf32>
    %428 = arith.addf %427, %426 : vector<2x128xf32>
    %429 = arith.divf %427, %428 : vector<2x128xf32>
    %430 = vector.extract_strided_slice %418 {offsets = [0, 128], sizes = [2, 128], strides = [1, 1]} : vector<2x384xf32> to vector<2x128xf32>
    %431 = vector.extract_strided_slice %421 {offsets = [0, 128], sizes = [2, 128], strides = [1, 1]} : vector<2x384xf32> to vector<2x128xf32>
    %432 = arith.addf %430, %431 : vector<2x128xf32>
    %433 = arith.negf %432 : vector<2x128xf32>
    %434 = math.exp %433 : vector<2x128xf32>
    %cst_196 = arith.constant 1.000000e+00 : f32
    %435 = vector.broadcast %cst_196 : f32 to vector<2x128xf32>
    %436 = arith.addf %435, %434 : vector<2x128xf32>
    %437 = arith.divf %435, %436 : vector<2x128xf32>
    %438 = vector.extract_strided_slice %418 {offsets = [0, 256], sizes = [2, 128], strides = [1, 1]} : vector<2x384xf32> to vector<2x128xf32>
    %439 = vector.extract_strided_slice %421 {offsets = [0, 256], sizes = [2, 128], strides = [1, 1]} : vector<2x384xf32> to vector<2x128xf32>
    %440 = arith.mulf %429, %439 : vector<2x128xf32>
    %441 = arith.addf %438, %440 : vector<2x128xf32>
    %442 = math.tanh %441 : vector<2x128xf32>
    %cst_197 = arith.constant 1.000000e+00 : f32
    %443 = vector.broadcast %cst_197 : f32 to vector<2x128xf32>
    %444 = arith.subf %443, %437 : vector<2x128xf32>
    %445 = arith.mulf %444, %442 : vector<2x128xf32>
    %446 = arith.mulf %437, %359 : vector<2x128xf32>
    %447 = arith.addf %445, %446 : vector<2x128xf32>
    %448 = vector.shape_cast %447 : vector<2x128xf32> to vector<2x1x128xf32>
    %c0_198 = arith.constant 0 : index
    %c4_199 = arith.constant 4 : index
    %c0_200 = arith.constant 0 : index
    %449 = vector.load %arg13[%c0_198, %c4_199, %c0_200] : memref<2x8x128xf32, #tpu.memory_space<vmem>>, vector<2x1x128xf32>
    tpu.vector_store %arg13[%c0_198, %c4_199, %c0_200], %448 {strides = array<i32>} : memref<2x8x128xf32, #tpu.memory_space<vmem>>, vector<2x1x128xf32>,
    %450 = vector.shape_cast %395 : vector<2x128xf32> to vector<2x1x128xf32>
    %c0_201 = arith.constant 0 : index
    %c4_202 = arith.constant 4 : index
    %c0_203 = arith.constant 0 : index
    %451 = vector.load %arg14[%c0_201, %c4_202, %c0_203] : memref<2x8x128xf32, #tpu.memory_space<vmem>>, vector<2x1x128xf32>
    tpu.vector_store %arg14[%c0_201, %c4_202, %c0_203], %450 {strides = array<i32>} : memref<2x8x128xf32, #tpu.memory_space<vmem>>, vector<2x1x128xf32>,
    %c0_204 = arith.constant 0 : index
    %c5 = arith.constant 5 : index
    %c0_205 = arith.constant 0 : index
    %452 = vector.load %arg2[%c0_204, %c5, %c0_205] : memref<2x8x16xf32, #tpu.memory_space<vmem>>, vector<2x1x16xf32>
    %453 = vector.shape_cast %452 : vector<2x1x16xf32> to vector<2x16xf32>
    %c0_206 = arith.constant 0 : index
    %c5_207 = arith.constant 5 : index
    %c0_208 = arith.constant 0 : index
    %454 = vector.load %arg3[%c0_206, %c5_207, %c0_208] : memref<2x8x256xf32, #tpu.memory_space<vmem>>, vector<2x1x256xf32>
    %455 = vector.shape_cast %454 : vector<2x1x256xf32> to vector<2x256xf32>
    %456 = vector.extract_strided_slice %455 {offsets = [0, 0], sizes = [2, 128], strides = [1, 1]} : vector<2x256xf32> to vector<2x128xf32>
    %457 = vector.extract_strided_slice %455 {offsets = [0, 128], sizes = [2, 128], strides = [1, 1]} : vector<2x256xf32> to vector<2x128xf32>
    %c0_209 = arith.constant 0 : index
    %c0_210 = arith.constant 0 : index
    %458 = vector.load %arg8[%c0_209, %c0_210] : memref<128x512xf32, #tpu.memory_space<vmem>>, vector<128x512xf32>
    %cst_211 = arith.constant dense<0.000000e+00> : vector<2x512xf32>
    %459 = tpu.matmul %447, %458, %cst_211 {dimension_numbers = #tpu.dot_dimension_numbers<[1], [0], [0], [1], [0, 0, 1, 1], [], []>} : vector<2x128xf32>, vector<128x512xf32>, vector<2x512xf32> -> vector<2x512xf32>
    %460 = vector.extract_strided_slice %459 {offsets = [0, 0], sizes = [2, 128], strides = [1, 1]} : vector<2x512xf32> to vector<2x128xf32>
    %461 = arith.addf %456, %460 : vector<2x128xf32>
    %c0_212 = arith.constant 0 : index
    %c0_213 = arith.constant 0 : index
    %c0_214 = arith.constant 0 : index
    %462 = vector.load %arg6[%c0_212, %c0_213, %c0_214] : memref<2x128x128xf32, #tpu.memory_space<vmem>>, vector<2x128x128xf32>
    %463 = vector.shape_cast %461 : vector<2x128xf32> to vector<2x1x128xf32>
    %464 = vector.broadcast %463 : vector<2x1x128xf32> to vector<2x128x128xf32>
    %465 = arith.addf %462, %464 : vector<2x128x128xf32>
    %466 = math.tanh %465 : vector<2x128x128xf32>
    %467 = vector.broadcast %7 : vector<1x1x128xf32> to vector<2x128x128xf32>
    %468 = arith.mulf %466, %467 : vector<2x128x128xf32>
    %cst_215 = arith.constant dense<0.000000e+00> : vector<2x128xf32>
    %469 = vector.multi_reduction <add>, %468, %cst_215 [2] : vector<2x128x128xf32> to vector<2x128xf32>
    %cst_216 = arith.constant -1.000000e+30 : f32
    %470 = vector.broadcast %cst_216 : f32 to vector<2x128xf32>
    %471 = arith.select %5, %469, %470 : vector<2x128xi1>, vector<2x128xf32>
    %cst_217 = arith.constant dense<0xFF800000> : vector<2xf32>
    %472 = vector.multi_reduction <maximumf>, %471, %cst_217 [1] : vector<2x128xf32> to vector<2xf32>
    %473 = vector.shape_cast %472 : vector<2xf32> to vector<2x1xf32>
    %474 = vector.broadcast %473 : vector<2x1xf32> to vector<2x128xf32>
    %475 = arith.subf %471, %474 : vector<2x128xf32>
    %476 = math.exp %475 : vector<2x128xf32>
    %477 = arith.mulf %476, %3 : vector<2x128xf32>
    %cst_218 = arith.constant dense<0.000000e+00> : vector<2xf32>
    %478 = vector.multi_reduction <add>, %477, %cst_218 [1] : vector<2x128xf32> to vector<2xf32>
    %479 = vector.shape_cast %478 : vector<2xf32> to vector<2x1xf32>
    %cst_219 = arith.constant 9.99999982E-14 : f32
    %480 = vector.broadcast %cst_219 : f32 to vector<2x1xf32>
    %481 = arith.addf %479, %480 : vector<2x1xf32>
    %482 = vector.broadcast %481 : vector<2x1xf32> to vector<2x128xf32>
    %483 = arith.divf %477, %482 : vector<2x128xf32>
    %484 = vector.shape_cast %483 : vector<2x128xf32> to vector<2x1x128xf32>
    %c0_220 = arith.constant 0 : index
    %c0_221 = arith.constant 0 : index
    %c0_222 = arith.constant 0 : index
    %485 = vector.load %arg4[%c0_220, %c0_221, %c0_222] : memref<2x128x16xf32, #tpu.memory_space<vmem>>, vector<2x128x16xf32>
    "tpu.trace_start"() <{level = 10 : i32, message = "bqn,bnd->bqd"}> : () -> ()
    %cst_223 = arith.constant dense<0.000000e+00> : vector<2x1x16xf32>
    %486 = tpu.matmul %484, %485, %cst_223 {dimension_numbers = #tpu.dot_dimension_numbers<[2], [1], [1], [2], [0, 0, 0, 1, 1, 2], [0], [0]>} : vector<2x1x128xf32>, vector<2x128x16xf32>, vector<2x1x16xf32> -> vector<2x1x16xf32>
    "tpu.trace_stop"() : () -> ()
    %487 = vector.shape_cast %486 : vector<2x1x16xf32> to vector<2x16xf32>
    %c0_224 = arith.constant 0 : index
    %c0_225 = arith.constant 0 : index
    %488 = vector.load %arg9[%c0_224, %c0_225] : memref<16x128xf32, #tpu.memory_space<vmem>>, vector<16x128xf32>
    %cst_226 = arith.constant dense<0.000000e+00> : vector<2x128xf32>
    %489 = tpu.matmul %487, %488, %cst_226 {dimension_numbers = #tpu.dot_dimension_numbers<[1], [0], [0], [1], [0, 0, 1, 1], [], []>} : vector<2x16xf32>, vector<16x128xf32>, vector<2x128xf32> -> vector<2x128xf32>
    %490 = arith.addf %457, %489 : vector<2x128xf32>
    %491 = arith.negf %490 : vector<2x128xf32>
    %492 = math.exp %491 : vector<2x128xf32>
    %cst_227 = arith.constant 1.000000e+00 : f32
    %493 = vector.broadcast %cst_227 : f32 to vector<2x128xf32>
    %494 = arith.addf %493, %492 : vector<2x128xf32>
    %495 = arith.divf %493, %494 : vector<2x128xf32>
    %496 = vector.extract_strided_slice %495 {offsets = [0, 0], sizes = [2, 16], strides = [1, 1]} : vector<2x128xf32> to vector<2x16xf32>
    %497 = arith.mulf %496, %453 : vector<2x16xf32>
    %498 = vector.extract_strided_slice %495 {offsets = [0, 16], sizes = [2, 16], strides = [1, 1]} : vector<2x128xf32> to vector<2x16xf32>
    %499 = arith.mulf %498, %487 : vector<2x16xf32>
    %c0_228 = arith.constant 0 : index
    %c0_229 = arith.constant 0 : index
    %500 = vector.load %arg10[%c0_228, %c0_229] : memref<16x384xf32, #tpu.memory_space<vmem>>, vector<16x384xf32>
    %cst_230 = arith.constant dense<0.000000e+00> : vector<2x384xf32>
    %501 = tpu.matmul %497, %500, %cst_230 {dimension_numbers = #tpu.dot_dimension_numbers<[1], [0], [0], [1], [0, 0, 1, 1], [], []>} : vector<2x16xf32>, vector<16x384xf32>, vector<2x384xf32> -> vector<2x384xf32>
    %c0_231 = arith.constant 0 : index
    %c0_232 = arith.constant 0 : index
    %502 = vector.load %arg11[%c0_231, %c0_232] : memref<16x384xf32, #tpu.memory_space<vmem>>, vector<16x384xf32>
    %cst_233 = arith.constant dense<0.000000e+00> : vector<2x384xf32>
    %503 = tpu.matmul %499, %502, %cst_233 {dimension_numbers = #tpu.dot_dimension_numbers<[1], [0], [0], [1], [0, 0, 1, 1], [], []>} : vector<2x16xf32>, vector<16x384xf32>, vector<2x384xf32> -> vector<2x384xf32>
    %504 = arith.addf %501, %503 : vector<2x384xf32>
    %505 = vector.broadcast %9 : vector<1x384xf32> to vector<2x384xf32>
    %506 = arith.addf %504, %505 : vector<2x384xf32>
    %507 = vector.extract_strided_slice %459 {offsets = [0, 128], sizes = [2, 384], strides = [1, 1]} : vector<2x512xf32> to vector<2x384xf32>
    %508 = vector.broadcast %10 : vector<1x384xf32> to vector<2x384xf32>
    %509 = arith.addf %507, %508 : vector<2x384xf32>
    %510 = vector.extract_strided_slice %506 {offsets = [0, 0], sizes = [2, 128], strides = [1, 1]} : vector<2x384xf32> to vector<2x128xf32>
    %511 = vector.extract_strided_slice %509 {offsets = [0, 0], sizes = [2, 128], strides = [1, 1]} : vector<2x384xf32> to vector<2x128xf32>
    %512 = arith.addf %510, %511 : vector<2x128xf32>
    %513 = arith.negf %512 : vector<2x128xf32>
    %514 = math.exp %513 : vector<2x128xf32>
    %cst_234 = arith.constant 1.000000e+00 : f32
    %515 = vector.broadcast %cst_234 : f32 to vector<2x128xf32>
    %516 = arith.addf %515, %514 : vector<2x128xf32>
    %517 = arith.divf %515, %516 : vector<2x128xf32>
    %518 = vector.extract_strided_slice %506 {offsets = [0, 128], sizes = [2, 128], strides = [1, 1]} : vector<2x384xf32> to vector<2x128xf32>
    %519 = vector.extract_strided_slice %509 {offsets = [0, 128], sizes = [2, 128], strides = [1, 1]} : vector<2x384xf32> to vector<2x128xf32>
    %520 = arith.addf %518, %519 : vector<2x128xf32>
    %521 = arith.negf %520 : vector<2x128xf32>
    %522 = math.exp %521 : vector<2x128xf32>
    %cst_235 = arith.constant 1.000000e+00 : f32
    %523 = vector.broadcast %cst_235 : f32 to vector<2x128xf32>
    %524 = arith.addf %523, %522 : vector<2x128xf32>
    %525 = arith.divf %523, %524 : vector<2x128xf32>
    %526 = vector.extract_strided_slice %506 {offsets = [0, 256], sizes = [2, 128], strides = [1, 1]} : vector<2x384xf32> to vector<2x128xf32>
    %527 = vector.extract_strided_slice %509 {offsets = [0, 256], sizes = [2, 128], strides = [1, 1]} : vector<2x384xf32> to vector<2x128xf32>
    %528 = arith.mulf %517, %527 : vector<2x128xf32>
    %529 = arith.addf %526, %528 : vector<2x128xf32>
    %530 = math.tanh %529 : vector<2x128xf32>
    %cst_236 = arith.constant 1.000000e+00 : f32
    %531 = vector.broadcast %cst_236 : f32 to vector<2x128xf32>
    %532 = arith.subf %531, %525 : vector<2x128xf32>
    %533 = arith.mulf %532, %530 : vector<2x128xf32>
    %534 = arith.mulf %525, %447 : vector<2x128xf32>
    %535 = arith.addf %533, %534 : vector<2x128xf32>
    %536 = vector.shape_cast %535 : vector<2x128xf32> to vector<2x1x128xf32>
    %c0_237 = arith.constant 0 : index
    %c5_238 = arith.constant 5 : index
    %c0_239 = arith.constant 0 : index
    %537 = vector.load %arg13[%c0_237, %c5_238, %c0_239] : memref<2x8x128xf32, #tpu.memory_space<vmem>>, vector<2x1x128xf32>
    tpu.vector_store %arg13[%c0_237, %c5_238, %c0_239], %536 {strides = array<i32>} : memref<2x8x128xf32, #tpu.memory_space<vmem>>, vector<2x1x128xf32>,
    %538 = vector.shape_cast %483 : vector<2x128xf32> to vector<2x1x128xf32>
    %c0_240 = arith.constant 0 : index
    %c5_241 = arith.constant 5 : index
    %c0_242 = arith.constant 0 : index
    %539 = vector.load %arg14[%c0_240, %c5_241, %c0_242] : memref<2x8x128xf32, #tpu.memory_space<vmem>>, vector<2x1x128xf32>
    tpu.vector_store %arg14[%c0_240, %c5_241, %c0_242], %538 {strides = array<i32>} : memref<2x8x128xf32, #tpu.memory_space<vmem>>, vector<2x1x128xf32>,
    %c0_243 = arith.constant 0 : index
    %c6 = arith.constant 6 : index
    %c0_244 = arith.constant 0 : index
    %540 = vector.load %arg2[%c0_243, %c6, %c0_244] : memref<2x8x16xf32, #tpu.memory_space<vmem>>, vector<2x1x16xf32>
    %541 = vector.shape_cast %540 : vector<2x1x16xf32> to vector<2x16xf32>
    %c0_245 = arith.constant 0 : index
    %c6_246 = arith.constant 6 : index
    %c0_247 = arith.constant 0 : index
    %542 = vector.load %arg3[%c0_245, %c6_246, %c0_247] : memref<2x8x256xf32, #tpu.memory_space<vmem>>, vector<2x1x256xf32>
    %543 = vector.shape_cast %542 : vector<2x1x256xf32> to vector<2x256xf32>
    %544 = vector.extract_strided_slice %543 {offsets = [0, 0], sizes = [2, 128], strides = [1, 1]} : vector<2x256xf32> to vector<2x128xf32>
    %545 = vector.extract_strided_slice %543 {offsets = [0, 128], sizes = [2, 128], strides = [1, 1]} : vector<2x256xf32> to vector<2x128xf32>
    %c0_248 = arith.constant 0 : index
    %c0_249 = arith.constant 0 : index
    %546 = vector.load %arg8[%c0_248, %c0_249] : memref<128x512xf32, #tpu.memory_space<vmem>>, vector<128x512xf32>
    %cst_250 = arith.constant dense<0.000000e+00> : vector<2x512xf32>
    %547 = tpu.matmul %535, %546, %cst_250 {dimension_numbers = #tpu.dot_dimension_numbers<[1], [0], [0], [1], [0, 0, 1, 1], [], []>} : vector<2x128xf32>, vector<128x512xf32>, vector<2x512xf32> -> vector<2x512xf32>
    %548 = vector.extract_strided_slice %547 {offsets = [0, 0], sizes = [2, 128], strides = [1, 1]} : vector<2x512xf32> to vector<2x128xf32>
    %549 = arith.addf %544, %548 : vector<2x128xf32>
    %c0_251 = arith.constant 0 : index
    %c0_252 = arith.constant 0 : index
    %c0_253 = arith.constant 0 : index
    %550 = vector.load %arg6[%c0_251, %c0_252, %c0_253] : memref<2x128x128xf32, #tpu.memory_space<vmem>>, vector<2x128x128xf32>
    %551 = vector.shape_cast %549 : vector<2x128xf32> to vector<2x1x128xf32>
    %552 = vector.broadcast %551 : vector<2x1x128xf32> to vector<2x128x128xf32>
    %553 = arith.addf %550, %552 : vector<2x128x128xf32>
    %554 = math.tanh %553 : vector<2x128x128xf32>
    %555 = vector.broadcast %7 : vector<1x1x128xf32> to vector<2x128x128xf32>
    %556 = arith.mulf %554, %555 : vector<2x128x128xf32>
    %cst_254 = arith.constant dense<0.000000e+00> : vector<2x128xf32>
    %557 = vector.multi_reduction <add>, %556, %cst_254 [2] : vector<2x128x128xf32> to vector<2x128xf32>
    %cst_255 = arith.constant -1.000000e+30 : f32
    %558 = vector.broadcast %cst_255 : f32 to vector<2x128xf32>
    %559 = arith.select %5, %557, %558 : vector<2x128xi1>, vector<2x128xf32>
    %cst_256 = arith.constant dense<0xFF800000> : vector<2xf32>
    %560 = vector.multi_reduction <maximumf>, %559, %cst_256 [1] : vector<2x128xf32> to vector<2xf32>
    %561 = vector.shape_cast %560 : vector<2xf32> to vector<2x1xf32>
    %562 = vector.broadcast %561 : vector<2x1xf32> to vector<2x128xf32>
    %563 = arith.subf %559, %562 : vector<2x128xf32>
    %564 = math.exp %563 : vector<2x128xf32>
    %565 = arith.mulf %564, %3 : vector<2x128xf32>
    %cst_257 = arith.constant dense<0.000000e+00> : vector<2xf32>
    %566 = vector.multi_reduction <add>, %565, %cst_257 [1] : vector<2x128xf32> to vector<2xf32>
    %567 = vector.shape_cast %566 : vector<2xf32> to vector<2x1xf32>
    %cst_258 = arith.constant 9.99999982E-14 : f32
    %568 = vector.broadcast %cst_258 : f32 to vector<2x1xf32>
    %569 = arith.addf %567, %568 : vector<2x1xf32>
    %570 = vector.broadcast %569 : vector<2x1xf32> to vector<2x128xf32>
    %571 = arith.divf %565, %570 : vector<2x128xf32>
    %572 = vector.shape_cast %571 : vector<2x128xf32> to vector<2x1x128xf32>
    %c0_259 = arith.constant 0 : index
    %c0_260 = arith.constant 0 : index
    %c0_261 = arith.constant 0 : index
    %573 = vector.load %arg4[%c0_259, %c0_260, %c0_261] : memref<2x128x16xf32, #tpu.memory_space<vmem>>, vector<2x128x16xf32>
    "tpu.trace_start"() <{level = 10 : i32, message = "bqn,bnd->bqd"}> : () -> ()
    %cst_262 = arith.constant dense<0.000000e+00> : vector<2x1x16xf32>
    %574 = tpu.matmul %572, %573, %cst_262 {dimension_numbers = #tpu.dot_dimension_numbers<[2], [1], [1], [2], [0, 0, 0, 1, 1, 2], [0], [0]>} : vector<2x1x128xf32>, vector<2x128x16xf32>, vector<2x1x16xf32> -> vector<2x1x16xf32>
    "tpu.trace_stop"() : () -> ()
    %575 = vector.shape_cast %574 : vector<2x1x16xf32> to vector<2x16xf32>
    %c0_263 = arith.constant 0 : index
    %c0_264 = arith.constant 0 : index
    %576 = vector.load %arg9[%c0_263, %c0_264] : memref<16x128xf32, #tpu.memory_space<vmem>>, vector<16x128xf32>
    %cst_265 = arith.constant dense<0.000000e+00> : vector<2x128xf32>
    %577 = tpu.matmul %575, %576, %cst_265 {dimension_numbers = #tpu.dot_dimension_numbers<[1], [0], [0], [1], [0, 0, 1, 1], [], []>} : vector<2x16xf32>, vector<16x128xf32>, vector<2x128xf32> -> vector<2x128xf32>
    %578 = arith.addf %545, %577 : vector<2x128xf32>
    %579 = arith.negf %578 : vector<2x128xf32>
    %580 = math.exp %579 : vector<2x128xf32>
    %cst_266 = arith.constant 1.000000e+00 : f32
    %581 = vector.broadcast %cst_266 : f32 to vector<2x128xf32>
    %582 = arith.addf %581, %580 : vector<2x128xf32>
    %583 = arith.divf %581, %582 : vector<2x128xf32>
    %584 = vector.extract_strided_slice %583 {offsets = [0, 0], sizes = [2, 16], strides = [1, 1]} : vector<2x128xf32> to vector<2x16xf32>
    %585 = arith.mulf %584, %541 : vector<2x16xf32>
    %586 = vector.extract_strided_slice %583 {offsets = [0, 16], sizes = [2, 16], strides = [1, 1]} : vector<2x128xf32> to vector<2x16xf32>
    %587 = arith.mulf %586, %575 : vector<2x16xf32>
    %c0_267 = arith.constant 0 : index
    %c0_268 = arith.constant 0 : index
    %588 = vector.load %arg10[%c0_267, %c0_268] : memref<16x384xf32, #tpu.memory_space<vmem>>, vector<16x384xf32>
    %cst_269 = arith.constant dense<0.000000e+00> : vector<2x384xf32>
    %589 = tpu.matmul %585, %588, %cst_269 {dimension_numbers = #tpu.dot_dimension_numbers<[1], [0], [0], [1], [0, 0, 1, 1], [], []>} : vector<2x16xf32>, vector<16x384xf32>, vector<2x384xf32> -> vector<2x384xf32>
    %c0_270 = arith.constant 0 : index
    %c0_271 = arith.constant 0 : index
    %590 = vector.load %arg11[%c0_270, %c0_271] : memref<16x384xf32, #tpu.memory_space<vmem>>, vector<16x384xf32>
    %cst_272 = arith.constant dense<0.000000e+00> : vector<2x384xf32>
    %591 = tpu.matmul %587, %590, %cst_272 {dimension_numbers = #tpu.dot_dimension_numbers<[1], [0], [0], [1], [0, 0, 1, 1], [], []>} : vector<2x16xf32>, vector<16x384xf32>, vector<2x384xf32> -> vector<2x384xf32>
    %592 = arith.addf %589, %591 : vector<2x384xf32>
    %593 = vector.broadcast %9 : vector<1x384xf32> to vector<2x384xf32>
    %594 = arith.addf %592, %593 : vector<2x384xf32>
    %595 = vector.extract_strided_slice %547 {offsets = [0, 128], sizes = [2, 384], strides = [1, 1]} : vector<2x512xf32> to vector<2x384xf32>
    %596 = vector.broadcast %10 : vector<1x384xf32> to vector<2x384xf32>
    %597 = arith.addf %595, %596 : vector<2x384xf32>
    %598 = vector.extract_strided_slice %594 {offsets = [0, 0], sizes = [2, 128], strides = [1, 1]} : vector<2x384xf32> to vector<2x128xf32>
    %599 = vector.extract_strided_slice %597 {offsets = [0, 0], sizes = [2, 128], strides = [1, 1]} : vector<2x384xf32> to vector<2x128xf32>
    %600 = arith.addf %598, %599 : vector<2x128xf32>
    %601 = arith.negf %600 : vector<2x128xf32>
    %602 = math.exp %601 : vector<2x128xf32>
    %cst_273 = arith.constant 1.000000e+00 : f32
    %603 = vector.broadcast %cst_273 : f32 to vector<2x128xf32>
    %604 = arith.addf %603, %602 : vector<2x128xf32>
    %605 = arith.divf %603, %604 : vector<2x128xf32>
    %606 = vector.extract_strided_slice %594 {offsets = [0, 128], sizes = [2, 128], strides = [1, 1]} : vector<2x384xf32> to vector<2x128xf32>
    %607 = vector.extract_strided_slice %597 {offsets = [0, 128], sizes = [2, 128], strides = [1, 1]} : vector<2x384xf32> to vector<2x128xf32>
    %608 = arith.addf %606, %607 : vector<2x128xf32>
    %609 = arith.negf %608 : vector<2x128xf32>
    %610 = math.exp %609 : vector<2x128xf32>
    %cst_274 = arith.constant 1.000000e+00 : f32
    %611 = vector.broadcast %cst_274 : f32 to vector<2x128xf32>
    %612 = arith.addf %611, %610 : vector<2x128xf32>
    %613 = arith.divf %611, %612 : vector<2x128xf32>
    %614 = vector.extract_strided_slice %594 {offsets = [0, 256], sizes = [2, 128], strides = [1, 1]} : vector<2x384xf32> to vector<2x128xf32>
    %615 = vector.extract_strided_slice %597 {offsets = [0, 256], sizes = [2, 128], strides = [1, 1]} : vector<2x384xf32> to vector<2x128xf32>
    %616 = arith.mulf %605, %615 : vector<2x128xf32>
    %617 = arith.addf %614, %616 : vector<2x128xf32>
    %618 = math.tanh %617 : vector<2x128xf32>
    %cst_275 = arith.constant 1.000000e+00 : f32
    %619 = vector.broadcast %cst_275 : f32 to vector<2x128xf32>
    %620 = arith.subf %619, %613 : vector<2x128xf32>
    %621 = arith.mulf %620, %618 : vector<2x128xf32>
    %622 = arith.mulf %613, %535 : vector<2x128xf32>
    %623 = arith.addf %621, %622 : vector<2x128xf32>
    %624 = vector.shape_cast %623 : vector<2x128xf32> to vector<2x1x128xf32>
    %c0_276 = arith.constant 0 : index
    %c6_277 = arith.constant 6 : index
    %c0_278 = arith.constant 0 : index
    %625 = vector.load %arg13[%c0_276, %c6_277, %c0_278] : memref<2x8x128xf32, #tpu.memory_space<vmem>>, vector<2x1x128xf32>
    tpu.vector_store %arg13[%c0_276, %c6_277, %c0_278], %624 {strides = array<i32>} : memref<2x8x128xf32, #tpu.memory_space<vmem>>, vector<2x1x128xf32>,
    %626 = vector.shape_cast %571 : vector<2x128xf32> to vector<2x1x128xf32>
    %c0_279 = arith.constant 0 : index
    %c6_280 = arith.constant 6 : index
    %c0_281 = arith.constant 0 : index
    %627 = vector.load %arg14[%c0_279, %c6_280, %c0_281] : memref<2x8x128xf32, #tpu.memory_space<vmem>>, vector<2x1x128xf32>
    tpu.vector_store %arg14[%c0_279, %c6_280, %c0_281], %626 {strides = array<i32>} : memref<2x8x128xf32, #tpu.memory_space<vmem>>, vector<2x1x128xf32>,
    %c0_282 = arith.constant 0 : index
    %c7 = arith.constant 7 : index
    %c0_283 = arith.constant 0 : index
    %628 = vector.load %arg2[%c0_282, %c7, %c0_283] : memref<2x8x16xf32, #tpu.memory_space<vmem>>, vector<2x1x16xf32>
    %629 = vector.shape_cast %628 : vector<2x1x16xf32> to vector<2x16xf32>
    %c0_284 = arith.constant 0 : index
    %c7_285 = arith.constant 7 : index
    %c0_286 = arith.constant 0 : index
    %630 = vector.load %arg3[%c0_284, %c7_285, %c0_286] : memref<2x8x256xf32, #tpu.memory_space<vmem>>, vector<2x1x256xf32>
    %631 = vector.shape_cast %630 : vector<2x1x256xf32> to vector<2x256xf32>
    %632 = vector.extract_strided_slice %631 {offsets = [0, 0], sizes = [2, 128], strides = [1, 1]} : vector<2x256xf32> to vector<2x128xf32>
    %633 = vector.extract_strided_slice %631 {offsets = [0, 128], sizes = [2, 128], strides = [1, 1]} : vector<2x256xf32> to vector<2x128xf32>
    %c0_287 = arith.constant 0 : index
    %c0_288 = arith.constant 0 : index
    %634 = vector.load %arg8[%c0_287, %c0_288] : memref<128x512xf32, #tpu.memory_space<vmem>>, vector<128x512xf32>
    %cst_289 = arith.constant dense<0.000000e+00> : vector<2x512xf32>
    %635 = tpu.matmul %623, %634, %cst_289 {dimension_numbers = #tpu.dot_dimension_numbers<[1], [0], [0], [1], [0, 0, 1, 1], [], []>} : vector<2x128xf32>, vector<128x512xf32>, vector<2x512xf32> -> vector<2x512xf32>
    %636 = vector.extract_strided_slice %635 {offsets = [0, 0], sizes = [2, 128], strides = [1, 1]} : vector<2x512xf32> to vector<2x128xf32>
    %637 = arith.addf %632, %636 : vector<2x128xf32>
    %c0_290 = arith.constant 0 : index
    %c0_291 = arith.constant 0 : index
    %c0_292 = arith.constant 0 : index
    %638 = vector.load %arg6[%c0_290, %c0_291, %c0_292] : memref<2x128x128xf32, #tpu.memory_space<vmem>>, vector<2x128x128xf32>
    %639 = vector.shape_cast %637 : vector<2x128xf32> to vector<2x1x128xf32>
    %640 = vector.broadcast %639 : vector<2x1x128xf32> to vector<2x128x128xf32>
    %641 = arith.addf %638, %640 : vector<2x128x128xf32>
    %642 = math.tanh %641 : vector<2x128x128xf32>
    %643 = vector.broadcast %7 : vector<1x1x128xf32> to vector<2x128x128xf32>
    %644 = arith.mulf %642, %643 : vector<2x128x128xf32>
    %cst_293 = arith.constant dense<0.000000e+00> : vector<2x128xf32>
    %645 = vector.multi_reduction <add>, %644, %cst_293 [2] : vector<2x128x128xf32> to vector<2x128xf32>
    %cst_294 = arith.constant -1.000000e+30 : f32
    %646 = vector.broadcast %cst_294 : f32 to vector<2x128xf32>
    %647 = arith.select %5, %645, %646 : vector<2x128xi1>, vector<2x128xf32>
    %cst_295 = arith.constant dense<0xFF800000> : vector<2xf32>
    %648 = vector.multi_reduction <maximumf>, %647, %cst_295 [1] : vector<2x128xf32> to vector<2xf32>
    %649 = vector.shape_cast %648 : vector<2xf32> to vector<2x1xf32>
    %650 = vector.broadcast %649 : vector<2x1xf32> to vector<2x128xf32>
    %651 = arith.subf %647, %650 : vector<2x128xf32>
    %652 = math.exp %651 : vector<2x128xf32>
    %653 = arith.mulf %652, %3 : vector<2x128xf32>
    %cst_296 = arith.constant dense<0.000000e+00> : vector<2xf32>
    %654 = vector.multi_reduction <add>, %653, %cst_296 [1] : vector<2x128xf32> to vector<2xf32>
    %655 = vector.shape_cast %654 : vector<2xf32> to vector<2x1xf32>
    %cst_297 = arith.constant 9.99999982E-14 : f32
    %656 = vector.broadcast %cst_297 : f32 to vector<2x1xf32>
    %657 = arith.addf %655, %656 : vector<2x1xf32>
    %658 = vector.broadcast %657 : vector<2x1xf32> to vector<2x128xf32>
    %659 = arith.divf %653, %658 : vector<2x128xf32>
    %660 = vector.shape_cast %659 : vector<2x128xf32> to vector<2x1x128xf32>
    %c0_298 = arith.constant 0 : index
    %c0_299 = arith.constant 0 : index
    %c0_300 = arith.constant 0 : index
    %661 = vector.load %arg4[%c0_298, %c0_299, %c0_300] : memref<2x128x16xf32, #tpu.memory_space<vmem>>, vector<2x128x16xf32>
    "tpu.trace_start"() <{level = 10 : i32, message = "bqn,bnd->bqd"}> : () -> ()
    %cst_301 = arith.constant dense<0.000000e+00> : vector<2x1x16xf32>
    %662 = tpu.matmul %660, %661, %cst_301 {dimension_numbers = #tpu.dot_dimension_numbers<[2], [1], [1], [2], [0, 0, 0, 1, 1, 2], [0], [0]>} : vector<2x1x128xf32>, vector<2x128x16xf32>, vector<2x1x16xf32> -> vector<2x1x16xf32>
    "tpu.trace_stop"() : () -> ()
    %663 = vector.shape_cast %662 : vector<2x1x16xf32> to vector<2x16xf32>
    %c0_302 = arith.constant 0 : index
    %c0_303 = arith.constant 0 : index
    %664 = vector.load %arg9[%c0_302, %c0_303] : memref<16x128xf32, #tpu.memory_space<vmem>>, vector<16x128xf32>
    %cst_304 = arith.constant dense<0.000000e+00> : vector<2x128xf32>
    %665 = tpu.matmul %663, %664, %cst_304 {dimension_numbers = #tpu.dot_dimension_numbers<[1], [0], [0], [1], [0, 0, 1, 1], [], []>} : vector<2x16xf32>, vector<16x128xf32>, vector<2x128xf32> -> vector<2x128xf32>
    %666 = arith.addf %633, %665 : vector<2x128xf32>
    %667 = arith.negf %666 : vector<2x128xf32>
    %668 = math.exp %667 : vector<2x128xf32>
    %cst_305 = arith.constant 1.000000e+00 : f32
    %669 = vector.broadcast %cst_305 : f32 to vector<2x128xf32>
    %670 = arith.addf %669, %668 : vector<2x128xf32>
    %671 = arith.divf %669, %670 : vector<2x128xf32>
    %672 = vector.extract_strided_slice %671 {offsets = [0, 0], sizes = [2, 16], strides = [1, 1]} : vector<2x128xf32> to vector<2x16xf32>
    %673 = arith.mulf %672, %629 : vector<2x16xf32>
    %674 = vector.extract_strided_slice %671 {offsets = [0, 16], sizes = [2, 16], strides = [1, 1]} : vector<2x128xf32> to vector<2x16xf32>
    %675 = arith.mulf %674, %663 : vector<2x16xf32>
    %c0_306 = arith.constant 0 : index
    %c0_307 = arith.constant 0 : index
    %676 = vector.load %arg10[%c0_306, %c0_307] : memref<16x384xf32, #tpu.memory_space<vmem>>, vector<16x384xf32>
    %cst_308 = arith.constant dense<0.000000e+00> : vector<2x384xf32>
    %677 = tpu.matmul %673, %676, %cst_308 {dimension_numbers = #tpu.dot_dimension_numbers<[1], [0], [0], [1], [0, 0, 1, 1], [], []>} : vector<2x16xf32>, vector<16x384xf32>, vector<2x384xf32> -> vector<2x384xf32>
    %c0_309 = arith.constant 0 : index
    %c0_310 = arith.constant 0 : index
    %678 = vector.load %arg11[%c0_309, %c0_310] : memref<16x384xf32, #tpu.memory_space<vmem>>, vector<16x384xf32>
    %cst_311 = arith.constant dense<0.000000e+00> : vector<2x384xf32>
    %679 = tpu.matmul %675, %678, %cst_311 {dimension_numbers = #tpu.dot_dimension_numbers<[1], [0], [0], [1], [0, 0, 1, 1], [], []>} : vector<2x16xf32>, vector<16x384xf32>, vector<2x384xf32> -> vector<2x384xf32>
    %680 = arith.addf %677, %679 : vector<2x384xf32>
    %681 = vector.broadcast %9 : vector<1x384xf32> to vector<2x384xf32>
    %682 = arith.addf %680, %681 : vector<2x384xf32>
    %683 = vector.extract_strided_slice %635 {offsets = [0, 128], sizes = [2, 384], strides = [1, 1]} : vector<2x512xf32> to vector<2x384xf32>
    %684 = vector.broadcast %10 : vector<1x384xf32> to vector<2x384xf32>
    %685 = arith.addf %683, %684 : vector<2x384xf32>
    %686 = vector.extract_strided_slice %682 {offsets = [0, 0], sizes = [2, 128], strides = [1, 1]} : vector<2x384xf32> to vector<2x128xf32>
    %687 = vector.extract_strided_slice %685 {offsets = [0, 0], sizes = [2, 128], strides = [1, 1]} : vector<2x384xf32> to vector<2x128xf32>
    %688 = arith.addf %686, %687 : vector<2x128xf32>
    %689 = arith.negf %688 : vector<2x128xf32>
    %690 = math.exp %689 : vector<2x128xf32>
    %cst_312 = arith.constant 1.000000e+00 : f32
    %691 = vector.broadcast %cst_312 : f32 to vector<2x128xf32>
    %692 = arith.addf %691, %690 : vector<2x128xf32>
    %693 = arith.divf %691, %692 : vector<2x128xf32>
    %694 = vector.extract_strided_slice %682 {offsets = [0, 128], sizes = [2, 128], strides = [1, 1]} : vector<2x384xf32> to vector<2x128xf32>
    %695 = vector.extract_strided_slice %685 {offsets = [0, 128], sizes = [2, 128], strides = [1, 1]} : vector<2x384xf32> to vector<2x128xf32>
    %696 = arith.addf %694, %695 : vector<2x128xf32>
    %697 = arith.negf %696 : vector<2x128xf32>
    %698 = math.exp %697 : vector<2x128xf32>
    %cst_313 = arith.constant 1.000000e+00 : f32
    %699 = vector.broadcast %cst_313 : f32 to vector<2x128xf32>
    %700 = arith.addf %699, %698 : vector<2x128xf32>
    %701 = arith.divf %699, %700 : vector<2x128xf32>
    %702 = vector.extract_strided_slice %682 {offsets = [0, 256], sizes = [2, 128], strides = [1, 1]} : vector<2x384xf32> to vector<2x128xf32>
    %703 = vector.extract_strided_slice %685 {offsets = [0, 256], sizes = [2, 128], strides = [1, 1]} : vector<2x384xf32> to vector<2x128xf32>
    %704 = arith.mulf %693, %703 : vector<2x128xf32>
    %705 = arith.addf %702, %704 : vector<2x128xf32>
    %706 = math.tanh %705 : vector<2x128xf32>
    %cst_314 = arith.constant 1.000000e+00 : f32
    %707 = vector.broadcast %cst_314 : f32 to vector<2x128xf32>
    %708 = arith.subf %707, %701 : vector<2x128xf32>
    %709 = arith.mulf %708, %706 : vector<2x128xf32>
    %710 = arith.mulf %701, %623 : vector<2x128xf32>
    %711 = arith.addf %709, %710 : vector<2x128xf32>
    %712 = vector.shape_cast %711 : vector<2x128xf32> to vector<2x1x128xf32>
    %c0_315 = arith.constant 0 : index
    %c7_316 = arith.constant 7 : index
    %c0_317 = arith.constant 0 : index
    %713 = vector.load %arg13[%c0_315, %c7_316, %c0_317] : memref<2x8x128xf32, #tpu.memory_space<vmem>>, vector<2x1x128xf32>
    tpu.vector_store %arg13[%c0_315, %c7_316, %c0_317], %712 {strides = array<i32>} : memref<2x8x128xf32, #tpu.memory_space<vmem>>, vector<2x1x128xf32>,
    %714 = vector.shape_cast %659 : vector<2x128xf32> to vector<2x1x128xf32>
    %c0_318 = arith.constant 0 : index
    %c7_319 = arith.constant 7 : index
    %c0_320 = arith.constant 0 : index
    %715 = vector.load %arg14[%c0_318, %c7_319, %c0_320] : memref<2x8x128xf32, #tpu.memory_space<vmem>>, vector<2x1x128xf32>
    tpu.vector_store %arg14[%c0_318, %c7_319, %c0_320], %714 {strides = array<i32>} : memref<2x8x128xf32, #tpu.memory_space<vmem>>, vector<2x1x128xf32>,
    %c0_321 = arith.constant 0 : index
    %c0_322 = arith.constant 0 : index
    %716 = vector.load %arg15[%c0_321, %c0_322] : memref<2x128xf32, #tpu.memory_space<vmem>>, vector<2x128xf32>
    tpu.vector_store %arg15[%c0_321, %c0_322], %711 {strides = array<i32>} : memref<2x128xf32, #tpu.memory_space<vmem>>, vector<2x128xf32>,
    return
  }
  func.func @transform_0(%arg0: i32, %arg1: i32) -> (i32, i32, i32) {
    %c0_i32 = arith.constant 0 : i32
    %c0_i32_0 = arith.constant 0 : i32
    return %arg0, %arg1, %c0_i32 : i32, i32, i32
  }
  func.func @transform_1(%arg0: i32, %arg1: i32) -> (i32, i32, i32) {
    %c0_i32 = arith.constant 0 : i32
    %c0_i32_0 = arith.constant 0 : i32
    return %arg0, %arg1, %c0_i32 : i32, i32, i32
  }
  func.func @transform_2(%arg0: i32, %arg1: i32) -> (i32, i32, i32) {
    %c0_i32 = arith.constant 0 : i32
    %c0_i32_0 = arith.constant 0 : i32
    %c0_i32_1 = arith.constant 0 : i32
    return %arg0, %c0_i32, %c0_i32_0 : i32, i32, i32
  }
  func.func @transform_3(%arg0: i32, %arg1: i32) -> (i32, i32) {
    %c0_i32 = arith.constant 0 : i32
    %c0_i32_0 = arith.constant 0 : i32
    return %arg0, %c0_i32 : i32, i32
  }
  func.func @transform_4(%arg0: i32, %arg1: i32) -> (i32, i32, i32) {
    %c0_i32 = arith.constant 0 : i32
    %c0_i32_0 = arith.constant 0 : i32
    %c0_i32_1 = arith.constant 0 : i32
    return %arg0, %c0_i32, %c0_i32_0 : i32, i32, i32
  }
  func.func @transform_5(%arg0: i32, %arg1: i32) -> (i32, i32) {
    %c0_i32 = arith.constant 0 : i32
    %c0_i32_0 = arith.constant 0 : i32
    %c0_i32_1 = arith.constant 0 : i32
    return %c0_i32, %c0_i32_0 : i32, i32
  }
  func.func @transform_6(%arg0: i32, %arg1: i32) -> (i32, i32) {
    %c0_i32 = arith.constant 0 : i32
    %c0_i32_0 = arith.constant 0 : i32
    %c0_i32_1 = arith.constant 0 : i32
    return %c0_i32, %c0_i32_0 : i32, i32
  }
  func.func @transform_7(%arg0: i32, %arg1: i32) -> (i32, i32) {
    %c0_i32 = arith.constant 0 : i32
    %c0_i32_0 = arith.constant 0 : i32
    %c0_i32_1 = arith.constant 0 : i32
    return %c0_i32, %c0_i32_0 : i32, i32
  }
  func.func @transform_8(%arg0: i32, %arg1: i32) -> (i32, i32) {
    %c0_i32 = arith.constant 0 : i32
    %c0_i32_0 = arith.constant 0 : i32
    %c0_i32_1 = arith.constant 0 : i32
    return %c0_i32, %c0_i32_0 : i32, i32
  }
  func.func @transform_9(%arg0: i32, %arg1: i32) -> (i32, i32) {
    %c0_i32 = arith.constant 0 : i32
    %c0_i32_0 = arith.constant 0 : i32
    %c0_i32_1 = arith.constant 0 : i32
    return %c0_i32, %c0_i32_0 : i32, i32
  }
  func.func @transform_10(%arg0: i32, %arg1: i32) -> (i32, i32) {
    %c0_i32 = arith.constant 0 : i32
    %c0_i32_0 = arith.constant 0 : i32
    %c0_i32_1 = arith.constant 0 : i32
    return %c0_i32, %c0_i32_0 : i32, i32
  }
  func.func @transform_11(%arg0: i32, %arg1: i32) -> (i32, i32, i32) {
    %c0_i32 = arith.constant 0 : i32
    %c0_i32_0 = arith.constant 0 : i32
    return %arg0, %arg1, %c0_i32 : i32, i32, i32
  }
  func.func @transform_12(%arg0: i32, %arg1: i32) -> (i32, i32, i32) {
    %c0_i32 = arith.constant 0 : i32
    %c0_i32_0 = arith.constant 0 : i32
    return %arg0, %arg1, %c0_i32 : i32, i32, i32
  }
}

</mosaic_0001>

<llo_original>
// kernel: match_attention_forward.1
$region0: #{match_attention_forward.1}
  #allocation0 [shape = 'u32[]', space=smem, size = 0x4, offset = 0x4, fixed_abs, tag = 'smem constant byte address 0x4 - core index']
  #allocation1 [shape = 'u32[72,128]{1,0:T(1,128)}', space=vmem, size = 0x9000, scoped, tag = 'internal scratch']
  #allocation2 [shape = 'f32[2,128]{1,0:T(2,128)}', space=vmem, size = 0x400, scoped, tag = 'scratch operand']
  %s0 = inlined_call_operand.vmem [shape: f32[2,16,16], index: 0, kind: input, shape index: {}]
  %s1 = inlined_call_operand.vmem [shape: f32[2,16,256], index: 1, kind: input, shape index: {}]
  %s2 = inlined_call_operand.vmem [shape: f32[2,128,16], index: 2, kind: input, shape index: {}]
  %s3 = inlined_call_operand.vmem [shape: f32[2,128], index: 3, kind: input, shape index: {}]
  %s4 = inlined_call_operand.vmem [shape: f32[2,128,128], index: 4, kind: input, shape index: {}]
  %s5 = inlined_call_operand.vmem [shape: f32[1,128], index: 5, kind: input, shape index: {}]
  %s6 = inlined_call_operand.vmem [shape: f32[128,512], index: 6, kind: input, shape index: {}]
  %s7 = inlined_call_operand.vmem [shape: f32[16,128], index: 7, kind: input, shape index: {}]
  %s8 = inlined_call_operand.vmem [shape: f32[16,384], index: 8, kind: input, shape index: {}]
  %s9 = inlined_call_operand.vmem [shape: f32[16,384], index: 9, kind: input, shape index: {}]
  %s10 = inlined_call_operand.vmem [shape: f32[2,384], index: 10, kind: input, shape index: {}]
  %s11 = inlined_call_operand.vmem [shape: f32[2,16,128], index: 11, kind: output, shape index: {0}]
  %s12 = inlined_call_operand.vmem [shape: f32[2,16,128], index: 12, kind: output, shape index: {1}]
  %13 = xla_tuple %s11, %s12
  %s14 = sld [smem:[#allocation0]]
  $region218: #{match_attention_forward.1} parent=0
    _
  %s16 = ssub.s32 1, %s14
  %s17 = scalar_select 0, %s16, %s14
  $region1: #{match_attention_forward.1} parent=0
    #allocation3 [shape = 'u8[16384]{0}', space=vmem, size = 0x4000, scoped, tag = 'input window, operand 0']
    #allocation4 [shape = 'u8[32768]{0}', space=vmem, size = 0x8000, scoped, tag = 'input window, operand 1']
    #allocation5 [shape = 'u8[16384]{0}', space=vmem, size = 0x4000, scoped, tag = 'output window, operand 0']
    #allocation6 [shape = 'u8[16384]{0}', space=vmem, size = 0x4000, scoped, tag = 'output window, operand 1']
    loop: start=0, step=1, limit=4
    $region2: #{match_attention_forward.1} parent=1 // loop_pre_header
      _
    $region3: #{match_attention_forward.1} parent=1 // loop_header
      %s19 = sphi 0, %s23
      %p20 = scmp.ge.s32.totalorder %s19, 4
      %s26 = sphi 0, %s38
      %s27 = sphi 0, %s34
      %s28 = sphi 0, %s26
      %s29 = sphi 0, %s27
      %s30 = sphi 0, %s28
      %s31 = sphi 0, %s29
      %s43 = sphi 0, %s45
      %s46 = sphi 0, %s43
      %s47 = sphi 0, %s46
      %s63 = sphi 0, %s47
      %s71 = sphi 0, %s73
      %s74 = sphi 0, %s71
      %s75 = sphi 0, %s74
      %s91 = sphi 0, %s75
      %s97 = sphi 0, %s99
      %s100 = sphi 0, %s97
      %s101 = sphi 0, %s100
      %s117 = sphi 0, %s101
      %s123 = sphi 0, %s125
      %s126 = sphi 0, %s123
      %s127 = sphi 0, %s126
      %s143 = sphi 0, %s127
      %s149 = sphi 0, %s151
      %s152 = sphi 0, %s149
      %s153 = sphi 0, %s152
      %s169 = sphi 0, %s153
      %s173 = sphi 0, %s173
      %s175 = sphi 0, %s173
      %s176 = sphi 0, %s175
      %s190 = sphi 0, %s176
      %s194 = sphi 0, %s194
      %s196 = sphi 0, %s194
      %s197 = sphi 0, %s196
      %s211 = sphi 0, %s197
      %s215 = sphi 0, %s215
      %s217 = sphi 0, %s215
      %s218 = sphi 0, %s217
      %s232 = sphi 0, %s218
      %s236 = sphi 0, %s236
      %s238 = sphi 0, %s236
      %s239 = sphi 0, %s238
      %s253 = sphi 0, %s239
      %s257 = sphi 0, %s257
      %s259 = sphi 0, %s257
      %s260 = sphi 0, %s259
      %s274 = sphi 0, %s260
      %s278 = sphi 0, %s278
      %s280 = sphi 0, %s278
      %s281 = sphi 0, %s280
      %s295 = sphi 0, %s281
      %s303 = sphi 0, %s305
      %s306 = sphi 0, %s303
      %s307 = sphi 0, %s306
      %s323 = sphi 0, %s307
      %s331 = sphi 0, %s333
      %s334 = sphi 0, %s331
      %s335 = sphi 0, %s334
      %s351 = sphi 0, %s335
    $region4: #{match_attention_forward.1} parent=1 // loop_header_branch
      %22 = sbr.rel (%p20) target = $region8
    $region5: #{match_attention_forward.1} parent=1 // loop_body
      %s24 = ssub.s32 %s19, 1
      %s25 = ssub.s32 %s19, 2
      %s32 = sadd.s32 1, %s27
      %p33 = scmp.ge.s32.totalorder %s32, 2
      %s34 = scalar_select %p33, 0, %s32
      %s35 = sadd.s32 1, %s26
      %s36 = scalar_select %p33, %s35, %s26
      %p37 = scmp.ge.s32.totalorder %s36, 1
      %s38 = scalar_select %p37, 0, %s36
      %s39 = ssub.s32 %s26, %s38
      %s40 = ssub.s32 %s27, %s34
      %s41 = sor.u32 %s39, %s40
      %p42 = scmp.eq.s32.totalorder %s41, 0
      %s44 = sadd.s32 %s43, 1
      %s45 = scalar_select %p42, %s43, %s44
      %p48 = pneg %p42
      %p49 = scmp.eq.s32.totalorder %s19, 1
      %p50 = por %p48, %p49
      %p51 = scmp.ne.s32.totalorder %s43, %s46
      %p52 = scmp.eq.s32.totalorder %s19, 0
      %p53 = por %p51, %p52
      %p54 = scmp.ne.s32.totalorder %s43, %s46
      %p55 = scmp.eq.s32.totalorder %s24, 1
      %p56 = por %p54, %p55
      %p57 = scmp.ne.s32.totalorder %s46, %s47
      %p58 = scmp.eq.s32.totalorder %s24, 0
      %p59 = por %p57, %p58
      %p60 = scmp.ne.s32.totalorder %s46, %s47
      %p61 = scmp.eq.s32.totalorder %s25, 1
      %p62 = por %p60, %p61
      %p64 = scmp.ne.s32.totalorder %s47, %s63
      %p65 = scmp.eq.s32.totalorder %s25, 0
      %p66 = por %p64, %p65
      %s67 = ssub.s32 %s26, %s38
      %s68 = ssub.s32 %s27, %s34
      %s69 = sor.u32 %s67, %s68
      %p70 = scmp.eq.s32.totalorder %s69, 0
      %s72 = sadd.s32 %s71, 1
      %s73 = scalar_select %p70, %s71, %s72
      %p76 = pneg %p70
      %p77 = scmp.eq.s32.totalorder %s19, 1
      %p78 = por %p76, %p77
      %p79 = scmp.ne.s32.totalorder %s71, %s74
      %p80 = scmp.eq.s32.totalorder %s19, 0
      %p81 = por %p79, %p80
      %p82 = scmp.ne.s32.totalorder %s71, %s74
      %p83 = scmp.eq.s32.totalorder %s24, 1
      %p84 = por %p82, %p83
      %p85 = scmp.ne.s32.totalorder %s74, %s75
      %p86 = scmp.eq.s32.totalorder %s24, 0
      %p87 = por %p85, %p86
      %p88 = scmp.ne.s32.totalorder %s74, %s75
      %p89 = scmp.eq.s32.totalorder %s25, 1
      %p90 = por %p88, %p89
      %p92 = scmp.ne.s32.totalorder %s75, %s91
      %p93 = scmp.eq.s32.totalorder %s25, 0
      %p94 = por %p92, %p93
      %s95 = ssub.s32 %s26, %s38
      %p96 = scmp.eq.s32.totalorder %s95, 0
      %s98 = sadd.s32 %s97, 1
      %s99 = scalar_select %p96, %s97, %s98
      %p102 = pneg %p96
      %p103 = scmp.eq.s32.totalorder %s19, 1
      %p104 = por %p102, %p103
      %p105 = scmp.ne.s32.totalorder %s97, %s100
      %p106 = scmp.eq.s32.totalorder %s19, 0
      %p107 = por %p105, %p106
      %p108 = scmp.ne.s32.totalorder %s97, %s100
      %p109 = scmp.eq.s32.totalorder %s24, 1
      %p110 = por %p108, %p109
      %p111 = scmp.ne.s32.totalorder %s100, %s101
      %p112 = scmp.eq.s32.totalorder %s24, 0
      %p113 = por %p111, %p112
      %p114 = scmp.ne.s32.totalorder %s100, %s101
      %p115 = scmp.eq.s32.totalorder %s25, 1
      %p116 = por %p114, %p115
      %p118 = scmp.ne.s32.totalorder %s101, %s117
      %p119 = scmp.eq.s32.totalorder %s25, 0
      %p120 = por %p118, %p119
      %s121 = ssub.s32 %s26, %s38
      %p122 = scmp.eq.s32.totalorder %s121, 0
      %s124 = sadd.s32 %s123, 1
      %s125 = scalar_select %p122, %s123, %s124
      %p128 = pneg %p122
      %p129 = scmp.eq.s32.totalorder %s19, 1
      %p130 = por %p128, %p129
      %p131 = scmp.ne.s32.totalorder %s123, %s126
      %p132 = scmp.eq.s32.totalorder %s19, 0
      %p133 = por %p131, %p132
      %p134 = scmp.ne.s32.totalorder %s123, %s126
      %p135 = scmp.eq.s32.totalorder %s24, 1
      %p136 = por %p134, %p135
      %p137 = scmp.ne.s32.totalorder %s126, %s127
      %p138 = scmp.eq.s32.totalorder %s24, 0
      %p139 = por %p137, %p138
      %p140 = scmp.ne.s32.totalorder %s126, %s127
      %p141 = scmp.eq.s32.totalorder %s25, 1
      %p142 = por %p140, %p141
      %p144 = scmp.ne.s32.totalorder %s127, %s143
      %p145 = scmp.eq.s32.totalorder %s25, 0
      %p146 = por %p144, %p145
      %s147 = ssub.s32 %s26, %s38
      %p148 = scmp.eq.s32.totalorder %s147, 0
      %s150 = sadd.s32 %s149, 1
      %s151 = scalar_select %p148, %s149, %s150
      %p154 = pneg %p148
      %p155 = scmp.eq.s32.totalorder %s19, 1
      %p156 = por %p154, %p155
      %p157 = scmp.ne.s32.totalorder %s149, %s152
      %p158 = scmp.eq.s32.totalorder %s19, 0
      %p159 = por %p157, %p158
      %p160 = scmp.ne.s32.totalorder %s149, %s152
      %p161 = scmp.eq.s32.totalorder %s24, 1
      %p162 = por %p160, %p161
      %p163 = scmp.ne.s32.totalorder %s152, %s153
      %p164 = scmp.eq.s32.totalorder %s24, 0
      %p165 = por %p163, %p164
      %p166 = scmp.ne.s32.totalorder %s152, %s153
      %p167 = scmp.eq.s32.totalorder %s25, 1
      %p168 = por %p166, %p167
      %p170 = scmp.ne.s32.totalorder %s153, %s169
      %p171 = scmp.eq.s32.totalorder %s25, 0
      %p172 = por %p170, %p171
      %s174 = sadd.s32 %s173, 1
      %p177 = scmp.eq.s32.totalorder %s19, 1
      %p178 = scmp.ne.s32.totalorder %s173, %s175
      %p179 = scmp.eq.s32.totalorder %s19, 0
      %p180 = por %p178, %p179
      %p181 = scmp.ne.s32.totalorder %s173, %s175
      %p182 = scmp.eq.s32.totalorder %s24, 1
      %p183 = por %p181, %p182
      %p184 = scmp.ne.s32.totalorder %s175, %s176
      %p185 = scmp.eq.s32.totalorder %s24, 0
      %p186 = por %p184, %p185
      %p187 = scmp.ne.s32.totalorder %s175, %s176
      %p188 = scmp.eq.s32.totalorder %s25, 1
      %p189 = por %p187, %p188
      %p191 = scmp.ne.s32.totalorder %s176, %s190
      %p192 = scmp.eq.s32.totalorder %s25, 0
      %p193 = por %p191, %p192
      %s195 = sadd.s32 %s194, 1
      %p198 = scmp.eq.s32.totalorder %s19, 1
      %p199 = scmp.ne.s32.totalorder %s194, %s196
      %p200 = scmp.eq.s32.totalorder %s19, 0
      %p201 = por %p199, %p200
      %p202 = scmp.ne.s32.totalorder %s194, %s196
      %p203 = scmp.eq.s32.totalorder %s24, 1
      %p204 = por %p202, %p203
      %p205 = scmp.ne.s32.totalorder %s196, %s197
      %p206 = scmp.eq.s32.totalorder %s24, 0
      %p207 = por %p205, %p206
      %p208 = scmp.ne.s32.totalorder %s196, %s197
      %p209 = scmp.eq.s32.totalorder %s25, 1
      %p210 = por %p208, %p209
      %p212 = scmp.ne.s32.totalorder %s197, %s211
      %p213 = scmp.eq.s32.totalorder %s25, 0
      %p214 = por %p212, %p213
      %s216 = sadd.s32 %s215, 1
      %p219 = scmp.eq.s32.totalorder %s19, 1
      %p220 = scmp.ne.s32.totalorder %s215, %s217
      %p221 = scmp.eq.s32.totalorder %s19, 0
      %p222 = por %p220, %p221
      %p223 = scmp.ne.s32.totalorder %s215, %s217
      %p224 = scmp.eq.s32.totalorder %s24, 1
      %p225 = por %p223, %p224
      %p226 = scmp.ne.s32.totalorder %s217, %s218
      %p227 = scmp.eq.s32.totalorder %s24, 0
      %p228 = por %p226, %p227
      %p229 = scmp.ne.s32.totalorder %s217, %s218
      %p230 = scmp.eq.s32.totalorder %s25, 1
      %p231 = por %p229, %p230
      %p233 = scmp.ne.s32.totalorder %s218, %s232
      %p234 = scmp.eq.s32.totalorder %s25, 0
      %p235 = por %p233, %p234
      %s237 = sadd.s32 %s236, 1
      %p240 = scmp.eq.s32.totalorder %s19, 1
      %p241 = scmp.ne.s32.totalorder %s236, %s238
      %p242 = scmp.eq.s32.totalorder %s19, 0
      %p243 = por %p241, %p242
      %p244 = scmp.ne.s32.totalorder %s236, %s238
      %p245 = scmp.eq.s32.totalorder %s24, 1
      %p246 = por %p244, %p245
      %p247 = scmp.ne.s32.totalorder %s238, %s239
      %p248 = scmp.eq.s32.totalorder %s24, 0
      %p249 = por %p247, %p248
      %p250 = scmp.ne.s32.totalorder %s238, %s239
      %p251 = scmp.eq.s32.totalorder %s25, 1
      %p252 = por %p250, %p251
      %p254 = scmp.ne.s32.totalorder %s239, %s253
      %p255 = scmp.eq.s32.totalorder %s25, 0
      %p256 = por %p254, %p255
      %s258 = sadd.s32 %s257, 1
      %p261 = scmp.eq.s32.totalorder %s19, 1
      %p262 = scmp.ne.s32.totalorder %s257, %s259
      %p263 = scmp.eq.s32.totalorder %s19, 0
      %p264 = por %p262, %p263
      %p265 = scmp.ne.s32.totalorder %s257, %s259
      %p266 = scmp.eq.s32.totalorder %s24, 1
      %p267 = por %p265, %p266
      %p268 = scmp.ne.s32.totalorder %s259, %s260
      %p269 = scmp.eq.s32.totalorder %s24, 0
      %p270 = por %p268, %p269
      %p271 = scmp.ne.s32.totalorder %s259, %s260
      %p272 = scmp.eq.s32.totalorder %s25, 1
      %p273 = por %p271, %p272
      %p275 = scmp.ne.s32.totalorder %s260, %s274
      %p276 = scmp.eq.s32.totalorder %s25, 0
      %p277 = por %p275, %p276
      %s279 = sadd.s32 %s278, 1
      %p282 = scmp.eq.s32.totalorder %s19, 1
      %p283 = scmp.ne.s32.totalorder %s278, %s280
      %p284 = scmp.eq.s32.totalorder %s19, 0
      %p285 = por %p283, %p284
      %p286 = scmp.ne.s32.totalorder %s278, %s280
      %p287 = scmp.eq.s32.totalorder %s24, 1
      %p288 = por %p286, %p287
      %p289 = scmp.ne.s32.totalorder %s280, %s281
      %p290 = scmp.eq.s32.totalorder %s24, 0
      %p291 = por %p289, %p290
      %p292 = scmp.ne.s32.totalorder %s280, %s281
      %p293 = scmp.eq.s32.totalorder %s25, 1
      %p294 = por %p292, %p293
      %p296 = scmp.ne.s32.totalorder %s281, %s295
      %p297 = scmp.eq.s32.totalorder %s25, 0
      %p298 = por %p296, %p297
      %s299 = ssub.s32 %s26, %s38
      %s300 = ssub.s32 %s27, %s34
      %s301 = sor.u32 %s299, %s300
      %p302 = scmp.eq.s32.totalorder %s301, 0
      %s304 = sadd.s32 %s303, 1
      %s305 = scalar_select %p302, %s303, %s304
      %p308 = pneg %p302
      %p309 = scmp.eq.s32.totalorder %s19, 1
      %p310 = por %p308, %p309
      %p311 = scmp.ne.s32.totalorder %s303, %s306
      %p312 = scmp.eq.s32.totalorder %s19, 0
      %p313 = por %p311, %p312
      %p314 = scmp.ne.s32.totalorder %s303, %s306
      %p315 = scmp.eq.s32.totalorder %s24, 1
      %p316 = por %p314, %p315
      %p317 = scmp.ne.s32.totalorder %s306, %s307
      %p318 = scmp.eq.s32.totalorder %s24, 0
      %p319 = por %p317, %p318
      %p320 = scmp.ne.s32.totalorder %s306, %s307
      %p321 = scmp.eq.s32.totalorder %s25, 1
      %p322 = por %p320, %p321
      %p324 = scmp.ne.s32.totalorder %s307, %s323
      %p325 = scmp.eq.s32.totalorder %s25, 0
      %p326 = por %p324, %p325
      %s327 = ssub.s32 %s26, %s38
      %s328 = ssub.s32 %s27, %s34
      %s329 = sor.u32 %s327, %s328
      %p330 = scmp.eq.s32.totalorder %s329, 0
      %s332 = sadd.s32 %s331, 1
      %s333 = scalar_select %p330, %s331, %s332
      %p336 = pneg %p330
      %p337 = scmp.eq.s32.totalorder %s19, 1
      %p338 = por %p336, %p337
      %p339 = scmp.ne.s32.totalorder %s331, %s334
      %p340 = scmp.eq.s32.totalorder %s19, 0
      %p341 = por %p339, %p340
      %p342 = scmp.ne.s32.totalorder %s331, %s334
      %p343 = scmp.eq.s32.totalorder %s24, 1
      %p344 = por %p342, %p343
      %p345 = scmp.ne.s32.totalorder %s334, %s335
      %p346 = scmp.eq.s32.totalorder %s24, 0
      %p347 = por %p345, %p346
      %p348 = scmp.ne.s32.totalorder %s334, %s335
      %p349 = scmp.eq.s32.totalorder %s25, 1
      %p350 = por %p348, %p349
      %p352 = scmp.ne.s32.totalorder %s335, %s351
      %p353 = scmp.eq.s32.totalorder %s25, 0
      %p354 = por %p352, %p353
      %p355 = scmp.le.s32.totalorder 1, %s19
      %p356 = scmp.lt.s32.totalorder %s19, 3
      %p357 = pnand %p355, %p356
      %p358 = pneg %p357
      // Predicated region
      $region9: #{match_attention_forward.1} parent=5 // pred_check
        _
      $region10: #{match_attention_forward.1} parent=5 // pred_check_branch
        %360 = sbr.rel (%p357) target = $region12
      $region11: #{match_attention_forward.1} parent=5 // pred_region
        %s361 = ssub.s32 %s19, 1
        // Predicated region
        $region13: #{match_attention_forward.1} parent=11 // pred_check
          %p362 = pneg %p113
        $region14: #{match_attention_forward.1} parent=11 // pred_check_branch
          %364 = sbr.rel (%p362) target = $region16
        $region15: #{match_attention_forward.1} parent=11 // pred_region
          %s365 = smul.u32 2, %s28
          %p366 = scmp.lt.s32.totalorder %s365, 1
          %s367 = scalar_select %p366, %s365, 1
          %s368 = smul.addr %s367, 16
          %s369 = smul.addr %s368, 8
          %s370 = scalar_lea.vmem %s2, %s369
          %s371 = smul.u32 2, %s28
        $region16: #{match_attention_forward.1} parent=11 // pred_fallthru
          _
        // Predicated region
        $region17: #{match_attention_forward.1} parent=11 // pred_check
          %p372 = pneg %p139
        $region18: #{match_attention_forward.1} parent=11 // pred_check_branch
          %374 = sbr.rel (%p372) target = $region20
        $region19: #{match_attention_forward.1} parent=11 // pred_region
          %p375 = scmp.lt.s32.totalorder %s28, 0
          %s376 = scalar_select %p375, %s28, 0
          %s377 = smul.addr %s376, 2
          %s378 = scalar_lea.vmem %s3, %s377
        $region20: #{match_attention_forward.1} parent=11 // pred_fallthru
          _
        // Predicated region
        $region21: #{match_attention_forward.1} parent=11 // pred_check
          %p379 = pneg %p165
        $region22: #{match_attention_forward.1} parent=11 // pred_check_branch
          %381 = sbr.rel (%p379) target = $region24
        $region23: #{match_attention_forward.1} parent=11 // pred_region
          %s382 = smul.u32 2, %s28
          %p383 = scmp.lt.s32.totalorder %s382, 1
          %s384 = scalar_select %p383, %s382, 1
          %s385 = smul.addr %s384, 16
          %s386 = smul.addr %s385, 8
          %s387 = scalar_lea.vmem %s4, %s386
          %s388 = smul.u32 2, %s28
        $region24: #{match_attention_forward.1} parent=11 // pred_fallthru
          _
        // Predicated region
        $region25: #{match_attention_forward.1} parent=11 // pred_check
          %p389 = pneg %p186
        $region26: #{match_attention_forward.1} parent=11 // pred_check_branch
          %391 = sbr.rel (%p389) target = $region28
        $region27: #{match_attention_forward.1} parent=11 // pred_region
          _
        $region28: #{match_attention_forward.1} parent=11 // pred_fallthru
          _
        // Predicated region
        $region29: #{match_attention_forward.1} parent=11 // pred_check
          %p392 = pneg %p207
        $region30: #{match_attention_forward.1} parent=11 // pred_check_branch
          %394 = sbr.rel (%p392) target = $region32
        $region31: #{match_attention_forward.1} parent=11 // pred_region
          _
        $region32: #{match_attention_forward.1} parent=11 // pred_fallthru
          _
        // Predicated region
        $region33: #{match_attention_forward.1} parent=11 // pred_check
          %p395 = pneg %p228
        $region34: #{match_attention_forward.1} parent=11 // pred_check_branch
          %397 = sbr.rel (%p395) target = $region36
        $region35: #{match_attention_forward.1} parent=11 // pred_region
          _
        $region36: #{match_attention_forward.1} parent=11 // pred_fallthru
          _
        // Predicated region
        $region37: #{match_attention_forward.1} parent=11 // pred_check
          %p398 = pneg %p249
        $region38: #{match_attention_forward.1} parent=11 // pred_check_branch
          %400 = sbr.rel (%p398) target = $region40
        $region39: #{match_attention_forward.1} parent=11 // pred_region
          _
        $region40: #{match_attention_forward.1} parent=11 // pred_fallthru
          _
        // Predicated region
        $region41: #{match_attention_forward.1} parent=11 // pred_check
          %p401 = pneg %p270
        $region42: #{match_attention_forward.1} parent=11 // pred_check_branch
          %403 = sbr.rel (%p401) target = $region44
        $region43: #{match_attention_forward.1} parent=11 // pred_region
          _
        $region44: #{match_attention_forward.1} parent=11 // pred_fallthru
          _
        // Predicated region
        $region45: #{match_attention_forward.1} parent=11 // pred_check
          %p404 = pneg %p291
        $region46: #{match_attention_forward.1} parent=11 // pred_check_branch
          %406 = sbr.rel (%p404) target = $region48
        $region47: #{match_attention_forward.1} parent=11 // pred_region
          _
        $region48: #{match_attention_forward.1} parent=11 // pred_fallthru
          _
      $region12: #{match_attention_forward.1} parent=5 // pred_fallthru
        _
      %p407 = scmp.lt.s32.totalorder %s19, 2
      // Predicated region
      $region49: #{match_attention_forward.1} parent=5 // pred_check
        %p408 = pneg %p407
      $region50: #{match_attention_forward.1} parent=5 // pred_check_branch
        %410 = sbr.rel (%p408) target = $region52
      $region51: #{match_attention_forward.1} parent=5 // pred_region
        // Predicated region
        $region53: #{match_attention_forward.1} parent=51 // pred_check
          %p411 = pneg %p53
        $region54: #{match_attention_forward.1} parent=51 // pred_check_branch
          %413 = sbr.rel (%p411) target = $region56
        $region55: #{match_attention_forward.1} parent=51 // pred_region
          %s414 = sand.u32 %s43, 1
          %s415 = sand.u32 %s43, 1
          %s416 = smul.addr %s415, 16
          %s417 = scalar_lea.vmem [#allocation3], %s416
          %s418 = smul.u32 2, %s26
          %s419 = smul.addr %s418, 2
          %s420 = sadd.s32 %s27, %s419
          %s421 = smul.addr %s420, 8
          %s422 = scalar_lea.vmem %s0, %s421
          // Predicated region
          $region57: #{match_attention_forward.1} parent=55 // pred_check
            _
          $region58: #{match_attention_forward.1} parent=55 // pred_check_branch
            %424 = sbr.rel (0) target = $region60
          $region59: #{match_attention_forward.1} parent=55 // pred_region
            // Predicated region
            $region61: #{match_attention_forward.1} parent=59 // pred_check
              _
            $region62: #{match_attention_forward.1} parent=59 // pred_check_branch
              %426 = sbr.rel (0) target = $region64
            $region63: #{match_attention_forward.1} parent=59 // pred_region
              // Predicated region
              $region76: #{match_attention_forward.1} parent=63 // pred_check
                _
              $region77: #{match_attention_forward.1} parent=63 // pred_check_branch
                %444 = sbr.rel (0) target = $region79
              $region78: #{match_attention_forward.1} parent=63 // pred_region
                loop: start=0, step=1, limit=1
                $region80: #{match_attention_forward.1} parent=78 // loop_pre_header
                  _
                $region81: #{match_attention_forward.1} parent=78 // loop_header
                  %s446 = sphi 0, %s450
                  %p447 = scmp.ge.s32.totalorder %s446, 1
                  %s451 = sphi %s422, %s422
                  %s452 = sphi %s417, %s417
                $region82: #{match_attention_forward.1} parent=78 // loop_header_branch
                  %449 = sbr.rel (%p447) target = $region86
                $region83: #{match_attention_forward.1} parent=78 // loop_body
                  %v453 = vld [vmem:[%s451] sm:$0xff]
                  %454 = vst [vmem:[%s452] sm:$0xff] %v453
                  %v455 = vld [vmem:[%s451 + $0x10] sm:$0xff]
                  %456 = vst [vmem:[%s452 + $0x8] sm:$0xff] %v455
                $region84: #{match_attention_forward.1} parent=78 // loop_footer
                  %s450 = sadd.s32 1, %s446
                $region85: #{match_attention_forward.1} parent=78 // loop_footer_branch
                  %445 = sbr.rel target = $region81
                $region86: #{match_attention_forward.1} parent=78 // loop_exit
                  _
              $region79: #{match_attention_forward.1} parent=63 // pred_fallthru
                _
              // Predicated region
              $region87: #{match_attention_forward.1} parent=63 // pred_check
                _
              $region88: #{match_attention_forward.1} parent=63 // pred_check_branch
                %458 = sbr.rel target = $region90
              $region89: #{match_attention_forward.1} parent=63 // pred_region
                _
              $region90: #{match_attention_forward.1} parent=63 // pred_fallthru
                _
            $region64: #{match_attention_forward.1} parent=59 // pred_fallthru
              _
            // Predicated region
            $region65: #{match_attention_forward.1} parent=59 // pred_check
              _
            $region66: #{match_attention_forward.1} parent=59 // pred_check_branch
              %428 = sbr.rel target = $region68
            $region67: #{match_attention_forward.1} parent=59 // pred_region
              %s430 = ssub.s32 256, 1
              loop: start=0, step=1, limit=1
              $region69: #{match_attention_forward.1} parent=67 // loop_pre_header
                _
              $region70: #{match_attention_forward.1} parent=67 // loop_header
                %s432 = sphi 0, %s436
                %p433 = scmp.ge.s32.totalorder %s432, 1
                %s437 = sphi %s422, %s422
                %s438 = sphi %s417, %s417
              $region71: #{match_attention_forward.1} parent=67 // loop_header_branch
                %435 = sbr.rel (%p433) target = $region75
              $region72: #{match_attention_forward.1} parent=67 // loop_body
                %v439 = vld [vmem:[%s437] sm:%s430]
                %440 = vst [vmem:[%s438] sm:%s430] %v439
                %v441 = vld [vmem:[%s437 + $0x10] sm:%s430]
                %442 = vst [vmem:[%s438 + $0x8] sm:%s430] %v441
              $region73: #{match_attention_forward.1} parent=67 // loop_footer
                %s436 = sadd.s32 1, %s432
              $region74: #{match_attention_forward.1} parent=67 // loop_footer_branch
                %431 = sbr.rel target = $region70
              $region75: #{match_attention_forward.1} parent=67 // loop_exit
                _
            $region68: #{match_attention_forward.1} parent=59 // pred_fallthru
              _
          $region60: #{match_attention_forward.1} parent=55 // pred_fallthru
            _
          %459 = vnop
        $region56: #{match_attention_forward.1} parent=51 // pred_fallthru
          _
        // Predicated region
        $region91: #{match_attention_forward.1} parent=51 // pred_check
          %p460 = pneg %p81
        $region92: #{match_attention_forward.1} parent=51 // pred_check_branch
          %462 = sbr.rel (%p460) target = $region94
        $region93: #{match_attention_forward.1} parent=51 // pred_region
          %s463 = sand.u32 %s71, 1
          %s464 = sand.u32 %s71, 1
          %s465 = smul.addr %s464, 32
          %s466 = scalar_lea.vmem [#allocation4], %s465
          %s467 = smul.u32 2, %s26
          %s468 = smul.addr %s27, 2
          %s469 = smul.addr %s467, 4
          %s470 = sadd.s32 %s468, %s469
          %s471 = smul.addr %s470, 8
          %s472 = scalar_lea.vmem %s1, %s471
          // Predicated region
          $region95: #{match_attention_forward.1} parent=93 // pred_check
            _
          $region96: #{match_attention_forward.1} parent=93 // pred_check_branch
            %474 = sbr.rel (0) target = $region98
          $region97: #{match_attention_forward.1} parent=93 // pred_region
            // Predicated region
            $region99: #{match_attention_forward.1} parent=97 // pred_check
              _
            $region100: #{match_attention_forward.1} parent=97 // pred_check_branch
              %476 = sbr.rel (0) target = $region102
            $region101: #{match_attention_forward.1} parent=97 // pred_region
              loop: start=0, step=1, limit=1
              $region103: #{match_attention_forward.1} parent=101 // loop_pre_header
                _
              $region104: #{match_attention_forward.1} parent=101 // loop_header
                %s478 = sphi 0, %s482
                %p479 = scmp.ge.s32.totalorder %s478, 1
                %s483 = sphi %s472, %s472
                %s484 = sphi %s466, %s466
              $region105: #{match_attention_forward.1} parent=101 // loop_header_branch
                %481 = sbr.rel (%p479) target = $region109
              $region106: #{match_attention_forward.1} parent=101 // loop_body
                %v485 = vld [vmem:[%s483] sm:$0xff]
                %486 = vst [vmem:[%s484] sm:$0xff] %v485
                %v487 = vld [vmem:[%s483 + $0x8] sm:$0xff]
                %488 = vst [vmem:[%s484 + $0x8] sm:$0xff] %v487
                %v489 = vld [vmem:[%s483 + $0x20] sm:$0xff]
                %490 = vst [vmem:[%s484 + $0x10] sm:$0xff] %v489
                %v491 = vld [vmem:[%s483 + $0x28] sm:$0xff]
                %492 = vst [vmem:[%s484 + $0x18] sm:$0xff] %v491
              $region107: #{match_attention_forward.1} parent=101 // loop_footer
                %s482 = sadd.s32 1, %s478
              $region108: #{match_attention_forward.1} parent=101 // loop_footer_branch
                %477 = sbr.rel target = $region104
              $region109: #{match_attention_forward.1} parent=101 // loop_exit
                _
            $region102: #{match_attention_forward.1} parent=97 // pred_fallthru
              _
            // Predicated region
            $region110: #{match_attention_forward.1} parent=97 // pred_check
              _
            $region111: #{match_attention_forward.1} parent=97 // pred_check_branch
              %494 = sbr.rel target = $region113
            $region112: #{match_attention_forward.1} parent=97 // pred_region
              _
            $region113: #{match_attention_forward.1} parent=97 // pred_fallthru
              _
          $region98: #{match_attention_forward.1} parent=93 // pred_fallthru
            _
          %495 = vnop
        $region94: #{match_attention_forward.1} parent=51 // pred_fallthru
          _
      $region52: #{match_attention_forward.1} parent=5 // pred_fallthru
        _
      %p496 = scmp.le.s32.totalorder 1, %s19
      %p497 = scmp.lt.s32.totalorder %s19, 3
      %p498 = pnand %p496, %p497
      %p499 = pneg %p498
      // Predicated region
      $region114: #{match_attention_forward.1} parent=5 // pred_check
        _
      $region115: #{match_attention_forward.1} parent=5 // pred_check_branch
        %501 = sbr.rel (%p498) target = $region117
      $region116: #{match_attention_forward.1} parent=5 // pred_region
        %s502 = ssub.s32 %s19, 1
        %s503 = sand.u32 %s46, 1
        %s504 = sand.u32 %s46, 1
        %s505 = smul.addr %s504, 16
        %s506 = scalar_lea.vmem [#allocation3], %s505
        // Predicated region
        $region118: #{match_attention_forward.1} parent=116 // pred_check
          %p507 = pneg %p59
        $region119: #{match_attention_forward.1} parent=116 // pred_check_branch
          %509 = sbr.rel (%p507) target = $region121
        $region120: #{match_attention_forward.1} parent=116 // pred_region
          _
        $region121: #{match_attention_forward.1} parent=116 // pred_fallthru
          _
        %s510 = sand.u32 %s74, 1
        %s511 = sand.u32 %s74, 1
        %s512 = smul.addr %s511, 32
        %s513 = scalar_lea.vmem [#allocation4], %s512
        // Predicated region
        $region122: #{match_attention_forward.1} parent=116 // pred_check
          %p514 = pneg %p87
        $region123: #{match_attention_forward.1} parent=116 // pred_check_branch
          %516 = sbr.rel (%p514) target = $region125
        $region124: #{match_attention_forward.1} parent=116 // pred_region
          _
        $region125: #{match_attention_forward.1} parent=116 // pred_fallthru
          _
        %s517 = sand.u32 %s46, 1
        %s518 = sand.u32 %s46, 1
        %s519 = smul.addr %s518, 16
        %s520 = scalar_lea.vmem [#allocation3], %s519
        %p521 = pneg %p59
        %p522 = pneg %p56
        %s523 = sand.u32 %s74, 1
        %s524 = sand.u32 %s74, 1
        %s525 = smul.addr %s524, 32
        %s526 = scalar_lea.vmem [#allocation4], %s525
        %p527 = pneg %p87
        %p528 = pneg %p84
        %s529 = smul.u32 2, %s28
        %p530 = scmp.lt.s32.totalorder %s529, 1
        %s531 = scalar_select %p530, %s529, 1
        %s532 = smul.addr %s531, 16
        %s533 = smul.addr %s532, 8
        %s534 = scalar_lea.vmem %s2, %s533
        %p535 = pneg %p113
        %p536 = pneg %p110
        %p537 = scmp.lt.s32.totalorder %s28, 0
        %s538 = scalar_select %p537, %s28, 0
        %s539 = smul.addr %s538, 2
        %s540 = scalar_lea.vmem %s3, %s539
        %p541 = pneg %p139
        %p542 = pneg %p136
        %s543 = smul.u32 2, %s28
        %p544 = scmp.lt.s32.totalorder %s543, 1
        %s545 = scalar_select %p544, %s543, 1
        %s546 = smul.addr %s545, 16
        %s547 = smul.addr %s546, 8
        %s548 = scalar_lea.vmem %s4, %s547
        %p549 = pneg %p165
        %p550 = pneg %p162
        %p551 = pneg %p186
        %p552 = pneg %p183
        %p553 = pneg %p207
        %p554 = pneg %p204
        %p555 = pneg %p228
        %p556 = pneg %p225
        %p557 = pneg %p249
        %p558 = pneg %p246
        %p559 = pneg %p270
        %p560 = pneg %p267
        %p561 = pneg %p291
        %p562 = pneg %p288
        %p563 = pneg %p319
        %p564 = pneg %p316
        %s565 = sand.u32 %s306, 1
        %s566 = sand.u32 %s306, 1
        %s567 = smul.addr %s566, 16
        %s568 = scalar_lea.vmem [#allocation5], %s567
        %p569 = pneg %p347
        %p570 = pneg %p344
        %s571 = sand.u32 %s334, 1
        %s572 = sand.u32 %s334, 1
        %s573 = smul.addr %s572, 16
        %s574 = scalar_lea.vmem [#allocation6], %s573
        %s575 = smul.u32 2, %s28
        %s576 = smul.u32 2, %s28
        %s577 = smul.u32 2, %s28
        %p578 = scmp.lt.s32.totalorder %s577, 1
        %s579 = scalar_select %p578, %s577, 1
        %s580 = smul.addr %s579, 16
        %s581 = smul.addr %s580, 8
        %s582 = scalar_lea.vmem %s2, %s581
        %s583 = smul.u32 2, %s28
        %p584 = scmp.lt.s32.totalorder %s28, 0
        %s585 = scalar_select %p584, %s28, 0
        %s586 = smul.addr %s585, 2
        %s587 = scalar_lea.vmem %s3, %s586
        %s588 = smul.u32 2, %s28
        %p589 = scmp.lt.s32.totalorder %s588, 1
        %s590 = scalar_select %p589, %s588, 1
        %s591 = smul.addr %s590, 16
        %s592 = smul.addr %s591, 8
        %s593 = scalar_lea.vmem %s4, %s592
        %s594 = smul.u32 2, %s28
        %s595 = smul.u32 2, %s28
        %s596 = smul.u32 2, %s28
        %p597 = scmp.eq.s32.totalorder %s29, 0
        // Predicated region
        $region126: #{match_attention_forward.1} parent=116 // pred_check
          %p598 = pneg %p597
        $region127: #{match_attention_forward.1} parent=116 // pred_check_branch
          %600 = sbr.rel (%p598) target = $region129
        $region128: #{match_attention_forward.1} parent=116 // pred_region
          %601 = vst [vmem:[#allocation2] sm:$0x3] 0.0
        $region129: #{match_attention_forward.1} parent=116 // pred_fallthru
          _
        %v602 = vld [vmem:[%s587] sm:$0x3]
        %vm603 = vcmp.gt.f32.partialorder %v602, 0.0
        %v604 = vld [vmem:[%s5] sm:$0x1]
        %v605 = vld [vmem:[%s10] sm:$0x3f]
        %v606 = vld [vmem:[#allocation2] sm:$0x3]
        %v607 = vld [vmem:[%s506] sm:$0x1]
        %v608 = vld [vmem:[%s506 + $0x8] sm:$0x1]
        %v609 = vld [vmem:[%s513] ss:$8 sm:$0x3]
        %s610 = scalar_lea.vmem %s513, 16 [#allocation4]
        %v611 = vld [vmem:[%s610] ss:$8 sm:$0x3]
        %v612 = vld [vmem:[%s6] sm:$0xff]
        %v613 = vld [vmem:[%s6 + $0x8] sm:$0xff]
        %v614 = vld [vmem:[%s6 + $0x10] sm:$0xff]
        %v615 = vld [vmem:[%s6 + $0x18] sm:$0xff]
        %v616 = vld [vmem:[%s6 + $0x20] sm:$0xff]
        %v617 = vld [vmem:[%s6 + $0x28] sm:$0xff]
        %v618 = vld [vmem:[%s6 + $0x30] sm:$0xff]
        %v619 = vld [vmem:[%s6 + $0x38] sm:$0xff]
        %v620 = vld [vmem:[%s6 + $0x40] sm:$0xff]
        %v621 = vld [vmem:[%s6 + $0x48] sm:$0xff]
        %v622 = vld [vmem:[%s6 + $0x50] sm:$0xff]
        %v623 = vld [vmem:[%s6 + $0x58] sm:$0xff]
        %v624 = vld [vmem:[%s6 + $0x60] sm:$0xff]
        %v625 = vld [vmem:[%s6 + $0x68] sm:$0xff]
        %v626 = vld [vmem:[%s6 + $0x70] sm:$0xff]
        %v627 = vld [vmem:[%s6 + $0x78] sm:$0xff]
        %v628 = vld [vmem:[%s6 + $0x80] sm:$0xff]
        %v629 = vld [vmem:[%s6 + $0x88] sm:$0xff]
        %v630 = vld [vmem:[%s6 + $0x90] sm:$0xff]
        %v631 = vld [vmem:[%s6 + $0x98] sm:$0xff]
        %v632 = vld [vmem:[%s6 + $0xa0] sm:$0xff]
        %v633 = vld [vmem:[%s6 + $0xa8] sm:$0xff]
        %v634 = vld [vmem:[%s6 + $0xb0] sm:$0xff]
        %v635 = vld [vmem:[%s6 + $0xb8] sm:$0xff]
        %v636 = vld [vmem:[%s6 + $0xc0] sm:$0xff]
        %v637 = vld [vmem:[%s6 + $0xc8] sm:$0xff]
        %v638 = vld [vmem:[%s6 + $0xd0] sm:$0xff]
        %v639 = vld [vmem:[%s6 + $0xd8] sm:$0xff]
        %v640 = vld [vmem:[%s6 + $0xe0] sm:$0xff]
        %v641 = vld [vmem:[%s6 + $0xe8] sm:$0xff]
        %v642 = vld [vmem:[%s6 + $0xf0] sm:$0xff]
        %v643 = vld [vmem:[%s6 + $0xf8] sm:$0xff]
        %v644 = vld [vmem:[%s6 + $0x100] sm:$0xff]
        %v645 = vld [vmem:[%s6 + $0x108] sm:$0xff]
        %v646 = vld [vmem:[%s6 + $0x110] sm:$0xff]
        %v647 = vld [vmem:[%s6 + $0x118] sm:$0xff]
        %v648 = vld [vmem:[%s6 + $0x120] sm:$0xff]
        %v649 = vld [vmem:[%s6 + $0x128] sm:$0xff]
        %v650 = vld [vmem:[%s6 + $0x130] sm:$0xff]
        %v651 = vld [vmem:[%s6 + $0x138] sm:$0xff]
        %v652 = vld [vmem:[%s6 + $0x140] sm:$0xff]
        %v653 = vld [vmem:[%s6 + $0x148] sm:$0xff]
        %v654 = vld [vmem:[%s6 + $0x150] sm:$0xff]
        %v655 = vld [vmem:[%s6 + $0x158] sm:$0xff]
        %v656 = vld [vmem:[%s6 + $0x160] sm:$0xff]
        %v657 = vld [vmem:[%s6 + $0x168] sm:$0xff]
        %v658 = vld [vmem:[%s6 + $0x170] sm:$0xff]
        %v659 = vld [vmem:[%s6 + $0x178] sm:$0xff]
        %v660 = vld [vmem:[%s6 + $0x180] sm:$0xff]
        %v661 = vld [vmem:[%s6 + $0x188] sm:$0xff]
        %v662 = vld [vmem:[%s6 + $0x190] sm:$0xff]
        %v663 = vld [vmem:[%s6 + $0x198] sm:$0xff]
        %v664 = vld [vmem:[%s6 + $0x1a0] sm:$0xff]
        %v665 = vld [vmem:[%s6 + $0x1a8] sm:$0xff]
        %v666 = vld [vmem:[%s6 + $0x1b0] sm:$0xff]
        %v667 = vld [vmem:[%s6 + $0x1b8] sm:$0xff]
        %v668 = vld [vmem:[%s6 + $0x1c0] sm:$0xff]
        %v669 = vld [vmem:[%s6 + $0x1c8] sm:$0xff]
        %v670 = vld [vmem:[%s6 + $0x1d0] sm:$0xff]
        %v671 = vld [vmem:[%s6 + $0x1d8] sm:$0xff]
        %v672 = vld [vmem:[%s6 + $0x1e0] sm:$0xff]
        %v673 = vld [vmem:[%s6 + $0x1e8] sm:$0xff]
        %v674 = vld [vmem:[%s6 + $0x1f0] sm:$0xff]
        %v675 = vld [vmem:[%s6 + $0x1f8] sm:$0xff]
        %676 = vmatpush.msra.mxu0 %v672
        %677 = vmatpush.msra.mxu0 %v668
        %678 = vmatpush.msra.mxu0 %v664
        %679 = vmatpush.msra.mxu0 %v660
        %680 = vmatpush.msra.mxu0 %v656
        %681 = vmatpush.msra.mxu0 %v652
        %682 = vmatpush.msra.mxu0 %v648
        %683 = vmatpush.msra.mxu0 %v644
        %684 = vmatpush.msra.mxu0 %v640
        %685 = vmatpush.msra.mxu0 %v636
        %686 = vmatpush.msra.mxu0 %v632
        %687 = vmatpush.msra.mxu0 %v628
        %688 = vmatpush.msra.mxu0 %v624
        %689 = vmatpush.msra.mxu0 %v620
        %690 = vmatpush.msra.mxu0 %v616
        %691 = vmatpush.msra.mxu0 %v612
        %692 = vmatmul.f32.gmra.mxu0 %v606
        %v693 = vpop.f32.mrf.mxu0
        %v694 = vadd.f32 0.0, %v693
        %695 = vdwg.mxu0
        %696 = vmatpush.msra.mxu0 %v673
        %697 = vmatpush.msra.mxu0 %v669
        %698 = vmatpush.msra.mxu0 %v665
        %699 = vmatpush.msra.mxu0 %v661
        %700 = vmatpush.msra.mxu0 %v657
        %701 = vmatpush.msra.mxu0 %v653
        %702 = vmatpush.msra.mxu0 %v649
        %703 = vmatpush.msra.mxu0 %v645
        %704 = vmatpush.msra.mxu0 %v641
        %705 = vmatpush.msra.mxu0 %v637
        %706 = vmatpush.msra.mxu0 %v633
        %707 = vmatpush.msra.mxu0 %v629
        %708 = vmatpush.msra.mxu0 %v625
        %709 = vmatpush.msra.mxu0 %v621
        %710 = vmatpush.msra.mxu0 %v617
        %711 = vmatpush.msra.mxu0 %v613
        %712 = vmatmul.f32.gmra.mxu0 %v606
        %v713 = vpop.f32.mrf.mxu0
        %v714 = vadd.f32 0.0, %v713
        %715 = vdwg.mxu0
        %716 = vmatpush.msra.mxu0 %v674
        %717 = vmatpush.msra.mxu0 %v670
        %718 = vmatpush.msra.mxu0 %v666
        %719 = vmatpush.msra.mxu0 %v662
        %720 = vmatpush.msra.mxu0 %v658
        %721 = vmatpush.msra.mxu0 %v654
        %722 = vmatpush.msra.mxu0 %v650
        %723 = vmatpush.msra.mxu0 %v646
        %724 = vmatpush.msra.mxu0 %v642
        %725 = vmatpush.msra.mxu0 %v638
        %726 = vmatpush.msra.mxu0 %v634
        %727 = vmatpush.msra.mxu0 %v630
        %728 = vmatpush.msra.mxu0 %v626
        %729 = vmatpush.msra.mxu0 %v622
        %730 = vmatpush.msra.mxu0 %v618
        %731 = vmatpush.msra.mxu0 %v614
        %732 = vmatmul.f32.gmra.mxu0 %v606
        %v733 = vpop.f32.mrf.mxu0
        %v734 = vadd.f32 0.0, %v733
        %735 = vdwg.mxu0
        %736 = vmatpush.msra.mxu0 %v675
        %737 = vmatpush.msra.mxu0 %v671
        %738 = vmatpush.msra.mxu0 %v667
        %739 = vmatpush.msra.mxu0 %v663
        %740 = vmatpush.msra.mxu0 %v659
        %741 = vmatpush.msra.mxu0 %v655
        %742 = vmatpush.msra.mxu0 %v651
        %743 = vmatpush.msra.mxu0 %v647
        %744 = vmatpush.msra.mxu0 %v643
        %745 = vmatpush.msra.mxu0 %v639
        %746 = vmatpush.msra.mxu0 %v635
        %747 = vmatpush.msra.mxu0 %v631
        %748 = vmatpush.msra.mxu0 %v627
        %749 = vmatpush.msra.mxu0 %v623
        %750 = vmatpush.msra.mxu0 %v619
        %751 = vmatpush.msra.mxu0 %v615
        %752 = vmatmul.f32.gmra.mxu0 %v606
        %v753 = vpop.f32.mrf.mxu0
        %v754 = vadd.f32 0.0, %v753
        %755 = vdwg.mxu0
        %v757 = vrot.slane %v694, 1
        %v759 = vadd.f32 %v609, %v694
        %v760 = vadd.f32 %v611, %v757
        %v761 = vld [vmem:[%s593] sm:$0xff]
        %v762 = vld [vmem:[%s593 + $0x8] sm:$0xff]
        %v763 = vld [vmem:[%s593 + $0x10] sm:$0xff]
        %v764 = vld [vmem:[%s593 + $0x18] sm:$0xff]
        %v765 = vld [vmem:[%s593 + $0x20] sm:$0xff]
        %v766 = vld [vmem:[%s593 + $0x28] sm:$0xff]
        %v767 = vld [vmem:[%s593 + $0x30] sm:$0xff]
        %v768 = vld [vmem:[%s593 + $0x38] sm:$0xff]
        %v769 = vld [vmem:[%s593 + $0x40] sm:$0xff]
        %v770 = vld [vmem:[%s593 + $0x48] sm:$0xff]
        %v771 = vld [vmem:[%s593 + $0x50] sm:$0xff]
        %v772 = vld [vmem:[%s593 + $0x58] sm:$0xff]
        %v773 = vld [vmem:[%s593 + $0x60] sm:$0xff]
        %v774 = vld [vmem:[%s593 + $0x68] sm:$0xff]
        %v775 = vld [vmem:[%s593 + $0x70] sm:$0xff]
        %v776 = vld [vmem:[%s593 + $0x78] sm:$0xff]
        %v777 = vld [vmem:[%s593 + $0x80] sm:$0xff]
        %v778 = vld [vmem:[%s593 + $0x88] sm:$0xff]
        %v779 = vld [vmem:[%s593 + $0x90] sm:$0xff]
        %v780 = vld [vmem:[%s593 + $0x98] sm:$0xff]
        %v781 = vld [vmem:[%s593 + $0xa0] sm:$0xff]
        %v782 = vld [vmem:[%s593 + $0xa8] sm:$0xff]
        %v783 = vld [vmem:[%s593 + $0xb0] sm:$0xff]
        %v784 = vld [vmem:[%s593 + $0xb8] sm:$0xff]
        %v785 = vld [vmem:[%s593 + $0xc0] sm:$0xff]
        %v786 = vld [vmem:[%s593 + $0xc8] sm:$0xff]
        %v787 = vld [vmem:[%s593 + $0xd0] sm:$0xff]
        %v788 = vld [vmem:[%s593 + $0xd8] sm:$0xff]
        %v789 = vld [vmem:[%s593 + $0xe0] sm:$0xff]
        %v790 = vld [vmem:[%s593 + $0xe8] sm:$0xff]
        %v791 = vld [vmem:[%s593 + $0xf0] sm:$0xff]
        %v792 = vld [vmem:[%s593 + $0xf8] sm:$0xff]
        %v795 = vperm.slane %v759, 0
        %v796 = vperm.slane %v760, 0
        %v799 = vadd.f32 %v761, %v795
        %v800 = vadd.f32 %v762, %v795
        %v801 = vadd.f32 %v763, %v795
        %v802 = vadd.f32 %v764, %v795
        %v803 = vadd.f32 %v765, %v795
        %v804 = vadd.f32 %v766, %v795
        %v805 = vadd.f32 %v767, %v795
        %v806 = vadd.f32 %v768, %v795
        %v807 = vadd.f32 %v769, %v795
        %v808 = vadd.f32 %v770, %v795
        %v809 = vadd.f32 %v771, %v795
        %v810 = vadd.f32 %v772, %v795
        %v811 = vadd.f32 %v773, %v795
        %v812 = vadd.f32 %v774, %v795
        %v813 = vadd.f32 %v775, %v795
        %v814 = vadd.f32 %v776, %v795
        %v815 = vadd.f32 %v777, %v796
        %v816 = vadd.f32 %v778, %v796
        %v817 = vadd.f32 %v779, %v796
        %v818 = vadd.f32 %v780, %v796
        %v819 = vadd.f32 %v781, %v796
        %v820 = vadd.f32 %v782, %v796
        %v821 = vadd.f32 %v783, %v796
        %v822 = vadd.f32 %v784, %v796
        %v823 = vadd.f32 %v785, %v796
        %v824 = vadd.f32 %v786, %v796
        %v825 = vadd.f32 %v787, %v796
        %v826 = vadd.f32 %v788, %v796
        %v827 = vadd.f32 %v789, %v796
        %v828 = vadd.f32 %v790, %v796
        %v829 = vadd.f32 %v791, %v796
        %v830 = vadd.f32 %v792, %v796
        %v831 = vtanh.pop %v799
        %v832 = vtanh.pop %v800
        %v833 = vtanh.pop %v801
        %v834 = vtanh.pop %v802
        %v835 = vtanh.pop %v803
        %v836 = vtanh.pop %v804
        %v837 = vtanh.pop %v805
        %v838 = vtanh.pop %v806
        %v839 = vtanh.pop %v807
        %v840 = vtanh.pop %v808
        %v841 = vtanh.pop %v809
        %v842 = vtanh.pop %v810
        %v843 = vtanh.pop %v811
        %v844 = vtanh.pop %v812
        %v845 = vtanh.pop %v813
        %v846 = vtanh.pop %v814
        %v847 = vtanh.pop %v815
        %v848 = vtanh.pop %v816
        %v849 = vtanh.pop %v817
        %v850 = vtanh.pop %v818
        %v851 = vtanh.pop %v819
        %v852 = vtanh.pop %v820
        %v853 = vtanh.pop %v821
        %v854 = vtanh.pop %v822
        %v855 = vtanh.pop %v823
        %v856 = vtanh.pop %v824
        %v857 = vtanh.pop %v825
        %v858 = vtanh.pop %v826
        %v859 = vtanh.pop %v827
        %v860 = vtanh.pop %v828
        %v861 = vtanh.pop %v829
        %v862 = vtanh.pop %v830
        %v864 = vperm.slane %v604, 0
        %v866 = vmul.f32 %v831, %v864
        %v867 = vmul.f32 %v832, %v864
        %v868 = vmul.f32 %v833, %v864
        %v869 = vmul.f32 %v834, %v864
        %v870 = vmul.f32 %v835, %v864
        %v871 = vmul.f32 %v836, %v864
        %v872 = vmul.f32 %v837, %v864
        %v873 = vmul.f32 %v838, %v864
        %v874 = vmul.f32 %v839, %v864
        %v875 = vmul.f32 %v840, %v864
        %v876 = vmul.f32 %v841, %v864
        %v877 = vmul.f32 %v842, %v864
        %v878 = vmul.f32 %v843, %v864
        %v879 = vmul.f32 %v844, %v864
        %v880 = vmul.f32 %v845, %v864
        %v881 = vmul.f32 %v846, %v864
        %v882 = vmul.f32 %v847, %v864
        %v883 = vmul.f32 %v848, %v864
        %v884 = vmul.f32 %v849, %v864
        %v885 = vmul.f32 %v850, %v864
        %v886 = vmul.f32 %v851, %v864
        %v887 = vmul.f32 %v852, %v864
        %v888 = vmul.f32 %v853, %v864
        %v889 = vmul.f32 %v854, %v864
        %v890 = vmul.f32 %v855, %v864
        %v891 = vmul.f32 %v856, %v864
        %v892 = vmul.f32 %v857, %v864
        %v893 = vmul.f32 %v858, %v864
        %v894 = vmul.f32 %v859, %v864
        %v895 = vmul.f32 %v860, %v864
        %v896 = vmul.f32 %v861, %v864
        %v897 = vmul.f32 %v862, %v864
        %898 = vadd.xlane.f32.xlu0 %v866
        %v899 = vpop.xlane.xlu0 %898
        %900 = vadd.xlane.f32.xlu0 %v867
        %v901 = vpop.xlane.xlu0 %900
        %902 = vadd.xlane.f32.xlu0 %v868
        %v903 = vpop.xlane.xlu0 %902
        %904 = vadd.xlane.f32.xlu0 %v869
        %v905 = vpop.xlane.xlu0 %904
        %906 = vadd.xlane.f32.xlu0 %v870
        %v907 = vpop.xlane.xlu0 %906
        %908 = vadd.xlane.f32.xlu0 %v871
        %v909 = vpop.xlane.xlu0 %908
        %910 = vadd.xlane.f32.xlu0 %v872
        %v911 = vpop.xlane.xlu0 %910
        %912 = vadd.xlane.f32.xlu0 %v873
        %v913 = vpop.xlane.xlu0 %912
        %914 = vadd.xlane.f32.xlu0 %v874
        %v915 = vpop.xlane.xlu0 %914
        %916 = vadd.xlane.f32.xlu0 %v875
        %v917 = vpop.xlane.xlu0 %916
        %918 = vadd.xlane.f32.xlu0 %v876
        %v919 = vpop.xlane.xlu0 %918
        %920 = vadd.xlane.f32.xlu0 %v877
        %v921 = vpop.xlane.xlu0 %920
        %922 = vadd.xlane.f32.xlu0 %v878
        %v923 = vpop.xlane.xlu0 %922
        %924 = vadd.xlane.f32.xlu0 %v879
        %v925 = vpop.xlane.xlu0 %924
        %926 = vadd.xlane.f32.xlu0 %v880
        %v927 = vpop.xlane.xlu0 %926
        %928 = vadd.xlane.f32.xlu0 %v881
        %v929 = vpop.xlane.xlu0 %928
        %930 = vadd.xlane.f32.xlu0 %v882
        %v931 = vpop.xlane.xlu0 %930
        %932 = vadd.xlane.f32.xlu0 %v883
        %v933 = vpop.xlane.xlu0 %932
        %934 = vadd.xlane.f32.xlu0 %v884
        %v935 = vpop.xlane.xlu0 %934
        %936 = vadd.xlane.f32.xlu0 %v885
        %v937 = vpop.xlane.xlu0 %936
        %938 = vadd.xlane.f32.xlu0 %v886
        %v939 = vpop.xlane.xlu0 %938
        %940 = vadd.xlane.f32.xlu0 %v887
        %v941 = vpop.xlane.xlu0 %940
        %942 = vadd.xlane.f32.xlu0 %v888
        %v943 = vpop.xlane.xlu0 %942
        %944 = vadd.xlane.f32.xlu0 %v889
        %v945 = vpop.xlane.xlu0 %944
        %946 = vadd.xlane.f32.xlu0 %v890
        %v947 = vpop.xlane.xlu0 %946
        %948 = vadd.xlane.f32.xlu0 %v891
        %v949 = vpop.xlane.xlu0 %948
        %950 = vadd.xlane.f32.xlu0 %v892
        %v951 = vpop.xlane.xlu0 %950
        %952 = vadd.xlane.f32.xlu0 %v893
        %v953 = vpop.xlane.xlu0 %952
        %954 = vadd.xlane.f32.xlu0 %v894
        %v955 = vpop.xlane.xlu0 %954
        %956 = vadd.xlane.f32.xlu0 %v895
        %v957 = vpop.xlane.xlu0 %956
        %958 = vadd.xlane.f32.xlu0 %v896
        %v959 = vpop.xlane.xlu0 %958
        %960 = vadd.xlane.f32.xlu0 %v897
        %v961 = vpop.xlane.xlu0 %960
        %v994 = vlaneseq
        %v995 = vand.u32 %v994, 127
        %v996 = vperm.slane %v899, %v995
        %v997 = vadd.s32 %v995, 4294967288
        %v998 = vperm.slane %v901, %v997
        %vm999 = vcmask 130112
        %v1000 = vsel %vm999, %v998, %v996
        %v1001 = vadd.s32 %v995, 4294967280
        %v1002 = vperm.slane %v903, %v1001
        %vm1003 = vcmask 195712
        %v1004 = vsel %vm1003, %v1002, %v1000
        %v1005 = vadd.s32 %v995, 4294967272
        %v1006 = vperm.slane %v905, %v1005
        %vm1007 = vcmask 261312
        %v1008 = vsel %vm1007, %v1006, %v1004
        %v1009 = vadd.s32 %v995, 4294967264
        %v1010 = vperm.slane %v907, %v1009
        %vm1011 = vcmask 326912
        %v1012 = vsel %vm1011, %v1010, %v1008
        %v1013 = vadd.s32 %v995, 4294967256
        %v1014 = vperm.slane %v909, %v1013
        %vm1015 = vcmask 392512
        %v1016 = vsel %vm1015, %v1014, %v1012
        %v1017 = vadd.s32 %v995, 4294967248
        %v1018 = vperm.slane %v911, %v1017
        %vm1019 = vcmask 458112
        %v1020 = vsel %vm1019, %v1018, %v1016
        %v1021 = vadd.s32 %v995, 4294967240
        %v1022 = vperm.slane %v913, %v1021
        %vm1023 = vcmask 523712
        %v1024 = vsel %vm1023, %v1022, %v1020
        %v1025 = vadd.s32 %v995, 4294967232
        %v1026 = vperm.slane %v915, %v1025
        %vm1027 = vcmask 589312
        %v1028 = vsel %vm1027, %v1026, %v1024
        %v1029 = vadd.s32 %v995, 4294967224
        %v1030 = vperm.slane %v917, %v1029
        %vm1031 = vcmask 654912
        %v1032 = vsel %vm1031, %v1030, %v1028
        %v1033 = vadd.s32 %v995, 4294967216
        %v1034 = vperm.slane %v919, %v1033
        %vm1035 = vcmask 720512
        %v1036 = vsel %vm1035, %v1034, %v1032
        %v1037 = vadd.s32 %v995, 4294967208
        %v1038 = vperm.slane %v921, %v1037
        %vm1039 = vcmask 786112
        %v1040 = vsel %vm1039, %v1038, %v1036
        %v1041 = vadd.s32 %v995, 4294967200
        %v1042 = vperm.slane %v923, %v1041
        %vm1043 = vcmask 851712
        %v1044 = vsel %vm1043, %v1042, %v1040
        %v1045 = vadd.s32 %v995, 4294967192
        %v1046 = vperm.slane %v925, %v1045
        %vm1047 = vcmask 917312
        %v1048 = vsel %vm1047, %v1046, %v1044
        %v1049 = vadd.s32 %v995, 4294967184
        %v1050 = vperm.slane %v927, %v1049
        %vm1051 = vcmask 982912
        %v1052 = vsel %vm1051, %v1050, %v1048
        %v1053 = vadd.s32 %v995, 4294967176
        %v1054 = vperm.slane %v929, %v1053
        %vm1055 = vcmask 1048512
        %v1056 = vsel %vm1055, %v1054, %v1052
        %v1057 = vperm.slane %v931, %v995
        %v1058 = vperm.slane %v933, %v997
        %v1059 = vsel %vm999, %v1058, %v1057
        %v1060 = vperm.slane %v935, %v1001
        %v1061 = vsel %vm1003, %v1060, %v1059
        %v1062 = vperm.slane %v937, %v1005
        %v1063 = vsel %vm1007, %v1062, %v1061
        %v1064 = vperm.slane %v939, %v1009
        %v1065 = vsel %vm1011, %v1064, %v1063
        %v1066 = vperm.slane %v941, %v1013
        %v1067 = vsel %vm1015, %v1066, %v1065
        %v1068 = vperm.slane %v943, %v1017
        %v1069 = vsel %vm1019, %v1068, %v1067
        %v1070 = vperm.slane %v945, %v1021
        %v1071 = vsel %vm1023, %v1070, %v1069
        %v1072 = vperm.slane %v947, %v1025
        %v1073 = vsel %vm1027, %v1072, %v1071
        %v1074 = vperm.slane %v949, %v1029
        %v1075 = vsel %vm1031, %v1074, %v1073
        %v1076 = vperm.slane %v951, %v1033
        %v1077 = vsel %vm1035, %v1076, %v1075
        %v1078 = vperm.slane %v953, %v1037
        %v1079 = vsel %vm1039, %v1078, %v1077
        %v1080 = vperm.slane %v955, %v1041
        %v1081 = vsel %vm1043, %v1080, %v1079
        %v1082 = vperm.slane %v957, %v1045
        %v1083 = vsel %vm1047, %v1082, %v1081
        %v1084 = vperm.slane %v959, %v1049
        %v1085 = vsel %vm1051, %v1084, %v1083
        %v1086 = vperm.slane %v961, %v1053
        %v1087 = vsel %vm1055, %v1086, %v1085
        %vm1088 = vcmask 1041409
        %v1089 = vsel %vm1088, %v1087, %v1056
        %v1091 = vsel %vm603, %v1089, -1e+30
        %vm1092 = vcmask 1041408
        %v1093 = vsel %vm1092, %v1091, -inf
        %1094 = vmax.xlane.f32.xlu0 %v1093
        %v1095 = vpop.xlane.xlu0 %1094
        %v1096 = vsub.f32 %v1091, %v1095
        %v1097 = vmul.f32 %v1096, 1.442695
        %v1098 = vpow.pop %v1097
        %v1099 = vmul.f32 %v1098, %v602
        %v1100 = vsel %vm1092, %v1099, 0.0
        %1101 = vadd.xlane.f32.xlu0 %v1100
        %v1102 = vpop.xlane.xlu0 %1101
        %v1103 = vadd.f32 %v1102, 1e-13
        %v1104 = vrcp.pop %v1103
        %v1105 = vmul.f32 %v1103, %v1104
        %v1106 = vsub.f32 1.0, %v1105
        %v1107 = vmul.f32 %v1104, %v1106
        %v1108 = vadd.f32 %v1104, %v1107
        %vm1109 = vweird.f32 %v1103
        %vm1110 = vweird.f32 %v1104
        %vm1111 = vmor %vm1109, %vm1110
        %v1112 = vsel %vm1111, %v1104, %v1108
        %v1113 = vand.u32 2147483647, %v1103
        %vm1114 = vcmp.eq.f32.partialorder %v1113, 8.507059e+37
        %v1115 = vand.u32 %v1103, 2147483648
        %v1116 = vor.u32 1.1754944e-38, %v1115
        %v1117 = vsel %vm1114, %v1116, %v1112
        %v1118 = vmul.f32 %v1099, %v1117
        %v1120 = vrot.slane %v1118, 1
        %v1122 = vld [vmem:[%s582] sm:$0xff]
        %v1123 = vld [vmem:[%s582 + $0x8] sm:$0xff]
        %v1124 = vld [vmem:[%s582 + $0x10] sm:$0xff]
        %v1125 = vld [vmem:[%s582 + $0x18] sm:$0xff]
        %v1126 = vld [vmem:[%s582 + $0x20] sm:$0xff]
        %v1127 = vld [vmem:[%s582 + $0x28] sm:$0xff]
        %v1128 = vld [vmem:[%s582 + $0x30] sm:$0xff]
        %v1129 = vld [vmem:[%s582 + $0x38] sm:$0xff]
        %v1130 = vld [vmem:[%s582 + $0x40] sm:$0xff]
        %v1131 = vld [vmem:[%s582 + $0x48] sm:$0xff]
        %v1132 = vld [vmem:[%s582 + $0x50] sm:$0xff]
        %v1133 = vld [vmem:[%s582 + $0x58] sm:$0xff]
        %v1134 = vld [vmem:[%s582 + $0x60] sm:$0xff]
        %v1135 = vld [vmem:[%s582 + $0x68] sm:$0xff]
        %v1136 = vld [vmem:[%s582 + $0x70] sm:$0xff]
        %v1137 = vld [vmem:[%s582 + $0x78] sm:$0xff]
        %v1138 = vld [vmem:[%s582 + $0x80] sm:$0xff]
        %v1139 = vld [vmem:[%s582 + $0x88] sm:$0xff]
        %v1140 = vld [vmem:[%s582 + $0x90] sm:$0xff]
        %v1141 = vld [vmem:[%s582 + $0x98] sm:$0xff]
        %v1142 = vld [vmem:[%s582 + $0xa0] sm:$0xff]
        %v1143 = vld [vmem:[%s582 + $0xa8] sm:$0xff]
        %v1144 = vld [vmem:[%s582 + $0xb0] sm:$0xff]
        %v1145 = vld [vmem:[%s582 + $0xb8] sm:$0xff]
        %v1146 = vld [vmem:[%s582 + $0xc0] sm:$0xff]
        %v1147 = vld [vmem:[%s582 + $0xc8] sm:$0xff]
        %v1148 = vld [vmem:[%s582 + $0xd0] sm:$0xff]
        %v1149 = vld [vmem:[%s582 + $0xd8] sm:$0xff]
        %v1150 = vld [vmem:[%s582 + $0xe0] sm:$0xff]
        %v1151 = vld [vmem:[%s582 + $0xe8] sm:$0xff]
        %v1152 = vld [vmem:[%s582 + $0xf0] sm:$0xff]
        %v1153 = vld [vmem:[%s582 + $0xf8] sm:$0xff]
        %1154 = vmatpush.msra.mxu0 %v1137
        %1155 = vmatpush.msra.mxu0 %v1136
        %1156 = vmatpush.msra.mxu0 %v1135
        %1157 = vmatpush.msra.mxu0 %v1134
        %1158 = vmatpush.msra.mxu0 %v1133
        %1159 = vmatpush.msra.mxu0 %v1132
        %1160 = vmatpush.msra.mxu0 %v1131
        %1161 = vmatpush.msra.mxu0 %v1130
        %1162 = vmatpush.msra.mxu0 %v1129
        %1163 = vmatpush.msra.mxu0 %v1128
        %1164 = vmatpush.msra.mxu0 %v1127
        %1165 = vmatpush.msra.mxu0 %v1126
        %1166 = vmatpush.msra.mxu0 %v1125
        %1167 = vmatpush.msra.mxu0 %v1124
        %1168 = vmatpush.msra.mxu0 %v1123
        %1169 = vmatpush.msra.mxu0 %v1122
        %1170 = vmatmul.f32.gmra.mxu0 %v1118
        %v1171 = vpop.f32.mrf.mxu0
        %v1172 = vadd.f32 0.0, %v1171
        %1173 = vdwg.mxu0
        %1174 = vmatpush.msra.mxu0 %v1153
        %1175 = vmatpush.msra.mxu0 %v1152
        %1176 = vmatpush.msra.mxu0 %v1151
        %1177 = vmatpush.msra.mxu0 %v1150
        %1178 = vmatpush.msra.mxu0 %v1149
        %1179 = vmatpush.msra.mxu0 %v1148
        %1180 = vmatpush.msra.mxu0 %v1147
        %1181 = vmatpush.msra.mxu0 %v1146
        %1182 = vmatpush.msra.mxu0 %v1145
        %1183 = vmatpush.msra.mxu0 %v1144
        %1184 = vmatpush.msra.mxu0 %v1143
        %1185 = vmatpush.msra.mxu0 %v1142
        %1186 = vmatpush.msra.mxu0 %v1141
        %1187 = vmatpush.msra.mxu0 %v1140
        %1188 = vmatpush.msra.mxu0 %v1139
        %1189 = vmatpush.msra.mxu0 %v1138
        %1190 = vmatmul.f32.gmra.mxu0 %v1120
        %v1191 = vpop.f32.mrf.mxu0
        %v1192 = vadd.f32 0.0, %v1191
        %1193 = vdwg.mxu0
        %v1194 = vld [vmem:[%s7] sm:$0xff]
        %v1195 = vld [vmem:[%s7 + $0x8] sm:$0xff]
        %v1198 = vrot.slane %v1192, 7
        %v1199 = vsel %vm1088, %v1198, %v1172
        %vm1200 = vcmask 130048
        %v1201 = vsel %vm1200, %v1199, 0
        %1203 = vmatpush.msra.mxu0 0.0
        %1204 = vmatpush.msra.mxu0 0.0
        %1205 = vmatpush.msra.mxu0 0.0
        %1206 = vmatpush.msra.mxu0 0.0
        %1207 = vmatpush.msra.mxu0 0.0
        %1208 = vmatpush.msra.mxu0 0.0
        %1209 = vmatpush.msra.mxu0 0.0
        %1210 = vmatpush.msra.mxu0 0.0
        %1211 = vmatpush.msra.mxu0 0.0
        %1212 = vmatpush.msra.mxu0 0.0
        %1213 = vmatpush.msra.mxu0 0.0
        %1214 = vmatpush.msra.mxu0 0.0
        %1215 = vmatpush.msra.mxu0 0.0
        %1216 = vmatpush.msra.mxu0 0.0
        %1217 = vmatpush.msra.mxu0 %v1195
        %1218 = vmatpush.msra.mxu0 %v1194
        %1219 = vmatmul.f32.gmra.mxu0 %v1201
        %v1220 = vpop.f32.mrf.mxu0
        %v1221 = vadd.f32 0.0, %v1220
        %1222 = vdwg.mxu0
        %v1225 = vrot.slane %v609, 1
        %v1226 = vrot.slane %v611, 1
        %v1230 = vrot.slane %v1221, 1
        %v1232 = vadd.f32 %v1225, %v1221
        %v1233 = vadd.f32 %v1226, %v1230
        %v1234 = vxor.u32 %v1232, 2147483648
        %v1235 = vxor.u32 %v1233, 2147483648
        %v1236 = vmul.f32 %v1234, 1.442695
        %v1237 = vpow.pop %v1236
        %v1238 = vmul.f32 %v1235, 1.442695
        %v1239 = vpow.pop %v1238
        %v1240 = vadd.f32 %v1237, 1.0
        %v1241 = vadd.f32 %v1239, 1.0
        %v1242 = vrcp.pop %v1240
        %v1243 = vmul.f32 %v1240, %v1242
        %v1244 = vsub.f32 1.0, %v1243
        %v1245 = vmul.f32 %v1242, %v1244
        %v1246 = vadd.f32 %v1242, %v1245
        %vm1247 = vweird.f32 %v1240
        %vm1248 = vweird.f32 %v1242
        %vm1249 = vmor %vm1247, %vm1248
        %v1250 = vsel %vm1249, %v1242, %v1246
        %v1251 = vand.u32 2147483647, %v1240
        %vm1252 = vcmp.eq.f32.partialorder %v1251, 8.507059e+37
        %v1253 = vand.u32 %v1240, 2147483648
        %v1254 = vor.u32 1.1754944e-38, %v1253
        %v1255 = vsel %vm1252, %v1254, %v1250
        %v1256 = vmul.f32 1.0, %v1255
        %v1257 = vrcp.pop %v1241
        %v1258 = vmul.f32 %v1241, %v1257
        %v1259 = vsub.f32 1.0, %v1258
        %v1260 = vmul.f32 %v1257, %v1259
        %v1261 = vadd.f32 %v1257, %v1260
        %vm1262 = vweird.f32 %v1241
        %vm1263 = vweird.f32 %v1257
        %vm1264 = vmor %vm1262, %vm1263
        %v1265 = vsel %vm1264, %v1257, %v1261
        %v1266 = vand.u32 2147483647, %v1241
        %vm1267 = vcmp.eq.f32.partialorder %v1266, 8.507059e+37
        %v1268 = vand.u32 %v1241, 2147483648
        %v1269 = vor.u32 1.1754944e-38, %v1268
        %v1270 = vsel %vm1267, %v1269, %v1265
        %v1271 = vmul.f32 1.0, %v1270
        %v1272 = vmul.f32 %v1256, %v607
        %v1273 = vmul.f32 %v1271, %v608
        %1274 = vrot.lane.b32.xlu0 %v1172, 16
        %v1275 = vpop.permute.xlu0 %1274
        %1276 = vrot.lane.b32.xlu0 %v1192, 16
        %v1277 = vpop.permute.xlu0 %1276
        %v1280 = vmul.f32 %v1256, %v1275
        %v1281 = vmul.f32 %v1271, %v1277
        %v1282 = vld [vmem:[%s8] sm:$0xff]
        %v1283 = vld [vmem:[%s8 + $0x8] sm:$0xff]
        %v1284 = vld [vmem:[%s8 + $0x10] sm:$0xff]
        %v1285 = vld [vmem:[%s8 + $0x18] sm:$0xff]
        %v1286 = vld [vmem:[%s8 + $0x20] sm:$0xff]
        %v1287 = vld [vmem:[%s8 + $0x28] sm:$0xff]
        %v1288 = vld [vmem:[%s9] sm:$0xff]
        %v1289 = vld [vmem:[%s9 + $0x8] sm:$0xff]
        %v1290 = vld [vmem:[%s9 + $0x10] sm:$0xff]
        %v1291 = vld [vmem:[%s9 + $0x18] sm:$0xff]
        %v1292 = vld [vmem:[%s9 + $0x20] sm:$0xff]
        %v1293 = vld [vmem:[%s9 + $0x28] sm:$0xff]
        %1296 = vst [vmem:[#allocation1] ss:$9 sm:$0xff] %v1280
        %s1297 = scalar_lea.vmem [#allocation1], 1
        %1298 = vst [vmem:[%s1297] ss:$9 sm:$0xff] %v1281
        %v1299 = vld [vmem:[#allocation1] sm:$0xff]
        %1300 = vrot.lane.b32.xlu0 %v1299, 112
        %v1301 = vpop.permute.xlu0 %1300
        %v1302 = vsel %vm1200, %v1301, 0
        %1304 = vmatpush.msra.mxu0 0.0
        %1305 = vmatpush.msra.mxu0 0.0
        %1306 = vmatpush.msra.mxu0 0.0
        %1307 = vmatpush.msra.mxu0 0.0
        %1308 = vmatpush.msra.mxu0 0.0
        %1309 = vmatpush.msra.mxu0 0.0
        %1310 = vmatpush.msra.mxu0 0.0
        %1311 = vmatpush.msra.mxu0 0.0
        %1312 = vmatpush.msra.mxu0 0.0
        %1313 = vmatpush.msra.mxu0 0.0
        %1314 = vmatpush.msra.mxu0 0.0
        %1315 = vmatpush.msra.mxu0 0.0
        %1316 = vmatpush.msra.mxu0 0.0
        %1317 = vmatpush.msra.mxu0 0.0
        %1318 = vmatpush.msra.mxu0 %v1291
        %1319 = vmatpush.msra.mxu0 %v1288
        %1320 = vmatmul.f32.gmra.mxu0 %v1302
        %v1321 = vpop.f32.mrf.mxu0
        %v1322 = vadd.f32 0.0, %v1321
        %1323 = vdwg.mxu0
        %1324 = vmatpush.msra.mxu0 0.0
        %1325 = vmatpush.msra.mxu0 0.0
        %1326 = vmatpush.msra.mxu0 0.0
        %1327 = vmatpush.msra.mxu0 0.0
        %1328 = vmatpush.msra.mxu0 0.0
        %1329 = vmatpush.msra.mxu0 0.0
        %1330 = vmatpush.msra.mxu0 0.0
        %1331 = vmatpush.msra.mxu0 0.0
        %1332 = vmatpush.msra.mxu0 0.0
        %1333 = vmatpush.msra.mxu0 0.0
        %1334 = vmatpush.msra.mxu0 0.0
        %1335 = vmatpush.msra.mxu0 0.0
        %1336 = vmatpush.msra.mxu0 0.0
        %1337 = vmatpush.msra.mxu0 0.0
        %1338 = vmatpush.msra.mxu0 %v1292
        %1339 = vmatpush.msra.mxu0 %v1289
        %1340 = vmatmul.f32.gmra.mxu0 %v1302
        %v1341 = vpop.f32.mrf.mxu0
        %v1342 = vadd.f32 0.0, %v1341
        %1343 = vdwg.mxu0
        %1344 = vmatpush.msra.mxu0 0.0
        %1345 = vmatpush.msra.mxu0 0.0
        %1346 = vmatpush.msra.mxu0 0.0
        %1347 = vmatpush.msra.mxu0 0.0
        %1348 = vmatpush.msra.mxu0 0.0
        %1349 = vmatpush.msra.mxu0 0.0
        %1350 = vmatpush.msra.mxu0 0.0
        %1351 = vmatpush.msra.mxu0 0.0
        %1352 = vmatpush.msra.mxu0 0.0
        %1353 = vmatpush.msra.mxu0 0.0
        %1354 = vmatpush.msra.mxu0 0.0
        %1355 = vmatpush.msra.mxu0 0.0
        %1356 = vmatpush.msra.mxu0 0.0
        %1357 = vmatpush.msra.mxu0 0.0
        %1358 = vmatpush.msra.mxu0 %v1293
        %1359 = vmatpush.msra.mxu0 %v1290
        %1360 = vmatmul.f32.gmra.mxu0 %v1302
        %v1361 = vpop.f32.mrf.mxu0
        %v1362 = vadd.f32 0.0, %v1361
        %1363 = vdwg.mxu0
        %1366 = vst [vmem:[#allocation1] ss:$9 sm:$0xff] %v1272
        %s1367 = scalar_lea.vmem [#allocation1], 1
        %1368 = vst [vmem:[%s1367] ss:$9 sm:$0xff] %v1273
        %v1369 = vld [vmem:[#allocation1] sm:$0xff]
        %v1370 = vsel %vm1200, %v1369, 0
        %1372 = vmatpush.msra.mxu0 0.0
        %1373 = vmatpush.msra.mxu0 0.0
        %1374 = vmatpush.msra.mxu0 0.0
        %1375 = vmatpush.msra.mxu0 0.0
        %1376 = vmatpush.msra.mxu0 0.0
        %1377 = vmatpush.msra.mxu0 0.0
        %1378 = vmatpush.msra.mxu0 0.0
        %1379 = vmatpush.msra.mxu0 0.0
        %1380 = vmatpush.msra.mxu0 0.0
        %1381 = vmatpush.msra.mxu0 0.0
        %1382 = vmatpush.msra.mxu0 0.0
        %1383 = vmatpush.msra.mxu0 0.0
        %1384 = vmatpush.msra.mxu0 0.0
        %1385 = vmatpush.msra.mxu0 0.0
        %1386 = vmatpush.msra.mxu0 %v1285
        %1387 = vmatpush.msra.mxu0 %v1282
        %1388 = vmatmul.f32.gmra.mxu0 %v1370
        %v1389 = vpop.f32.mrf.mxu0
        %v1390 = vadd.f32 %v1322, %v1389
        %1391 = vdwg.mxu0
        %1392 = vmatpush.msra.mxu0 0.0
        %1393 = vmatpush.msra.mxu0 0.0
        %1394 = vmatpush.msra.mxu0 0.0
        %1395 = vmatpush.msra.mxu0 0.0
        %1396 = vmatpush.msra.mxu0 0.0
        %1397 = vmatpush.msra.mxu0 0.0
        %1398 = vmatpush.msra.mxu0 0.0
        %1399 = vmatpush.msra.mxu0 0.0
        %1400 = vmatpush.msra.mxu0 0.0
        %1401 = vmatpush.msra.mxu0 0.0
        %1402 = vmatpush.msra.mxu0 0.0
        %1403 = vmatpush.msra.mxu0 0.0
        %1404 = vmatpush.msra.mxu0 0.0
        %1405 = vmatpush.msra.mxu0 0.0
        %1406 = vmatpush.msra.mxu0 %v1286
        %1407 = vmatpush.msra.mxu0 %v1283
        %1408 = vmatmul.f32.gmra.mxu0 %v1370
        %v1409 = vpop.f32.mrf.mxu0
        %v1410 = vadd.f32 %v1342, %v1409
        %1411 = vdwg.mxu0
        %1412 = vmatpush.msra.mxu0 0.0
        %1413 = vmatpush.msra.mxu0 0.0
        %1414 = vmatpush.msra.mxu0 0.0
        %1415 = vmatpush.msra.mxu0 0.0
        %1416 = vmatpush.msra.mxu0 0.0
        %1417 = vmatpush.msra.mxu0 0.0
        %1418 = vmatpush.msra.mxu0 0.0
        %1419 = vmatpush.msra.mxu0 0.0
        %1420 = vmatpush.msra.mxu0 0.0
        %1421 = vmatpush.msra.mxu0 0.0
        %1422 = vmatpush.msra.mxu0 0.0
        %1423 = vmatpush.msra.mxu0 0.0
        %1424 = vmatpush.msra.mxu0 0.0
        %1425 = vmatpush.msra.mxu0 0.0
        %1426 = vmatpush.msra.mxu0 %v1287
        %1427 = vmatpush.msra.mxu0 %v1284
        %1428 = vmatmul.f32.gmra.mxu0 %v1370
        %v1429 = vpop.f32.mrf.mxu0
        %v1430 = vadd.f32 %v1362, %v1429
        %1431 = vdwg.mxu0
        %v1433 = vperm.slane %v605, 0
        %v1434 = vperm.slane %v605, 2
        %v1435 = vperm.slane %v605, 4
        %v1439 = vperm.slane %v1433, 0
        %v1440 = vperm.slane %v1434, 0
        %v1441 = vperm.slane %v1435, 0
        %v1442 = vadd.f32 %v1390, %v1439
        %v1443 = vadd.f32 %v1410, %v1440
        %v1444 = vadd.f32 %v1430, %v1441
        %v1445 = vperm.slane %v605, 1
        %v1446 = vperm.slane %v605, 3
        %v1447 = vperm.slane %v605, 5
        %v1451 = vperm.slane %v1445, 1
        %v1452 = vperm.slane %v1446, 1
        %v1453 = vperm.slane %v1447, 1
        %v1454 = vadd.f32 %v714, %v1451
        %v1455 = vadd.f32 %v734, %v1452
        %v1456 = vadd.f32 %v754, %v1453
        %v1457 = vadd.f32 %v1442, %v1454
        %v1458 = vxor.u32 %v1457, 2147483648
        %v1459 = vmul.f32 %v1458, 1.442695
        %v1460 = vpow.pop %v1459
        %v1461 = vadd.f32 %v1460, 1.0
        %v1462 = vrcp.pop %v1461
        %v1463 = vmul.f32 %v1461, %v1462
        %v1464 = vsub.f32 1.0, %v1463
        %v1465 = vmul.f32 %v1462, %v1464
        %v1466 = vadd.f32 %v1462, %v1465
        %vm1467 = vweird.f32 %v1461
        %vm1468 = vweird.f32 %v1462
        %vm1469 = vmor %vm1467, %vm1468
        %v1470 = vsel %vm1469, %v1462, %v1466
        %v1471 = vand.u32 2147483647, %v1461
        %vm1472 = vcmp.eq.f32.partialorder %v1471, 8.507059e+37
        %v1473 = vand.u32 %v1461, 2147483648
        %v1474 = vor.u32 1.1754944e-38, %v1473
        %v1475 = vsel %vm1472, %v1474, %v1470
        %v1476 = vmul.f32 1.0, %v1475
        %v1477 = vadd.f32 %v1443, %v1455
        %v1478 = vxor.u32 %v1477, 2147483648
        %v1479 = vmul.f32 %v1478, 1.442695
        %v1480 = vpow.pop %v1479
        %v1481 = vadd.f32 %v1480, 1.0
        %v1482 = vrcp.pop %v1481
        %v1483 = vmul.f32 %v1481, %v1482
        %v1484 = vsub.f32 1.0, %v1483
        %v1485 = vmul.f32 %v1482, %v1484
        %v1486 = vadd.f32 %v1482, %v1485
        %vm1487 = vweird.f32 %v1481
        %vm1488 = vweird.f32 %v1482
        %vm1489 = vmor %vm1487, %vm1488
        %v1490 = vsel %vm1489, %v1482, %v1486
        %v1491 = vand.u32 2147483647, %v1481
        %vm1492 = vcmp.eq.f32.partialorder %v1491, 8.507059e+37
        %v1493 = vand.u32 %v1481, 2147483648
        %v1494 = vor.u32 1.1754944e-38, %v1493
        %v1495 = vsel %vm1492, %v1494, %v1490
        %v1496 = vmul.f32 1.0, %v1495
        %v1497 = vmul.f32 %v1476, %v1456
        %v1498 = vadd.f32 %v1444, %v1497
        %v1499 = vtanh.pop %v1498
        %v1500 = vsub.f32 1.0, %v1496
        %v1501 = vmul.f32 %v1500, %v1499
        %v1502 = vmul.f32 %v1496, %v606
        %v1503 = vadd.f32 %v1501, %v1502
        %v1505 = vrot.slane %v1503, 1
        %1507 = vst [vmem:[%s568] sm:$0x1] %v1503
        %1508 = vst [vmem:[%s568 + $0x8] sm:$0x1] %v1505
        %1509 = vst [vmem:[%s574] sm:$0x1] %v1118
        %1510 = vst [vmem:[%s574 + $0x8] sm:$0x1] %v1120
        %v1511 = vld [vmem:[%s506 + $0x1] sm:$0x1]
        %v1512 = vld [vmem:[%s506 + $0x9] sm:$0x1]
        %s1513 = scalar_lea.vmem %s513, 1 [#allocation4]
        %v1514 = vld [vmem:[%s1513] ss:$8 sm:$0x3]
        %s1515 = scalar_lea.vmem %s513, 17 [#allocation4]
        %v1516 = vld [vmem:[%s1515] ss:$8 sm:$0x3]
        %v1517 = vld [vmem:[%s6] sm:$0xff]
        %v1518 = vld [vmem:[%s6 + $0x8] sm:$0xff]
        %v1519 = vld [vmem:[%s6 + $0x10] sm:$0xff]
        %v1520 = vld [vmem:[%s6 + $0x18] sm:$0xff]
        %v1521 = vld [vmem:[%s6 + $0x20] sm:$0xff]
        %v1522 = vld [vmem:[%s6 + $0x28] sm:$0xff]
        %v1523 = vld [vmem:[%s6 + $0x30] sm:$0xff]
        %v1524 = vld [vmem:[%s6 + $0x38] sm:$0xff]
        %v1525 = vld [vmem:[%s6 + $0x40] sm:$0xff]
        %v1526 = vld [vmem:[%s6 + $0x48] sm:$0xff]
        %v1527 = vld [vmem:[%s6 + $0x50] sm:$0xff]
        %v1528 = vld [vmem:[%s6 + $0x58] sm:$0xff]
        %v1529 = vld [vmem:[%s6 + $0x60] sm:$0xff]
        %v1530 = vld [vmem:[%s6 + $0x68] sm:$0xff]
        %v1531 = vld [vmem:[%s6 + $0x70] sm:$0xff]
        %v1532 = vld [vmem:[%s6 + $0x78] sm:$0xff]
        %v1533 = vld [vmem:[%s6 + $0x80] sm:$0xff]
        %v1534 = vld [vmem:[%s6 + $0x88] sm:$0xff]
        %v1535 = vld [vmem:[%s6 + $0x90] sm:$0xff]
        %v1536 = vld [vmem:[%s6 + $0x98] sm:$0xff]
        %v1537 = vld [vmem:[%s6 + $0xa0] sm:$0xff]
        %v1538 = vld [vmem:[%s6 + $0xa8] sm:$0xff]
        %v1539 = vld [vmem:[%s6 + $0xb0] sm:$0xff]
        %v1540 = vld [vmem:[%s6 + $0xb8] sm:$0xff]
        %v1541 = vld [vmem:[%s6 + $0xc0] sm:$0xff]
        %v1542 = vld [vmem:[%s6 + $0xc8] sm:$0xff]
        %v1543 = vld [vmem:[%s6 + $0xd0] sm:$0xff]
        %v1544 = vld [vmem:[%s6 + $0xd8] sm:$0xff]
        %v1545 = vld [vmem:[%s6 + $0xe0] sm:$0xff]
        %v1546 = vld [vmem:[%s6 + $0xe8] sm:$0xff]
        %v1547 = vld [vmem:[%s6 + $0xf0] sm:$0xff]
        %v1548 = vld [vmem:[%s6 + $0xf8] sm:$0xff]
        %v1549 = vld [vmem:[%s6 + $0x100] sm:$0xff]
        %v1550 = vld [vmem:[%s6 + $0x108] sm:$0xff]
        %v1551 = vld [vmem:[%s6 + $0x110] sm:$0xff]
        %v1552 = vld [vmem:[%s6 + $0x118] sm:$0xff]
        %v1553 = vld [vmem:[%s6 + $0x120] sm:$0xff]
        %v1554 = vld [vmem:[%s6 + $0x128] sm:$0xff]
        %v1555 = vld [vmem:[%s6 + $0x130] sm:$0xff]
        %v1556 = vld [vmem:[%s6 + $0x138] sm:$0xff]
        %v1557 = vld [vmem:[%s6 + $0x140] sm:$0xff]
        %v1558 = vld [vmem:[%s6 + $0x148] sm:$0xff]
        %v1559 = vld [vmem:[%s6 + $0x150] sm:$0xff]
        %v1560 = vld [vmem:[%s6 + $0x158] sm:$0xff]
        %v1561 = vld [vmem:[%s6 + $0x160] sm:$0xff]
        %v1562 = vld [vmem:[%s6 + $0x168] sm:$0xff]
        %v1563 = vld [vmem:[%s6 + $0x170] sm:$0xff]
        %v1564 = vld [vmem:[%s6 + $0x178] sm:$0xff]
        %v1565 = vld [vmem:[%s6 + $0x180] sm:$0xff]
        %v1566 = vld [vmem:[%s6 + $0x188] sm:$0xff]
        %v1567 = vld [vmem:[%s6 + $0x190] sm:$0xff]
        %v1568 = vld [vmem:[%s6 + $0x198] sm:$0xff]
        %v1569 = vld [vmem:[%s6 + $0x1a0] sm:$0xff]
        %v1570 = vld [vmem:[%s6 + $0x1a8] sm:$0xff]
        %v1571 = vld [vmem:[%s6 + $0x1b0] sm:$0xff]
        %v1572 = vld [vmem:[%s6 + $0x1b8] sm:$0xff]
        %v1573 = vld [vmem:[%s6 + $0x1c0] sm:$0xff]
        %v1574 = vld [vmem:[%s6 + $0x1c8] sm:$0xff]
        %v1575 = vld [vmem:[%s6 + $0x1d0] sm:$0xff]
        %v1576 = vld [vmem:[%s6 + $0x1d8] sm:$0xff]
        %v1577 = vld [vmem:[%s6 + $0x1e0] sm:$0xff]
        %v1578 = vld [vmem:[%s6 + $0x1e8] sm:$0xff]
        %v1579 = vld [vmem:[%s6 + $0x1f0] sm:$0xff]
        %v1580 = vld [vmem:[%s6 + $0x1f8] sm:$0xff]
        %1581 = vmatpush.msra.mxu0 %v1577
        %1582 = vmatpush.msra.mxu0 %v1573
        %1583 = vmatpush.msra.mxu0 %v1569
        %1584 = vmatpush.msra.mxu0 %v1565
        %1585 = vmatpush.msra.mxu0 %v1561
        %1586 = vmatpush.msra.mxu0 %v1557
        %1587 = vmatpush.msra.mxu0 %v1553
        %1588 = vmatpush.msra.mxu0 %v1549
        %1589 = vmatpush.msra.mxu0 %v1545
        %1590 = vmatpush.msra.mxu0 %v1541
        %1591 = vmatpush.msra.mxu0 %v1537
        %1592 = vmatpush.msra.mxu0 %v1533
        %1593 = vmatpush.msra.mxu0 %v1529
        %1594 = vmatpush.msra.mxu0 %v1525
        %1595 = vmatpush.msra.mxu0 %v1521
        %1596 = vmatpush.msra.mxu0 %v1517
        %1597 = vmatmul.f32.gmra.mxu0 %v1503
        %v1598 = vpop.f32.mrf.mxu0
        %v1599 = vadd.f32 0.0, %v1598
        %1600 = vdwg.mxu0
        %1601 = vmatpush.msra.mxu0 %v1578
        %1602 = vmatpush.msra.mxu0 %v1574
        %1603 = vmatpush.msra.mxu0 %v1570
        %1604 = vmatpush.msra.mxu0 %v1566
        %1605 = vmatpush.msra.mxu0 %v1562
        %1606 = vmatpush.msra.mxu0 %v1558
        %1607 = vmatpush.msra.mxu0 %v1554
        %1608 = vmatpush.msra.mxu0 %v1550
        %1609 = vmatpush.msra.mxu0 %v1546
        %1610 = vmatpush.msra.mxu0 %v1542
        %1611 = vmatpush.msra.mxu0 %v1538
        %1612 = vmatpush.msra.mxu0 %v1534
        %1613 = vmatpush.msra.mxu0 %v1530
        %1614 = vmatpush.msra.mxu0 %v1526
        %1615 = vmatpush.msra.mxu0 %v1522
        %1616 = vmatpush.msra.mxu0 %v1518
        %1617 = vmatmul.f32.gmra.mxu0 %v1503
        %v1618 = vpop.f32.mrf.mxu0
        %v1619 = vadd.f32 0.0, %v1618
        %1620 = vdwg.mxu0
        %1621 = vmatpush.msra.mxu0 %v1579
        %1622 = vmatpush.msra.mxu0 %v1575
        %1623 = vmatpush.msra.mxu0 %v1571
        %1624 = vmatpush.msra.mxu0 %v1567
        %1625 = vmatpush.msra.mxu0 %v1563
        %1626 = vmatpush.msra.mxu0 %v1559
        %1627 = vmatpush.msra.mxu0 %v1555
        %1628 = vmatpush.msra.mxu0 %v1551
        %1629 = vmatpush.msra.mxu0 %v1547
        %1630 = vmatpush.msra.mxu0 %v1543
        %1631 = vmatpush.msra.mxu0 %v1539
        %1632 = vmatpush.msra.mxu0 %v1535
        %1633 = vmatpush.msra.mxu0 %v1531
        %1634 = vmatpush.msra.mxu0 %v1527
        %1635 = vmatpush.msra.mxu0 %v1523
        %1636 = vmatpush.msra.mxu0 %v1519
        %1637 = vmatmul.f32.gmra.mxu0 %v1503
        %v1638 = vpop.f32.mrf.mxu0
        %v1639 = vadd.f32 0.0, %v1638
        %1640 = vdwg.mxu0
        %1641 = vmatpush.msra.mxu0 %v1580
        %1642 = vmatpush.msra.mxu0 %v1576
        %1643 = vmatpush.msra.mxu0 %v1572
        %1644 = vmatpush.msra.mxu0 %v1568
        %1645 = vmatpush.msra.mxu0 %v1564
        %1646 = vmatpush.msra.mxu0 %v1560
        %1647 = vmatpush.msra.mxu0 %v1556
        %1648 = vmatpush.msra.mxu0 %v1552
        %1649 = vmatpush.msra.mxu0 %v1548
        %1650 = vmatpush.msra.mxu0 %v1544
        %1651 = vmatpush.msra.mxu0 %v1540
        %1652 = vmatpush.msra.mxu0 %v1536
        %1653 = vmatpush.msra.mxu0 %v1532
        %1654 = vmatpush.msra.mxu0 %v1528
        %1655 = vmatpush.msra.mxu0 %v1524
        %1656 = vmatpush.msra.mxu0 %v1520
        %1657 = vmatmul.f32.gmra.mxu0 %v1503
        %v1658 = vpop.f32.mrf.mxu0
        %v1659 = vadd.f32 0.0, %v1658
        %1660 = vdwg.mxu0
        %v1662 = vrot.slane %v1599, 1
        %v1664 = vadd.f32 %v1514, %v1599
        %v1665 = vadd.f32 %v1516, %v1662
        %v1666 = vld [vmem:[%s593] sm:$0xff]
        %v1667 = vld [vmem:[%s593 + $0x8] sm:$0xff]
        %v1668 = vld [vmem:[%s593 + $0x10] sm:$0xff]
        %v1669 = vld [vmem:[%s593 + $0x18] sm:$0xff]
        %v1670 = vld [vmem:[%s593 + $0x20] sm:$0xff]
        %v1671 = vld [vmem:[%s593 + $0x28] sm:$0xff]
        %v1672 = vld [vmem:[%s593 + $0x30] sm:$0xff]
        %v1673 = vld [vmem:[%s593 + $0x38] sm:$0xff]
        %v1674 = vld [vmem:[%s593 + $0x40] sm:$0xff]
        %v1675 = vld [vmem:[%s593 + $0x48] sm:$0xff]
        %v1676 = vld [vmem:[%s593 + $0x50] sm:$0xff]
        %v1677 = vld [vmem:[%s593 + $0x58] sm:$0xff]
        %v1678 = vld [vmem:[%s593 + $0x60] sm:$0xff]
        %v1679 = vld [vmem:[%s593 + $0x68] sm:$0xff]
        %v1680 = vld [vmem:[%s593 + $0x70] sm:$0xff]
        %v1681 = vld [vmem:[%s593 + $0x78] sm:$0xff]
        %v1682 = vld [vmem:[%s593 + $0x80] sm:$0xff]
        %v1683 = vld [vmem:[%s593 + $0x88] sm:$0xff]
        %v1684 = vld [vmem:[%s593 + $0x90] sm:$0xff]
        %v1685 = vld [vmem:[%s593 + $0x98] sm:$0xff]
        %v1686 = vld [vmem:[%s593 + $0xa0] sm:$0xff]
        %v1687 = vld [vmem:[%s593 + $0xa8] sm:$0xff]
        %v1688 = vld [vmem:[%s593 + $0xb0] sm:$0xff]
        %v1689 = vld [vmem:[%s593 + $0xb8] sm:$0xff]
        %v1690 = vld [vmem:[%s593 + $0xc0] sm:$0xff]
        %v1691 = vld [vmem:[%s593 + $0xc8] sm:$0xff]
        %v1692 = vld [vmem:[%s593 + $0xd0] sm:$0xff]
        %v1693 = vld [vmem:[%s593 + $0xd8] sm:$0xff]
        %v1694 = vld [vmem:[%s593 + $0xe0] sm:$0xff]
        %v1695 = vld [vmem:[%s593 + $0xe8] sm:$0xff]
        %v1696 = vld [vmem:[%s593 + $0xf0] sm:$0xff]
        %v1697 = vld [vmem:[%s593 + $0xf8] sm:$0xff]
        %v1700 = vperm.slane %v1664, 0
        %v1701 = vperm.slane %v1665, 0
        %v1704 = vadd.f32 %v1666, %v1700
        %v1705 = vadd.f32 %v1667, %v1700
        %v1706 = vadd.f32 %v1668, %v1700
        %v1707 = vadd.f32 %v1669, %v1700
        %v1708 = vadd.f32 %v1670, %v1700
        %v1709 = vadd.f32 %v1671, %v1700
        %v1710 = vadd.f32 %v1672, %v1700
        %v1711 = vadd.f32 %v1673, %v1700
        %v1712 = vadd.f32 %v1674, %v1700
        %v1713 = vadd.f32 %v1675, %v1700
        %v1714 = vadd.f32 %v1676, %v1700
        %v1715 = vadd.f32 %v1677, %v1700
        %v1716 = vadd.f32 %v1678, %v1700
        %v1717 = vadd.f32 %v1679, %v1700
        %v1718 = vadd.f32 %v1680, %v1700
        %v1719 = vadd.f32 %v1681, %v1700
        %v1720 = vadd.f32 %v1682, %v1701
        %v1721 = vadd.f32 %v1683, %v1701
        %v1722 = vadd.f32 %v1684, %v1701
        %v1723 = vadd.f32 %v1685, %v1701
        %v1724 = vadd.f32 %v1686, %v1701
        %v1725 = vadd.f32 %v1687, %v1701
        %v1726 = vadd.f32 %v1688, %v1701
        %v1727 = vadd.f32 %v1689, %v1701
        %v1728 = vadd.f32 %v1690, %v1701
        %v1729 = vadd.f32 %v1691, %v1701
        %v1730 = vadd.f32 %v1692, %v1701
        %v1731 = vadd.f32 %v1693, %v1701
        %v1732 = vadd.f32 %v1694, %v1701
        %v1733 = vadd.f32 %v1695, %v1701
        %v1734 = vadd.f32 %v1696, %v1701
        %v1735 = vadd.f32 %v1697, %v1701
        %v1736 = vtanh.pop %v1704
        %v1737 = vtanh.pop %v1705
        %v1738 = vtanh.pop %v1706
        %v1739 = vtanh.pop %v1707
        %v1740 = vtanh.pop %v1708
        %v1741 = vtanh.pop %v1709
        %v1742 = vtanh.pop %v1710
        %v1743 = vtanh.pop %v1711
        %v1744 = vtanh.pop %v1712
        %v1745 = vtanh.pop %v1713
        %v1746 = vtanh.pop %v1714
        %v1747 = vtanh.pop %v1715
        %v1748 = vtanh.pop %v1716
        %v1749 = vtanh.pop %v1717
        %v1750 = vtanh.pop %v1718
        %v1751 = vtanh.pop %v1719
        %v1752 = vtanh.pop %v1720
        %v1753 = vtanh.pop %v1721
        %v1754 = vtanh.pop %v1722
        %v1755 = vtanh.pop %v1723
        %v1756 = vtanh.pop %v1724
        %v1757 = vtanh.pop %v1725
        %v1758 = vtanh.pop %v1726
        %v1759 = vtanh.pop %v1727
        %v1760 = vtanh.pop %v1728
        %v1761 = vtanh.pop %v1729
        %v1762 = vtanh.pop %v1730
        %v1763 = vtanh.pop %v1731
        %v1764 = vtanh.pop %v1732
        %v1765 = vtanh.pop %v1733
        %v1766 = vtanh.pop %v1734
        %v1767 = vtanh.pop %v1735
        %v1768 = vmul.f32 %v1736, %v864
        %v1769 = vmul.f32 %v1737, %v864
        %v1770 = vmul.f32 %v1738, %v864
        %v1771 = vmul.f32 %v1739, %v864
        %v1772 = vmul.f32 %v1740, %v864
        %v1773 = vmul.f32 %v1741, %v864
        %v1774 = vmul.f32 %v1742, %v864
        %v1775 = vmul.f32 %v1743, %v864
        %v1776 = vmul.f32 %v1744, %v864
        %v1777 = vmul.f32 %v1745, %v864
        %v1778 = vmul.f32 %v1746, %v864
        %v1779 = vmul.f32 %v1747, %v864
        %v1780 = vmul.f32 %v1748, %v864
        %v1781 = vmul.f32 %v1749, %v864
        %v1782 = vmul.f32 %v1750, %v864
        %v1783 = vmul.f32 %v1751, %v864
        %v1784 = vmul.f32 %v1752, %v864
        %v1785 = vmul.f32 %v1753, %v864
        %v1786 = vmul.f32 %v1754, %v864
        %v1787 = vmul.f32 %v1755, %v864
        %v1788 = vmul.f32 %v1756, %v864
        %v1789 = vmul.f32 %v1757, %v864
        %v1790 = vmul.f32 %v1758, %v864
        %v1791 = vmul.f32 %v1759, %v864
        %v1792 = vmul.f32 %v1760, %v864
        %v1793 = vmul.f32 %v1761, %v864
        %v1794 = vmul.f32 %v1762, %v864
        %v1795 = vmul.f32 %v1763, %v864
        %v1796 = vmul.f32 %v1764, %v864
        %v1797 = vmul.f32 %v1765, %v864
        %v1798 = vmul.f32 %v1766, %v864
        %v1799 = vmul.f32 %v1767, %v864
        %1800 = vadd.xlane.f32.xlu0 %v1768
        %v1801 = vpop.xlane.xlu0 %1800
        %1802 = vadd.xlane.f32.xlu0 %v1769
        %v1803 = vpop.xlane.xlu0 %1802
        %1804 = vadd.xlane.f32.xlu0 %v1770
        %v1805 = vpop.xlane.xlu0 %1804
        %1806 = vadd.xlane.f32.xlu0 %v1771
        %v1807 = vpop.xlane.xlu0 %1806
        %1808 = vadd.xlane.f32.xlu0 %v1772
        %v1809 = vpop.xlane.xlu0 %1808
        %1810 = vadd.xlane.f32.xlu0 %v1773
        %v1811 = vpop.xlane.xlu0 %1810
        %1812 = vadd.xlane.f32.xlu0 %v1774
        %v1813 = vpop.xlane.xlu0 %1812
        %1814 = vadd.xlane.f32.xlu0 %v1775
        %v1815 = vpop.xlane.xlu0 %1814
        %1816 = vadd.xlane.f32.xlu0 %v1776
        %v1817 = vpop.xlane.xlu0 %1816
        %1818 = vadd.xlane.f32.xlu0 %v1777
        %v1819 = vpop.xlane.xlu0 %1818
        %1820 = vadd.xlane.f32.xlu0 %v1778
        %v1821 = vpop.xlane.xlu0 %1820
        %1822 = vadd.xlane.f32.xlu0 %v1779
        %v1823 = vpop.xlane.xlu0 %1822
        %1824 = vadd.xlane.f32.xlu0 %v1780
        %v1825 = vpop.xlane.xlu0 %1824
        %1826 = vadd.xlane.f32.xlu0 %v1781
        %v1827 = vpop.xlane.xlu0 %1826
        %1828 = vadd.xlane.f32.xlu0 %v1782
        %v1829 = vpop.xlane.xlu0 %1828
        %1830 = vadd.xlane.f32.xlu0 %v1783
        %v1831 = vpop.xlane.xlu0 %1830
        %1832 = vadd.xlane.f32.xlu0 %v1784
        %v1833 = vpop.xlane.xlu0 %1832
        %1834 = vadd.xlane.f32.xlu0 %v1785
        %v1835 = vpop.xlane.xlu0 %1834
        %1836 = vadd.xlane.f32.xlu0 %v1786
        %v1837 = vpop.xlane.xlu0 %1836
        %1838 = vadd.xlane.f32.xlu0 %v1787
        %v1839 = vpop.xlane.xlu0 %1838
        %1840 = vadd.xlane.f32.xlu0 %v1788
        %v1841 = vpop.xlane.xlu0 %1840
        %1842 = vadd.xlane.f32.xlu0 %v1789
        %v1843 = vpop.xlane.xlu0 %1842
        %1844 = vadd.xlane.f32.xlu0 %v1790
        %v1845 = vpop.xlane.xlu0 %1844
        %1846 = vadd.xlane.f32.xlu0 %v1791
        %v1847 = vpop.xlane.xlu0 %1846
        %1848 = vadd.xlane.f32.xlu0 %v1792
        %v1849 = vpop.xlane.xlu0 %1848
        %1850 = vadd.xlane.f32.xlu0 %v1793
        %v1851 = vpop.xlane.xlu0 %1850
        %1852 = vadd.xlane.f32.xlu0 %v1794
        %v1853 = vpop.xlane.xlu0 %1852
        %1854 = vadd.xlane.f32.xlu0 %v1795
        %v1855 = vpop.xlane.xlu0 %1854
        %1856 = vadd.xlane.f32.xlu0 %v1796
        %v1857 = vpop.xlane.xlu0 %1856
        %1858 = vadd.xlane.f32.xlu0 %v1797
        %v1859 = vpop.xlane.xlu0 %1858
        %1860 = vadd.xlane.f32.xlu0 %v1798
        %v1861 = vpop.xlane.xlu0 %1860
        %1862 = vadd.xlane.f32.xlu0 %v1799
        %v1863 = vpop.xlane.xlu0 %1862
        %v1896 = vperm.slane %v1801, %v995
        %v1897 = vperm.slane %v1803, %v997
        %v1898 = vsel %vm999, %v1897, %v1896
        %v1899 = vperm.slane %v1805, %v1001
        %v1900 = vsel %vm1003, %v1899, %v1898
        %v1901 = vperm.slane %v1807, %v1005
        %v1902 = vsel %vm1007, %v1901, %v1900
        %v1903 = vperm.slane %v1809, %v1009
        %v1904 = vsel %vm1011, %v1903, %v1902
        %v1905 = vperm.slane %v1811, %v1013
        %v1906 = vsel %vm1015, %v1905, %v1904
        %v1907 = vperm.slane %v1813, %v1017
        %v1908 = vsel %vm1019, %v1907, %v1906
        %v1909 = vperm.slane %v1815, %v1021
        %v1910 = vsel %vm1023, %v1909, %v1908
        %v1911 = vperm.slane %v1817, %v1025
        %v1912 = vsel %vm1027, %v1911, %v1910
        %v1913 = vperm.slane %v1819, %v1029
        %v1914 = vsel %vm1031, %v1913, %v1912
        %v1915 = vperm.slane %v1821, %v1033
        %v1916 = vsel %vm1035, %v1915, %v1914
        %v1917 = vperm.slane %v1823, %v1037
        %v1918 = vsel %vm1039, %v1917, %v1916
        %v1919 = vperm.slane %v1825, %v1041
        %v1920 = vsel %vm1043, %v1919, %v1918
        %v1921 = vperm.slane %v1827, %v1045
        %v1922 = vsel %vm1047, %v1921, %v1920
        %v1923 = vperm.slane %v1829, %v1049
        %v1924 = vsel %vm1051, %v1923, %v1922
        %v1925 = vperm.slane %v1831, %v1053
        %v1926 = vsel %vm1055, %v1925, %v1924
        %v1927 = vperm.slane %v1833, %v995
        %v1928 = vperm.slane %v1835, %v997
        %v1929 = vsel %vm999, %v1928, %v1927
        %v1930 = vperm.slane %v1837, %v1001
        %v1931 = vsel %vm1003, %v1930, %v1929
        %v1932 = vperm.slane %v1839, %v1005
        %v1933 = vsel %vm1007, %v1932, %v1931
        %v1934 = vperm.slane %v1841, %v1009
        %v1935 = vsel %vm1011, %v1934, %v1933
        %v1936 = vperm.slane %v1843, %v1013
        %v1937 = vsel %vm1015, %v1936, %v1935
        %v1938 = vperm.slane %v1845, %v1017
        %v1939 = vsel %vm1019, %v1938, %v1937
        %v1940 = vperm.slane %v1847, %v1021
        %v1941 = vsel %vm1023, %v1940, %v1939
        %v1942 = vperm.slane %v1849, %v1025
        %v1943 = vsel %vm1027, %v1942, %v1941
        %v1944 = vperm.slane %v1851, %v1029
        %v1945 = vsel %vm1031, %v1944, %v1943
        %v1946 = vperm.slane %v1853, %v1033
        %v1947 = vsel %vm1035, %v1946, %v1945
        %v1948 = vperm.slane %v1855, %v1037
        %v1949 = vsel %vm1039, %v1948, %v1947
        %v1950 = vperm.slane %v1857, %v1041
        %v1951 = vsel %vm1043, %v1950, %v1949
        %v1952 = vperm.slane %v1859, %v1045
        %v1953 = vsel %vm1047, %v1952, %v1951
        %v1954 = vperm.slane %v1861, %v1049
        %v1955 = vsel %vm1051, %v1954, %v1953
        %v1956 = vperm.slane %v1863, %v1053
        %v1957 = vsel %vm1055, %v1956, %v1955
        %v1958 = vsel %vm1088, %v1957, %v1926
        %v1960 = vsel %vm603, %v1958, -1e+30
        %v1961 = vsel %vm1092, %v1960, -inf
        %1962 = vmax.xlane.f32.xlu0 %v1961
        %v1963 = vpop.xlane.xlu0 %1962
        %v1964 = vsub.f32 %v1960, %v1963
        %v1965 = vmul.f32 %v1964, 1.442695
        %v1966 = vpow.pop %v1965
        %v1967 = vmul.f32 %v1966, %v602
        %v1968 = vsel %vm1092, %v1967, 0.0
        %1969 = vadd.xlane.f32.xlu0 %v1968
        %v1970 = vpop.xlane.xlu0 %1969
        %v1971 = vadd.f32 %v1970, 1e-13
        %v1972 = vrcp.pop %v1971
        %v1973 = vmul.f32 %v1971, %v1972
        %v1974 = vsub.f32 1.0, %v1973
        %v1975 = vmul.f32 %v1972, %v1974
        %v1976 = vadd.f32 %v1972, %v1975
        %vm1977 = vweird.f32 %v1971
        %vm1978 = vweird.f32 %v1972
        %vm1979 = vmor %vm1977, %vm1978
        %v1980 = vsel %vm1979, %v1972, %v1976
        %v1981 = vand.u32 2147483647, %v1971
        %vm1982 = vcmp.eq.f32.partialorder %v1981, 8.507059e+37
        %v1983 = vand.u32 %v1971, 2147483648
        %v1984 = vor.u32 1.1754944e-38, %v1983
        %v1985 = vsel %vm1982, %v1984, %v1980
        %v1986 = vmul.f32 %v1967, %v1985
        %v1988 = vrot.slane %v1986, 1
        %v1990 = vld [vmem:[%s582] sm:$0xff]
        %v1991 = vld [vmem:[%s582 + $0x8] sm:$0xff]
        %v1992 = vld [vmem:[%s582 + $0x10] sm:$0xff]
        %v1993 = vld [vmem:[%s582 + $0x18] sm:$0xff]
        %v1994 = vld [vmem:[%s582 + $0x20] sm:$0xff]
        %v1995 = vld [vmem:[%s582 + $0x28] sm:$0xff]
        %v1996 = vld [vmem:[%s582 + $0x30] sm:$0xff]
        %v1997 = vld [vmem:[%s582 + $0x38] sm:$0xff]
        %v1998 = vld [vmem:[%s582 + $0x40] sm:$0xff]
        %v1999 = vld [vmem:[%s582 + $0x48] sm:$0xff]
        %v2000 = vld [vmem:[%s582 + $0x50] sm:$0xff]
        %v2001 = vld [vmem:[%s582 + $0x58] sm:$0xff]
        %v2002 = vld [vmem:[%s582 + $0x60] sm:$0xff]
        %v2003 = vld [vmem:[%s582 + $0x68] sm:$0xff]
        %v2004 = vld [vmem:[%s582 + $0x70] sm:$0xff]
        %v2005 = vld [vmem:[%s582 + $0x78] sm:$0xff]
        %v2006 = vld [vmem:[%s582 + $0x80] sm:$0xff]
        %v2007 = vld [vmem:[%s582 + $0x88] sm:$0xff]
        %v2008 = vld [vmem:[%s582 + $0x90] sm:$0xff]
        %v2009 = vld [vmem:[%s582 + $0x98] sm:$0xff]
        %v2010 = vld [vmem:[%s582 + $0xa0] sm:$0xff]
        %v2011 = vld [vmem:[%s582 + $0xa8] sm:$0xff]
        %v2012 = vld [vmem:[%s582 + $0xb0] sm:$0xff]
        %v2013 = vld [vmem:[%s582 + $0xb8] sm:$0xff]
        %v2014 = vld [vmem:[%s582 + $0xc0] sm:$0xff]
        %v2015 = vld [vmem:[%s582 + $0xc8] sm:$0xff]
        %v2016 = vld [vmem:[%s582 + $0xd0] sm:$0xff]
        %v2017 = vld [vmem:[%s582 + $0xd8] sm:$0xff]
        %v2018 = vld [vmem:[%s582 + $0xe0] sm:$0xff]
        %v2019 = vld [vmem:[%s582 + $0xe8] sm:$0xff]
        %v2020 = vld [vmem:[%s582 + $0xf0] sm:$0xff]
        %v2021 = vld [vmem:[%s582 + $0xf8] sm:$0xff]
        %2022 = vmatpush.msra.mxu0 %v2005
        %2023 = vmatpush.msra.mxu0 %v2004
        %2024 = vmatpush.msra.mxu0 %v2003
        %2025 = vmatpush.msra.mxu0 %v2002
        %2026 = vmatpush.msra.mxu0 %v2001
        %2027 = vmatpush.msra.mxu0 %v2000
        %2028 = vmatpush.msra.mxu0 %v1999
        %2029 = vmatpush.msra.mxu0 %v1998
        %2030 = vmatpush.msra.mxu0 %v1997
        %2031 = vmatpush.msra.mxu0 %v1996
        %2032 = vmatpush.msra.mxu0 %v1995
        %2033 = vmatpush.msra.mxu0 %v1994
        %2034 = vmatpush.msra.mxu0 %v1993
        %2035 = vmatpush.msra.mxu0 %v1992
        %2036 = vmatpush.msra.mxu0 %v1991
        %2037 = vmatpush.msra.mxu0 %v1990
        %2038 = vmatmul.f32.gmra.mxu0 %v1986
        %v2039 = vpop.f32.mrf.mxu0
        %v2040 = vadd.f32 0.0, %v2039
        %2041 = vdwg.mxu0
        %2042 = vmatpush.msra.mxu0 %v2021
        %2043 = vmatpush.msra.mxu0 %v2020
        %2044 = vmatpush.msra.mxu0 %v2019
        %2045 = vmatpush.msra.mxu0 %v2018
        %2046 = vmatpush.msra.mxu0 %v2017
        %2047 = vmatpush.msra.mxu0 %v2016
        %2048 = vmatpush.msra.mxu0 %v2015
        %2049 = vmatpush.msra.mxu0 %v2014
        %2050 = vmatpush.msra.mxu0 %v2013
        %2051 = vmatpush.msra.mxu0 %v2012
        %2052 = vmatpush.msra.mxu0 %v2011
        %2053 = vmatpush.msra.mxu0 %v2010
        %2054 = vmatpush.msra.mxu0 %v2009
        %2055 = vmatpush.msra.mxu0 %v2008
        %2056 = vmatpush.msra.mxu0 %v2007
        %2057 = vmatpush.msra.mxu0 %v2006
        %2058 = vmatmul.f32.gmra.mxu0 %v1988
        %v2059 = vpop.f32.mrf.mxu0
        %v2060 = vadd.f32 0.0, %v2059
        %2061 = vdwg.mxu0
        %v2062 = vld [vmem:[%s7] sm:$0xff]
        %v2063 = vld [vmem:[%s7 + $0x8] sm:$0xff]
        %v2066 = vrot.slane %v2060, 7
        %v2067 = vsel %vm1088, %v2066, %v2040
        %v2068 = vsel %vm1200, %v2067, 0
        %2070 = vmatpush.msra.mxu0 0.0
        %2071 = vmatpush.msra.mxu0 0.0
        %2072 = vmatpush.msra.mxu0 0.0
        %2073 = vmatpush.msra.mxu0 0.0
        %2074 = vmatpush.msra.mxu0 0.0
        %2075 = vmatpush.msra.mxu0 0.0
        %2076 = vmatpush.msra.mxu0 0.0
        %2077 = vmatpush.msra.mxu0 0.0
        %2078 = vmatpush.msra.mxu0 0.0
        %2079 = vmatpush.msra.mxu0 0.0
        %2080 = vmatpush.msra.mxu0 0.0
        %2081 = vmatpush.msra.mxu0 0.0
        %2082 = vmatpush.msra.mxu0 0.0
        %2083 = vmatpush.msra.mxu0 0.0
        %2084 = vmatpush.msra.mxu0 %v2063
        %2085 = vmatpush.msra.mxu0 %v2062
        %2086 = vmatmul.f32.gmra.mxu0 %v2068
        %v2087 = vpop.f32.mrf.mxu0
        %v2088 = vadd.f32 0.0, %v2087
        %2089 = vdwg.mxu0
        %v2092 = vrot.slane %v1514, 1
        %v2093 = vrot.slane %v1516, 1
        %v2097 = vrot.slane %v2088, 1
        %v2099 = vadd.f32 %v2092, %v2088
        %v2100 = vadd.f32 %v2093, %v2097
        %v2101 = vxor.u32 %v2099, 2147483648
        %v2102 = vxor.u32 %v2100, 2147483648
        %v2103 = vmul.f32 %v2101, 1.442695
        %v2104 = vpow.pop %v2103
        %v2105 = vmul.f32 %v2102, 1.442695
        %v2106 = vpow.pop %v2105
        %v2107 = vadd.f32 %v2104, 1.0
        %v2108 = vadd.f32 %v2106, 1.0
        %v2109 = vrcp.pop %v2107
        %v2110 = vmul.f32 %v2107, %v2109
        %v2111 = vsub.f32 1.0, %v2110
        %v2112 = vmul.f32 %v2109, %v2111
        %v2113 = vadd.f32 %v2109, %v2112
        %vm2114 = vweird.f32 %v2107
        %vm2115 = vweird.f32 %v2109
        %vm2116 = vmor %vm2114, %vm2115
        %v2117 = vsel %vm2116, %v2109, %v2113
        %v2118 = vand.u32 2147483647, %v2107
        %vm2119 = vcmp.eq.f32.partialorder %v2118, 8.507059e+37
        %v2120 = vand.u32 %v2107, 2147483648
        %v2121 = vor.u32 1.1754944e-38, %v2120
        %v2122 = vsel %vm2119, %v2121, %v2117
        %v2123 = vmul.f32 1.0, %v2122
        %v2124 = vrcp.pop %v2108
        %v2125 = vmul.f32 %v2108, %v2124
        %v2126 = vsub.f32 1.0, %v2125
        %v2127 = vmul.f32 %v2124, %v2126
        %v2128 = vadd.f32 %v2124, %v2127
        %vm2129 = vweird.f32 %v2108
        %vm2130 = vweird.f32 %v2124
        %vm2131 = vmor %vm2129, %vm2130
        %v2132 = vsel %vm2131, %v2124, %v2128
        %v2133 = vand.u32 2147483647, %v2108
        %vm2134 = vcmp.eq.f32.partialorder %v2133, 8.507059e+37
        %v2135 = vand.u32 %v2108, 2147483648
        %v2136 = vor.u32 1.1754944e-38, %v2135
        %v2137 = vsel %vm2134, %v2136, %v2132
        %v2138 = vmul.f32 1.0, %v2137
        %v2139 = vmul.f32 %v2123, %v1511
        %v2140 = vmul.f32 %v2138, %v1512
        %2141 = vrot.lane.b32.xlu0 %v2040, 16
        %v2142 = vpop.permute.xlu0 %2141
        %2143 = vrot.lane.b32.xlu0 %v2060, 16
        %v2144 = vpop.permute.xlu0 %2143
        %v2147 = vmul.f32 %v2123, %v2142
        %v2148 = vmul.f32 %v2138, %v2144
        %v2149 = vld [vmem:[%s8] sm:$0xff]
        %v2150 = vld [vmem:[%s8 + $0x8] sm:$0xff]
        %v2151 = vld [vmem:[%s8 + $0x10] sm:$0xff]
        %v2152 = vld [vmem:[%s8 + $0x18] sm:$0xff]
        %v2153 = vld [vmem:[%s8 + $0x20] sm:$0xff]
        %v2154 = vld [vmem:[%s8 + $0x28] sm:$0xff]
        %v2155 = vld [vmem:[%s9] sm:$0xff]
        %v2156 = vld [vmem:[%s9 + $0x8] sm:$0xff]
        %v2157 = vld [vmem:[%s9 + $0x10] sm:$0xff]
        %v2158 = vld [vmem:[%s9 + $0x18] sm:$0xff]
        %v2159 = vld [vmem:[%s9 + $0x20] sm:$0xff]
        %v2160 = vld [vmem:[%s9 + $0x28] sm:$0xff]
        %2163 = vst [vmem:[#allocation1] ss:$9 sm:$0xff] %v2147
        %s2164 = scalar_lea.vmem [#allocation1], 1
        %2165 = vst [vmem:[%s2164] ss:$9 sm:$0xff] %v2148
        %v2166 = vld [vmem:[#allocation1] sm:$0xff]
        %2167 = vrot.lane.b32.xlu0 %v2166, 112
        %v2168 = vpop.permute.xlu0 %2167
        %v2169 = vsel %vm1200, %v2168, 0
        %2171 = vmatpush.msra.mxu0 0.0
        %2172 = vmatpush.msra.mxu0 0.0
        %2173 = vmatpush.msra.mxu0 0.0
        %2174 = vmatpush.msra.mxu0 0.0
        %2175 = vmatpush.msra.mxu0 0.0
        %2176 = vmatpush.msra.mxu0 0.0
        %2177 = vmatpush.msra.mxu0 0.0
        %2178 = vmatpush.msra.mxu0 0.0
        %2179 = vmatpush.msra.mxu0 0.0
        %2180 = vmatpush.msra.mxu0 0.0
        %2181 = vmatpush.msra.mxu0 0.0
        %2182 = vmatpush.msra.mxu0 0.0
        %2183 = vmatpush.msra.mxu0 0.0
        %2184 = vmatpush.msra.mxu0 0.0
        %2185 = vmatpush.msra.mxu0 %v2158
        %2186 = vmatpush.msra.mxu0 %v2155
        %2187 = vmatmul.f32.gmra.mxu0 %v2169
        %v2188 = vpop.f32.mrf.mxu0
        %v2189 = vadd.f32 0.0, %v2188
        %2190 = vdwg.mxu0
        %2191 = vmatpush.msra.mxu0 0.0
        %2192 = vmatpush.msra.mxu0 0.0
        %2193 = vmatpush.msra.mxu0 0.0
        %2194 = vmatpush.msra.mxu0 0.0
        %2195 = vmatpush.msra.mxu0 0.0
        %2196 = vmatpush.msra.mxu0 0.0
        %2197 = vmatpush.msra.mxu0 0.0
        %2198 = vmatpush.msra.mxu0 0.0
        %2199 = vmatpush.msra.mxu0 0.0
        %2200 = vmatpush.msra.mxu0 0.0
        %2201 = vmatpush.msra.mxu0 0.0
        %2202 = vmatpush.msra.mxu0 0.0
        %2203 = vmatpush.msra.mxu0 0.0
        %2204 = vmatpush.msra.mxu0 0.0
        %2205 = vmatpush.msra.mxu0 %v2159
        %2206 = vmatpush.msra.mxu0 %v2156
        %2207 = vmatmul.f32.gmra.mxu0 %v2169
        %v2208 = vpop.f32.mrf.mxu0
        %v2209 = vadd.f32 0.0, %v2208
        %2210 = vdwg.mxu0
        %2211 = vmatpush.msra.mxu0 0.0
        %2212 = vmatpush.msra.mxu0 0.0
        %2213 = vmatpush.msra.mxu0 0.0
        %2214 = vmatpush.msra.mxu0 0.0
        %2215 = vmatpush.msra.mxu0 0.0
        %2216 = vmatpush.msra.mxu0 0.0
        %2217 = vmatpush.msra.mxu0 0.0
        %2218 = vmatpush.msra.mxu0 0.0
        %2219 = vmatpush.msra.mxu0 0.0
        %2220 = vmatpush.msra.mxu0 0.0
        %2221 = vmatpush.msra.mxu0 0.0
        %2222 = vmatpush.msra.mxu0 0.0
        %2223 = vmatpush.msra.mxu0 0.0
        %2224 = vmatpush.msra.mxu0 0.0
        %2225 = vmatpush.msra.mxu0 %v2160
        %2226 = vmatpush.msra.mxu0 %v2157
        %2227 = vmatmul.f32.gmra.mxu0 %v2169
        %v2228 = vpop.f32.mrf.mxu0
        %v2229 = vadd.f32 0.0, %v2228
        %2230 = vdwg.mxu0
        %2233 = vst [vmem:[#allocation1] ss:$9 sm:$0xff] %v2139
        %s2234 = scalar_lea.vmem [#allocation1], 1
        %2235 = vst [vmem:[%s2234] ss:$9 sm:$0xff] %v2140
        %v2236 = vld [vmem:[#allocation1] sm:$0xff]
        %v2237 = vsel %vm1200, %v2236, 0
        %2239 = vmatpush.msra.mxu0 0.0
        %2240 = vmatpush.msra.mxu0 0.0
        %2241 = vmatpush.msra.mxu0 0.0
        %2242 = vmatpush.msra.mxu0 0.0
        %2243 = vmatpush.msra.mxu0 0.0
        %2244 = vmatpush.msra.mxu0 0.0
        %2245 = vmatpush.msra.mxu0 0.0
        %2246 = vmatpush.msra.mxu0 0.0
        %2247 = vmatpush.msra.mxu0 0.0
        %2248 = vmatpush.msra.mxu0 0.0
        %2249 = vmatpush.msra.mxu0 0.0
        %2250 = vmatpush.msra.mxu0 0.0
        %2251 = vmatpush.msra.mxu0 0.0
        %2252 = vmatpush.msra.mxu0 0.0
        %2253 = vmatpush.msra.mxu0 %v2152
        %2254 = vmatpush.msra.mxu0 %v2149
        %2255 = vmatmul.f32.gmra.mxu0 %v2237
        %v2256 = vpop.f32.mrf.mxu0
        %v2257 = vadd.f32 %v2189, %v2256
        %2258 = vdwg.mxu0
        %2259 = vmatpush.msra.mxu0 0.0
        %2260 = vmatpush.msra.mxu0 0.0
        %2261 = vmatpush.msra.mxu0 0.0
        %2262 = vmatpush.msra.mxu0 0.0
        %2263 = vmatpush.msra.mxu0 0.0
        %2264 = vmatpush.msra.mxu0 0.0
        %2265 = vmatpush.msra.mxu0 0.0
        %2266 = vmatpush.msra.mxu0 0.0
        %2267 = vmatpush.msra.mxu0 0.0
        %2268 = vmatpush.msra.mxu0 0.0
        %2269 = vmatpush.msra.mxu0 0.0
        %2270 = vmatpush.msra.mxu0 0.0
        %2271 = vmatpush.msra.mxu0 0.0
        %2272 = vmatpush.msra.mxu0 0.0
        %2273 = vmatpush.msra.mxu0 %v2153
        %2274 = vmatpush.msra.mxu0 %v2150
        %2275 = vmatmul.f32.gmra.mxu0 %v2237
        %v2276 = vpop.f32.mrf.mxu0
        %v2277 = vadd.f32 %v2209, %v2276
        %2278 = vdwg.mxu0
        %2279 = vmatpush.msra.mxu0 0.0
        %2280 = vmatpush.msra.mxu0 0.0
        %2281 = vmatpush.msra.mxu0 0.0
        %2282 = vmatpush.msra.mxu0 0.0
        %2283 = vmatpush.msra.mxu0 0.0
        %2284 = vmatpush.msra.mxu0 0.0
        %2285 = vmatpush.msra.mxu0 0.0
        %2286 = vmatpush.msra.mxu0 0.0
        %2287 = vmatpush.msra.mxu0 0.0
        %2288 = vmatpush.msra.mxu0 0.0
        %2289 = vmatpush.msra.mxu0 0.0
        %2290 = vmatpush.msra.mxu0 0.0
        %2291 = vmatpush.msra.mxu0 0.0
        %2292 = vmatpush.msra.mxu0 0.0
        %2293 = vmatpush.msra.mxu0 %v2154
        %2294 = vmatpush.msra.mxu0 %v2151
        %2295 = vmatmul.f32.gmra.mxu0 %v2237
        %v2296 = vpop.f32.mrf.mxu0
        %v2297 = vadd.f32 %v2229, %v2296
        %2298 = vdwg.mxu0
        %v2299 = vadd.f32 %v2257, %v1439
        %v2300 = vadd.f32 %v2277, %v1440
        %v2301 = vadd.f32 %v2297, %v1441
        %v2302 = vadd.f32 %v1619, %v1451
        %v2303 = vadd.f32 %v1639, %v1452
        %v2304 = vadd.f32 %v1659, %v1453
        %v2305 = vadd.f32 %v2299, %v2302
        %v2306 = vxor.u32 %v2305, 2147483648
        %v2307 = vmul.f32 %v2306, 1.442695
        %v2308 = vpow.pop %v2307
        %v2309 = vadd.f32 %v2308, 1.0
        %v2310 = vrcp.pop %v2309
        %v2311 = vmul.f32 %v2309, %v2310
        %v2312 = vsub.f32 1.0, %v2311
        %v2313 = vmul.f32 %v2310, %v2312
        %v2314 = vadd.f32 %v2310, %v2313
        %vm2315 = vweird.f32 %v2309
        %vm2316 = vweird.f32 %v2310
        %vm2317 = vmor %vm2315, %vm2316
        %v2318 = vsel %vm2317, %v2310, %v2314
        %v2319 = vand.u32 2147483647, %v2309
        %vm2320 = vcmp.eq.f32.partialorder %v2319, 8.507059e+37
        %v2321 = vand.u32 %v2309, 2147483648
        %v2322 = vor.u32 1.1754944e-38, %v2321
        %v2323 = vsel %vm2320, %v2322, %v2318
        %v2324 = vmul.f32 1.0, %v2323
        %v2325 = vadd.f32 %v2300, %v2303
        %v2326 = vxor.u32 %v2325, 2147483648
        %v2327 = vmul.f32 %v2326, 1.442695
        %v2328 = vpow.pop %v2327
        %v2329 = vadd.f32 %v2328, 1.0
        %v2330 = vrcp.pop %v2329
        %v2331 = vmul.f32 %v2329, %v2330
        %v2332 = vsub.f32 1.0, %v2331
        %v2333 = vmul.f32 %v2330, %v2332
        %v2334 = vadd.f32 %v2330, %v2333
        %vm2335 = vweird.f32 %v2329
        %vm2336 = vweird.f32 %v2330
        %vm2337 = vmor %vm2335, %vm2336
        %v2338 = vsel %vm2337, %v2330, %v2334
        %v2339 = vand.u32 2147483647, %v2329
        %vm2340 = vcmp.eq.f32.partialorder %v2339, 8.507059e+37
        %v2341 = vand.u32 %v2329, 2147483648
        %v2342 = vor.u32 1.1754944e-38, %v2341
        %v2343 = vsel %vm2340, %v2342, %v2338
        %v2344 = vmul.f32 1.0, %v2343
        %v2345 = vmul.f32 %v2324, %v2304
        %v2346 = vadd.f32 %v2301, %v2345
        %v2347 = vtanh.pop %v2346
        %v2348 = vsub.f32 1.0, %v2344
        %v2349 = vmul.f32 %v2348, %v2347
        %v2350 = vmul.f32 %v2344, %v1503
        %v2351 = vadd.f32 %v2349, %v2350
        %v2353 = vrot.slane %v2351, 1
        %2355 = vst [vmem:[%s568 + $0x1] sm:$0x1] %v2351
        %2356 = vst [vmem:[%s568 + $0x9] sm:$0x1] %v2353
        %2357 = vst [vmem:[%s574 + $0x1] sm:$0x1] %v1986
        %2358 = vst [vmem:[%s574 + $0x9] sm:$0x1] %v1988
        %v2359 = vld [vmem:[%s506 + $0x2] sm:$0x1]
        %v2360 = vld [vmem:[%s506 + $0xa] sm:$0x1]
        %s2361 = scalar_lea.vmem %s513, 2 [#allocation4]
        %v2362 = vld [vmem:[%s2361] ss:$8 sm:$0x3]
        %s2363 = scalar_lea.vmem %s513, 18 [#allocation4]
        %v2364 = vld [vmem:[%s2363] ss:$8 sm:$0x3]
        %v2365 = vld [vmem:[%s6] sm:$0xff]
        %v2366 = vld [vmem:[%s6 + $0x8] sm:$0xff]
        %v2367 = vld [vmem:[%s6 + $0x10] sm:$0xff]
        %v2368 = vld [vmem:[%s6 + $0x18] sm:$0xff]
        %v2369 = vld [vmem:[%s6 + $0x20] sm:$0xff]
        %v2370 = vld [vmem:[%s6 + $0x28] sm:$0xff]
        %v2371 = vld [vmem:[%s6 + $0x30] sm:$0xff]
        %v2372 = vld [vmem:[%s6 + $0x38] sm:$0xff]
        %v2373 = vld [vmem:[%s6 + $0x40] sm:$0xff]
        %v2374 = vld [vmem:[%s6 + $0x48] sm:$0xff]
        %v2375 = vld [vmem:[%s6 + $0x50] sm:$0xff]
        %v2376 = vld [vmem:[%s6 + $0x58] sm:$0xff]
        %v2377 = vld [vmem:[%s6 + $0x60] sm:$0xff]
        %v2378 = vld [vmem:[%s6 + $0x68] sm:$0xff]
        %v2379 = vld [vmem:[%s6 + $0x70] sm:$0xff]
        %v2380 = vld [vmem:[%s6 + $0x78] sm:$0xff]
        %v2381 = vld [vmem:[%s6 + $0x80] sm:$0xff]
        %v2382 = vld [vmem:[%s6 + $0x88] sm:$0xff]
        %v2383 = vld [vmem:[%s6 + $0x90] sm:$0xff]
        %v2384 = vld [vmem:[%s6 + $0x98] sm:$0xff]
        %v2385 = vld [vmem:[%s6 + $0xa0] sm:$0xff]
        %v2386 = vld [vmem:[%s6 + $0xa8] sm:$0xff]
        %v2387 = vld [vmem:[%s6 + $0xb0] sm:$0xff]
        %v2388 = vld [vmem:[%s6 + $0xb8] sm:$0xff]
        %v2389 = vld [vmem:[%s6 + $0xc0] sm:$0xff]
        %v2390 = vld [vmem:[%s6 + $0xc8] sm:$0xff]
        %v2391 = vld [vmem:[%s6 + $0xd0] sm:$0xff]
        %v2392 = vld [vmem:[%s6 + $0xd8] sm:$0xff]
        %v2393 = vld [vmem:[%s6 + $0xe0] sm:$0xff]
        %v2394 = vld [vmem:[%s6 + $0xe8] sm:$0xff]
        %v2395 = vld [vmem:[%s6 + $0xf0] sm:$0xff]
        %v2396 = vld [vmem:[%s6 + $0xf8] sm:$0xff]
        %v2397 = vld [vmem:[%s6 + $0x100] sm:$0xff]
        %v2398 = vld [vmem:[%s6 + $0x108] sm:$0xff]
        %v2399 = vld [vmem:[%s6 + $0x110] sm:$0xff]
        %v2400 = vld [vmem:[%s6 + $0x118] sm:$0xff]
        %v2401 = vld [vmem:[%s6 + $0x120] sm:$0xff]
        %v2402 = vld [vmem:[%s6 + $0x128] sm:$0xff]
        %v2403 = vld [vmem:[%s6 + $0x130] sm:$0xff]
        %v2404 = vld [vmem:[%s6 + $0x138] sm:$0xff]
        %v2405 = vld [vmem:[%s6 + $0x140] sm:$0xff]
        %v2406 = vld [vmem:[%s6 + $0x148] sm:$0xff]
        %v2407 = vld [vmem:[%s6 + $0x150] sm:$0xff]
        %v2408 = vld [vmem:[%s6 + $0x158] sm:$0xff]
        %v2409 = vld [vmem:[%s6 + $0x160] sm:$0xff]
        %v2410 = vld [vmem:[%s6 + $0x168] sm:$0xff]
        %v2411 = vld [vmem:[%s6 + $0x170] sm:$0xff]
        %v2412 = vld [vmem:[%s6 + $0x178] sm:$0xff]
        %v2413 = vld [vmem:[%s6 + $0x180] sm:$0xff]
        %v2414 = vld [vmem:[%s6 + $0x188] sm:$0xff]
        %v2415 = vld [vmem:[%s6 + $0x190] sm:$0xff]
        %v2416 = vld [vmem:[%s6 + $0x198] sm:$0xff]
        %v2417 = vld [vmem:[%s6 + $0x1a0] sm:$0xff]
        %v2418 = vld [vmem:[%s6 + $0x1a8] sm:$0xff]
        %v2419 = vld [vmem:[%s6 + $0x1b0] sm:$0xff]
        %v2420 = vld [vmem:[%s6 + $0x1b8] sm:$0xff]
        %v2421 = vld [vmem:[%s6 + $0x1c0] sm:$0xff]
        %v2422 = vld [vmem:[%s6 + $0x1c8] sm:$0xff]
        %v2423 = vld [vmem:[%s6 + $0x1d0] sm:$0xff]
        %v2424 = vld [vmem:[%s6 + $0x1d8] sm:$0xff]
        %v2425 = vld [vmem:[%s6 + $0x1e0] sm:$0xff]
        %v2426 = vld [vmem:[%s6 + $0x1e8] sm:$0xff]
        %v2427 = vld [vmem:[%s6 + $0x1f0] sm:$0xff]
        %v2428 = vld [vmem:[%s6 + $0x1f8] sm:$0xff]
        %2429 = vmatpush.msra.mxu0 %v2425
        %2430 = vmatpush.msra.mxu0 %v2421
        %2431 = vmatpush.msra.mxu0 %v2417
        %2432 = vmatpush.msra.mxu0 %v2413
        %2433 = vmatpush.msra.mxu0 %v2409
        %2434 = vmatpush.msra.mxu0 %v2405
        %2435 = vmatpush.msra.mxu0 %v2401
        %2436 = vmatpush.msra.mxu0 %v2397
        %2437 = vmatpush.msra.mxu0 %v2393
        %2438 = vmatpush.msra.mxu0 %v2389
        %2439 = vmatpush.msra.mxu0 %v2385
        %2440 = vmatpush.msra.mxu0 %v2381
        %2441 = vmatpush.msra.mxu0 %v2377
        %2442 = vmatpush.msra.mxu0 %v2373
        %2443 = vmatpush.msra.mxu0 %v2369
        %2444 = vmatpush.msra.mxu0 %v2365
        %2445 = vmatmul.f32.gmra.mxu0 %v2351
        %v2446 = vpop.f32.mrf.mxu0
        %v2447 = vadd.f32 0.0, %v2446
        %2448 = vdwg.mxu0
        %2449 = vmatpush.msra.mxu0 %v2426
        %2450 = vmatpush.msra.mxu0 %v2422
        %2451 = vmatpush.msra.mxu0 %v2418
        %2452 = vmatpush.msra.mxu0 %v2414
        %2453 = vmatpush.msra.mxu0 %v2410
        %2454 = vmatpush.msra.mxu0 %v2406
        %2455 = vmatpush.msra.mxu0 %v2402
        %2456 = vmatpush.msra.mxu0 %v2398
        %2457 = vmatpush.msra.mxu0 %v2394
        %2458 = vmatpush.msra.mxu0 %v2390
        %2459 = vmatpush.msra.mxu0 %v2386
        %2460 = vmatpush.msra.mxu0 %v2382
        %2461 = vmatpush.msra.mxu0 %v2378
        %2462 = vmatpush.msra.mxu0 %v2374
        %2463 = vmatpush.msra.mxu0 %v2370
        %2464 = vmatpush.msra.mxu0 %v2366
        %2465 = vmatmul.f32.gmra.mxu0 %v2351
        %v2466 = vpop.f32.mrf.mxu0
        %v2467 = vadd.f32 0.0, %v2466
        %2468 = vdwg.mxu0
        %2469 = vmatpush.msra.mxu0 %v2427
        %2470 = vmatpush.msra.mxu0 %v2423
        %2471 = vmatpush.msra.mxu0 %v2419
        %2472 = vmatpush.msra.mxu0 %v2415
        %2473 = vmatpush.msra.mxu0 %v2411
        %2474 = vmatpush.msra.mxu0 %v2407
        %2475 = vmatpush.msra.mxu0 %v2403
        %2476 = vmatpush.msra.mxu0 %v2399
        %2477 = vmatpush.msra.mxu0 %v2395
        %2478 = vmatpush.msra.mxu0 %v2391
        %2479 = vmatpush.msra.mxu0 %v2387
        %2480 = vmatpush.msra.mxu0 %v2383
        %2481 = vmatpush.msra.mxu0 %v2379
        %2482 = vmatpush.msra.mxu0 %v2375
        %2483 = vmatpush.msra.mxu0 %v2371
        %2484 = vmatpush.msra.mxu0 %v2367
        %2485 = vmatmul.f32.gmra.mxu0 %v2351
        %v2486 = vpop.f32.mrf.mxu0
        %v2487 = vadd.f32 0.0, %v2486
        %2488 = vdwg.mxu0
        %2489 = vmatpush.msra.mxu0 %v2428
        %2490 = vmatpush.msra.mxu0 %v2424
        %2491 = vmatpush.msra.mxu0 %v2420
        %2492 = vmatpush.msra.mxu0 %v2416
        %2493 = vmatpush.msra.mxu0 %v2412
        %2494 = vmatpush.msra.mxu0 %v2408
        %2495 = vmatpush.msra.mxu0 %v2404
        %2496 = vmatpush.msra.mxu0 %v2400
        %2497 = vmatpush.msra.mxu0 %v2396
        %2498 = vmatpush.msra.mxu0 %v2392
        %2499 = vmatpush.msra.mxu0 %v2388
        %2500 = vmatpush.msra.mxu0 %v2384
        %2501 = vmatpush.msra.mxu0 %v2380
        %2502 = vmatpush.msra.mxu0 %v2376
        %2503 = vmatpush.msra.mxu0 %v2372
        %2504 = vmatpush.msra.mxu0 %v2368
        %2505 = vmatmul.f32.gmra.mxu0 %v2351
        %v2506 = vpop.f32.mrf.mxu0
        %v2507 = vadd.f32 0.0, %v2506
        %2508 = vdwg.mxu0
        %v2510 = vrot.slane %v2447, 1
        %v2512 = vadd.f32 %v2362, %v2447
        %v2513 = vadd.f32 %v2364, %v2510
        %v2514 = vld [vmem:[%s593] sm:$0xff]
        %v2515 = vld [vmem:[%s593 + $0x8] sm:$0xff]
        %v2516 = vld [vmem:[%s593 + $0x10] sm:$0xff]
        %v2517 = vld [vmem:[%s593 + $0x18] sm:$0xff]
        %v2518 = vld [vmem:[%s593 + $0x20] sm:$0xff]
        %v2519 = vld [vmem:[%s593 + $0x28] sm:$0xff]
        %v2520 = vld [vmem:[%s593 + $0x30] sm:$0xff]
        %v2521 = vld [vmem:[%s593 + $0x38] sm:$0xff]
        %v2522 = vld [vmem:[%s593 + $0x40] sm:$0xff]
        %v2523 = vld [vmem:[%s593 + $0x48] sm:$0xff]
        %v2524 = vld [vmem:[%s593 + $0x50] sm:$0xff]
        %v2525 = vld [vmem:[%s593 + $0x58] sm:$0xff]
        %v2526 = vld [vmem:[%s593 + $0x60] sm:$0xff]
        %v2527 = vld [vmem:[%s593 + $0x68] sm:$0xff]
        %v2528 = vld [vmem:[%s593 + $0x70] sm:$0xff]
        %v2529 = vld [vmem:[%s593 + $0x78] sm:$0xff]
        %v2530 = vld [vmem:[%s593 + $0x80] sm:$0xff]
        %v2531 = vld [vmem:[%s593 + $0x88] sm:$0xff]
        %v2532 = vld [vmem:[%s593 + $0x90] sm:$0xff]
        %v2533 = vld [vmem:[%s593 + $0x98] sm:$0xff]
        %v2534 = vld [vmem:[%s593 + $0xa0] sm:$0xff]
        %v2535 = vld [vmem:[%s593 + $0xa8] sm:$0xff]
        %v2536 = vld [vmem:[%s593 + $0xb0] sm:$0xff]
        %v2537 = vld [vmem:[%s593 + $0xb8] sm:$0xff]
        %v2538 = vld [vmem:[%s593 + $0xc0] sm:$0xff]
        %v2539 = vld [vmem:[%s593 + $0xc8] sm:$0xff]
        %v2540 = vld [vmem:[%s593 + $0xd0] sm:$0xff]
        %v2541 = vld [vmem:[%s593 + $0xd8] sm:$0xff]
        %v2542 = vld [vmem:[%s593 + $0xe0] sm:$0xff]
        %v2543 = vld [vmem:[%s593 + $0xe8] sm:$0xff]
        %v2544 = vld [vmem:[%s593 + $0xf0] sm:$0xff]
        %v2545 = vld [vmem:[%s593 + $0xf8] sm:$0xff]
        %v2548 = vperm.slane %v2512, 0
        %v2549 = vperm.slane %v2513, 0
        %v2552 = vadd.f32 %v2514, %v2548
        %v2553 = vadd.f32 %v2515, %v2548
        %v2554 = vadd.f32 %v2516, %v2548
        %v2555 = vadd.f32 %v2517, %v2548
        %v2556 = vadd.f32 %v2518, %v2548
        %v2557 = vadd.f32 %v2519, %v2548
        %v2558 = vadd.f32 %v2520, %v2548
        %v2559 = vadd.f32 %v2521, %v2548
        %v2560 = vadd.f32 %v2522, %v2548
        %v2561 = vadd.f32 %v2523, %v2548
        %v2562 = vadd.f32 %v2524, %v2548
        %v2563 = vadd.f32 %v2525, %v2548
        %v2564 = vadd.f32 %v2526, %v2548
        %v2565 = vadd.f32 %v2527, %v2548
        %v2566 = vadd.f32 %v2528, %v2548
        %v2567 = vadd.f32 %v2529, %v2548
        %v2568 = vadd.f32 %v2530, %v2549
        %v2569 = vadd.f32 %v2531, %v2549
        %v2570 = vadd.f32 %v2532, %v2549
        %v2571 = vadd.f32 %v2533, %v2549
        %v2572 = vadd.f32 %v2534, %v2549
        %v2573 = vadd.f32 %v2535, %v2549
        %v2574 = vadd.f32 %v2536, %v2549
        %v2575 = vadd.f32 %v2537, %v2549
        %v2576 = vadd.f32 %v2538, %v2549
        %v2577 = vadd.f32 %v2539, %v2549
        %v2578 = vadd.f32 %v2540, %v2549
        %v2579 = vadd.f32 %v2541, %v2549
        %v2580 = vadd.f32 %v2542, %v2549
        %v2581 = vadd.f32 %v2543, %v2549
        %v2582 = vadd.f32 %v2544, %v2549
        %v2583 = vadd.f32 %v2545, %v2549
        %v2584 = vtanh.pop %v2552
        %v2585 = vtanh.pop %v2553
        %v2586 = vtanh.pop %v2554
        %v2587 = vtanh.pop %v2555
        %v2588 = vtanh.pop %v2556
        %v2589 = vtanh.pop %v2557
        %v2590 = vtanh.pop %v2558
        %v2591 = vtanh.pop %v2559
        %v2592 = vtanh.pop %v2560
        %v2593 = vtanh.pop %v2561
        %v2594 = vtanh.pop %v2562
        %v2595 = vtanh.pop %v2563
        %v2596 = vtanh.pop %v2564
        %v2597 = vtanh.pop %v2565
        %v2598 = vtanh.pop %v2566
        %v2599 = vtanh.pop %v2567
        %v2600 = vtanh.pop %v2568
        %v2601 = vtanh.pop %v2569
        %v2602 = vtanh.pop %v2570
        %v2603 = vtanh.pop %v2571
        %v2604 = vtanh.pop %v2572
        %v2605 = vtanh.pop %v2573
        %v2606 = vtanh.pop %v2574
        %v2607 = vtanh.pop %v2575
        %v2608 = vtanh.pop %v2576
        %v2609 = vtanh.pop %v2577
        %v2610 = vtanh.pop %v2578
        %v2611 = vtanh.pop %v2579
        %v2612 = vtanh.pop %v2580
        %v2613 = vtanh.pop %v2581
        %v2614 = vtanh.pop %v2582
        %v2615 = vtanh.pop %v2583
        %v2616 = vmul.f32 %v2584, %v864
        %v2617 = vmul.f32 %v2585, %v864
        %v2618 = vmul.f32 %v2586, %v864
        %v2619 = vmul.f32 %v2587, %v864
        %v2620 = vmul.f32 %v2588, %v864
        %v2621 = vmul.f32 %v2589, %v864
        %v2622 = vmul.f32 %v2590, %v864
        %v2623 = vmul.f32 %v2591, %v864
        %v2624 = vmul.f32 %v2592, %v864
        %v2625 = vmul.f32 %v2593, %v864
        %v2626 = vmul.f32 %v2594, %v864
        %v2627 = vmul.f32 %v2595, %v864
        %v2628 = vmul.f32 %v2596, %v864
        %v2629 = vmul.f32 %v2597, %v864
        %v2630 = vmul.f32 %v2598, %v864
        %v2631 = vmul.f32 %v2599, %v864
        %v2632 = vmul.f32 %v2600, %v864
        %v2633 = vmul.f32 %v2601, %v864
        %v2634 = vmul.f32 %v2602, %v864
        %v2635 = vmul.f32 %v2603, %v864
        %v2636 = vmul.f32 %v2604, %v864
        %v2637 = vmul.f32 %v2605, %v864
        %v2638 = vmul.f32 %v2606, %v864
        %v2639 = vmul.f32 %v2607, %v864
        %v2640 = vmul.f32 %v2608, %v864
        %v2641 = vmul.f32 %v2609, %v864
        %v2642 = vmul.f32 %v2610, %v864
        %v2643 = vmul.f32 %v2611, %v864
        %v2644 = vmul.f32 %v2612, %v864
        %v2645 = vmul.f32 %v2613, %v864
        %v2646 = vmul.f32 %v2614, %v864
        %v2647 = vmul.f32 %v2615, %v864
        %2648 = vadd.xlane.f32.xlu0 %v2616
        %v2649 = vpop.xlane.xlu0 %2648
        %2650 = vadd.xlane.f32.xlu0 %v2617
        %v2651 = vpop.xlane.xlu0 %2650
        %2652 = vadd.xlane.f32.xlu0 %v2618
        %v2653 = vpop.xlane.xlu0 %2652
        %2654 = vadd.xlane.f32.xlu0 %v2619
        %v2655 = vpop.xlane.xlu0 %2654
        %2656 = vadd.xlane.f32.xlu0 %v2620
        %v2657 = vpop.xlane.xlu0 %2656
        %2658 = vadd.xlane.f32.xlu0 %v2621
        %v2659 = vpop.xlane.xlu0 %2658
        %2660 = vadd.xlane.f32.xlu0 %v2622
        %v2661 = vpop.xlane.xlu0 %2660
        %2662 = vadd.xlane.f32.xlu0 %v2623
        %v2663 = vpop.xlane.xlu0 %2662
        %2664 = vadd.xlane.f32.xlu0 %v2624
        %v2665 = vpop.xlane.xlu0 %2664
        %2666 = vadd.xlane.f32.xlu0 %v2625
        %v2667 = vpop.xlane.xlu0 %2666
        %2668 = vadd.xlane.f32.xlu0 %v2626
        %v2669 = vpop.xlane.xlu0 %2668
        %2670 = vadd.xlane.f32.xlu0 %v2627
        %v2671 = vpop.xlane.xlu0 %2670
        %2672 = vadd.xlane.f32.xlu0 %v2628
        %v2673 = vpop.xlane.xlu0 %2672
        %2674 = vadd.xlane.f32.xlu0 %v2629
        %v2675 = vpop.xlane.xlu0 %2674
        %2676 = vadd.xlane.f32.xlu0 %v2630
        %v2677 = vpop.xlane.xlu0 %2676
        %2678 = vadd.xlane.f32.xlu0 %v2631
        %v2679 = vpop.xlane.xlu0 %2678
        %2680 = vadd.xlane.f32.xlu0 %v2632
        %v2681 = vpop.xlane.xlu0 %2680
        %2682 = vadd.xlane.f32.xlu0 %v2633
        %v2683 = vpop.xlane.xlu0 %2682
        %2684 = vadd.xlane.f32.xlu0 %v2634
        %v2685 = vpop.xlane.xlu0 %2684
        %2686 = vadd.xlane.f32.xlu0 %v2635
        %v2687 = vpop.xlane.xlu0 %2686
        %2688 = vadd.xlane.f32.xlu0 %v2636
        %v2689 = vpop.xlane.xlu0 %2688
        %2690 = vadd.xlane.f32.xlu0 %v2637
        %v2691 = vpop.xlane.xlu0 %2690
        %2692 = vadd.xlane.f32.xlu0 %v2638
        %v2693 = vpop.xlane.xlu0 %2692
        %2694 = vadd.xlane.f32.xlu0 %v2639
        %v2695 = vpop.xlane.xlu0 %2694
        %2696 = vadd.xlane.f32.xlu0 %v2640
        %v2697 = vpop.xlane.xlu0 %2696
        %2698 = vadd.xlane.f32.xlu0 %v2641
        %v2699 = vpop.xlane.xlu0 %2698
        %2700 = vadd.xlane.f32.xlu0 %v2642
        %v2701 = vpop.xlane.xlu0 %2700
        %2702 = vadd.xlane.f32.xlu0 %v2643
        %v2703 = vpop.xlane.xlu0 %2702
        %2704 = vadd.xlane.f32.xlu0 %v2644
        %v2705 = vpop.xlane.xlu0 %2704
        %2706 = vadd.xlane.f32.xlu0 %v2645
        %v2707 = vpop.xlane.xlu0 %2706
        %2708 = vadd.xlane.f32.xlu0 %v2646
        %v2709 = vpop.xlane.xlu0 %2708
        %2710 = vadd.xlane.f32.xlu0 %v2647
        %v2711 = vpop.xlane.xlu0 %2710
        %v2744 = vperm.slane %v2649, %v995
        %v2745 = vperm.slane %v2651, %v997
        %v2746 = vsel %vm999, %v2745, %v2744
        %v2747 = vperm.slane %v2653, %v1001
        %v2748 = vsel %vm1003, %v2747, %v2746
        %v2749 = vperm.slane %v2655, %v1005
        %v2750 = vsel %vm1007, %v2749, %v2748
        %v2751 = vperm.slane %v2657, %v1009
        %v2752 = vsel %vm1011, %v2751, %v2750
        %v2753 = vperm.slane %v2659, %v1013
        %v2754 = vsel %vm1015, %v2753, %v2752
        %v2755 = vperm.slane %v2661, %v1017
        %v2756 = vsel %vm1019, %v2755, %v2754
        %v2757 = vperm.slane %v2663, %v1021
        %v2758 = vsel %vm1023, %v2757, %v2756
        %v2759 = vperm.slane %v2665, %v1025
        %v2760 = vsel %vm1027, %v2759, %v2758
        %v2761 = vperm.slane %v2667, %v1029
        %v2762 = vsel %vm1031, %v2761, %v2760
        %v2763 = vperm.slane %v2669, %v1033
        %v2764 = vsel %vm1035, %v2763, %v2762
        %v2765 = vperm.slane %v2671, %v1037
        %v2766 = vsel %vm1039, %v2765, %v2764
        %v2767 = vperm.slane %v2673, %v1041
        %v2768 = vsel %vm1043, %v2767, %v2766
        %v2769 = vperm.slane %v2675, %v1045
        %v2770 = vsel %vm1047, %v2769, %v2768
        %v2771 = vperm.slane %v2677, %v1049
        %v2772 = vsel %vm1051, %v2771, %v2770
        %v2773 = vperm.slane %v2679, %v1053
        %v2774 = vsel %vm1055, %v2773, %v2772
        %v2775 = vperm.slane %v2681, %v995
        %v2776 = vperm.slane %v2683, %v997
        %v2777 = vsel %vm999, %v2776, %v2775
        %v2778 = vperm.slane %v2685, %v1001
        %v2779 = vsel %vm1003, %v2778, %v2777
        %v2780 = vperm.slane %v2687, %v1005
        %v2781 = vsel %vm1007, %v2780, %v2779
        %v2782 = vperm.slane %v2689, %v1009
        %v2783 = vsel %vm1011, %v2782, %v2781
        %v2784 = vperm.slane %v2691, %v1013
        %v2785 = vsel %vm1015, %v2784, %v2783
        %v2786 = vperm.slane %v2693, %v1017
        %v2787 = vsel %vm1019, %v2786, %v2785
        %v2788 = vperm.slane %v2695, %v1021
        %v2789 = vsel %vm1023, %v2788, %v2787
        %v2790 = vperm.slane %v2697, %v1025
        %v2791 = vsel %vm1027, %v2790, %v2789
        %v2792 = vperm.slane %v2699, %v1029
        %v2793 = vsel %vm1031, %v2792, %v2791
        %v2794 = vperm.slane %v2701, %v1033
        %v2795 = vsel %vm1035, %v2794, %v2793
        %v2796 = vperm.slane %v2703, %v1037
        %v2797 = vsel %vm1039, %v2796, %v2795
        %v2798 = vperm.slane %v2705, %v1041
        %v2799 = vsel %vm1043, %v2798, %v2797
        %v2800 = vperm.slane %v2707, %v1045
        %v2801 = vsel %vm1047, %v2800, %v2799
        %v2802 = vperm.slane %v2709, %v1049
        %v2803 = vsel %vm1051, %v2802, %v2801
        %v2804 = vperm.slane %v2711, %v1053
        %v2805 = vsel %vm1055, %v2804, %v2803
        %v2806 = vsel %vm1088, %v2805, %v2774
        %v2808 = vsel %vm603, %v2806, -1e+30
        %v2809 = vsel %vm1092, %v2808, -inf
        %2810 = vmax.xlane.f32.xlu0 %v2809
        %v2811 = vpop.xlane.xlu0 %2810
        %v2812 = vsub.f32 %v2808, %v2811
        %v2813 = vmul.f32 %v2812, 1.442695
        %v2814 = vpow.pop %v2813
        %v2815 = vmul.f32 %v2814, %v602
        %v2816 = vsel %vm1092, %v2815, 0.0
        %2817 = vadd.xlane.f32.xlu0 %v2816
        %v2818 = vpop.xlane.xlu0 %2817
        %v2819 = vadd.f32 %v2818, 1e-13
        %v2820 = vrcp.pop %v2819
        %v2821 = vmul.f32 %v2819, %v2820
        %v2822 = vsub.f32 1.0, %v2821
        %v2823 = vmul.f32 %v2820, %v2822
        %v2824 = vadd.f32 %v2820, %v2823
        %vm2825 = vweird.f32 %v2819
        %vm2826 = vweird.f32 %v2820
        %vm2827 = vmor %vm2825, %vm2826
        %v2828 = vsel %vm2827, %v2820, %v2824
        %v2829 = vand.u32 2147483647, %v2819
        %vm2830 = vcmp.eq.f32.partialorder %v2829, 8.507059e+37
        %v2831 = vand.u32 %v2819, 2147483648
        %v2832 = vor.u32 1.1754944e-38, %v2831
        %v2833 = vsel %vm2830, %v2832, %v2828
        %v2834 = vmul.f32 %v2815, %v2833
        %v2836 = vrot.slane %v2834, 1
        %v2838 = vld [vmem:[%s582] sm:$0xff]
        %v2839 = vld [vmem:[%s582 + $0x8] sm:$0xff]
        %v2840 = vld [vmem:[%s582 + $0x10] sm:$0xff]
        %v2841 = vld [vmem:[%s582 + $0x18] sm:$0xff]
        %v2842 = vld [vmem:[%s582 + $0x20] sm:$0xff]
        %v2843 = vld [vmem:[%s582 + $0x28] sm:$0xff]
        %v2844 = vld [vmem:[%s582 + $0x30] sm:$0xff]
        %v2845 = vld [vmem:[%s582 + $0x38] sm:$0xff]
        %v2846 = vld [vmem:[%s582 + $0x40] sm:$0xff]
        %v2847 = vld [vmem:[%s582 + $0x48] sm:$0xff]
        %v2848 = vld [vmem:[%s582 + $0x50] sm:$0xff]
        %v2849 = vld [vmem:[%s582 + $0x58] sm:$0xff]
        %v2850 = vld [vmem:[%s582 + $0x60] sm:$0xff]
        %v2851 = vld [vmem:[%s582 + $0x68] sm:$0xff]
        %v2852 = vld [vmem:[%s582 + $0x70] sm:$0xff]
        %v2853 = vld [vmem:[%s582 + $0x78] sm:$0xff]
        %v2854 = vld [vmem:[%s582 + $0x80] sm:$0xff]
        %v2855 = vld [vmem:[%s582 + $0x88] sm:$0xff]
        %v2856 = vld [vmem:[%s582 + $0x90] sm:$0xff]
        %v2857 = vld [vmem:[%s582 + $0x98] sm:$0xff]
        %v2858 = vld [vmem:[%s582 + $0xa0] sm:$0xff]
        %v2859 = vld [vmem:[%s582 + $0xa8] sm:$0xff]
        %v2860 = vld [vmem:[%s582 + $0xb0] sm:$0xff]
        %v2861 = vld [vmem:[%s582 + $0xb8] sm:$0xff]
        %v2862 = vld [vmem:[%s582 + $0xc0] sm:$0xff]
        %v2863 = vld [vmem:[%s582 + $0xc8] sm:$0xff]
        %v2864 = vld [vmem:[%s582 + $0xd0] sm:$0xff]
        %v2865 = vld [vmem:[%s582 + $0xd8] sm:$0xff]
        %v2866 = vld [vmem:[%s582 + $0xe0] sm:$0xff]
        %v2867 = vld [vmem:[%s582 + $0xe8] sm:$0xff]
        %v2868 = vld [vmem:[%s582 + $0xf0] sm:$0xff]
        %v2869 = vld [vmem:[%s582 + $0xf8] sm:$0xff]
        %2870 = vmatpush.msra.mxu0 %v2853
        %2871 = vmatpush.msra.mxu0 %v2852
        %2872 = vmatpush.msra.mxu0 %v2851
        %2873 = vmatpush.msra.mxu0 %v2850
        %2874 = vmatpush.msra.mxu0 %v2849
        %2875 = vmatpush.msra.mxu0 %v2848
        %2876 = vmatpush.msra.mxu0 %v2847
        %2877 = vmatpush.msra.mxu0 %v2846
        %2878 = vmatpush.msra.mxu0 %v2845
        %2879 = vmatpush.msra.mxu0 %v2844
        %2880 = vmatpush.msra.mxu0 %v2843
        %2881 = vmatpush.msra.mxu0 %v2842
        %2882 = vmatpush.msra.mxu0 %v2841
        %2883 = vmatpush.msra.mxu0 %v2840
        %2884 = vmatpush.msra.mxu0 %v2839
        %2885 = vmatpush.msra.mxu0 %v2838
        %2886 = vmatmul.f32.gmra.mxu0 %v2834
        %v2887 = vpop.f32.mrf.mxu0
        %v2888 = vadd.f32 0.0, %v2887
        %2889 = vdwg.mxu0
        %2890 = vmatpush.msra.mxu0 %v2869
        %2891 = vmatpush.msra.mxu0 %v2868
        %2892 = vmatpush.msra.mxu0 %v2867
        %2893 = vmatpush.msra.mxu0 %v2866
        %2894 = vmatpush.msra.mxu0 %v2865
        %2895 = vmatpush.msra.mxu0 %v2864
        %2896 = vmatpush.msra.mxu0 %v2863
        %2897 = vmatpush.msra.mxu0 %v2862
        %2898 = vmatpush.msra.mxu0 %v2861
        %2899 = vmatpush.msra.mxu0 %v2860
        %2900 = vmatpush.msra.mxu0 %v2859
        %2901 = vmatpush.msra.mxu0 %v2858
        %2902 = vmatpush.msra.mxu0 %v2857
        %2903 = vmatpush.msra.mxu0 %v2856
        %2904 = vmatpush.msra.mxu0 %v2855
        %2905 = vmatpush.msra.mxu0 %v2854
        %2906 = vmatmul.f32.gmra.mxu0 %v2836
        %v2907 = vpop.f32.mrf.mxu0
        %v2908 = vadd.f32 0.0, %v2907
        %2909 = vdwg.mxu0
        %v2910 = vld [vmem:[%s7] sm:$0xff]
        %v2911 = vld [vmem:[%s7 + $0x8] sm:$0xff]
        %v2914 = vrot.slane %v2908, 7
        %v2915 = vsel %vm1088, %v2914, %v2888
        %v2916 = vsel %vm1200, %v2915, 0
        %2918 = vmatpush.msra.mxu0 0.0
        %2919 = vmatpush.msra.mxu0 0.0
        %2920 = vmatpush.msra.mxu0 0.0
        %2921 = vmatpush.msra.mxu0 0.0
        %2922 = vmatpush.msra.mxu0 0.0
        %2923 = vmatpush.msra.mxu0 0.0
        %2924 = vmatpush.msra.mxu0 0.0
        %2925 = vmatpush.msra.mxu0 0.0
        %2926 = vmatpush.msra.mxu0 0.0
        %2927 = vmatpush.msra.mxu0 0.0
        %2928 = vmatpush.msra.mxu0 0.0
        %2929 = vmatpush.msra.mxu0 0.0
        %2930 = vmatpush.msra.mxu0 0.0
        %2931 = vmatpush.msra.mxu0 0.0
        %2932 = vmatpush.msra.mxu0 %v2911
        %2933 = vmatpush.msra.mxu0 %v2910
        %2934 = vmatmul.f32.gmra.mxu0 %v2916
        %v2935 = vpop.f32.mrf.mxu0
        %v2936 = vadd.f32 0.0, %v2935
        %2937 = vdwg.mxu0
        %v2940 = vrot.slane %v2362, 1
        %v2941 = vrot.slane %v2364, 1
        %v2945 = vrot.slane %v2936, 1
        %v2947 = vadd.f32 %v2940, %v2936
        %v2948 = vadd.f32 %v2941, %v2945
        %v2949 = vxor.u32 %v2947, 2147483648
        %v2950 = vxor.u32 %v2948, 2147483648
        %v2951 = vmul.f32 %v2949, 1.442695
        %v2952 = vpow.pop %v2951
        %v2953 = vmul.f32 %v2950, 1.442695
        %v2954 = vpow.pop %v2953
        %v2955 = vadd.f32 %v2952, 1.0
        %v2956 = vadd.f32 %v2954, 1.0
        %v2957 = vrcp.pop %v2955
        %v2958 = vmul.f32 %v2955, %v2957
        %v2959 = vsub.f32 1.0, %v2958
        %v2960 = vmul.f32 %v2957, %v2959
        %v2961 = vadd.f32 %v2957, %v2960
        %vm2962 = vweird.f32 %v2955
        %vm2963 = vweird.f32 %v2957
        %vm2964 = vmor %vm2962, %vm2963
        %v2965 = vsel %vm2964, %v2957, %v2961
        %v2966 = vand.u32 2147483647, %v2955
        %vm2967 = vcmp.eq.f32.partialorder %v2966, 8.507059e+37
        %v2968 = vand.u32 %v2955, 2147483648
        %v2969 = vor.u32 1.1754944e-38, %v2968
        %v2970 = vsel %vm2967, %v2969, %v2965
        %v2971 = vmul.f32 1.0, %v2970
        %v2972 = vrcp.pop %v2956
        %v2973 = vmul.f32 %v2956, %v2972
        %v2974 = vsub.f32 1.0, %v2973
        %v2975 = vmul.f32 %v2972, %v2974
        %v2976 = vadd.f32 %v2972, %v2975
        %vm2977 = vweird.f32 %v2956
        %vm2978 = vweird.f32 %v2972
        %vm2979 = vmor %vm2977, %vm2978
        %v2980 = vsel %vm2979, %v2972, %v2976
        %v2981 = vand.u32 2147483647, %v2956
        %vm2982 = vcmp.eq.f32.partialorder %v2981, 8.507059e+37
        %v2983 = vand.u32 %v2956, 2147483648
        %v2984 = vor.u32 1.1754944e-38, %v2983
        %v2985 = vsel %vm2982, %v2984, %v2980
        %v2986 = vmul.f32 1.0, %v2985
        %v2987 = vmul.f32 %v2971, %v2359
        %v2988 = vmul.f32 %v2986, %v2360
        %2989 = vrot.lane.b32.xlu0 %v2888, 16
        %v2990 = vpop.permute.xlu0 %2989
        %2991 = vrot.lane.b32.xlu0 %v2908, 16
        %v2992 = vpop.permute.xlu0 %2991
        %v2995 = vmul.f32 %v2971, %v2990
        %v2996 = vmul.f32 %v2986, %v2992
        %v2997 = vld [vmem:[%s8] sm:$0xff]
        %v2998 = vld [vmem:[%s8 + $0x8] sm:$0xff]
        %v2999 = vld [vmem:[%s8 + $0x10] sm:$0xff]
        %v3000 = vld [vmem:[%s8 + $0x18] sm:$0xff]
        %v3001 = vld [vmem:[%s8 + $0x20] sm:$0xff]
        %v3002 = vld [vmem:[%s8 + $0x28] sm:$0xff]
        %v3003 = vld [vmem:[%s9] sm:$0xff]
        %v3004 = vld [vmem:[%s9 + $0x8] sm:$0xff]
        %v3005 = vld [vmem:[%s9 + $0x10] sm:$0xff]
        %v3006 = vld [vmem:[%s9 + $0x18] sm:$0xff]
        %v3007 = vld [vmem:[%s9 + $0x20] sm:$0xff]
        %v3008 = vld [vmem:[%s9 + $0x28] sm:$0xff]
        %3011 = vst [vmem:[#allocation1] ss:$9 sm:$0xff] %v2995
        %s3012 = scalar_lea.vmem [#allocation1], 1
        %3013 = vst [vmem:[%s3012] ss:$9 sm:$0xff] %v2996
        %v3014 = vld [vmem:[#allocation1] sm:$0xff]
        %3015 = vrot.lane.b32.xlu0 %v3014, 112
        %v3016 = vpop.permute.xlu0 %3015
        %v3017 = vsel %vm1200, %v3016, 0
        %3019 = vmatpush.msra.mxu0 0.0
        %3020 = vmatpush.msra.mxu0 0.0
        %3021 = vmatpush.msra.mxu0 0.0
        %3022 = vmatpush.msra.mxu0 0.0
        %3023 = vmatpush.msra.mxu0 0.0
        %3024 = vmatpush.msra.mxu0 0.0
        %3025 = vmatpush.msra.mxu0 0.0
        %3026 = vmatpush.msra.mxu0 0.0
        %3027 = vmatpush.msra.mxu0 0.0
        %3028 = vmatpush.msra.mxu0 0.0
        %3029 = vmatpush.msra.mxu0 0.0
        %3030 = vmatpush.msra.mxu0 0.0
        %3031 = vmatpush.msra.mxu0 0.0
        %3032 = vmatpush.msra.mxu0 0.0
        %3033 = vmatpush.msra.mxu0 %v3006
        %3034 = vmatpush.msra.mxu0 %v3003
        %3035 = vmatmul.f32.gmra.mxu0 %v3017
        %v3036 = vpop.f32.mrf.mxu0
        %v3037 = vadd.f32 0.0, %v3036
        %3038 = vdwg.mxu0
        %3039 = vmatpush.msra.mxu0 0.0
        %3040 = vmatpush.msra.mxu0 0.0
        %3041 = vmatpush.msra.mxu0 0.0
        %3042 = vmatpush.msra.mxu0 0.0
        %3043 = vmatpush.msra.mxu0 0.0
        %3044 = vmatpush.msra.mxu0 0.0
        %3045 = vmatpush.msra.mxu0 0.0
        %3046 = vmatpush.msra.mxu0 0.0
        %3047 = vmatpush.msra.mxu0 0.0
        %3048 = vmatpush.msra.mxu0 0.0
        %3049 = vmatpush.msra.mxu0 0.0
        %3050 = vmatpush.msra.mxu0 0.0
        %3051 = vmatpush.msra.mxu0 0.0
        %3052 = vmatpush.msra.mxu0 0.0
        %3053 = vmatpush.msra.mxu0 %v3007
        %3054 = vmatpush.msra.mxu0 %v3004
        %3055 = vmatmul.f32.gmra.mxu0 %v3017
        %v3056 = vpop.f32.mrf.mxu0
        %v3057 = vadd.f32 0.0, %v3056
        %3058 = vdwg.mxu0
        %3059 = vmatpush.msra.mxu0 0.0
        %3060 = vmatpush.msra.mxu0 0.0
        %3061 = vmatpush.msra.mxu0 0.0
        %3062 = vmatpush.msra.mxu0 0.0
        %3063 = vmatpush.msra.mxu0 0.0
        %3064 = vmatpush.msra.mxu0 0.0
        %3065 = vmatpush.msra.mxu0 0.0
        %3066 = vmatpush.msra.mxu0 0.0
        %3067 = vmatpush.msra.mxu0 0.0
        %3068 = vmatpush.msra.mxu0 0.0
        %3069 = vmatpush.msra.mxu0 0.0
        %3070 = vmatpush.msra.mxu0 0.0
        %3071 = vmatpush.msra.mxu0 0.0
        %3072 = vmatpush.msra.mxu0 0.0
        %3073 = vmatpush.msra.mxu0 %v3008
        %3074 = vmatpush.msra.mxu0 %v3005
        %3075 = vmatmul.f32.gmra.mxu0 %v3017
        %v3076 = vpop.f32.mrf.mxu0
        %v3077 = vadd.f32 0.0, %v3076
        %3078 = vdwg.mxu0
        %3081 = vst [vmem:[#allocation1] ss:$9 sm:$0xff] %v2987
        %s3082 = scalar_lea.vmem [#allocation1], 1
        %3083 = vst [vmem:[%s3082] ss:$9 sm:$0xff] %v2988
        %v3084 = vld [vmem:[#allocation1] sm:$0xff]
        %v3085 = vsel %vm1200, %v3084, 0
        %3087 = vmatpush.msra.mxu0 0.0
        %3088 = vmatpush.msra.mxu0 0.0
        %3089 = vmatpush.msra.mxu0 0.0
        %3090 = vmatpush.msra.mxu0 0.0
        %3091 = vmatpush.msra.mxu0 0.0
        %3092 = vmatpush.msra.mxu0 0.0
        %3093 = vmatpush.msra.mxu0 0.0
        %3094 = vmatpush.msra.mxu0 0.0
        %3095 = vmatpush.msra.mxu0 0.0
        %3096 = vmatpush.msra.mxu0 0.0
        %3097 = vmatpush.msra.mxu0 0.0
        %3098 = vmatpush.msra.mxu0 0.0
        %3099 = vmatpush.msra.mxu0 0.0
        %3100 = vmatpush.msra.mxu0 0.0
        %3101 = vmatpush.msra.mxu0 %v3000
        %3102 = vmatpush.msra.mxu0 %v2997
        %3103 = vmatmul.f32.gmra.mxu0 %v3085
        %v3104 = vpop.f32.mrf.mxu0
        %v3105 = vadd.f32 %v3037, %v3104
        %3106 = vdwg.mxu0
        %3107 = vmatpush.msra.mxu0 0.0
        %3108 = vmatpush.msra.mxu0 0.0
        %3109 = vmatpush.msra.mxu0 0.0
        %3110 = vmatpush.msra.mxu0 0.0
        %3111 = vmatpush.msra.mxu0 0.0
        %3112 = vmatpush.msra.mxu0 0.0
        %3113 = vmatpush.msra.mxu0 0.0
        %3114 = vmatpush.msra.mxu0 0.0
        %3115 = vmatpush.msra.mxu0 0.0
        %3116 = vmatpush.msra.mxu0 0.0
        %3117 = vmatpush.msra.mxu0 0.0
        %3118 = vmatpush.msra.mxu0 0.0
        %3119 = vmatpush.msra.mxu0 0.0
        %3120 = vmatpush.msra.mxu0 0.0
        %3121 = vmatpush.msra.mxu0 %v3001
        %3122 = vmatpush.msra.mxu0 %v2998
        %3123 = vmatmul.f32.gmra.mxu0 %v3085
        %v3124 = vpop.f32.mrf.mxu0
        %v3125 = vadd.f32 %v3057, %v3124
        %3126 = vdwg.mxu0
        %3127 = vmatpush.msra.mxu0 0.0
        %3128 = vmatpush.msra.mxu0 0.0
        %3129 = vmatpush.msra.mxu0 0.0
        %3130 = vmatpush.msra.mxu0 0.0
        %3131 = vmatpush.msra.mxu0 0.0
        %3132 = vmatpush.msra.mxu0 0.0
        %3133 = vmatpush.msra.mxu0 0.0
        %3134 = vmatpush.msra.mxu0 0.0
        %3135 = vmatpush.msra.mxu0 0.0
        %3136 = vmatpush.msra.mxu0 0.0
        %3137 = vmatpush.msra.mxu0 0.0
        %3138 = vmatpush.msra.mxu0 0.0
        %3139 = vmatpush.msra.mxu0 0.0
        %3140 = vmatpush.msra.mxu0 0.0
        %3141 = vmatpush.msra.mxu0 %v3002
        %3142 = vmatpush.msra.mxu0 %v2999
        %3143 = vmatmul.f32.gmra.mxu0 %v3085
        %v3144 = vpop.f32.mrf.mxu0
        %v3145 = vadd.f32 %v3077, %v3144
        %3146 = vdwg.mxu0
        %v3147 = vadd.f32 %v3105, %v1439
        %v3148 = vadd.f32 %v3125, %v1440
        %v3149 = vadd.f32 %v3145, %v1441
        %v3150 = vadd.f32 %v2467, %v1451
        %v3151 = vadd.f32 %v2487, %v1452
        %v3152 = vadd.f32 %v2507, %v1453
        %v3153 = vadd.f32 %v3147, %v3150
        %v3154 = vxor.u32 %v3153, 2147483648
        %v3155 = vmul.f32 %v3154, 1.442695
        %v3156 = vpow.pop %v3155
        %v3157 = vadd.f32 %v3156, 1.0
        %v3158 = vrcp.pop %v3157
        %v3159 = vmul.f32 %v3157, %v3158
        %v3160 = vsub.f32 1.0, %v3159
        %v3161 = vmul.f32 %v3158, %v3160
        %v3162 = vadd.f32 %v3158, %v3161
        %vm3163 = vweird.f32 %v3157
        %vm3164 = vweird.f32 %v3158
        %vm3165 = vmor %vm3163, %vm3164
        %v3166 = vsel %vm3165, %v3158, %v3162
        %v3167 = vand.u32 2147483647, %v3157
        %vm3168 = vcmp.eq.f32.partialorder %v3167, 8.507059e+37
        %v3169 = vand.u32 %v3157, 2147483648
        %v3170 = vor.u32 1.1754944e-38, %v3169
        %v3171 = vsel %vm3168, %v3170, %v3166
        %v3172 = vmul.f32 1.0, %v3171
        %v3173 = vadd.f32 %v3148, %v3151
        %v3174 = vxor.u32 %v3173, 2147483648
        %v3175 = vmul.f32 %v3174, 1.442695
        %v3176 = vpow.pop %v3175
        %v3177 = vadd.f32 %v3176, 1.0
        %v3178 = vrcp.pop %v3177
        %v3179 = vmul.f32 %v3177, %v3178
        %v3180 = vsub.f32 1.0, %v3179
        %v3181 = vmul.f32 %v3178, %v3180
        %v3182 = vadd.f32 %v3178, %v3181
        %vm3183 = vweird.f32 %v3177
        %vm3184 = vweird.f32 %v3178
        %vm3185 = vmor %vm3183, %vm3184
        %v3186 = vsel %vm3185, %v3178, %v3182
        %v3187 = vand.u32 2147483647, %v3177
        %vm3188 = vcmp.eq.f32.partialorder %v3187, 8.507059e+37
        %v3189 = vand.u32 %v3177, 2147483648
        %v3190 = vor.u32 1.1754944e-38, %v3189
        %v3191 = vsel %vm3188, %v3190, %v3186
        %v3192 = vmul.f32 1.0, %v3191
        %v3193 = vmul.f32 %v3172, %v3152
        %v3194 = vadd.f32 %v3149, %v3193
        %v3195 = vtanh.pop %v3194
        %v3196 = vsub.f32 1.0, %v3192
        %v3197 = vmul.f32 %v3196, %v3195
        %v3198 = vmul.f32 %v3192, %v2351
        %v3199 = vadd.f32 %v3197, %v3198
        %v3201 = vrot.slane %v3199, 1
        %3203 = vst [vmem:[%s568 + $0x2] sm:$0x1] %v3199
        %3204 = vst [vmem:[%s568 + $0xa] sm:$0x1] %v3201
        %3205 = vst [vmem:[%s574 + $0x2] sm:$0x1] %v2834
        %3206 = vst [vmem:[%s574 + $0xa] sm:$0x1] %v2836
        %v3207 = vld [vmem:[%s506 + $0x3] sm:$0x1]
        %v3208 = vld [vmem:[%s506 + $0xb] sm:$0x1]
        %s3209 = scalar_lea.vmem %s513, 3 [#allocation4]
        %v3210 = vld [vmem:[%s3209] ss:$8 sm:$0x3]
        %s3211 = scalar_lea.vmem %s513, 19 [#allocation4]
        %v3212 = vld [vmem:[%s3211] ss:$8 sm:$0x3]
        %v3213 = vld [vmem:[%s6] sm:$0xff]
        %v3214 = vld [vmem:[%s6 + $0x8] sm:$0xff]
        %v3215 = vld [vmem:[%s6 + $0x10] sm:$0xff]
        %v3216 = vld [vmem:[%s6 + $0x18] sm:$0xff]
        %v3217 = vld [vmem:[%s6 + $0x20] sm:$0xff]
        %v3218 = vld [vmem:[%s6 + $0x28] sm:$0xff]
        %v3219 = vld [vmem:[%s6 + $0x30] sm:$0xff]
        %v3220 = vld [vmem:[%s6 + $0x38] sm:$0xff]
        %v3221 = vld [vmem:[%s6 + $0x40] sm:$0xff]
        %v3222 = vld [vmem:[%s6 + $0x48] sm:$0xff]
        %v3223 = vld [vmem:[%s6 + $0x50] sm:$0xff]
        %v3224 = vld [vmem:[%s6 + $0x58] sm:$0xff]
        %v3225 = vld [vmem:[%s6 + $0x60] sm:$0xff]
        %v3226 = vld [vmem:[%s6 + $0x68] sm:$0xff]
        %v3227 = vld [vmem:[%s6 + $0x70] sm:$0xff]
        %v3228 = vld [vmem:[%s6 + $0x78] sm:$0xff]
        %v3229 = vld [vmem:[%s6 + $0x80] sm:$0xff]
        %v3230 = vld [vmem:[%s6 + $0x88] sm:$0xff]
        %v3231 = vld [vmem:[%s6 + $0x90] sm:$0xff]
        %v3232 = vld [vmem:[%s6 + $0x98] sm:$0xff]
        %v3233 = vld [vmem:[%s6 + $0xa0] sm:$0xff]
        %v3234 = vld [vmem:[%s6 + $0xa8] sm:$0xff]
        %v3235 = vld [vmem:[%s6 + $0xb0] sm:$0xff]
        %v3236 = vld [vmem:[%s6 + $0xb8] sm:$0xff]
        %v3237 = vld [vmem:[%s6 + $0xc0] sm:$0xff]
        %v3238 = vld [vmem:[%s6 + $0xc8] sm:$0xff]
        %v3239 = vld [vmem:[%s6 + $0xd0] sm:$0xff]
        %v3240 = vld [vmem:[%s6 + $0xd8] sm:$0xff]
        %v3241 = vld [vmem:[%s6 + $0xe0] sm:$0xff]
        %v3242 = vld [vmem:[%s6 + $0xe8] sm:$0xff]
        %v3243 = vld [vmem:[%s6 + $0xf0] sm:$0xff]
        %v3244 = vld [vmem:[%s6 + $0xf8] sm:$0xff]
        %v3245 = vld [vmem:[%s6 + $0x100] sm:$0xff]
        %v3246 = vld [vmem:[%s6 + $0x108] sm:$0xff]
        %v3247 = vld [vmem:[%s6 + $0x110] sm:$0xff]
        %v3248 = vld [vmem:[%s6 + $0x118] sm:$0xff]
        %v3249 = vld [vmem:[%s6 + $0x120] sm:$0xff]
        %v3250 = vld [vmem:[%s6 + $0x128] sm:$0xff]
        %v3251 = vld [vmem:[%s6 + $0x130] sm:$0xff]
        %v3252 = vld [vmem:[%s6 + $0x138] sm:$0xff]
        %v3253 = vld [vmem:[%s6 + $0x140] sm:$0xff]
        %v3254 = vld [vmem:[%s6 + $0x148] sm:$0xff]
        %v3255 = vld [vmem:[%s6 + $0x150] sm:$0xff]
        %v3256 = vld [vmem:[%s6 + $0x158] sm:$0xff]
        %v3257 = vld [vmem:[%s6 + $0x160] sm:$0xff]
        %v3258 = vld [vmem:[%s6 + $0x168] sm:$0xff]
        %v3259 = vld [vmem:[%s6 + $0x170] sm:$0xff]
        %v3260 = vld [vmem:[%s6 + $0x178] sm:$0xff]
        %v3261 = vld [vmem:[%s6 + $0x180] sm:$0xff]
        %v3262 = vld [vmem:[%s6 + $0x188] sm:$0xff]
        %v3263 = vld [vmem:[%s6 + $0x190] sm:$0xff]
        %v3264 = vld [vmem:[%s6 + $0x198] sm:$0xff]
        %v3265 = vld [vmem:[%s6 + $0x1a0] sm:$0xff]
        %v3266 = vld [vmem:[%s6 + $0x1a8] sm:$0xff]
        %v3267 = vld [vmem:[%s6 + $0x1b0] sm:$0xff]
        %v3268 = vld [vmem:[%s6 + $0x1b8] sm:$0xff]
        %v3269 = vld [vmem:[%s6 + $0x1c0] sm:$0xff]
        %v3270 = vld [vmem:[%s6 + $0x1c8] sm:$0xff]
        %v3271 = vld [vmem:[%s6 + $0x1d0] sm:$0xff]
        %v3272 = vld [vmem:[%s6 + $0x1d8] sm:$0xff]
        %v3273 = vld [vmem:[%s6 + $0x1e0] sm:$0xff]
        %v3274 = vld [vmem:[%s6 + $0x1e8] sm:$0xff]
        %v3275 = vld [vmem:[%s6 + $0x1f0] sm:$0xff]
        %v3276 = vld [vmem:[%s6 + $0x1f8] sm:$0xff]
        %3277 = vmatpush.msra.mxu0 %v3273
        %3278 = vmatpush.msra.mxu0 %v3269
        %3279 = vmatpush.msra.mxu0 %v3265
        %3280 = vmatpush.msra.mxu0 %v3261
        %3281 = vmatpush.msra.mxu0 %v3257
        %3282 = vmatpush.msra.mxu0 %v3253
        %3283 = vmatpush.msra.mxu0 %v3249
        %3284 = vmatpush.msra.mxu0 %v3245
        %3285 = vmatpush.msra.mxu0 %v3241
        %3286 = vmatpush.msra.mxu0 %v3237
        %3287 = vmatpush.msra.mxu0 %v3233
        %3288 = vmatpush.msra.mxu0 %v3229
        %3289 = vmatpush.msra.mxu0 %v3225
        %3290 = vmatpush.msra.mxu0 %v3221
        %3291 = vmatpush.msra.mxu0 %v3217
        %3292 = vmatpush.msra.mxu0 %v3213
        %3293 = vmatmul.f32.gmra.mxu0 %v3199
        %v3294 = vpop.f32.mrf.mxu0
        %v3295 = vadd.f32 0.0, %v3294
        %3296 = vdwg.mxu0
        %3297 = vmatpush.msra.mxu0 %v3274
        %3298 = vmatpush.msra.mxu0 %v3270
        %3299 = vmatpush.msra.mxu0 %v3266
        %3300 = vmatpush.msra.mxu0 %v3262
        %3301 = vmatpush.msra.mxu0 %v3258
        %3302 = vmatpush.msra.mxu0 %v3254
        %3303 = vmatpush.msra.mxu0 %v3250
        %3304 = vmatpush.msra.mxu0 %v3246
        %3305 = vmatpush.msra.mxu0 %v3242
        %3306 = vmatpush.msra.mxu0 %v3238
        %3307 = vmatpush.msra.mxu0 %v3234
        %3308 = vmatpush.msra.mxu0 %v3230
        %3309 = vmatpush.msra.mxu0 %v3226
        %3310 = vmatpush.msra.mxu0 %v3222
        %3311 = vmatpush.msra.mxu0 %v3218
        %3312 = vmatpush.msra.mxu0 %v3214
        %3313 = vmatmul.f32.gmra.mxu0 %v3199
        %v3314 = vpop.f32.mrf.mxu0
        %v3315 = vadd.f32 0.0, %v3314
        %3316 = vdwg.mxu0
        %3317 = vmatpush.msra.mxu0 %v3275
        %3318 = vmatpush.msra.mxu0 %v3271
        %3319 = vmatpush.msra.mxu0 %v3267
        %3320 = vmatpush.msra.mxu0 %v3263
        %3321 = vmatpush.msra.mxu0 %v3259
        %3322 = vmatpush.msra.mxu0 %v3255
        %3323 = vmatpush.msra.mxu0 %v3251
        %3324 = vmatpush.msra.mxu0 %v3247
        %3325 = vmatpush.msra.mxu0 %v3243
        %3326 = vmatpush.msra.mxu0 %v3239
        %3327 = vmatpush.msra.mxu0 %v3235
        %3328 = vmatpush.msra.mxu0 %v3231
        %3329 = vmatpush.msra.mxu0 %v3227
        %3330 = vmatpush.msra.mxu0 %v3223
        %3331 = vmatpush.msra.mxu0 %v3219
        %3332 = vmatpush.msra.mxu0 %v3215
        %3333 = vmatmul.f32.gmra.mxu0 %v3199
        %v3334 = vpop.f32.mrf.mxu0
        %v3335 = vadd.f32 0.0, %v3334
        %3336 = vdwg.mxu0
        %3337 = vmatpush.msra.mxu0 %v3276
        %3338 = vmatpush.msra.mxu0 %v3272
        %3339 = vmatpush.msra.mxu0 %v3268
        %3340 = vmatpush.msra.mxu0 %v3264
        %3341 = vmatpush.msra.mxu0 %v3260
        %3342 = vmatpush.msra.mxu0 %v3256
        %3343 = vmatpush.msra.mxu0 %v3252
        %3344 = vmatpush.msra.mxu0 %v3248
        %3345 = vmatpush.msra.mxu0 %v3244
        %3346 = vmatpush.msra.mxu0 %v3240
        %3347 = vmatpush.msra.mxu0 %v3236
        %3348 = vmatpush.msra.mxu0 %v3232
        %3349 = vmatpush.msra.mxu0 %v3228
        %3350 = vmatpush.msra.mxu0 %v3224
        %3351 = vmatpush.msra.mxu0 %v3220
        %3352 = vmatpush.msra.mxu0 %v3216
        %3353 = vmatmul.f32.gmra.mxu0 %v3199
        %v3354 = vpop.f32.mrf.mxu0
        %v3355 = vadd.f32 0.0, %v3354
        %3356 = vdwg.mxu0
        %v3358 = vrot.slane %v3295, 1
        %v3360 = vadd.f32 %v3210, %v3295
        %v3361 = vadd.f32 %v3212, %v3358
        %v3362 = vld [vmem:[%s593] sm:$0xff]
        %v3363 = vld [vmem:[%s593 + $0x8] sm:$0xff]
        %v3364 = vld [vmem:[%s593 + $0x10] sm:$0xff]
        %v3365 = vld [vmem:[%s593 + $0x18] sm:$0xff]
        %v3366 = vld [vmem:[%s593 + $0x20] sm:$0xff]
        %v3367 = vld [vmem:[%s593 + $0x28] sm:$0xff]
        %v3368 = vld [vmem:[%s593 + $0x30] sm:$0xff]
        %v3369 = vld [vmem:[%s593 + $0x38] sm:$0xff]
        %v3370 = vld [vmem:[%s593 + $0x40] sm:$0xff]
        %v3371 = vld [vmem:[%s593 + $0x48] sm:$0xff]
        %v3372 = vld [vmem:[%s593 + $0x50] sm:$0xff]
        %v3373 = vld [vmem:[%s593 + $0x58] sm:$0xff]
        %v3374 = vld [vmem:[%s593 + $0x60] sm:$0xff]
        %v3375 = vld [vmem:[%s593 + $0x68] sm:$0xff]
        %v3376 = vld [vmem:[%s593 + $0x70] sm:$0xff]
        %v3377 = vld [vmem:[%s593 + $0x78] sm:$0xff]
        %v3378 = vld [vmem:[%s593 + $0x80] sm:$0xff]
        %v3379 = vld [vmem:[%s593 + $0x88] sm:$0xff]
        %v3380 = vld [vmem:[%s593 + $0x90] sm:$0xff]
        %v3381 = vld [vmem:[%s593 + $0x98] sm:$0xff]
        %v3382 = vld [vmem:[%s593 + $0xa0] sm:$0xff]
        %v3383 = vld [vmem:[%s593 + $0xa8] sm:$0xff]
        %v3384 = vld [vmem:[%s593 + $0xb0] sm:$0xff]
        %v3385 = vld [vmem:[%s593 + $0xb8] sm:$0xff]
        %v3386 = vld [vmem:[%s593 + $0xc0] sm:$0xff]
        %v3387 = vld [vmem:[%s593 + $0xc8] sm:$0xff]
        %v3388 = vld [vmem:[%s593 + $0xd0] sm:$0xff]
        %v3389 = vld [vmem:[%s593 + $0xd8] sm:$0xff]
        %v3390 = vld [vmem:[%s593 + $0xe0] sm:$0xff]
        %v3391 = vld [vmem:[%s593 + $0xe8] sm:$0xff]
        %v3392 = vld [vmem:[%s593 + $0xf0] sm:$0xff]
        %v3393 = vld [vmem:[%s593 + $0xf8] sm:$0xff]
        %v3396 = vperm.slane %v3360, 0
        %v3397 = vperm.slane %v3361, 0
        %v3400 = vadd.f32 %v3362, %v3396
        %v3401 = vadd.f32 %v3363, %v3396
        %v3402 = vadd.f32 %v3364, %v3396
        %v3403 = vadd.f32 %v3365, %v3396
        %v3404 = vadd.f32 %v3366, %v3396
        %v3405 = vadd.f32 %v3367, %v3396
        %v3406 = vadd.f32 %v3368, %v3396
        %v3407 = vadd.f32 %v3369, %v3396
        %v3408 = vadd.f32 %v3370, %v3396
        %v3409 = vadd.f32 %v3371, %v3396
        %v3410 = vadd.f32 %v3372, %v3396
        %v3411 = vadd.f32 %v3373, %v3396
        %v3412 = vadd.f32 %v3374, %v3396
        %v3413 = vadd.f32 %v3375, %v3396
        %v3414 = vadd.f32 %v3376, %v3396
        %v3415 = vadd.f32 %v3377, %v3396
        %v3416 = vadd.f32 %v3378, %v3397
        %v3417 = vadd.f32 %v3379, %v3397
        %v3418 = vadd.f32 %v3380, %v3397
        %v3419 = vadd.f32 %v3381, %v3397
        %v3420 = vadd.f32 %v3382, %v3397
        %v3421 = vadd.f32 %v3383, %v3397
        %v3422 = vadd.f32 %v3384, %v3397
        %v3423 = vadd.f32 %v3385, %v3397
        %v3424 = vadd.f32 %v3386, %v3397
        %v3425 = vadd.f32 %v3387, %v3397
        %v3426 = vadd.f32 %v3388, %v3397
        %v3427 = vadd.f32 %v3389, %v3397
        %v3428 = vadd.f32 %v3390, %v3397
        %v3429 = vadd.f32 %v3391, %v3397
        %v3430 = vadd.f32 %v3392, %v3397
        %v3431 = vadd.f32 %v3393, %v3397
        %v3432 = vtanh.pop %v3400
        %v3433 = vtanh.pop %v3401
        %v3434 = vtanh.pop %v3402
        %v3435 = vtanh.pop %v3403
        %v3436 = vtanh.pop %v3404
        %v3437 = vtanh.pop %v3405
        %v3438 = vtanh.pop %v3406
        %v3439 = vtanh.pop %v3407
        %v3440 = vtanh.pop %v3408
        %v3441 = vtanh.pop %v3409
        %v3442 = vtanh.pop %v3410
        %v3443 = vtanh.pop %v3411
        %v3444 = vtanh.pop %v3412
        %v3445 = vtanh.pop %v3413
        %v3446 = vtanh.pop %v3414
        %v3447 = vtanh.pop %v3415
        %v3448 = vtanh.pop %v3416
        %v3449 = vtanh.pop %v3417
        %v3450 = vtanh.pop %v3418
        %v3451 = vtanh.pop %v3419
        %v3452 = vtanh.pop %v3420
        %v3453 = vtanh.pop %v3421
        %v3454 = vtanh.pop %v3422
        %v3455 = vtanh.pop %v3423
        %v3456 = vtanh.pop %v3424
        %v3457 = vtanh.pop %v3425
        %v3458 = vtanh.pop %v3426
        %v3459 = vtanh.pop %v3427
        %v3460 = vtanh.pop %v3428
        %v3461 = vtanh.pop %v3429
        %v3462 = vtanh.pop %v3430
        %v3463 = vtanh.pop %v3431
        %v3464 = vmul.f32 %v3432, %v864
        %v3465 = vmul.f32 %v3433, %v864
        %v3466 = vmul.f32 %v3434, %v864
        %v3467 = vmul.f32 %v3435, %v864
        %v3468 = vmul.f32 %v3436, %v864
        %v3469 = vmul.f32 %v3437, %v864
        %v3470 = vmul.f32 %v3438, %v864
        %v3471 = vmul.f32 %v3439, %v864
        %v3472 = vmul.f32 %v3440, %v864
        %v3473 = vmul.f32 %v3441, %v864
        %v3474 = vmul.f32 %v3442, %v864
        %v3475 = vmul.f32 %v3443, %v864
        %v3476 = vmul.f32 %v3444, %v864
        %v3477 = vmul.f32 %v3445, %v864
        %v3478 = vmul.f32 %v3446, %v864
        %v3479 = vmul.f32 %v3447, %v864
        %v3480 = vmul.f32 %v3448, %v864
        %v3481 = vmul.f32 %v3449, %v864
        %v3482 = vmul.f32 %v3450, %v864
        %v3483 = vmul.f32 %v3451, %v864
        %v3484 = vmul.f32 %v3452, %v864
        %v3485 = vmul.f32 %v3453, %v864
        %v3486 = vmul.f32 %v3454, %v864
        %v3487 = vmul.f32 %v3455, %v864
        %v3488 = vmul.f32 %v3456, %v864
        %v3489 = vmul.f32 %v3457, %v864
        %v3490 = vmul.f32 %v3458, %v864
        %v3491 = vmul.f32 %v3459, %v864
        %v3492 = vmul.f32 %v3460, %v864
        %v3493 = vmul.f32 %v3461, %v864
        %v3494 = vmul.f32 %v3462, %v864
        %v3495 = vmul.f32 %v3463, %v864
        %3496 = vadd.xlane.f32.xlu0 %v3464
        %v3497 = vpop.xlane.xlu0 %3496
        %3498 = vadd.xlane.f32.xlu0 %v3465
        %v3499 = vpop.xlane.xlu0 %3498
        %3500 = vadd.xlane.f32.xlu0 %v3466
        %v3501 = vpop.xlane.xlu0 %3500
        %3502 = vadd.xlane.f32.xlu0 %v3467
        %v3503 = vpop.xlane.xlu0 %3502
        %3504 = vadd.xlane.f32.xlu0 %v3468
        %v3505 = vpop.xlane.xlu0 %3504
        %3506 = vadd.xlane.f32.xlu0 %v3469
        %v3507 = vpop.xlane.xlu0 %3506
        %3508 = vadd.xlane.f32.xlu0 %v3470
        %v3509 = vpop.xlane.xlu0 %3508
        %3510 = vadd.xlane.f32.xlu0 %v3471
        %v3511 = vpop.xlane.xlu0 %3510
        %3512 = vadd.xlane.f32.xlu0 %v3472
        %v3513 = vpop.xlane.xlu0 %3512
        %3514 = vadd.xlane.f32.xlu0 %v3473
        %v3515 = vpop.xlane.xlu0 %3514
        %3516 = vadd.xlane.f32.xlu0 %v3474
        %v3517 = vpop.xlane.xlu0 %3516
        %3518 = vadd.xlane.f32.xlu0 %v3475
        %v3519 = vpop.xlane.xlu0 %3518
        %3520 = vadd.xlane.f32.xlu0 %v3476
        %v3521 = vpop.xlane.xlu0 %3520
        %3522 = vadd.xlane.f32.xlu0 %v3477
        %v3523 = vpop.xlane.xlu0 %3522
        %3524 = vadd.xlane.f32.xlu0 %v3478
        %v3525 = vpop.xlane.xlu0 %3524
        %3526 = vadd.xlane.f32.xlu0 %v3479
        %v3527 = vpop.xlane.xlu0 %3526
        %3528 = vadd.xlane.f32.xlu0 %v3480
        %v3529 = vpop.xlane.xlu0 %3528
        %3530 = vadd.xlane.f32.xlu0 %v3481
        %v3531 = vpop.xlane.xlu0 %3530
        %3532 = vadd.xlane.f32.xlu0 %v3482
        %v3533 = vpop.xlane.xlu0 %3532
        %3534 = vadd.xlane.f32.xlu0 %v3483
        %v3535 = vpop.xlane.xlu0 %3534
        %3536 = vadd.xlane.f32.xlu0 %v3484
        %v3537 = vpop.xlane.xlu0 %3536
        %3538 = vadd.xlane.f32.xlu0 %v3485
        %v3539 = vpop.xlane.xlu0 %3538
        %3540 = vadd.xlane.f32.xlu0 %v3486
        %v3541 = vpop.xlane.xlu0 %3540
        %3542 = vadd.xlane.f32.xlu0 %v3487
        %v3543 = vpop.xlane.xlu0 %3542
        %3544 = vadd.xlane.f32.xlu0 %v3488
        %v3545 = vpop.xlane.xlu0 %3544
        %3546 = vadd.xlane.f32.xlu0 %v3489
        %v3547 = vpop.xlane.xlu0 %3546
        %3548 = vadd.xlane.f32.xlu0 %v3490
        %v3549 = vpop.xlane.xlu0 %3548
        %3550 = vadd.xlane.f32.xlu0 %v3491
        %v3551 = vpop.xlane.xlu0 %3550
        %3552 = vadd.xlane.f32.xlu0 %v3492
        %v3553 = vpop.xlane.xlu0 %3552
        %3554 = vadd.xlane.f32.xlu0 %v3493
        %v3555 = vpop.xlane.xlu0 %3554
        %3556 = vadd.xlane.f32.xlu0 %v3494
        %v3557 = vpop.xlane.xlu0 %3556
        %3558 = vadd.xlane.f32.xlu0 %v3495
        %v3559 = vpop.xlane.xlu0 %3558
        %v3592 = vperm.slane %v3497, %v995
        %v3593 = vperm.slane %v3499, %v997
        %v3594 = vsel %vm999, %v3593, %v3592
        %v3595 = vperm.slane %v3501, %v1001
        %v3596 = vsel %vm1003, %v3595, %v3594
        %v3597 = vperm.slane %v3503, %v1005
        %v3598 = vsel %vm1007, %v3597, %v3596
        %v3599 = vperm.slane %v3505, %v1009
        %v3600 = vsel %vm1011, %v3599, %v3598
        %v3601 = vperm.slane %v3507, %v1013
        %v3602 = vsel %vm1015, %v3601, %v3600
        %v3603 = vperm.slane %v3509, %v1017
        %v3604 = vsel %vm1019, %v3603, %v3602
        %v3605 = vperm.slane %v3511, %v1021
        %v3606 = vsel %vm1023, %v3605, %v3604
        %v3607 = vperm.slane %v3513, %v1025
        %v3608 = vsel %vm1027, %v3607, %v3606
        %v3609 = vperm.slane %v3515, %v1029
        %v3610 = vsel %vm1031, %v3609, %v3608
        %v3611 = vperm.slane %v3517, %v1033
        %v3612 = vsel %vm1035, %v3611, %v3610
        %v3613 = vperm.slane %v3519, %v1037
        %v3614 = vsel %vm1039, %v3613, %v3612
        %v3615 = vperm.slane %v3521, %v1041
        %v3616 = vsel %vm1043, %v3615, %v3614
        %v3617 = vperm.slane %v3523, %v1045
        %v3618 = vsel %vm1047, %v3617, %v3616
        %v3619 = vperm.slane %v3525, %v1049
        %v3620 = vsel %vm1051, %v3619, %v3618
        %v3621 = vperm.slane %v3527, %v1053
        %v3622 = vsel %vm1055, %v3621, %v3620
        %v3623 = vperm.slane %v3529, %v995
        %v3624 = vperm.slane %v3531, %v997
        %v3625 = vsel %vm999, %v3624, %v3623
        %v3626 = vperm.slane %v3533, %v1001
        %v3627 = vsel %vm1003, %v3626, %v3625
        %v3628 = vperm.slane %v3535, %v1005
        %v3629 = vsel %vm1007, %v3628, %v3627
        %v3630 = vperm.slane %v3537, %v1009
        %v3631 = vsel %vm1011, %v3630, %v3629
        %v3632 = vperm.slane %v3539, %v1013
        %v3633 = vsel %vm1015, %v3632, %v3631
        %v3634 = vperm.slane %v3541, %v1017
        %v3635 = vsel %vm1019, %v3634, %v3633
        %v3636 = vperm.slane %v3543, %v1021
        %v3637 = vsel %vm1023, %v3636, %v3635
        %v3638 = vperm.slane %v3545, %v1025
        %v3639 = vsel %vm1027, %v3638, %v3637
        %v3640 = vperm.slane %v3547, %v1029
        %v3641 = vsel %vm1031, %v3640, %v3639
        %v3642 = vperm.slane %v3549, %v1033
        %v3643 = vsel %vm1035, %v3642, %v3641
        %v3644 = vperm.slane %v3551, %v1037
        %v3645 = vsel %vm1039, %v3644, %v3643
        %v3646 = vperm.slane %v3553, %v1041
        %v3647 = vsel %vm1043, %v3646, %v3645
        %v3648 = vperm.slane %v3555, %v1045
        %v3649 = vsel %vm1047, %v3648, %v3647
        %v3650 = vperm.slane %v3557, %v1049
        %v3651 = vsel %vm1051, %v3650, %v3649
        %v3652 = vperm.slane %v3559, %v1053
        %v3653 = vsel %vm1055, %v3652, %v3651
        %v3654 = vsel %vm1088, %v3653, %v3622
        %v3656 = vsel %vm603, %v3654, -1e+30
        %v3657 = vsel %vm1092, %v3656, -inf
        %3658 = vmax.xlane.f32.xlu0 %v3657
        %v3659 = vpop.xlane.xlu0 %3658
        %v3660 = vsub.f32 %v3656, %v3659
        %v3661 = vmul.f32 %v3660, 1.442695
        %v3662 = vpow.pop %v3661
        %v3663 = vmul.f32 %v3662, %v602
        %v3664 = vsel %vm1092, %v3663, 0.0
        %3665 = vadd.xlane.f32.xlu0 %v3664
        %v3666 = vpop.xlane.xlu0 %3665
        %v3667 = vadd.f32 %v3666, 1e-13
        %v3668 = vrcp.pop %v3667
        %v3669 = vmul.f32 %v3667, %v3668
        %v3670 = vsub.f32 1.0, %v3669
        %v3671 = vmul.f32 %v3668, %v3670
        %v3672 = vadd.f32 %v3668, %v3671
        %vm3673 = vweird.f32 %v3667
        %vm3674 = vweird.f32 %v3668
        %vm3675 = vmor %vm3673, %vm3674
        %v3676 = vsel %vm3675, %v3668, %v3672
        %v3677 = vand.u32 2147483647, %v3667
        %vm3678 = vcmp.eq.f32.partialorder %v3677, 8.507059e+37
        %v3679 = vand.u32 %v3667, 2147483648
        %v3680 = vor.u32 1.1754944e-38, %v3679
        %v3681 = vsel %vm3678, %v3680, %v3676
        %v3682 = vmul.f32 %v3663, %v3681
        %v3684 = vrot.slane %v3682, 1
        %v3686 = vld [vmem:[%s582] sm:$0xff]
        %v3687 = vld [vmem:[%s582 + $0x8] sm:$0xff]
        %v3688 = vld [vmem:[%s582 + $0x10] sm:$0xff]
        %v3689 = vld [vmem:[%s582 + $0x18] sm:$0xff]
        %v3690 = vld [vmem:[%s582 + $0x20] sm:$0xff]
        %v3691 = vld [vmem:[%s582 + $0x28] sm:$0xff]
        %v3692 = vld [vmem:[%s582 + $0x30] sm:$0xff]
        %v3693 = vld [vmem:[%s582 + $0x38] sm:$0xff]
        %v3694 = vld [vmem:[%s582 + $0x40] sm:$0xff]
        %v3695 = vld [vmem:[%s582 + $0x48] sm:$0xff]
        %v3696 = vld [vmem:[%s582 + $0x50] sm:$0xff]
        %v3697 = vld [vmem:[%s582 + $0x58] sm:$0xff]
        %v3698 = vld [vmem:[%s582 + $0x60] sm:$0xff]
        %v3699 = vld [vmem:[%s582 + $0x68] sm:$0xff]
        %v3700 = vld [vmem:[%s582 + $0x70] sm:$0xff]
        %v3701 = vld [vmem:[%s582 + $0x78] sm:$0xff]
        %v3702 = vld [vmem:[%s582 + $0x80] sm:$0xff]
        %v3703 = vld [vmem:[%s582 + $0x88] sm:$0xff]
        %v3704 = vld [vmem:[%s582 + $0x90] sm:$0xff]
        %v3705 = vld [vmem:[%s582 + $0x98] sm:$0xff]
        %v3706 = vld [vmem:[%s582 + $0xa0] sm:$0xff]
        %v3707 = vld [vmem:[%s582 + $0xa8] sm:$0xff]
        %v3708 = vld [vmem:[%s582 + $0xb0] sm:$0xff]
        %v3709 = vld [vmem:[%s582 + $0xb8] sm:$0xff]
        %v3710 = vld [vmem:[%s582 + $0xc0] sm:$0xff]
        %v3711 = vld [vmem:[%s582 + $0xc8] sm:$0xff]
        %v3712 = vld [vmem:[%s582 + $0xd0] sm:$0xff]
        %v3713 = vld [vmem:[%s582 + $0xd8] sm:$0xff]
        %v3714 = vld [vmem:[%s582 + $0xe0] sm:$0xff]
        %v3715 = vld [vmem:[%s582 + $0xe8] sm:$0xff]
        %v3716 = vld [vmem:[%s582 + $0xf0] sm:$0xff]
        %v3717 = vld [vmem:[%s582 + $0xf8] sm:$0xff]
        %3718 = vmatpush.msra.mxu0 %v3701
        %3719 = vmatpush.msra.mxu0 %v3700
        %3720 = vmatpush.msra.mxu0 %v3699
        %3721 = vmatpush.msra.mxu0 %v3698
        %3722 = vmatpush.msra.mxu0 %v3697
        %3723 = vmatpush.msra.mxu0 %v3696
        %3724 = vmatpush.msra.mxu0 %v3695
        %3725 = vmatpush.msra.mxu0 %v3694
        %3726 = vmatpush.msra.mxu0 %v3693
        %3727 = vmatpush.msra.mxu0 %v3692
        %3728 = vmatpush.msra.mxu0 %v3691
        %3729 = vmatpush.msra.mxu0 %v3690
        %3730 = vmatpush.msra.mxu0 %v3689
        %3731 = vmatpush.msra.mxu0 %v3688
        %3732 = vmatpush.msra.mxu0 %v3687
        %3733 = vmatpush.msra.mxu0 %v3686
        %3734 = vmatmul.f32.gmra.mxu0 %v3682
        %v3735 = vpop.f32.mrf.mxu0
        %v3736 = vadd.f32 0.0, %v3735
        %3737 = vdwg.mxu0
        %3738 = vmatpush.msra.mxu0 %v3717
        %3739 = vmatpush.msra.mxu0 %v3716
        %3740 = vmatpush.msra.mxu0 %v3715
        %3741 = vmatpush.msra.mxu0 %v3714
        %3742 = vmatpush.msra.mxu0 %v3713
        %3743 = vmatpush.msra.mxu0 %v3712
        %3744 = vmatpush.msra.mxu0 %v3711
        %3745 = vmatpush.msra.mxu0 %v3710
        %3746 = vmatpush.msra.mxu0 %v3709
        %3747 = vmatpush.msra.mxu0 %v3708
        %3748 = vmatpush.msra.mxu0 %v3707
        %3749 = vmatpush.msra.mxu0 %v3706
        %3750 = vmatpush.msra.mxu0 %v3705
        %3751 = vmatpush.msra.mxu0 %v3704
        %3752 = vmatpush.msra.mxu0 %v3703
        %3753 = vmatpush.msra.mxu0 %v3702
        %3754 = vmatmul.f32.gmra.mxu0 %v3684
        %v3755 = vpop.f32.mrf.mxu0
        %v3756 = vadd.f32 0.0, %v3755
        %3757 = vdwg.mxu0
        %v3758 = vld [vmem:[%s7] sm:$0xff]
        %v3759 = vld [vmem:[%s7 + $0x8] sm:$0xff]
        %v3762 = vrot.slane %v3756, 7
        %v3763 = vsel %vm1088, %v3762, %v3736
        %v3764 = vsel %vm1200, %v3763, 0
        %3766 = vmatpush.msra.mxu0 0.0
        %3767 = vmatpush.msra.mxu0 0.0
        %3768 = vmatpush.msra.mxu0 0.0
        %3769 = vmatpush.msra.mxu0 0.0
        %3770 = vmatpush.msra.mxu0 0.0
        %3771 = vmatpush.msra.mxu0 0.0
        %3772 = vmatpush.msra.mxu0 0.0
        %3773 = vmatpush.msra.mxu0 0.0
        %3774 = vmatpush.msra.mxu0 0.0
        %3775 = vmatpush.msra.mxu0 0.0
        %3776 = vmatpush.msra.mxu0 0.0
        %3777 = vmatpush.msra.mxu0 0.0
        %3778 = vmatpush.msra.mxu0 0.0
        %3779 = vmatpush.msra.mxu0 0.0
        %3780 = vmatpush.msra.mxu0 %v3759
        %3781 = vmatpush.msra.mxu0 %v3758
        %3782 = vmatmul.f32.gmra.mxu0 %v3764
        %v3783 = vpop.f32.mrf.mxu0
        %v3784 = vadd.f32 0.0, %v3783
        %3785 = vdwg.mxu0
        %v3788 = vrot.slane %v3210, 1
        %v3789 = vrot.slane %v3212, 1
        %v3793 = vrot.slane %v3784, 1
        %v3795 = vadd.f32 %v3788, %v3784
        %v3796 = vadd.f32 %v3789, %v3793
        %v3797 = vxor.u32 %v3795, 2147483648
        %v3798 = vxor.u32 %v3796, 2147483648
        %v3799 = vmul.f32 %v3797, 1.442695
        %v3800 = vpow.pop %v3799
        %v3801 = vmul.f32 %v3798, 1.442695
        %v3802 = vpow.pop %v3801
        %v3803 = vadd.f32 %v3800, 1.0
        %v3804 = vadd.f32 %v3802, 1.0
        %v3805 = vrcp.pop %v3803
        %v3806 = vmul.f32 %v3803, %v3805
        %v3807 = vsub.f32 1.0, %v3806
        %v3808 = vmul.f32 %v3805, %v3807
        %v3809 = vadd.f32 %v3805, %v3808
        %vm3810 = vweird.f32 %v3803
        %vm3811 = vweird.f32 %v3805
        %vm3812 = vmor %vm3810, %vm3811
        %v3813 = vsel %vm3812, %v3805, %v3809
        %v3814 = vand.u32 2147483647, %v3803
        %vm3815 = vcmp.eq.f32.partialorder %v3814, 8.507059e+37
        %v3816 = vand.u32 %v3803, 2147483648
        %v3817 = vor.u32 1.1754944e-38, %v3816
        %v3818 = vsel %vm3815, %v3817, %v3813
        %v3819 = vmul.f32 1.0, %v3818
        %v3820 = vrcp.pop %v3804
        %v3821 = vmul.f32 %v3804, %v3820
        %v3822 = vsub.f32 1.0, %v3821
        %v3823 = vmul.f32 %v3820, %v3822
        %v3824 = vadd.f32 %v3820, %v3823
        %vm3825 = vweird.f32 %v3804
        %vm3826 = vweird.f32 %v3820
        %vm3827 = vmor %vm3825, %vm3826
        %v3828 = vsel %vm3827, %v3820, %v3824
        %v3829 = vand.u32 2147483647, %v3804
        %vm3830 = vcmp.eq.f32.partialorder %v3829, 8.507059e+37
        %v3831 = vand.u32 %v3804, 2147483648
        %v3832 = vor.u32 1.1754944e-38, %v3831
        %v3833 = vsel %vm3830, %v3832, %v3828
        %v3834 = vmul.f32 1.0, %v3833
        %v3835 = vmul.f32 %v3819, %v3207
        %v3836 = vmul.f32 %v3834, %v3208
        %3837 = vrot.lane.b32.xlu0 %v3736, 16
        %v3838 = vpop.permute.xlu0 %3837
        %3839 = vrot.lane.b32.xlu0 %v3756, 16
        %v3840 = vpop.permute.xlu0 %3839
        %v3843 = vmul.f32 %v3819, %v3838
        %v3844 = vmul.f32 %v3834, %v3840
        %v3845 = vld [vmem:[%s8] sm:$0xff]
        %v3846 = vld [vmem:[%s8 + $0x8] sm:$0xff]
        %v3847 = vld [vmem:[%s8 + $0x10] sm:$0xff]
        %v3848 = vld [vmem:[%s8 + $0x18] sm:$0xff]
        %v3849 = vld [vmem:[%s8 + $0x20] sm:$0xff]
        %v3850 = vld [vmem:[%s8 + $0x28] sm:$0xff]
        %v3851 = vld [vmem:[%s9] sm:$0xff]
        %v3852 = vld [vmem:[%s9 + $0x8] sm:$0xff]
        %v3853 = vld [vmem:[%s9 + $0x10] sm:$0xff]
        %v3854 = vld [vmem:[%s9 + $0x18] sm:$0xff]
        %v3855 = vld [vmem:[%s9 + $0x20] sm:$0xff]
        %v3856 = vld [vmem:[%s9 + $0x28] sm:$0xff]
        %3859 = vst [vmem:[#allocation1] ss:$9 sm:$0xff] %v3843
        %s3860 = scalar_lea.vmem [#allocation1], 1
        %3861 = vst [vmem:[%s3860] ss:$9 sm:$0xff] %v3844
        %v3862 = vld [vmem:[#allocation1] sm:$0xff]
        %3863 = vrot.lane.b32.xlu0 %v3862, 112
        %v3864 = vpop.permute.xlu0 %3863
        %v3865 = vsel %vm1200, %v3864, 0
        %3867 = vmatpush.msra.mxu0 0.0
        %3868 = vmatpush.msra.mxu0 0.0
        %3869 = vmatpush.msra.mxu0 0.0
        %3870 = vmatpush.msra.mxu0 0.0
        %3871 = vmatpush.msra.mxu0 0.0
        %3872 = vmatpush.msra.mxu0 0.0
        %3873 = vmatpush.msra.mxu0 0.0
        %3874 = vmatpush.msra.mxu0 0.0
        %3875 = vmatpush.msra.mxu0 0.0
        %3876 = vmatpush.msra.mxu0 0.0
        %3877 = vmatpush.msra.mxu0 0.0
        %3878 = vmatpush.msra.mxu0 0.0
        %3879 = vmatpush.msra.mxu0 0.0
        %3880 = vmatpush.msra.mxu0 0.0
        %3881 = vmatpush.msra.mxu0 %v3854
        %3882 = vmatpush.msra.mxu0 %v3851
        %3883 = vmatmul.f32.gmra.mxu0 %v3865
        %v3884 = vpop.f32.mrf.mxu0
        %v3885 = vadd.f32 0.0, %v3884
        %3886 = vdwg.mxu0
        %3887 = vmatpush.msra.mxu0 0.0
        %3888 = vmatpush.msra.mxu0 0.0
        %3889 = vmatpush.msra.mxu0 0.0
        %3890 = vmatpush.msra.mxu0 0.0
        %3891 = vmatpush.msra.mxu0 0.0
        %3892 = vmatpush.msra.mxu0 0.0
        %3893 = vmatpush.msra.mxu0 0.0
        %3894 = vmatpush.msra.mxu0 0.0
        %3895 = vmatpush.msra.mxu0 0.0
        %3896 = vmatpush.msra.mxu0 0.0
        %3897 = vmatpush.msra.mxu0 0.0
        %3898 = vmatpush.msra.mxu0 0.0
        %3899 = vmatpush.msra.mxu0 0.0
        %3900 = vmatpush.msra.mxu0 0.0
        %3901 = vmatpush.msra.mxu0 %v3855
        %3902 = vmatpush.msra.mxu0 %v3852
        %3903 = vmatmul.f32.gmra.mxu0 %v3865
        %v3904 = vpop.f32.mrf.mxu0
        %v3905 = vadd.f32 0.0, %v3904
        %3906 = vdwg.mxu0
        %3907 = vmatpush.msra.mxu0 0.0
        %3908 = vmatpush.msra.mxu0 0.0
        %3909 = vmatpush.msra.mxu0 0.0
        %3910 = vmatpush.msra.mxu0 0.0
        %3911 = vmatpush.msra.mxu0 0.0
        %3912 = vmatpush.msra.mxu0 0.0
        %3913 = vmatpush.msra.mxu0 0.0
        %3914 = vmatpush.msra.mxu0 0.0
        %3915 = vmatpush.msra.mxu0 0.0
        %3916 = vmatpush.msra.mxu0 0.0
        %3917 = vmatpush.msra.mxu0 0.0
        %3918 = vmatpush.msra.mxu0 0.0
        %3919 = vmatpush.msra.mxu0 0.0
        %3920 = vmatpush.msra.mxu0 0.0
        %3921 = vmatpush.msra.mxu0 %v3856
        %3922 = vmatpush.msra.mxu0 %v3853
        %3923 = vmatmul.f32.gmra.mxu0 %v3865
        %v3924 = vpop.f32.mrf.mxu0
        %v3925 = vadd.f32 0.0, %v3924
        %3926 = vdwg.mxu0
        %3929 = vst [vmem:[#allocation1] ss:$9 sm:$0xff] %v3835
        %s3930 = scalar_lea.vmem [#allocation1], 1
        %3931 = vst [vmem:[%s3930] ss:$9 sm:$0xff] %v3836
        %v3932 = vld [vmem:[#allocation1] sm:$0xff]
        %v3933 = vsel %vm1200, %v3932, 0
        %3935 = vmatpush.msra.mxu0 0.0
        %3936 = vmatpush.msra.mxu0 0.0
        %3937 = vmatpush.msra.mxu0 0.0
        %3938 = vmatpush.msra.mxu0 0.0
        %3939 = vmatpush.msra.mxu0 0.0
        %3940 = vmatpush.msra.mxu0 0.0
        %3941 = vmatpush.msra.mxu0 0.0
        %3942 = vmatpush.msra.mxu0 0.0
        %3943 = vmatpush.msra.mxu0 0.0
        %3944 = vmatpush.msra.mxu0 0.0
        %3945 = vmatpush.msra.mxu0 0.0
        %3946 = vmatpush.msra.mxu0 0.0
        %3947 = vmatpush.msra.mxu0 0.0
        %3948 = vmatpush.msra.mxu0 0.0
        %3949 = vmatpush.msra.mxu0 %v3848
        %3950 = vmatpush.msra.mxu0 %v3845
        %3951 = vmatmul.f32.gmra.mxu0 %v3933
        %v3952 = vpop.f32.mrf.mxu0
        %v3953 = vadd.f32 %v3885, %v3952
        %3954 = vdwg.mxu0
        %3955 = vmatpush.msra.mxu0 0.0
        %3956 = vmatpush.msra.mxu0 0.0
        %3957 = vmatpush.msra.mxu0 0.0
        %3958 = vmatpush.msra.mxu0 0.0
        %3959 = vmatpush.msra.mxu0 0.0
        %3960 = vmatpush.msra.mxu0 0.0
        %3961 = vmatpush.msra.mxu0 0.0
        %3962 = vmatpush.msra.mxu0 0.0
        %3963 = vmatpush.msra.mxu0 0.0
        %3964 = vmatpush.msra.mxu0 0.0
        %3965 = vmatpush.msra.mxu0 0.0
        %3966 = vmatpush.msra.mxu0 0.0
        %3967 = vmatpush.msra.mxu0 0.0
        %3968 = vmatpush.msra.mxu0 0.0
        %3969 = vmatpush.msra.mxu0 %v3849
        %3970 = vmatpush.msra.mxu0 %v3846
        %3971 = vmatmul.f32.gmra.mxu0 %v3933
        %v3972 = vpop.f32.mrf.mxu0
        %v3973 = vadd.f32 %v3905, %v3972
        %3974 = vdwg.mxu0
        %3975 = vmatpush.msra.mxu0 0.0
        %3976 = vmatpush.msra.mxu0 0.0
        %3977 = vmatpush.msra.mxu0 0.0
        %3978 = vmatpush.msra.mxu0 0.0
        %3979 = vmatpush.msra.mxu0 0.0
        %3980 = vmatpush.msra.mxu0 0.0
        %3981 = vmatpush.msra.mxu0 0.0
        %3982 = vmatpush.msra.mxu0 0.0
        %3983 = vmatpush.msra.mxu0 0.0
        %3984 = vmatpush.msra.mxu0 0.0
        %3985 = vmatpush.msra.mxu0 0.0
        %3986 = vmatpush.msra.mxu0 0.0
        %3987 = vmatpush.msra.mxu0 0.0
        %3988 = vmatpush.msra.mxu0 0.0
        %3989 = vmatpush.msra.mxu0 %v3850
        %3990 = vmatpush.msra.mxu0 %v3847
        %3991 = vmatmul.f32.gmra.mxu0 %v3933
        %v3992 = vpop.f32.mrf.mxu0
        %v3993 = vadd.f32 %v3925, %v3992
        %3994 = vdwg.mxu0
        %v3995 = vadd.f32 %v3953, %v1439
        %v3996 = vadd.f32 %v3973, %v1440
        %v3997 = vadd.f32 %v3993, %v1441
        %v3998 = vadd.f32 %v3315, %v1451
        %v3999 = vadd.f32 %v3335, %v1452
        %v4000 = vadd.f32 %v3355, %v1453
        %v4001 = vadd.f32 %v3995, %v3998
        %v4002 = vxor.u32 %v4001, 2147483648
        %v4003 = vmul.f32 %v4002, 1.442695
        %v4004 = vpow.pop %v4003
        %v4005 = vadd.f32 %v4004, 1.0
        %v4006 = vrcp.pop %v4005
        %v4007 = vmul.f32 %v4005, %v4006
        %v4008 = vsub.f32 1.0, %v4007
        %v4009 = vmul.f32 %v4006, %v4008
        %v4010 = vadd.f32 %v4006, %v4009
        %vm4011 = vweird.f32 %v4005
        %vm4012 = vweird.f32 %v4006
        %vm4013 = vmor %vm4011, %vm4012
        %v4014 = vsel %vm4013, %v4006, %v4010
        %v4015 = vand.u32 2147483647, %v4005
        %vm4016 = vcmp.eq.f32.partialorder %v4015, 8.507059e+37
        %v4017 = vand.u32 %v4005, 2147483648
        %v4018 = vor.u32 1.1754944e-38, %v4017
        %v4019 = vsel %vm4016, %v4018, %v4014
        %v4020 = vmul.f32 1.0, %v4019
        %v4021 = vadd.f32 %v3996, %v3999
        %v4022 = vxor.u32 %v4021, 2147483648
        %v4023 = vmul.f32 %v4022, 1.442695
        %v4024 = vpow.pop %v4023
        %v4025 = vadd.f32 %v4024, 1.0
        %v4026 = vrcp.pop %v4025
        %v4027 = vmul.f32 %v4025, %v4026
        %v4028 = vsub.f32 1.0, %v4027
        %v4029 = vmul.f32 %v4026, %v4028
        %v4030 = vadd.f32 %v4026, %v4029
        %vm4031 = vweird.f32 %v4025
        %vm4032 = vweird.f32 %v4026
        %vm4033 = vmor %vm4031, %vm4032
        %v4034 = vsel %vm4033, %v4026, %v4030
        %v4035 = vand.u32 2147483647, %v4025
        %vm4036 = vcmp.eq.f32.partialorder %v4035, 8.507059e+37
        %v4037 = vand.u32 %v4025, 2147483648
        %v4038 = vor.u32 1.1754944e-38, %v4037
        %v4039 = vsel %vm4036, %v4038, %v4034
        %v4040 = vmul.f32 1.0, %v4039
        %v4041 = vmul.f32 %v4020, %v4000
        %v4042 = vadd.f32 %v3997, %v4041
        %v4043 = vtanh.pop %v4042
        %v4044 = vsub.f32 1.0, %v4040
        %v4045 = vmul.f32 %v4044, %v4043
        %v4046 = vmul.f32 %v4040, %v3199
        %v4047 = vadd.f32 %v4045, %v4046
        %v4049 = vrot.slane %v4047, 1
        %4051 = vst [vmem:[%s568 + $0x3] sm:$0x1] %v4047
        %4052 = vst [vmem:[%s568 + $0xb] sm:$0x1] %v4049
        %4053 = vst [vmem:[%s574 + $0x3] sm:$0x1] %v3682
        %4054 = vst [vmem:[%s574 + $0xb] sm:$0x1] %v3684
        %v4055 = vld [vmem:[%s506 + $0x4] sm:$0x1]
        %v4056 = vld [vmem:[%s506 + $0xc] sm:$0x1]
        %s4057 = scalar_lea.vmem %s513, 4 [#allocation4]
        %v4058 = vld [vmem:[%s4057] ss:$8 sm:$0x3]
        %s4059 = scalar_lea.vmem %s513, 20 [#allocation4]
        %v4060 = vld [vmem:[%s4059] ss:$8 sm:$0x3]
        %v4061 = vld [vmem:[%s6] sm:$0xff]
        %v4062 = vld [vmem:[%s6 + $0x8] sm:$0xff]
        %v4063 = vld [vmem:[%s6 + $0x10] sm:$0xff]
        %v4064 = vld [vmem:[%s6 + $0x18] sm:$0xff]
        %v4065 = vld [vmem:[%s6 + $0x20] sm:$0xff]
        %v4066 = vld [vmem:[%s6 + $0x28] sm:$0xff]
        %v4067 = vld [vmem:[%s6 + $0x30] sm:$0xff]
        %v4068 = vld [vmem:[%s6 + $0x38] sm:$0xff]
        %v4069 = vld [vmem:[%s6 + $0x40] sm:$0xff]
        %v4070 = vld [vmem:[%s6 + $0x48] sm:$0xff]
        %v4071 = vld [vmem:[%s6 + $0x50] sm:$0xff]
        %v4072 = vld [vmem:[%s6 + $0x58] sm:$0xff]
        %v4073 = vld [vmem:[%s6 + $0x60] sm:$0xff]
        %v4074 = vld [vmem:[%s6 + $0x68] sm:$0xff]
        %v4075 = vld [vmem:[%s6 + $0x70] sm:$0xff]
        %v4076 = vld [vmem:[%s6 + $0x78] sm:$0xff]
        %v4077 = vld [vmem:[%s6 + $0x80] sm:$0xff]
        %v4078 = vld [vmem:[%s6 + $0x88] sm:$0xff]
        %v4079 = vld [vmem:[%s6 + $0x90] sm:$0xff]
        %v4080 = vld [vmem:[%s6 + $0x98] sm:$0xff]
        %v4081 = vld [vmem:[%s6 + $0xa0] sm:$0xff]
        %v4082 = vld [vmem:[%s6 + $0xa8] sm:$0xff]
        %v4083 = vld [vmem:[%s6 + $0xb0] sm:$0xff]
        %v4084 = vld [vmem:[%s6 + $0xb8] sm:$0xff]
        %v4085 = vld [vmem:[%s6 + $0xc0] sm:$0xff]
        %v4086 = vld [vmem:[%s6 + $0xc8] sm:$0xff]
        %v4087 = vld [vmem:[%s6 + $0xd0] sm:$0xff]
        %v4088 = vld [vmem:[%s6 + $0xd8] sm:$0xff]
        %v4089 = vld [vmem:[%s6 + $0xe0] sm:$0xff]
        %v4090 = vld [vmem:[%s6 + $0xe8] sm:$0xff]
        %v4091 = vld [vmem:[%s6 + $0xf0] sm:$0xff]
        %v4092 = vld [vmem:[%s6 + $0xf8] sm:$0xff]
        %v4093 = vld [vmem:[%s6 + $0x100] sm:$0xff]
        %v4094 = vld [vmem:[%s6 + $0x108] sm:$0xff]
        %v4095 = vld [vmem:[%s6 + $0x110] sm:$0xff]
        %v4096 = vld [vmem:[%s6 + $0x118] sm:$0xff]
        %v4097 = vld [vmem:[%s6 + $0x120] sm:$0xff]
        %v4098 = vld [vmem:[%s6 + $0x128] sm:$0xff]
        %v4099 = vld [vmem:[%s6 + $0x130] sm:$0xff]
        %v4100 = vld [vmem:[%s6 + $0x138] sm:$0xff]
        %v4101 = vld [vmem:[%s6 + $0x140] sm:$0xff]
        %v4102 = vld [vmem:[%s6 + $0x148] sm:$0xff]
        %v4103 = vld [vmem:[%s6 + $0x150] sm:$0xff]
        %v4104 = vld [vmem:[%s6 + $0x158] sm:$0xff]
        %v4105 = vld [vmem:[%s6 + $0x160] sm:$0xff]
        %v4106 = vld [vmem:[%s6 + $0x168] sm:$0xff]
        %v4107 = vld [vmem:[%s6 + $0x170] sm:$0xff]
        %v4108 = vld [vmem:[%s6 + $0x178] sm:$0xff]
        %v4109 = vld [vmem:[%s6 + $0x180] sm:$0xff]
        %v4110 = vld [vmem:[%s6 + $0x188] sm:$0xff]
        %v4111 = vld [vmem:[%s6 + $0x190] sm:$0xff]
        %v4112 = vld [vmem:[%s6 + $0x198] sm:$0xff]
        %v4113 = vld [vmem:[%s6 + $0x1a0] sm:$0xff]
        %v4114 = vld [vmem:[%s6 + $0x1a8] sm:$0xff]
        %v4115 = vld [vmem:[%s6 + $0x1b0] sm:$0xff]
        %v4116 = vld [vmem:[%s6 + $0x1b8] sm:$0xff]
        %v4117 = vld [vmem:[%s6 + $0x1c0] sm:$0xff]
        %v4118 = vld [vmem:[%s6 + $0x1c8] sm:$0xff]
        %v4119 = vld [vmem:[%s6 + $0x1d0] sm:$0xff]
        %v4120 = vld [vmem:[%s6 + $0x1d8] sm:$0xff]
        %v4121 = vld [vmem:[%s6 + $0x1e0] sm:$0xff]
        %v4122 = vld [vmem:[%s6 + $0x1e8] sm:$0xff]
        %v4123 = vld [vmem:[%s6 + $0x1f0] sm:$0xff]
        %v4124 = vld [vmem:[%s6 + $0x1f8] sm:$0xff]
        %4125 = vmatpush.msra.mxu0 %v4121
        %4126 = vmatpush.msra.mxu0 %v4117
        %4127 = vmatpush.msra.mxu0 %v4113
        %4128 = vmatpush.msra.mxu0 %v4109
        %4129 = vmatpush.msra.mxu0 %v4105
        %4130 = vmatpush.msra.mxu0 %v4101
        %4131 = vmatpush.msra.mxu0 %v4097
        %4132 = vmatpush.msra.mxu0 %v4093
        %4133 = vmatpush.msra.mxu0 %v4089
        %4134 = vmatpush.msra.mxu0 %v4085
        %4135 = vmatpush.msra.mxu0 %v4081
        %4136 = vmatpush.msra.mxu0 %v4077
        %4137 = vmatpush.msra.mxu0 %v4073
        %4138 = vmatpush.msra.mxu0 %v4069
        %4139 = vmatpush.msra.mxu0 %v4065
        %4140 = vmatpush.msra.mxu0 %v4061
        %4141 = vmatmul.f32.gmra.mxu0 %v4047
        %v4142 = vpop.f32.mrf.mxu0
        %v4143 = vadd.f32 0.0, %v4142
        %4144 = vdwg.mxu0
        %4145 = vmatpush.msra.mxu0 %v4122
        %4146 = vmatpush.msra.mxu0 %v4118
        %4147 = vmatpush.msra.mxu0 %v4114
        %4148 = vmatpush.msra.mxu0 %v4110
        %4149 = vmatpush.msra.mxu0 %v4106
        %4150 = vmatpush.msra.mxu0 %v4102
        %4151 = vmatpush.msra.mxu0 %v4098
        %4152 = vmatpush.msra.mxu0 %v4094
        %4153 = vmatpush.msra.mxu0 %v4090
        %4154 = vmatpush.msra.mxu0 %v4086
        %4155 = vmatpush.msra.mxu0 %v4082
        %4156 = vmatpush.msra.mxu0 %v4078
        %4157 = vmatpush.msra.mxu0 %v4074
        %4158 = vmatpush.msra.mxu0 %v4070
        %4159 = vmatpush.msra.mxu0 %v4066
        %4160 = vmatpush.msra.mxu0 %v4062
        %4161 = vmatmul.f32.gmra.mxu0 %v4047
        %v4162 = vpop.f32.mrf.mxu0
        %v4163 = vadd.f32 0.0, %v4162
        %4164 = vdwg.mxu0
        %4165 = vmatpush.msra.mxu0 %v4123
        %4166 = vmatpush.msra.mxu0 %v4119
        %4167 = vmatpush.msra.mxu0 %v4115
        %4168 = vmatpush.msra.mxu0 %v4111
        %4169 = vmatpush.msra.mxu0 %v4107
        %4170 = vmatpush.msra.mxu0 %v4103
        %4171 = vmatpush.msra.mxu0 %v4099
        %4172 = vmatpush.msra.mxu0 %v4095
        %4173 = vmatpush.msra.mxu0 %v4091
        %4174 = vmatpush.msra.mxu0 %v4087
        %4175 = vmatpush.msra.mxu0 %v4083
        %4176 = vmatpush.msra.mxu0 %v4079
        %4177 = vmatpush.msra.mxu0 %v4075
        %4178 = vmatpush.msra.mxu0 %v4071
        %4179 = vmatpush.msra.mxu0 %v4067
        %4180 = vmatpush.msra.mxu0 %v4063
        %4181 = vmatmul.f32.gmra.mxu0 %v4047
        %v4182 = vpop.f32.mrf.mxu0
        %v4183 = vadd.f32 0.0, %v4182
        %4184 = vdwg.mxu0
        %4185 = vmatpush.msra.mxu0 %v4124
        %4186 = vmatpush.msra.mxu0 %v4120
        %4187 = vmatpush.msra.mxu0 %v4116
        %4188 = vmatpush.msra.mxu0 %v4112
        %4189 = vmatpush.msra.mxu0 %v4108
        %4190 = vmatpush.msra.mxu0 %v4104
        %4191 = vmatpush.msra.mxu0 %v4100
        %4192 = vmatpush.msra.mxu0 %v4096
        %4193 = vmatpush.msra.mxu0 %v4092
        %4194 = vmatpush.msra.mxu0 %v4088
        %4195 = vmatpush.msra.mxu0 %v4084
        %4196 = vmatpush.msra.mxu0 %v4080
        %4197 = vmatpush.msra.mxu0 %v4076
        %4198 = vmatpush.msra.mxu0 %v4072
        %4199 = vmatpush.msra.mxu0 %v4068
        %4200 = vmatpush.msra.mxu0 %v4064
        %4201 = vmatmul.f32.gmra.mxu0 %v4047
        %v4202 = vpop.f32.mrf.mxu0
        %v4203 = vadd.f32 0.0, %v4202
        %4204 = vdwg.mxu0
        %v4206 = vrot.slane %v4143, 1
        %v4208 = vadd.f32 %v4058, %v4143
        %v4209 = vadd.f32 %v4060, %v4206
        %v4210 = vld [vmem:[%s593] sm:$0xff]
        %v4211 = vld [vmem:[%s593 + $0x8] sm:$0xff]
        %v4212 = vld [vmem:[%s593 + $0x10] sm:$0xff]
        %v4213 = vld [vmem:[%s593 + $0x18] sm:$0xff]
        %v4214 = vld [vmem:[%s593 + $0x20] sm:$0xff]
        %v4215 = vld [vmem:[%s593 + $0x28] sm:$0xff]
        %v4216 = vld [vmem:[%s593 + $0x30] sm:$0xff]
        %v4217 = vld [vmem:[%s593 + $0x38] sm:$0xff]
        %v4218 = vld [vmem:[%s593 + $0x40] sm:$0xff]
        %v4219 = vld [vmem:[%s593 + $0x48] sm:$0xff]
        %v4220 = vld [vmem:[%s593 + $0x50] sm:$0xff]
        %v4221 = vld [vmem:[%s593 + $0x58] sm:$0xff]
        %v4222 = vld [vmem:[%s593 + $0x60] sm:$0xff]
        %v4223 = vld [vmem:[%s593 + $0x68] sm:$0xff]
        %v4224 = vld [vmem:[%s593 + $0x70] sm:$0xff]
        %v4225 = vld [vmem:[%s593 + $0x78] sm:$0xff]
        %v4226 = vld [vmem:[%s593 + $0x80] sm:$0xff]
        %v4227 = vld [vmem:[%s593 + $0x88] sm:$0xff]
        %v4228 = vld [vmem:[%s593 + $0x90] sm:$0xff]
        %v4229 = vld [vmem:[%s593 + $0x98] sm:$0xff]
        %v4230 = vld [vmem:[%s593 + $0xa0] sm:$0xff]
        %v4231 = vld [vmem:[%s593 + $0xa8] sm:$0xff]
        %v4232 = vld [vmem:[%s593 + $0xb0] sm:$0xff]
        %v4233 = vld [vmem:[%s593 + $0xb8] sm:$0xff]
        %v4234 = vld [vmem:[%s593 + $0xc0] sm:$0xff]
        %v4235 = vld [vmem:[%s593 + $0xc8] sm:$0xff]
        %v4236 = vld [vmem:[%s593 + $0xd0] sm:$0xff]
        %v4237 = vld [vmem:[%s593 + $0xd8] sm:$0xff]
        %v4238 = vld [vmem:[%s593 + $0xe0] sm:$0xff]
        %v4239 = vld [vmem:[%s593 + $0xe8] sm:$0xff]
        %v4240 = vld [vmem:[%s593 + $0xf0] sm:$0xff]
        %v4241 = vld [vmem:[%s593 + $0xf8] sm:$0xff]
        %v4244 = vperm.slane %v4208, 0
        %v4245 = vperm.slane %v4209, 0
        %v4248 = vadd.f32 %v4210, %v4244
        %v4249 = vadd.f32 %v4211, %v4244
        %v4250 = vadd.f32 %v4212, %v4244
        %v4251 = vadd.f32 %v4213, %v4244
        %v4252 = vadd.f32 %v4214, %v4244
        %v4253 = vadd.f32 %v4215, %v4244
        %v4254 = vadd.f32 %v4216, %v4244
        %v4255 = vadd.f32 %v4217, %v4244
        %v4256 = vadd.f32 %v4218, %v4244
        %v4257 = vadd.f32 %v4219, %v4244
        %v4258 = vadd.f32 %v4220, %v4244
        %v4259 = vadd.f32 %v4221, %v4244
        %v4260 = vadd.f32 %v4222, %v4244
        %v4261 = vadd.f32 %v4223, %v4244
        %v4262 = vadd.f32 %v4224, %v4244
        %v4263 = vadd.f32 %v4225, %v4244
        %v4264 = vadd.f32 %v4226, %v4245
        %v4265 = vadd.f32 %v4227, %v4245
        %v4266 = vadd.f32 %v4228, %v4245
        %v4267 = vadd.f32 %v4229, %v4245
        %v4268 = vadd.f32 %v4230, %v4245
        %v4269 = vadd.f32 %v4231, %v4245
        %v4270 = vadd.f32 %v4232, %v4245
        %v4271 = vadd.f32 %v4233, %v4245
        %v4272 = vadd.f32 %v4234, %v4245
        %v4273 = vadd.f32 %v4235, %v4245
        %v4274 = vadd.f32 %v4236, %v4245
        %v4275 = vadd.f32 %v4237, %v4245
        %v4276 = vadd.f32 %v4238, %v4245
        %v4277 = vadd.f32 %v4239, %v4245
        %v4278 = vadd.f32 %v4240, %v4245
        %v4279 = vadd.f32 %v4241, %v4245
        %v4280 = vtanh.pop %v4248
        %v4281 = vtanh.pop %v4249
        %v4282 = vtanh.pop %v4250
        %v4283 = vtanh.pop %v4251
        %v4284 = vtanh.pop %v4252
        %v4285 = vtanh.pop %v4253
        %v4286 = vtanh.pop %v4254
        %v4287 = vtanh.pop %v4255
        %v4288 = vtanh.pop %v4256
        %v4289 = vtanh.pop %v4257
        %v4290 = vtanh.pop %v4258
        %v4291 = vtanh.pop %v4259
        %v4292 = vtanh.pop %v4260
        %v4293 = vtanh.pop %v4261
        %v4294 = vtanh.pop %v4262
        %v4295 = vtanh.pop %v4263
        %v4296 = vtanh.pop %v4264
        %v4297 = vtanh.pop %v4265
        %v4298 = vtanh.pop %v4266
        %v4299 = vtanh.pop %v4267
        %v4300 = vtanh.pop %v4268
        %v4301 = vtanh.pop %v4269
        %v4302 = vtanh.pop %v4270
        %v4303 = vtanh.pop %v4271
        %v4304 = vtanh.pop %v4272
        %v4305 = vtanh.pop %v4273
        %v4306 = vtanh.pop %v4274
        %v4307 = vtanh.pop %v4275
        %v4308 = vtanh.pop %v4276
        %v4309 = vtanh.pop %v4277
        %v4310 = vtanh.pop %v4278
        %v4311 = vtanh.pop %v4279
        %v4312 = vmul.f32 %v4280, %v864
        %v4313 = vmul.f32 %v4281, %v864
        %v4314 = vmul.f32 %v4282, %v864
        %v4315 = vmul.f32 %v4283, %v864
        %v4316 = vmul.f32 %v4284, %v864
        %v4317 = vmul.f32 %v4285, %v864
        %v4318 = vmul.f32 %v4286, %v864
        %v4319 = vmul.f32 %v4287, %v864
        %v4320 = vmul.f32 %v4288, %v864
        %v4321 = vmul.f32 %v4289, %v864
        %v4322 = vmul.f32 %v4290, %v864
        %v4323 = vmul.f32 %v4291, %v864
        %v4324 = vmul.f32 %v4292, %v864
        %v4325 = vmul.f32 %v4293, %v864
        %v4326 = vmul.f32 %v4294, %v864
        %v4327 = vmul.f32 %v4295, %v864
        %v4328 = vmul.f32 %v4296, %v864
        %v4329 = vmul.f32 %v4297, %v864
        %v4330 = vmul.f32 %v4298, %v864
        %v4331 = vmul.f32 %v4299, %v864
        %v4332 = vmul.f32 %v4300, %v864
        %v4333 = vmul.f32 %v4301, %v864
        %v4334 = vmul.f32 %v4302, %v864
        %v4335 = vmul.f32 %v4303, %v864
        %v4336 = vmul.f32 %v4304, %v864
        %v4337 = vmul.f32 %v4305, %v864
        %v4338 = vmul.f32 %v4306, %v864
        %v4339 = vmul.f32 %v4307, %v864
        %v4340 = vmul.f32 %v4308, %v864
        %v4341 = vmul.f32 %v4309, %v864
        %v4342 = vmul.f32 %v4310, %v864
        %v4343 = vmul.f32 %v4311, %v864
        %4344 = vadd.xlane.f32.xlu0 %v4312
        %v4345 = vpop.xlane.xlu0 %4344
        %4346 = vadd.xlane.f32.xlu0 %v4313
        %v4347 = vpop.xlane.xlu0 %4346
        %4348 = vadd.xlane.f32.xlu0 %v4314
        %v4349 = vpop.xlane.xlu0 %4348
        %4350 = vadd.xlane.f32.xlu0 %v4315
        %v4351 = vpop.xlane.xlu0 %4350
        %4352 = vadd.xlane.f32.xlu0 %v4316
        %v4353 = vpop.xlane.xlu0 %4352
        %4354 = vadd.xlane.f32.xlu0 %v4317
        %v4355 = vpop.xlane.xlu0 %4354
        %4356 = vadd.xlane.f32.xlu0 %v4318
        %v4357 = vpop.xlane.xlu0 %4356
        %4358 = vadd.xlane.f32.xlu0 %v4319
        %v4359 = vpop.xlane.xlu0 %4358
        %4360 = vadd.xlane.f32.xlu0 %v4320
        %v4361 = vpop.xlane.xlu0 %4360
        %4362 = vadd.xlane.f32.xlu0 %v4321
        %v4363 = vpop.xlane.xlu0 %4362
        %4364 = vadd.xlane.f32.xlu0 %v4322
        %v4365 = vpop.xlane.xlu0 %4364
        %4366 = vadd.xlane.f32.xlu0 %v4323
        %v4367 = vpop.xlane.xlu0 %4366
        %4368 = vadd.xlane.f32.xlu0 %v4324
        %v4369 = vpop.xlane.xlu0 %4368
        %4370 = vadd.xlane.f32.xlu0 %v4325
        %v4371 = vpop.xlane.xlu0 %4370
        %4372 = vadd.xlane.f32.xlu0 %v4326
        %v4373 = vpop.xlane.xlu0 %4372
        %4374 = vadd.xlane.f32.xlu0 %v4327
        %v4375 = vpop.xlane.xlu0 %4374
        %4376 = vadd.xlane.f32.xlu0 %v4328
        %v4377 = vpop.xlane.xlu0 %4376
        %4378 = vadd.xlane.f32.xlu0 %v4329
        %v4379 = vpop.xlane.xlu0 %4378
        %4380 = vadd.xlane.f32.xlu0 %v4330
        %v4381 = vpop.xlane.xlu0 %4380
        %4382 = vadd.xlane.f32.xlu0 %v4331
        %v4383 = vpop.xlane.xlu0 %4382
        %4384 = vadd.xlane.f32.xlu0 %v4332
        %v4385 = vpop.xlane.xlu0 %4384
        %4386 = vadd.xlane.f32.xlu0 %v4333
        %v4387 = vpop.xlane.xlu0 %4386
        %4388 = vadd.xlane.f32.xlu0 %v4334
        %v4389 = vpop.xlane.xlu0 %4388
        %4390 = vadd.xlane.f32.xlu0 %v4335
        %v4391 = vpop.xlane.xlu0 %4390
        %4392 = vadd.xlane.f32.xlu0 %v4336
        %v4393 = vpop.xlane.xlu0 %4392
        %4394 = vadd.xlane.f32.xlu0 %v4337
        %v4395 = vpop.xlane.xlu0 %4394
        %4396 = vadd.xlane.f32.xlu0 %v4338
        %v4397 = vpop.xlane.xlu0 %4396
        %4398 = vadd.xlane.f32.xlu0 %v4339
        %v4399 = vpop.xlane.xlu0 %4398
        %4400 = vadd.xlane.f32.xlu0 %v4340
        %v4401 = vpop.xlane.xlu0 %4400
        %4402 = vadd.xlane.f32.xlu0 %v4341
        %v4403 = vpop.xlane.xlu0 %4402
        %4404 = vadd.xlane.f32.xlu0 %v4342
        %v4405 = vpop.xlane.xlu0 %4404
        %4406 = vadd.xlane.f32.xlu0 %v4343
        %v4407 = vpop.xlane.xlu0 %4406
        %v4440 = vperm.slane %v4345, %v995
        %v4441 = vperm.slane %v4347, %v997
        %v4442 = vsel %vm999, %v4441, %v4440
        %v4443 = vperm.slane %v4349, %v1001
        %v4444 = vsel %vm1003, %v4443, %v4442
        %v4445 = vperm.slane %v4351, %v1005
        %v4446 = vsel %vm1007, %v4445, %v4444
        %v4447 = vperm.slane %v4353, %v1009
        %v4448 = vsel %vm1011, %v4447, %v4446
        %v4449 = vperm.slane %v4355, %v1013
        %v4450 = vsel %vm1015, %v4449, %v4448
        %v4451 = vperm.slane %v4357, %v1017
        %v4452 = vsel %vm1019, %v4451, %v4450
        %v4453 = vperm.slane %v4359, %v1021
        %v4454 = vsel %vm1023, %v4453, %v4452
        %v4455 = vperm.slane %v4361, %v1025
        %v4456 = vsel %vm1027, %v4455, %v4454
        %v4457 = vperm.slane %v4363, %v1029
        %v4458 = vsel %vm1031, %v4457, %v4456
        %v4459 = vperm.slane %v4365, %v1033
        %v4460 = vsel %vm1035, %v4459, %v4458
        %v4461 = vperm.slane %v4367, %v1037
        %v4462 = vsel %vm1039, %v4461, %v4460
        %v4463 = vperm.slane %v4369, %v1041
        %v4464 = vsel %vm1043, %v4463, %v4462
        %v4465 = vperm.slane %v4371, %v1045
        %v4466 = vsel %vm1047, %v4465, %v4464
        %v4467 = vperm.slane %v4373, %v1049
        %v4468 = vsel %vm1051, %v4467, %v4466
        %v4469 = vperm.slane %v4375, %v1053
        %v4470 = vsel %vm1055, %v4469, %v4468
        %v4471 = vperm.slane %v4377, %v995
        %v4472 = vperm.slane %v4379, %v997
        %v4473 = vsel %vm999, %v4472, %v4471
        %v4474 = vperm.slane %v4381, %v1001
        %v4475 = vsel %vm1003, %v4474, %v4473
        %v4476 = vperm.slane %v4383, %v1005
        %v4477 = vsel %vm1007, %v4476, %v4475
        %v4478 = vperm.slane %v4385, %v1009
        %v4479 = vsel %vm1011, %v4478, %v4477
        %v4480 = vperm.slane %v4387, %v1013
        %v4481 = vsel %vm1015, %v4480, %v4479
        %v4482 = vperm.slane %v4389, %v1017
        %v4483 = vsel %vm1019, %v4482, %v4481
        %v4484 = vperm.slane %v4391, %v1021
        %v4485 = vsel %vm1023, %v4484, %v4483
        %v4486 = vperm.slane %v4393, %v1025
        %v4487 = vsel %vm1027, %v4486, %v4485
        %v4488 = vperm.slane %v4395, %v1029
        %v4489 = vsel %vm1031, %v4488, %v4487
        %v4490 = vperm.slane %v4397, %v1033
        %v4491 = vsel %vm1035, %v4490, %v4489
        %v4492 = vperm.slane %v4399, %v1037
        %v4493 = vsel %vm1039, %v4492, %v4491
        %v4494 = vperm.slane %v4401, %v1041
        %v4495 = vsel %vm1043, %v4494, %v4493
        %v4496 = vperm.slane %v4403, %v1045
        %v4497 = vsel %vm1047, %v4496, %v4495
        %v4498 = vperm.slane %v4405, %v1049
        %v4499 = vsel %vm1051, %v4498, %v4497
        %v4500 = vperm.slane %v4407, %v1053
        %v4501 = vsel %vm1055, %v4500, %v4499
        %v4502 = vsel %vm1088, %v4501, %v4470
        %v4504 = vsel %vm603, %v4502, -1e+30
        %v4505 = vsel %vm1092, %v4504, -inf
        %4506 = vmax.xlane.f32.xlu0 %v4505
        %v4507 = vpop.xlane.xlu0 %4506
        %v4508 = vsub.f32 %v4504, %v4507
        %v4509 = vmul.f32 %v4508, 1.442695
        %v4510 = vpow.pop %v4509
        %v4511 = vmul.f32 %v4510, %v602
        %v4512 = vsel %vm1092, %v4511, 0.0
        %4513 = vadd.xlane.f32.xlu0 %v4512
        %v4514 = vpop.xlane.xlu0 %4513
        %v4515 = vadd.f32 %v4514, 1e-13
        %v4516 = vrcp.pop %v4515
        %v4517 = vmul.f32 %v4515, %v4516
        %v4518 = vsub.f32 1.0, %v4517
        %v4519 = vmul.f32 %v4516, %v4518
        %v4520 = vadd.f32 %v4516, %v4519
        %vm4521 = vweird.f32 %v4515
        %vm4522 = vweird.f32 %v4516
        %vm4523 = vmor %vm4521, %vm4522
        %v4524 = vsel %vm4523, %v4516, %v4520
        %v4525 = vand.u32 2147483647, %v4515
        %vm4526 = vcmp.eq.f32.partialorder %v4525, 8.507059e+37
        %v4527 = vand.u32 %v4515, 2147483648
        %v4528 = vor.u32 1.1754944e-38, %v4527
        %v4529 = vsel %vm4526, %v4528, %v4524
        %v4530 = vmul.f32 %v4511, %v4529
        %v4532 = vrot.slane %v4530, 1
        %v4534 = vld [vmem:[%s582] sm:$0xff]
        %v4535 = vld [vmem:[%s582 + $0x8] sm:$0xff]
        %v4536 = vld [vmem:[%s582 + $0x10] sm:$0xff]
        %v4537 = vld [vmem:[%s582 + $0x18] sm:$0xff]
        %v4538 = vld [vmem:[%s582 + $0x20] sm:$0xff]
        %v4539 = vld [vmem:[%s582 + $0x28] sm:$0xff]
        %v4540 = vld [vmem:[%s582 + $0x30] sm:$0xff]
        %v4541 = vld [vmem:[%s582 + $0x38] sm:$0xff]
        %v4542 = vld [vmem:[%s582 + $0x40] sm:$0xff]
        %v4543 = vld [vmem:[%s582 + $0x48] sm:$0xff]
        %v4544 = vld [vmem:[%s582 + $0x50] sm:$0xff]
        %v4545 = vld [vmem:[%s582 + $0x58] sm:$0xff]
        %v4546 = vld [vmem:[%s582 + $0x60] sm:$0xff]
        %v4547 = vld [vmem:[%s582 + $0x68] sm:$0xff]
        %v4548 = vld [vmem:[%s582 + $0x70] sm:$0xff]
        %v4549 = vld [vmem:[%s582 + $0x78] sm:$0xff]
        %v4550 = vld [vmem:[%s582 + $0x80] sm:$0xff]
        %v4551 = vld [vmem:[%s582 + $0x88] sm:$0xff]
        %v4552 = vld [vmem:[%s582 + $0x90] sm:$0xff]
        %v4553 = vld [vmem:[%s582 + $0x98] sm:$0xff]
        %v4554 = vld [vmem:[%s582 + $0xa0] sm:$0xff]
        %v4555 = vld [vmem:[%s582 + $0xa8] sm:$0xff]
        %v4556 = vld [vmem:[%s582 + $0xb0] sm:$0xff]
        %v4557 = vld [vmem:[%s582 + $0xb8] sm:$0xff]
        %v4558 = vld [vmem:[%s582 + $0xc0] sm:$0xff]
        %v4559 = vld [vmem:[%s582 + $0xc8] sm:$0xff]
        %v4560 = vld [vmem:[%s582 + $0xd0] sm:$0xff]
        %v4561 = vld [vmem:[%s582 + $0xd8] sm:$0xff]
        %v4562 = vld [vmem:[%s582 + $0xe0] sm:$0xff]
        %v4563 = vld [vmem:[%s582 + $0xe8] sm:$0xff]
        %v4564 = vld [vmem:[%s582 + $0xf0] sm:$0xff]
        %v4565 = vld [vmem:[%s582 + $0xf8] sm:$0xff]
        %4566 = vmatpush.msra.mxu0 %v4549
        %4567 = vmatpush.msra.mxu0 %v4548
        %4568 = vmatpush.msra.mxu0 %v4547
        %4569 = vmatpush.msra.mxu0 %v4546
        %4570 = vmatpush.msra.mxu0 %v4545
        %4571 = vmatpush.msra.mxu0 %v4544
        %4572 = vmatpush.msra.mxu0 %v4543
        %4573 = vmatpush.msra.mxu0 %v4542
        %4574 = vmatpush.msra.mxu0 %v4541
        %4575 = vmatpush.msra.mxu0 %v4540
        %4576 = vmatpush.msra.mxu0 %v4539
        %4577 = vmatpush.msra.mxu0 %v4538
        %4578 = vmatpush.msra.mxu0 %v4537
        %4579 = vmatpush.msra.mxu0 %v4536
        %4580 = vmatpush.msra.mxu0 %v4535
        %4581 = vmatpush.msra.mxu0 %v4534
        %4582 = vmatmul.f32.gmra.mxu0 %v4530
        %v4583 = vpop.f32.mrf.mxu0
        %v4584 = vadd.f32 0.0, %v4583
        %4585 = vdwg.mxu0
        %4586 = vmatpush.msra.mxu0 %v4565
        %4587 = vmatpush.msra.mxu0 %v4564
        %4588 = vmatpush.msra.mxu0 %v4563
        %4589 = vmatpush.msra.mxu0 %v4562
        %4590 = vmatpush.msra.mxu0 %v4561
        %4591 = vmatpush.msra.mxu0 %v4560
        %4592 = vmatpush.msra.mxu0 %v4559
        %4593 = vmatpush.msra.mxu0 %v4558
        %4594 = vmatpush.msra.mxu0 %v4557
        %4595 = vmatpush.msra.mxu0 %v4556
        %4596 = vmatpush.msra.mxu0 %v4555
        %4597 = vmatpush.msra.mxu0 %v4554
        %4598 = vmatpush.msra.mxu0 %v4553
        %4599 = vmatpush.msra.mxu0 %v4552
        %4600 = vmatpush.msra.mxu0 %v4551
        %4601 = vmatpush.msra.mxu0 %v4550
        %4602 = vmatmul.f32.gmra.mxu0 %v4532
        %v4603 = vpop.f32.mrf.mxu0
        %v4604 = vadd.f32 0.0, %v4603
        %4605 = vdwg.mxu0
        %v4606 = vld [vmem:[%s7] sm:$0xff]
        %v4607 = vld [vmem:[%s7 + $0x8] sm:$0xff]
        %v4610 = vrot.slane %v4604, 7
        %v4611 = vsel %vm1088, %v4610, %v4584
        %v4612 = vsel %vm1200, %v4611, 0
        %4614 = vmatpush.msra.mxu0 0.0
        %4615 = vmatpush.msra.mxu0 0.0
        %4616 = vmatpush.msra.mxu0 0.0
        %4617 = vmatpush.msra.mxu0 0.0
        %4618 = vmatpush.msra.mxu0 0.0
        %4619 = vmatpush.msra.mxu0 0.0
        %4620 = vmatpush.msra.mxu0 0.0
        %4621 = vmatpush.msra.mxu0 0.0
        %4622 = vmatpush.msra.mxu0 0.0
        %4623 = vmatpush.msra.mxu0 0.0
        %4624 = vmatpush.msra.mxu0 0.0
        %4625 = vmatpush.msra.mxu0 0.0
        %4626 = vmatpush.msra.mxu0 0.0
        %4627 = vmatpush.msra.mxu0 0.0
        %4628 = vmatpush.msra.mxu0 %v4607
        %4629 = vmatpush.msra.mxu0 %v4606
        %4630 = vmatmul.f32.gmra.mxu0 %v4612
        %v4631 = vpop.f32.mrf.mxu0
        %v4632 = vadd.f32 0.0, %v4631
        %4633 = vdwg.mxu0
        %v4636 = vrot.slane %v4058, 1
        %v4637 = vrot.slane %v4060, 1
        %v4641 = vrot.slane %v4632, 1
        %v4643 = vadd.f32 %v4636, %v4632
        %v4644 = vadd.f32 %v4637, %v4641
        %v4645 = vxor.u32 %v4643, 2147483648
        %v4646 = vxor.u32 %v4644, 2147483648
        %v4647 = vmul.f32 %v4645, 1.442695
        %v4648 = vpow.pop %v4647
        %v4649 = vmul.f32 %v4646, 1.442695
        %v4650 = vpow.pop %v4649
        %v4651 = vadd.f32 %v4648, 1.0
        %v4652 = vadd.f32 %v4650, 1.0
        %v4653 = vrcp.pop %v4651
        %v4654 = vmul.f32 %v4651, %v4653
        %v4655 = vsub.f32 1.0, %v4654
        %v4656 = vmul.f32 %v4653, %v4655
        %v4657 = vadd.f32 %v4653, %v4656
        %vm4658 = vweird.f32 %v4651
        %vm4659 = vweird.f32 %v4653
        %vm4660 = vmor %vm4658, %vm4659
        %v4661 = vsel %vm4660, %v4653, %v4657
        %v4662 = vand.u32 2147483647, %v4651
        %vm4663 = vcmp.eq.f32.partialorder %v4662, 8.507059e+37
        %v4664 = vand.u32 %v4651, 2147483648
        %v4665 = vor.u32 1.1754944e-38, %v4664
        %v4666 = vsel %vm4663, %v4665, %v4661
        %v4667 = vmul.f32 1.0, %v4666
        %v4668 = vrcp.pop %v4652
        %v4669 = vmul.f32 %v4652, %v4668
        %v4670 = vsub.f32 1.0, %v4669
        %v4671 = vmul.f32 %v4668, %v4670
        %v4672 = vadd.f32 %v4668, %v4671
        %vm4673 = vweird.f32 %v4652
        %vm4674 = vweird.f32 %v4668
        %vm4675 = vmor %vm4673, %vm4674
        %v4676 = vsel %vm4675, %v4668, %v4672
        %v4677 = vand.u32 2147483647, %v4652
        %vm4678 = vcmp.eq.f32.partialorder %v4677, 8.507059e+37
        %v4679 = vand.u32 %v4652, 2147483648
        %v4680 = vor.u32 1.1754944e-38, %v4679
        %v4681 = vsel %vm4678, %v4680, %v4676
        %v4682 = vmul.f32 1.0, %v4681
        %v4683 = vmul.f32 %v4667, %v4055
        %v4684 = vmul.f32 %v4682, %v4056
        %4685 = vrot.lane.b32.xlu0 %v4584, 16
        %v4686 = vpop.permute.xlu0 %4685
        %4687 = vrot.lane.b32.xlu0 %v4604, 16
        %v4688 = vpop.permute.xlu0 %4687
        %v4691 = vmul.f32 %v4667, %v4686
        %v4692 = vmul.f32 %v4682, %v4688
        %v4693 = vld [vmem:[%s8] sm:$0xff]
        %v4694 = vld [vmem:[%s8 + $0x8] sm:$0xff]
        %v4695 = vld [vmem:[%s8 + $0x10] sm:$0xff]
        %v4696 = vld [vmem:[%s8 + $0x18] sm:$0xff]
        %v4697 = vld [vmem:[%s8 + $0x20] sm:$0xff]
        %v4698 = vld [vmem:[%s8 + $0x28] sm:$0xff]
        %v4699 = vld [vmem:[%s9] sm:$0xff]
        %v4700 = vld [vmem:[%s9 + $0x8] sm:$0xff]
        %v4701 = vld [vmem:[%s9 + $0x10] sm:$0xff]
        %v4702 = vld [vmem:[%s9 + $0x18] sm:$0xff]
        %v4703 = vld [vmem:[%s9 + $0x20] sm:$0xff]
        %v4704 = vld [vmem:[%s9 + $0x28] sm:$0xff]
        %4707 = vst [vmem:[#allocation1] ss:$9 sm:$0xff] %v4691
        %s4708 = scalar_lea.vmem [#allocation1], 1
        %4709 = vst [vmem:[%s4708] ss:$9 sm:$0xff] %v4692
        %v4710 = vld [vmem:[#allocation1] sm:$0xff]
        %4711 = vrot.lane.b32.xlu0 %v4710, 112
        %v4712 = vpop.permute.xlu0 %4711
        %v4713 = vsel %vm1200, %v4712, 0
        %4715 = vmatpush.msra.mxu0 0.0
        %4716 = vmatpush.msra.mxu0 0.0
        %4717 = vmatpush.msra.mxu0 0.0
        %4718 = vmatpush.msra.mxu0 0.0
        %4719 = vmatpush.msra.mxu0 0.0
        %4720 = vmatpush.msra.mxu0 0.0
        %4721 = vmatpush.msra.mxu0 0.0
        %4722 = vmatpush.msra.mxu0 0.0
        %4723 = vmatpush.msra.mxu0 0.0
        %4724 = vmatpush.msra.mxu0 0.0
        %4725 = vmatpush.msra.mxu0 0.0
        %4726 = vmatpush.msra.mxu0 0.0
        %4727 = vmatpush.msra.mxu0 0.0
        %4728 = vmatpush.msra.mxu0 0.0
        %4729 = vmatpush.msra.mxu0 %v4702
        %4730 = vmatpush.msra.mxu0 %v4699
        %4731 = vmatmul.f32.gmra.mxu0 %v4713
        %v4732 = vpop.f32.mrf.mxu0
        %v4733 = vadd.f32 0.0, %v4732
        %4734 = vdwg.mxu0
        %4735 = vmatpush.msra.mxu0 0.0
        %4736 = vmatpush.msra.mxu0 0.0
        %4737 = vmatpush.msra.mxu0 0.0
        %4738 = vmatpush.msra.mxu0 0.0
        %4739 = vmatpush.msra.mxu0 0.0
        %4740 = vmatpush.msra.mxu0 0.0
        %4741 = vmatpush.msra.mxu0 0.0
        %4742 = vmatpush.msra.mxu0 0.0
        %4743 = vmatpush.msra.mxu0 0.0
        %4744 = vmatpush.msra.mxu0 0.0
        %4745 = vmatpush.msra.mxu0 0.0
        %4746 = vmatpush.msra.mxu0 0.0
        %4747 = vmatpush.msra.mxu0 0.0
        %4748 = vmatpush.msra.mxu0 0.0
        %4749 = vmatpush.msra.mxu0 %v4703
        %4750 = vmatpush.msra.mxu0 %v4700
        %4751 = vmatmul.f32.gmra.mxu0 %v4713
        %v4752 = vpop.f32.mrf.mxu0
        %v4753 = vadd.f32 0.0, %v4752
        %4754 = vdwg.mxu0
        %4755 = vmatpush.msra.mxu0 0.0
        %4756 = vmatpush.msra.mxu0 0.0
        %4757 = vmatpush.msra.mxu0 0.0
        %4758 = vmatpush.msra.mxu0 0.0
        %4759 = vmatpush.msra.mxu0 0.0
        %4760 = vmatpush.msra.mxu0 0.0
        %4761 = vmatpush.msra.mxu0 0.0
        %4762 = vmatpush.msra.mxu0 0.0
        %4763 = vmatpush.msra.mxu0 0.0
        %4764 = vmatpush.msra.mxu0 0.0
        %4765 = vmatpush.msra.mxu0 0.0
        %4766 = vmatpush.msra.mxu0 0.0
        %4767 = vmatpush.msra.mxu0 0.0
        %4768 = vmatpush.msra.mxu0 0.0
        %4769 = vmatpush.msra.mxu0 %v4704
        %4770 = vmatpush.msra.mxu0 %v4701
        %4771 = vmatmul.f32.gmra.mxu0 %v4713
        %v4772 = vpop.f32.mrf.mxu0
        %v4773 = vadd.f32 0.0, %v4772
        %4774 = vdwg.mxu0
        %4777 = vst [vmem:[#allocation1] ss:$9 sm:$0xff] %v4683
        %s4778 = scalar_lea.vmem [#allocation1], 1
        %4779 = vst [vmem:[%s4778] ss:$9 sm:$0xff] %v4684
        %v4780 = vld [vmem:[#allocation1] sm:$0xff]
        %v4781 = vsel %vm1200, %v4780, 0
        %4783 = vmatpush.msra.mxu0 0.0
        %4784 = vmatpush.msra.mxu0 0.0
        %4785 = vmatpush.msra.mxu0 0.0
        %4786 = vmatpush.msra.mxu0 0.0
        %4787 = vmatpush.msra.mxu0 0.0
        %4788 = vmatpush.msra.mxu0 0.0
        %4789 = vmatpush.msra.mxu0 0.0
        %4790 = vmatpush.msra.mxu0 0.0
        %4791 = vmatpush.msra.mxu0 0.0
        %4792 = vmatpush.msra.mxu0 0.0
        %4793 = vmatpush.msra.mxu0 0.0
        %4794 = vmatpush.msra.mxu0 0.0
        %4795 = vmatpush.msra.mxu0 0.0
        %4796 = vmatpush.msra.mxu0 0.0
        %4797 = vmatpush.msra.mxu0 %v4696
        %4798 = vmatpush.msra.mxu0 %v4693
        %4799 = vmatmul.f32.gmra.mxu0 %v4781
        %v4800 = vpop.f32.mrf.mxu0
        %v4801 = vadd.f32 %v4733, %v4800
        %4802 = vdwg.mxu0
        %4803 = vmatpush.msra.mxu0 0.0
        %4804 = vmatpush.msra.mxu0 0.0
        %4805 = vmatpush.msra.mxu0 0.0
        %4806 = vmatpush.msra.mxu0 0.0
        %4807 = vmatpush.msra.mxu0 0.0
        %4808 = vmatpush.msra.mxu0 0.0
        %4809 = vmatpush.msra.mxu0 0.0
        %4810 = vmatpush.msra.mxu0 0.0
        %4811 = vmatpush.msra.mxu0 0.0
        %4812 = vmatpush.msra.mxu0 0.0
        %4813 = vmatpush.msra.mxu0 0.0
        %4814 = vmatpush.msra.mxu0 0.0
        %4815 = vmatpush.msra.mxu0 0.0
        %4816 = vmatpush.msra.mxu0 0.0
        %4817 = vmatpush.msra.mxu0 %v4697
        %4818 = vmatpush.msra.mxu0 %v4694
        %4819 = vmatmul.f32.gmra.mxu0 %v4781
        %v4820 = vpop.f32.mrf.mxu0
        %v4821 = vadd.f32 %v4753, %v4820
        %4822 = vdwg.mxu0
        %4823 = vmatpush.msra.mxu0 0.0
        %4824 = vmatpush.msra.mxu0 0.0
        %4825 = vmatpush.msra.mxu0 0.0
        %4826 = vmatpush.msra.mxu0 0.0
        %4827 = vmatpush.msra.mxu0 0.0
        %4828 = vmatpush.msra.mxu0 0.0
        %4829 = vmatpush.msra.mxu0 0.0
        %4830 = vmatpush.msra.mxu0 0.0
        %4831 = vmatpush.msra.mxu0 0.0
        %4832 = vmatpush.msra.mxu0 0.0
        %4833 = vmatpush.msra.mxu0 0.0
        %4834 = vmatpush.msra.mxu0 0.0
        %4835 = vmatpush.msra.mxu0 0.0
        %4836 = vmatpush.msra.mxu0 0.0
        %4837 = vmatpush.msra.mxu0 %v4698
        %4838 = vmatpush.msra.mxu0 %v4695
        %4839 = vmatmul.f32.gmra.mxu0 %v4781
        %v4840 = vpop.f32.mrf.mxu0
        %v4841 = vadd.f32 %v4773, %v4840
        %4842 = vdwg.mxu0
        %v4843 = vadd.f32 %v4801, %v1439
        %v4844 = vadd.f32 %v4821, %v1440
        %v4845 = vadd.f32 %v4841, %v1441
        %v4846 = vadd.f32 %v4163, %v1451
        %v4847 = vadd.f32 %v4183, %v1452
        %v4848 = vadd.f32 %v4203, %v1453
        %v4849 = vadd.f32 %v4843, %v4846
        %v4850 = vxor.u32 %v4849, 2147483648
        %v4851 = vmul.f32 %v4850, 1.442695
        %v4852 = vpow.pop %v4851
        %v4853 = vadd.f32 %v4852, 1.0
        %v4854 = vrcp.pop %v4853
        %v4855 = vmul.f32 %v4853, %v4854
        %v4856 = vsub.f32 1.0, %v4855
        %v4857 = vmul.f32 %v4854, %v4856
        %v4858 = vadd.f32 %v4854, %v4857
        %vm4859 = vweird.f32 %v4853
        %vm4860 = vweird.f32 %v4854
        %vm4861 = vmor %vm4859, %vm4860
        %v4862 = vsel %vm4861, %v4854, %v4858
        %v4863 = vand.u32 2147483647, %v4853
        %vm4864 = vcmp.eq.f32.partialorder %v4863, 8.507059e+37
        %v4865 = vand.u32 %v4853, 2147483648
        %v4866 = vor.u32 1.1754944e-38, %v4865
        %v4867 = vsel %vm4864, %v4866, %v4862
        %v4868 = vmul.f32 1.0, %v4867
        %v4869 = vadd.f32 %v4844, %v4847
        %v4870 = vxor.u32 %v4869, 2147483648
        %v4871 = vmul.f32 %v4870, 1.442695
        %v4872 = vpow.pop %v4871
        %v4873 = vadd.f32 %v4872, 1.0
        %v4874 = vrcp.pop %v4873
        %v4875 = vmul.f32 %v4873, %v4874
        %v4876 = vsub.f32 1.0, %v4875
        %v4877 = vmul.f32 %v4874, %v4876
        %v4878 = vadd.f32 %v4874, %v4877
        %vm4879 = vweird.f32 %v4873
        %vm4880 = vweird.f32 %v4874
        %vm4881 = vmor %vm4879, %vm4880
        %v4882 = vsel %vm4881, %v4874, %v4878
        %v4883 = vand.u32 2147483647, %v4873
        %vm4884 = vcmp.eq.f32.partialorder %v4883, 8.507059e+37
        %v4885 = vand.u32 %v4873, 2147483648
        %v4886 = vor.u32 1.1754944e-38, %v4885
        %v4887 = vsel %vm4884, %v4886, %v4882
        %v4888 = vmul.f32 1.0, %v4887
        %v4889 = vmul.f32 %v4868, %v4848
        %v4890 = vadd.f32 %v4845, %v4889
        %v4891 = vtanh.pop %v4890
        %v4892 = vsub.f32 1.0, %v4888
        %v4893 = vmul.f32 %v4892, %v4891
        %v4894 = vmul.f32 %v4888, %v4047
        %v4895 = vadd.f32 %v4893, %v4894
        %v4897 = vrot.slane %v4895, 1
        %4899 = vst [vmem:[%s568 + $0x4] sm:$0x1] %v4895
        %4900 = vst [vmem:[%s568 + $0xc] sm:$0x1] %v4897
        %4901 = vst [vmem:[%s574 + $0x4] sm:$0x1] %v4530
        %4902 = vst [vmem:[%s574 + $0xc] sm:$0x1] %v4532
        %v4903 = vld [vmem:[%s506 + $0x5] sm:$0x1]
        %v4904 = vld [vmem:[%s506 + $0xd] sm:$0x1]
        %s4905 = scalar_lea.vmem %s513, 5 [#allocation4]
        %v4906 = vld [vmem:[%s4905] ss:$8 sm:$0x3]
        %s4907 = scalar_lea.vmem %s513, 21 [#allocation4]
        %v4908 = vld [vmem:[%s4907] ss:$8 sm:$0x3]
        %v4909 = vld [vmem:[%s6] sm:$0xff]
        %v4910 = vld [vmem:[%s6 + $0x8] sm:$0xff]
        %v4911 = vld [vmem:[%s6 + $0x10] sm:$0xff]
        %v4912 = vld [vmem:[%s6 + $0x18] sm:$0xff]
        %v4913 = vld [vmem:[%s6 + $0x20] sm:$0xff]
        %v4914 = vld [vmem:[%s6 + $0x28] sm:$0xff]
        %v4915 = vld [vmem:[%s6 + $0x30] sm:$0xff]
        %v4916 = vld [vmem:[%s6 + $0x38] sm:$0xff]
        %v4917 = vld [vmem:[%s6 + $0x40] sm:$0xff]
        %v4918 = vld [vmem:[%s6 + $0x48] sm:$0xff]
        %v4919 = vld [vmem:[%s6 + $0x50] sm:$0xff]
        %v4920 = vld [vmem:[%s6 + $0x58] sm:$0xff]
        %v4921 = vld [vmem:[%s6 + $0x60] sm:$0xff]
        %v4922 = vld [vmem:[%s6 + $0x68] sm:$0xff]
        %v4923 = vld [vmem:[%s6 + $0x70] sm:$0xff]
        %v4924 = vld [vmem:[%s6 + $0x78] sm:$0xff]
        %v4925 = vld [vmem:[%s6 + $0x80] sm:$0xff]
        %v4926 = vld [vmem:[%s6 + $0x88] sm:$0xff]
        %v4927 = vld [vmem:[%s6 + $0x90] sm:$0xff]
        %v4928 = vld [vmem:[%s6 + $0x98] sm:$0xff]
        %v4929 = vld [vmem:[%s6 + $0xa0] sm:$0xff]
        %v4930 = vld [vmem:[%s6 + $0xa8] sm:$0xff]
        %v4931 = vld [vmem:[%s6 + $0xb0] sm:$0xff]
        %v4932 = vld [vmem:[%s6 + $0xb8] sm:$0xff]
        %v4933 = vld [vmem:[%s6 + $0xc0] sm:$0xff]
        %v4934 = vld [vmem:[%s6 + $0xc8] sm:$0xff]
        %v4935 = vld [vmem:[%s6 + $0xd0] sm:$0xff]
        %v4936 = vld [vmem:[%s6 + $0xd8] sm:$0xff]
        %v4937 = vld [vmem:[%s6 + $0xe0] sm:$0xff]
        %v4938 = vld [vmem:[%s6 + $0xe8] sm:$0xff]
        %v4939 = vld [vmem:[%s6 + $0xf0] sm:$0xff]
        %v4940 = vld [vmem:[%s6 + $0xf8] sm:$0xff]
        %v4941 = vld [vmem:[%s6 + $0x100] sm:$0xff]
        %v4942 = vld [vmem:[%s6 + $0x108] sm:$0xff]
        %v4943 = vld [vmem:[%s6 + $0x110] sm:$0xff]
        %v4944 = vld [vmem:[%s6 + $0x118] sm:$0xff]
        %v4945 = vld [vmem:[%s6 + $0x120] sm:$0xff]
        %v4946 = vld [vmem:[%s6 + $0x128] sm:$0xff]
        %v4947 = vld [vmem:[%s6 + $0x130] sm:$0xff]
        %v4948 = vld [vmem:[%s6 + $0x138] sm:$0xff]
        %v4949 = vld [vmem:[%s6 + $0x140] sm:$0xff]
        %v4950 = vld [vmem:[%s6 + $0x148] sm:$0xff]
        %v4951 = vld [vmem:[%s6 + $0x150] sm:$0xff]
        %v4952 = vld [vmem:[%s6 + $0x158] sm:$0xff]
        %v4953 = vld [vmem:[%s6 + $0x160] sm:$0xff]
        %v4954 = vld [vmem:[%s6 + $0x168] sm:$0xff]
        %v4955 = vld [vmem:[%s6 + $0x170] sm:$0xff]
        %v4956 = vld [vmem:[%s6 + $0x178] sm:$0xff]
        %v4957 = vld [vmem:[%s6 + $0x180] sm:$0xff]
        %v4958 = vld [vmem:[%s6 + $0x188] sm:$0xff]
        %v4959 = vld [vmem:[%s6 + $0x190] sm:$0xff]
        %v4960 = vld [vmem:[%s6 + $0x198] sm:$0xff]
        %v4961 = vld [vmem:[%s6 + $0x1a0] sm:$0xff]
        %v4962 = vld [vmem:[%s6 + $0x1a8] sm:$0xff]
        %v4963 = vld [vmem:[%s6 + $0x1b0] sm:$0xff]
        %v4964 = vld [vmem:[%s6 + $0x1b8] sm:$0xff]
        %v4965 = vld [vmem:[%s6 + $0x1c0] sm:$0xff]
        %v4966 = vld [vmem:[%s6 + $0x1c8] sm:$0xff]
        %v4967 = vld [vmem:[%s6 + $0x1d0] sm:$0xff]
        %v4968 = vld [vmem:[%s6 + $0x1d8] sm:$0xff]
        %v4969 = vld [vmem:[%s6 + $0x1e0] sm:$0xff]
        %v4970 = vld [vmem:[%s6 + $0x1e8] sm:$0xff]
        %v4971 = vld [vmem:[%s6 + $0x1f0] sm:$0xff]
        %v4972 = vld [vmem:[%s6 + $0x1f8] sm:$0xff]
        %4973 = vmatpush.msra.mxu0 %v4969
        %4974 = vmatpush.msra.mxu0 %v4965
        %4975 = vmatpush.msra.mxu0 %v4961
        %4976 = vmatpush.msra.mxu0 %v4957
        %4977 = vmatpush.msra.mxu0 %v4953
        %4978 = vmatpush.msra.mxu0 %v4949
        %4979 = vmatpush.msra.mxu0 %v4945
        %4980 = vmatpush.msra.mxu0 %v4941
        %4981 = vmatpush.msra.mxu0 %v4937
        %4982 = vmatpush.msra.mxu0 %v4933
        %4983 = vmatpush.msra.mxu0 %v4929
        %4984 = vmatpush.msra.mxu0 %v4925
        %4985 = vmatpush.msra.mxu0 %v4921
        %4986 = vmatpush.msra.mxu0 %v4917
        %4987 = vmatpush.msra.mxu0 %v4913
        %4988 = vmatpush.msra.mxu0 %v4909
        %4989 = vmatmul.f32.gmra.mxu0 %v4895
        %v4990 = vpop.f32.mrf.mxu0
        %v4991 = vadd.f32 0.0, %v4990
        %4992 = vdwg.mxu0
        %4993 = vmatpush.msra.mxu0 %v4970
        %4994 = vmatpush.msra.mxu0 %v4966
        %4995 = vmatpush.msra.mxu0 %v4962
        %4996 = vmatpush.msra.mxu0 %v4958
        %4997 = vmatpush.msra.mxu0 %v4954
        %4998 = vmatpush.msra.mxu0 %v4950
        %4999 = vmatpush.msra.mxu0 %v4946
        %5000 = vmatpush.msra.mxu0 %v4942
        %5001 = vmatpush.msra.mxu0 %v4938
        %5002 = vmatpush.msra.mxu0 %v4934
        %5003 = vmatpush.msra.mxu0 %v4930
        %5004 = vmatpush.msra.mxu0 %v4926
        %5005 = vmatpush.msra.mxu0 %v4922
        %5006 = vmatpush.msra.mxu0 %v4918
        %5007 = vmatpush.msra.mxu0 %v4914
        %5008 = vmatpush.msra.mxu0 %v4910
        %5009 = vmatmul.f32.gmra.mxu0 %v4895
        %v5010 = vpop.f32.mrf.mxu0
        %v5011 = vadd.f32 0.0, %v5010
        %5012 = vdwg.mxu0
        %5013 = vmatpush.msra.mxu0 %v4971
        %5014 = vmatpush.msra.mxu0 %v4967
        %5015 = vmatpush.msra.mxu0 %v4963
        %5016 = vmatpush.msra.mxu0 %v4959
        %5017 = vmatpush.msra.mxu0 %v4955
        %5018 = vmatpush.msra.mxu0 %v4951
        %5019 = vmatpush.msra.mxu0 %v4947
        %5020 = vmatpush.msra.mxu0 %v4943
        %5021 = vmatpush.msra.mxu0 %v4939
        %5022 = vmatpush.msra.mxu0 %v4935
        %5023 = vmatpush.msra.mxu0 %v4931
        %5024 = vmatpush.msra.mxu0 %v4927
        %5025 = vmatpush.msra.mxu0 %v4923
        %5026 = vmatpush.msra.mxu0 %v4919
        %5027 = vmatpush.msra.mxu0 %v4915
        %5028 = vmatpush.msra.mxu0 %v4911
        %5029 = vmatmul.f32.gmra.mxu0 %v4895
        %v5030 = vpop.f32.mrf.mxu0
        %v5031 = vadd.f32 0.0, %v5030
        %5032 = vdwg.mxu0
        %5033 = vmatpush.msra.mxu0 %v4972
        %5034 = vmatpush.msra.mxu0 %v4968
        %5035 = vmatpush.msra.mxu0 %v4964
        %5036 = vmatpush.msra.mxu0 %v4960
        %5037 = vmatpush.msra.mxu0 %v4956
        %5038 = vmatpush.msra.mxu0 %v4952
        %5039 = vmatpush.msra.mxu0 %v4948
        %5040 = vmatpush.msra.mxu0 %v4944
        %5041 = vmatpush.msra.mxu0 %v4940
        %5042 = vmatpush.msra.mxu0 %v4936
        %5043 = vmatpush.msra.mxu0 %v4932
        %5044 = vmatpush.msra.mxu0 %v4928
        %5045 = vmatpush.msra.mxu0 %v4924
        %5046 = vmatpush.msra.mxu0 %v4920
        %5047 = vmatpush.msra.mxu0 %v4916
        %5048 = vmatpush.msra.mxu0 %v4912
        %5049 = vmatmul.f32.gmra.mxu0 %v4895
        %v5050 = vpop.f32.mrf.mxu0
        %v5051 = vadd.f32 0.0, %v5050
        %5052 = vdwg.mxu0
        %v5054 = vrot.slane %v4991, 1
        %v5056 = vadd.f32 %v4906, %v4991
        %v5057 = vadd.f32 %v4908, %v5054
        %v5058 = vld [vmem:[%s593] sm:$0xff]
        %v5059 = vld [vmem:[%s593 + $0x8] sm:$0xff]
        %v5060 = vld [vmem:[%s593 + $0x10] sm:$0xff]
        %v5061 = vld [vmem:[%s593 + $0x18] sm:$0xff]
        %v5062 = vld [vmem:[%s593 + $0x20] sm:$0xff]
        %v5063 = vld [vmem:[%s593 + $0x28] sm:$0xff]
        %v5064 = vld [vmem:[%s593 + $0x30] sm:$0xff]
        %v5065 = vld [vmem:[%s593 + $0x38] sm:$0xff]
        %v5066 = vld [vmem:[%s593 + $0x40] sm:$0xff]
        %v5067 = vld [vmem:[%s593 + $0x48] sm:$0xff]
        %v5068 = vld [vmem:[%s593 + $0x50] sm:$0xff]
        %v5069 = vld [vmem:[%s593 + $0x58] sm:$0xff]
        %v5070 = vld [vmem:[%s593 + $0x60] sm:$0xff]
        %v5071 = vld [vmem:[%s593 + $0x68] sm:$0xff]
        %v5072 = vld [vmem:[%s593 + $0x70] sm:$0xff]
        %v5073 = vld [vmem:[%s593 + $0x78] sm:$0xff]
        %v5074 = vld [vmem:[%s593 + $0x80] sm:$0xff]
        %v5075 = vld [vmem:[%s593 + $0x88] sm:$0xff]
        %v5076 = vld [vmem:[%s593 + $0x90] sm:$0xff]
        %v5077 = vld [vmem:[%s593 + $0x98] sm:$0xff]
        %v5078 = vld [vmem:[%s593 + $0xa0] sm:$0xff]
        %v5079 = vld [vmem:[%s593 + $0xa8] sm:$0xff]
        %v5080 = vld [vmem:[%s593 + $0xb0] sm:$0xff]
        %v5081 = vld [vmem:[%s593 + $0xb8] sm:$0xff]
        %v5082 = vld [vmem:[%s593 + $0xc0] sm:$0xff]
        %v5083 = vld [vmem:[%s593 + $0xc8] sm:$0xff]
        %v5084 = vld [vmem:[%s593 + $0xd0] sm:$0xff]
        %v5085 = vld [vmem:[%s593 + $0xd8] sm:$0xff]
        %v5086 = vld [vmem:[%s593 + $0xe0] sm:$0xff]
        %v5087 = vld [vmem:[%s593 + $0xe8] sm:$0xff]
        %v5088 = vld [vmem:[%s593 + $0xf0] sm:$0xff]
        %v5089 = vld [vmem:[%s593 + $0xf8] sm:$0xff]
        %v5092 = vperm.slane %v5056, 0
        %v5093 = vperm.slane %v5057, 0
        %v5096 = vadd.f32 %v5058, %v5092
        %v5097 = vadd.f32 %v5059, %v5092
        %v5098 = vadd.f32 %v5060, %v5092
        %v5099 = vadd.f32 %v5061, %v5092
        %v5100 = vadd.f32 %v5062, %v5092
        %v5101 = vadd.f32 %v5063, %v5092
        %v5102 = vadd.f32 %v5064, %v5092
        %v5103 = vadd.f32 %v5065, %v5092
        %v5104 = vadd.f32 %v5066, %v5092
        %v5105 = vadd.f32 %v5067, %v5092
        %v5106 = vadd.f32 %v5068, %v5092
        %v5107 = vadd.f32 %v5069, %v5092
        %v5108 = vadd.f32 %v5070, %v5092
        %v5109 = vadd.f32 %v5071, %v5092
        %v5110 = vadd.f32 %v5072, %v5092
        %v5111 = vadd.f32 %v5073, %v5092
        %v5112 = vadd.f32 %v5074, %v5093
        %v5113 = vadd.f32 %v5075, %v5093
        %v5114 = vadd.f32 %v5076, %v5093
        %v5115 = vadd.f32 %v5077, %v5093
        %v5116 = vadd.f32 %v5078, %v5093
        %v5117 = vadd.f32 %v5079, %v5093
        %v5118 = vadd.f32 %v5080, %v5093
        %v5119 = vadd.f32 %v5081, %v5093
        %v5120 = vadd.f32 %v5082, %v5093
        %v5121 = vadd.f32 %v5083, %v5093
        %v5122 = vadd.f32 %v5084, %v5093
        %v5123 = vadd.f32 %v5085, %v5093
        %v5124 = vadd.f32 %v5086, %v5093
        %v5125 = vadd.f32 %v5087, %v5093
        %v5126 = vadd.f32 %v5088, %v5093
        %v5127 = vadd.f32 %v5089, %v5093
        %v5128 = vtanh.pop %v5096
        %v5129 = vtanh.pop %v5097
        %v5130 = vtanh.pop %v5098
        %v5131 = vtanh.pop %v5099
        %v5132 = vtanh.pop %v5100
        %v5133 = vtanh.pop %v5101
        %v5134 = vtanh.pop %v5102
        %v5135 = vtanh.pop %v5103
        %v5136 = vtanh.pop %v5104
        %v5137 = vtanh.pop %v5105
        %v5138 = vtanh.pop %v5106
        %v5139 = vtanh.pop %v5107
        %v5140 = vtanh.pop %v5108
        %v5141 = vtanh.pop %v5109
        %v5142 = vtanh.pop %v5110
        %v5143 = vtanh.pop %v5111
        %v5144 = vtanh.pop %v5112
        %v5145 = vtanh.pop %v5113
        %v5146 = vtanh.pop %v5114
        %v5147 = vtanh.pop %v5115
        %v5148 = vtanh.pop %v5116
        %v5149 = vtanh.pop %v5117
        %v5150 = vtanh.pop %v5118
        %v5151 = vtanh.pop %v5119
        %v5152 = vtanh.pop %v5120
        %v5153 = vtanh.pop %v5121
        %v5154 = vtanh.pop %v5122
        %v5155 = vtanh.pop %v5123
        %v5156 = vtanh.pop %v5124
        %v5157 = vtanh.pop %v5125
        %v5158 = vtanh.pop %v5126
        %v5159 = vtanh.pop %v5127
        %v5160 = vmul.f32 %v5128, %v864
        %v5161 = vmul.f32 %v5129, %v864
        %v5162 = vmul.f32 %v5130, %v864
        %v5163 = vmul.f32 %v5131, %v864
        %v5164 = vmul.f32 %v5132, %v864
        %v5165 = vmul.f32 %v5133, %v864
        %v5166 = vmul.f32 %v5134, %v864
        %v5167 = vmul.f32 %v5135, %v864
        %v5168 = vmul.f32 %v5136, %v864
        %v5169 = vmul.f32 %v5137, %v864
        %v5170 = vmul.f32 %v5138, %v864
        %v5171 = vmul.f32 %v5139, %v864
        %v5172 = vmul.f32 %v5140, %v864
        %v5173 = vmul.f32 %v5141, %v864
        %v5174 = vmul.f32 %v5142, %v864
        %v5175 = vmul.f32 %v5143, %v864
        %v5176 = vmul.f32 %v5144, %v864
        %v5177 = vmul.f32 %v5145, %v864
        %v5178 = vmul.f32 %v5146, %v864
        %v5179 = vmul.f32 %v5147, %v864
        %v5180 = vmul.f32 %v5148, %v864
        %v5181 = vmul.f32 %v5149, %v864
        %v5182 = vmul.f32 %v5150, %v864
        %v5183 = vmul.f32 %v5151, %v864
        %v5184 = vmul.f32 %v5152, %v864
        %v5185 = vmul.f32 %v5153, %v864
        %v5186 = vmul.f32 %v5154, %v864
        %v5187 = vmul.f32 %v5155, %v864
        %v5188 = vmul.f32 %v5156, %v864
        %v5189 = vmul.f32 %v5157, %v864
        %v5190 = vmul.f32 %v5158, %v864
        %v5191 = vmul.f32 %v5159, %v864
        %5192 = vadd.xlane.f32.xlu0 %v5160
        %v5193 = vpop.xlane.xlu0 %5192
        %5194 = vadd.xlane.f32.xlu0 %v5161
        %v5195 = vpop.xlane.xlu0 %5194
        %5196 = vadd.xlane.f32.xlu0 %v5162
        %v5197 = vpop.xlane.xlu0 %5196
        %5198 = vadd.xlane.f32.xlu0 %v5163
        %v5199 = vpop.xlane.xlu0 %5198
        %5200 = vadd.xlane.f32.xlu0 %v5164
        %v5201 = vpop.xlane.xlu0 %5200
        %5202 = vadd.xlane.f32.xlu0 %v5165
        %v5203 = vpop.xlane.xlu0 %5202
        %5204 = vadd.xlane.f32.xlu0 %v5166
        %v5205 = vpop.xlane.xlu0 %5204
        %5206 = vadd.xlane.f32.xlu0 %v5167
        %v5207 = vpop.xlane.xlu0 %5206
        %5208 = vadd.xlane.f32.xlu0 %v5168
        %v5209 = vpop.xlane.xlu0 %5208
        %5210 = vadd.xlane.f32.xlu0 %v5169
        %v5211 = vpop.xlane.xlu0 %5210
        %5212 = vadd.xlane.f32.xlu0 %v5170
        %v5213 = vpop.xlane.xlu0 %5212
        %5214 = vadd.xlane.f32.xlu0 %v5171
        %v5215 = vpop.xlane.xlu0 %5214
        %5216 = vadd.xlane.f32.xlu0 %v5172
        %v5217 = vpop.xlane.xlu0 %5216
        %5218 = vadd.xlane.f32.xlu0 %v5173
        %v5219 = vpop.xlane.xlu0 %5218
        %5220 = vadd.xlane.f32.xlu0 %v5174
        %v5221 = vpop.xlane.xlu0 %5220
        %5222 = vadd.xlane.f32.xlu0 %v5175
        %v5223 = vpop.xlane.xlu0 %5222
        %5224 = vadd.xlane.f32.xlu0 %v5176
        %v5225 = vpop.xlane.xlu0 %5224
        %5226 = vadd.xlane.f32.xlu0 %v5177
        %v5227 = vpop.xlane.xlu0 %5226
        %5228 = vadd.xlane.f32.xlu0 %v5178
        %v5229 = vpop.xlane.xlu0 %5228
        %5230 = vadd.xlane.f32.xlu0 %v5179
        %v5231 = vpop.xlane.xlu0 %5230
        %5232 = vadd.xlane.f32.xlu0 %v5180
        %v5233 = vpop.xlane.xlu0 %5232
        %5234 = vadd.xlane.f32.xlu0 %v5181
        %v5235 = vpop.xlane.xlu0 %5234
        %5236 = vadd.xlane.f32.xlu0 %v5182
        %v5237 = vpop.xlane.xlu0 %5236
        %5238 = vadd.xlane.f32.xlu0 %v5183
        %v5239 = vpop.xlane.xlu0 %5238
        %5240 = vadd.xlane.f32.xlu0 %v5184
        %v5241 = vpop.xlane.xlu0 %5240
        %5242 = vadd.xlane.f32.xlu0 %v5185
        %v5243 = vpop.xlane.xlu0 %5242
        %5244 = vadd.xlane.f32.xlu0 %v5186
        %v5245 = vpop.xlane.xlu0 %5244
        %5246 = vadd.xlane.f32.xlu0 %v5187
        %v5247 = vpop.xlane.xlu0 %5246
        %5248 = vadd.xlane.f32.xlu0 %v5188
        %v5249 = vpop.xlane.xlu0 %5248
        %5250 = vadd.xlane.f32.xlu0 %v5189
        %v5251 = vpop.xlane.xlu0 %5250
        %5252 = vadd.xlane.f32.xlu0 %v5190
        %v5253 = vpop.xlane.xlu0 %5252
        %5254 = vadd.xlane.f32.xlu0 %v5191
        %v5255 = vpop.xlane.xlu0 %5254
        %v5288 = vperm.slane %v5193, %v995
        %v5289 = vperm.slane %v5195, %v997
        %v5290 = vsel %vm999, %v5289, %v5288
        %v5291 = vperm.slane %v5197, %v1001
        %v5292 = vsel %vm1003, %v5291, %v5290
        %v5293 = vperm.slane %v5199, %v1005
        %v5294 = vsel %vm1007, %v5293, %v5292
        %v5295 = vperm.slane %v5201, %v1009
        %v5296 = vsel %vm1011, %v5295, %v5294
        %v5297 = vperm.slane %v5203, %v1013
        %v5298 = vsel %vm1015, %v5297, %v5296
        %v5299 = vperm.slane %v5205, %v1017
        %v5300 = vsel %vm1019, %v5299, %v5298
        %v5301 = vperm.slane %v5207, %v1021
        %v5302 = vsel %vm1023, %v5301, %v5300
        %v5303 = vperm.slane %v5209, %v1025
        %v5304 = vsel %vm1027, %v5303, %v5302
        %v5305 = vperm.slane %v5211, %v1029
        %v5306 = vsel %vm1031, %v5305, %v5304
        %v5307 = vperm.slane %v5213, %v1033
        %v5308 = vsel %vm1035, %v5307, %v5306
        %v5309 = vperm.slane %v5215, %v1037
        %v5310 = vsel %vm1039, %v5309, %v5308
        %v5311 = vperm.slane %v5217, %v1041
        %v5312 = vsel %vm1043, %v5311, %v5310
        %v5313 = vperm.slane %v5219, %v1045
        %v5314 = vsel %vm1047, %v5313, %v5312
        %v5315 = vperm.slane %v5221, %v1049
        %v5316 = vsel %vm1051, %v5315, %v5314
        %v5317 = vperm.slane %v5223, %v1053
        %v5318 = vsel %vm1055, %v5317, %v5316
        %v5319 = vperm.slane %v5225, %v995
        %v5320 = vperm.slane %v5227, %v997
        %v5321 = vsel %vm999, %v5320, %v5319
        %v5322 = vperm.slane %v5229, %v1001
        %v5323 = vsel %vm1003, %v5322, %v5321
        %v5324 = vperm.slane %v5231, %v1005
        %v5325 = vsel %vm1007, %v5324, %v5323
        %v5326 = vperm.slane %v5233, %v1009
        %v5327 = vsel %vm1011, %v5326, %v5325
        %v5328 = vperm.slane %v5235, %v1013
        %v5329 = vsel %vm1015, %v5328, %v5327
        %v5330 = vperm.slane %v5237, %v1017
        %v5331 = vsel %vm1019, %v5330, %v5329
        %v5332 = vperm.slane %v5239, %v1021
        %v5333 = vsel %vm1023, %v5332, %v5331
        %v5334 = vperm.slane %v5241, %v1025
        %v5335 = vsel %vm1027, %v5334, %v5333
        %v5336 = vperm.slane %v5243, %v1029
        %v5337 = vsel %vm1031, %v5336, %v5335
        %v5338 = vperm.slane %v5245, %v1033
        %v5339 = vsel %vm1035, %v5338, %v5337
        %v5340 = vperm.slane %v5247, %v1037
        %v5341 = vsel %vm1039, %v5340, %v5339
        %v5342 = vperm.slane %v5249, %v1041
        %v5343 = vsel %vm1043, %v5342, %v5341
        %v5344 = vperm.slane %v5251, %v1045
        %v5345 = vsel %vm1047, %v5344, %v5343
        %v5346 = vperm.slane %v5253, %v1049
        %v5347 = vsel %vm1051, %v5346, %v5345
        %v5348 = vperm.slane %v5255, %v1053
        %v5349 = vsel %vm1055, %v5348, %v5347
        %v5350 = vsel %vm1088, %v5349, %v5318
        %v5352 = vsel %vm603, %v5350, -1e+30
        %v5353 = vsel %vm1092, %v5352, -inf
        %5354 = vmax.xlane.f32.xlu0 %v5353
        %v5355 = vpop.xlane.xlu0 %5354
        %v5356 = vsub.f32 %v5352, %v5355
        %v5357 = vmul.f32 %v5356, 1.442695
        %v5358 = vpow.pop %v5357
        %v5359 = vmul.f32 %v5358, %v602
        %v5360 = vsel %vm1092, %v5359, 0.0
        %5361 = vadd.xlane.f32.xlu0 %v5360
        %v5362 = vpop.xlane.xlu0 %5361
        %v5363 = vadd.f32 %v5362, 1e-13
        %v5364 = vrcp.pop %v5363
        %v5365 = vmul.f32 %v5363, %v5364
        %v5366 = vsub.f32 1.0, %v5365
        %v5367 = vmul.f32 %v5364, %v5366
        %v5368 = vadd.f32 %v5364, %v5367
        %vm5369 = vweird.f32 %v5363
        %vm5370 = vweird.f32 %v5364
        %vm5371 = vmor %vm5369, %vm5370
        %v5372 = vsel %vm5371, %v5364, %v5368
        %v5373 = vand.u32 2147483647, %v5363
        %vm5374 = vcmp.eq.f32.partialorder %v5373, 8.507059e+37
        %v5375 = vand.u32 %v5363, 2147483648
        %v5376 = vor.u32 1.1754944e-38, %v5375
        %v5377 = vsel %vm5374, %v5376, %v5372
        %v5378 = vmul.f32 %v5359, %v5377
        %v5380 = vrot.slane %v5378, 1
        %v5382 = vld [vmem:[%s582] sm:$0xff]
        %v5383 = vld [vmem:[%s582 + $0x8] sm:$0xff]
        %v5384 = vld [vmem:[%s582 + $0x10] sm:$0xff]
        %v5385 = vld [vmem:[%s582 + $0x18] sm:$0xff]
        %v5386 = vld [vmem:[%s582 + $0x20] sm:$0xff]
        %v5387 = vld [vmem:[%s582 + $0x28] sm:$0xff]
        %v5388 = vld [vmem:[%s582 + $0x30] sm:$0xff]
        %v5389 = vld [vmem:[%s582 + $0x38] sm:$0xff]
        %v5390 = vld [vmem:[%s582 + $0x40] sm:$0xff]
        %v5391 = vld [vmem:[%s582 + $0x48] sm:$0xff]
        %v5392 = vld [vmem:[%s582 + $0x50] sm:$0xff]
        %v5393 = vld [vmem:[%s582 + $0x58] sm:$0xff]
        %v5394 = vld [vmem:[%s582 + $0x60] sm:$0xff]
        %v5395 = vld [vmem:[%s582 + $0x68] sm:$0xff]
        %v5396 = vld [vmem:[%s582 + $0x70] sm:$0xff]
        %v5397 = vld [vmem:[%s582 + $0x78] sm:$0xff]
        %v5398 = vld [vmem:[%s582 + $0x80] sm:$0xff]
        %v5399 = vld [vmem:[%s582 + $0x88] sm:$0xff]
        %v5400 = vld [vmem:[%s582 + $0x90] sm:$0xff]
        %v5401 = vld [vmem:[%s582 + $0x98] sm:$0xff]
        %v5402 = vld [vmem:[%s582 + $0xa0] sm:$0xff]
        %v5403 = vld [vmem:[%s582 + $0xa8] sm:$0xff]
        %v5404 = vld [vmem:[%s582 + $0xb0] sm:$0xff]
        %v5405 = vld [vmem:[%s582 + $0xb8] sm:$0xff]
        %v5406 = vld [vmem:[%s582 + $0xc0] sm:$0xff]
        %v5407 = vld [vmem:[%s582 + $0xc8] sm:$0xff]
        %v5408 = vld [vmem:[%s582 + $0xd0] sm:$0xff]
        %v5409 = vld [vmem:[%s582 + $0xd8] sm:$0xff]
        %v5410 = vld [vmem:[%s582 + $0xe0] sm:$0xff]
        %v5411 = vld [vmem:[%s582 + $0xe8] sm:$0xff]
        %v5412 = vld [vmem:[%s582 + $0xf0] sm:$0xff]
        %v5413 = vld [vmem:[%s582 + $0xf8] sm:$0xff]
        %5414 = vmatpush.msra.mxu0 %v5397
        %5415 = vmatpush.msra.mxu0 %v5396
        %5416 = vmatpush.msra.mxu0 %v5395
        %5417 = vmatpush.msra.mxu0 %v5394
        %5418 = vmatpush.msra.mxu0 %v5393
        %5419 = vmatpush.msra.mxu0 %v5392
        %5420 = vmatpush.msra.mxu0 %v5391
        %5421 = vmatpush.msra.mxu0 %v5390
        %5422 = vmatpush.msra.mxu0 %v5389
        %5423 = vmatpush.msra.mxu0 %v5388
        %5424 = vmatpush.msra.mxu0 %v5387
        %5425 = vmatpush.msra.mxu0 %v5386
        %5426 = vmatpush.msra.mxu0 %v5385
        %5427 = vmatpush.msra.mxu0 %v5384
        %5428 = vmatpush.msra.mxu0 %v5383
        %5429 = vmatpush.msra.mxu0 %v5382
        %5430 = vmatmul.f32.gmra.mxu0 %v5378
        %v5431 = vpop.f32.mrf.mxu0
        %v5432 = vadd.f32 0.0, %v5431
        %5433 = vdwg.mxu0
        %5434 = vmatpush.msra.mxu0 %v5413
        %5435 = vmatpush.msra.mxu0 %v5412
        %5436 = vmatpush.msra.mxu0 %v5411
        %5437 = vmatpush.msra.mxu0 %v5410
        %5438 = vmatpush.msra.mxu0 %v5409
        %5439 = vmatpush.msra.mxu0 %v5408
        %5440 = vmatpush.msra.mxu0 %v5407
        %5441 = vmatpush.msra.mxu0 %v5406
        %5442 = vmatpush.msra.mxu0 %v5405
        %5443 = vmatpush.msra.mxu0 %v5404
        %5444 = vmatpush.msra.mxu0 %v5403
        %5445 = vmatpush.msra.mxu0 %v5402
        %5446 = vmatpush.msra.mxu0 %v5401
        %5447 = vmatpush.msra.mxu0 %v5400
        %5448 = vmatpush.msra.mxu0 %v5399
        %5449 = vmatpush.msra.mxu0 %v5398
        %5450 = vmatmul.f32.gmra.mxu0 %v5380
        %v5451 = vpop.f32.mrf.mxu0
        %v5452 = vadd.f32 0.0, %v5451
        %5453 = vdwg.mxu0
        %v5454 = vld [vmem:[%s7] sm:$0xff]
        %v5455 = vld [vmem:[%s7 + $0x8] sm:$0xff]
        %v5458 = vrot.slane %v5452, 7
        %v5459 = vsel %vm1088, %v5458, %v5432
        %v5460 = vsel %vm1200, %v5459, 0
        %5462 = vmatpush.msra.mxu0 0.0
        %5463 = vmatpush.msra.mxu0 0.0
        %5464 = vmatpush.msra.mxu0 0.0
        %5465 = vmatpush.msra.mxu0 0.0
        %5466 = vmatpush.msra.mxu0 0.0
        %5467 = vmatpush.msra.mxu0 0.0
        %5468 = vmatpush.msra.mxu0 0.0
        %5469 = vmatpush.msra.mxu0 0.0
        %5470 = vmatpush.msra.mxu0 0.0
        %5471 = vmatpush.msra.mxu0 0.0
        %5472 = vmatpush.msra.mxu0 0.0
        %5473 = vmatpush.msra.mxu0 0.0
        %5474 = vmatpush.msra.mxu0 0.0
        %5475 = vmatpush.msra.mxu0 0.0
        %5476 = vmatpush.msra.mxu0 %v5455
        %5477 = vmatpush.msra.mxu0 %v5454
        %5478 = vmatmul.f32.gmra.mxu0 %v5460
        %v5479 = vpop.f32.mrf.mxu0
        %v5480 = vadd.f32 0.0, %v5479
        %5481 = vdwg.mxu0
        %v5484 = vrot.slane %v4906, 1
        %v5485 = vrot.slane %v4908, 1
        %v5489 = vrot.slane %v5480, 1
        %v5491 = vadd.f32 %v5484, %v5480
        %v5492 = vadd.f32 %v5485, %v5489
        %v5493 = vxor.u32 %v5491, 2147483648
        %v5494 = vxor.u32 %v5492, 2147483648
        %v5495 = vmul.f32 %v5493, 1.442695
        %v5496 = vpow.pop %v5495
        %v5497 = vmul.f32 %v5494, 1.442695
        %v5498 = vpow.pop %v5497
        %v5499 = vadd.f32 %v5496, 1.0
        %v5500 = vadd.f32 %v5498, 1.0
        %v5501 = vrcp.pop %v5499
        %v5502 = vmul.f32 %v5499, %v5501
        %v5503 = vsub.f32 1.0, %v5502
        %v5504 = vmul.f32 %v5501, %v5503
        %v5505 = vadd.f32 %v5501, %v5504
        %vm5506 = vweird.f32 %v5499
        %vm5507 = vweird.f32 %v5501
        %vm5508 = vmor %vm5506, %vm5507
        %v5509 = vsel %vm5508, %v5501, %v5505
        %v5510 = vand.u32 2147483647, %v5499
        %vm5511 = vcmp.eq.f32.partialorder %v5510, 8.507059e+37
        %v5512 = vand.u32 %v5499, 2147483648
        %v5513 = vor.u32 1.1754944e-38, %v5512
        %v5514 = vsel %vm5511, %v5513, %v5509
        %v5515 = vmul.f32 1.0, %v5514
        %v5516 = vrcp.pop %v5500
        %v5517 = vmul.f32 %v5500, %v5516
        %v5518 = vsub.f32 1.0, %v5517
        %v5519 = vmul.f32 %v5516, %v5518
        %v5520 = vadd.f32 %v5516, %v5519
        %vm5521 = vweird.f32 %v5500
        %vm5522 = vweird.f32 %v5516
        %vm5523 = vmor %vm5521, %vm5522
        %v5524 = vsel %vm5523, %v5516, %v5520
        %v5525 = vand.u32 2147483647, %v5500
        %vm5526 = vcmp.eq.f32.partialorder %v5525, 8.507059e+37
        %v5527 = vand.u32 %v5500, 2147483648
        %v5528 = vor.u32 1.1754944e-38, %v5527
        %v5529 = vsel %vm5526, %v5528, %v5524
        %v5530 = vmul.f32 1.0, %v5529
        %v5531 = vmul.f32 %v5515, %v4903
        %v5532 = vmul.f32 %v5530, %v4904
        %5533 = vrot.lane.b32.xlu0 %v5432, 16
        %v5534 = vpop.permute.xlu0 %5533
        %5535 = vrot.lane.b32.xlu0 %v5452, 16
        %v5536 = vpop.permute.xlu0 %5535
        %v5539 = vmul.f32 %v5515, %v5534
        %v5540 = vmul.f32 %v5530, %v5536
        %v5541 = vld [vmem:[%s8] sm:$0xff]
        %v5542 = vld [vmem:[%s8 + $0x8] sm:$0xff]
        %v5543 = vld [vmem:[%s8 + $0x10] sm:$0xff]
        %v5544 = vld [vmem:[%s8 + $0x18] sm:$0xff]
        %v5545 = vld [vmem:[%s8 + $0x20] sm:$0xff]
        %v5546 = vld [vmem:[%s8 + $0x28] sm:$0xff]
        %v5547 = vld [vmem:[%s9] sm:$0xff]
        %v5548 = vld [vmem:[%s9 + $0x8] sm:$0xff]
        %v5549 = vld [vmem:[%s9 + $0x10] sm:$0xff]
        %v5550 = vld [vmem:[%s9 + $0x18] sm:$0xff]
        %v5551 = vld [vmem:[%s9 + $0x20] sm:$0xff]
        %v5552 = vld [vmem:[%s9 + $0x28] sm:$0xff]
        %5555 = vst [vmem:[#allocation1] ss:$9 sm:$0xff] %v5539
        %s5556 = scalar_lea.vmem [#allocation1], 1
        %5557 = vst [vmem:[%s5556] ss:$9 sm:$0xff] %v5540
        %v5558 = vld [vmem:[#allocation1] sm:$0xff]
        %5559 = vrot.lane.b32.xlu0 %v5558, 112
        %v5560 = vpop.permute.xlu0 %5559
        %v5561 = vsel %vm1200, %v5560, 0
        %5563 = vmatpush.msra.mxu0 0.0
        %5564 = vmatpush.msra.mxu0 0.0
        %5565 = vmatpush.msra.mxu0 0.0
        %5566 = vmatpush.msra.mxu0 0.0
        %5567 = vmatpush.msra.mxu0 0.0
        %5568 = vmatpush.msra.mxu0 0.0
        %5569 = vmatpush.msra.mxu0 0.0
        %5570 = vmatpush.msra.mxu0 0.0
        %5571 = vmatpush.msra.mxu0 0.0
        %5572 = vmatpush.msra.mxu0 0.0
        %5573 = vmatpush.msra.mxu0 0.0
        %5574 = vmatpush.msra.mxu0 0.0
        %5575 = vmatpush.msra.mxu0 0.0
        %5576 = vmatpush.msra.mxu0 0.0
        %5577 = vmatpush.msra.mxu0 %v5550
        %5578 = vmatpush.msra.mxu0 %v5547
        %5579 = vmatmul.f32.gmra.mxu0 %v5561
        %v5580 = vpop.f32.mrf.mxu0
        %v5581 = vadd.f32 0.0, %v5580
        %5582 = vdwg.mxu0
        %5583 = vmatpush.msra.mxu0 0.0
        %5584 = vmatpush.msra.mxu0 0.0
        %5585 = vmatpush.msra.mxu0 0.0
        %5586 = vmatpush.msra.mxu0 0.0
        %5587 = vmatpush.msra.mxu0 0.0
        %5588 = vmatpush.msra.mxu0 0.0
        %5589 = vmatpush.msra.mxu0 0.0
        %5590 = vmatpush.msra.mxu0 0.0
        %5591 = vmatpush.msra.mxu0 0.0
        %5592 = vmatpush.msra.mxu0 0.0
        %5593 = vmatpush.msra.mxu0 0.0
        %5594 = vmatpush.msra.mxu0 0.0
        %5595 = vmatpush.msra.mxu0 0.0
        %5596 = vmatpush.msra.mxu0 0.0
        %5597 = vmatpush.msra.mxu0 %v5551
        %5598 = vmatpush.msra.mxu0 %v5548
        %5599 = vmatmul.f32.gmra.mxu0 %v5561
        %v5600 = vpop.f32.mrf.mxu0
        %v5601 = vadd.f32 0.0, %v5600
        %5602 = vdwg.mxu0
        %5603 = vmatpush.msra.mxu0 0.0
        %5604 = vmatpush.msra.mxu0 0.0
        %5605 = vmatpush.msra.mxu0 0.0
        %5606 = vmatpush.msra.mxu0 0.0
        %5607 = vmatpush.msra.mxu0 0.0
        %5608 = vmatpush.msra.mxu0 0.0
        %5609 = vmatpush.msra.mxu0 0.0
        %5610 = vmatpush.msra.mxu0 0.0
        %5611 = vmatpush.msra.mxu0 0.0
        %5612 = vmatpush.msra.mxu0 0.0
        %5613 = vmatpush.msra.mxu0 0.0
        %5614 = vmatpush.msra.mxu0 0.0
        %5615 = vmatpush.msra.mxu0 0.0
        %5616 = vmatpush.msra.mxu0 0.0
        %5617 = vmatpush.msra.mxu0 %v5552
        %5618 = vmatpush.msra.mxu0 %v5549
        %5619 = vmatmul.f32.gmra.mxu0 %v5561
        %v5620 = vpop.f32.mrf.mxu0
        %v5621 = vadd.f32 0.0, %v5620
        %5622 = vdwg.mxu0
        %5625 = vst [vmem:[#allocation1] ss:$9 sm:$0xff] %v5531
        %s5626 = scalar_lea.vmem [#allocation1], 1
        %5627 = vst [vmem:[%s5626] ss:$9 sm:$0xff] %v5532
        %v5628 = vld [vmem:[#allocation1] sm:$0xff]
        %v5629 = vsel %vm1200, %v5628, 0
        %5631 = vmatpush.msra.mxu0 0.0
        %5632 = vmatpush.msra.mxu0 0.0
        %5633 = vmatpush.msra.mxu0 0.0
        %5634 = vmatpush.msra.mxu0 0.0
        %5635 = vmatpush.msra.mxu0 0.0
        %5636 = vmatpush.msra.mxu0 0.0
        %5637 = vmatpush.msra.mxu0 0.0
        %5638 = vmatpush.msra.mxu0 0.0
        %5639 = vmatpush.msra.mxu0 0.0
        %5640 = vmatpush.msra.mxu0 0.0
        %5641 = vmatpush.msra.mxu0 0.0
        %5642 = vmatpush.msra.mxu0 0.0
        %5643 = vmatpush.msra.mxu0 0.0
        %5644 = vmatpush.msra.mxu0 0.0
        %5645 = vmatpush.msra.mxu0 %v5544
        %5646 = vmatpush.msra.mxu0 %v5541
        %5647 = vmatmul.f32.gmra.mxu0 %v5629
        %v5648 = vpop.f32.mrf.mxu0
        %v5649 = vadd.f32 %v5581, %v5648
        %5650 = vdwg.mxu0
        %5651 = vmatpush.msra.mxu0 0.0
        %5652 = vmatpush.msra.mxu0 0.0
        %5653 = vmatpush.msra.mxu0 0.0
        %5654 = vmatpush.msra.mxu0 0.0
        %5655 = vmatpush.msra.mxu0 0.0
        %5656 = vmatpush.msra.mxu0 0.0
        %5657 = vmatpush.msra.mxu0 0.0
        %5658 = vmatpush.msra.mxu0 0.0
        %5659 = vmatpush.msra.mxu0 0.0
        %5660 = vmatpush.msra.mxu0 0.0
        %5661 = vmatpush.msra.mxu0 0.0
        %5662 = vmatpush.msra.mxu0 0.0
        %5663 = vmatpush.msra.mxu0 0.0
        %5664 = vmatpush.msra.mxu0 0.0
        %5665 = vmatpush.msra.mxu0 %v5545
        %5666 = vmatpush.msra.mxu0 %v5542
        %5667 = vmatmul.f32.gmra.mxu0 %v5629
        %v5668 = vpop.f32.mrf.mxu0
        %v5669 = vadd.f32 %v5601, %v5668
        %5670 = vdwg.mxu0
        %5671 = vmatpush.msra.mxu0 0.0
        %5672 = vmatpush.msra.mxu0 0.0
        %5673 = vmatpush.msra.mxu0 0.0
        %5674 = vmatpush.msra.mxu0 0.0
        %5675 = vmatpush.msra.mxu0 0.0
        %5676 = vmatpush.msra.mxu0 0.0
        %5677 = vmatpush.msra.mxu0 0.0
        %5678 = vmatpush.msra.mxu0 0.0
        %5679 = vmatpush.msra.mxu0 0.0
        %5680 = vmatpush.msra.mxu0 0.0
        %5681 = vmatpush.msra.mxu0 0.0
        %5682 = vmatpush.msra.mxu0 0.0
        %5683 = vmatpush.msra.mxu0 0.0
        %5684 = vmatpush.msra.mxu0 0.0
        %5685 = vmatpush.msra.mxu0 %v5546
        %5686 = vmatpush.msra.mxu0 %v5543
        %5687 = vmatmul.f32.gmra.mxu0 %v5629
        %v5688 = vpop.f32.mrf.mxu0
        %v5689 = vadd.f32 %v5621, %v5688
        %5690 = vdwg.mxu0
        %v5691 = vadd.f32 %v5649, %v1439
        %v5692 = vadd.f32 %v5669, %v1440
        %v5693 = vadd.f32 %v5689, %v1441
        %v5694 = vadd.f32 %v5011, %v1451
        %v5695 = vadd.f32 %v5031, %v1452
        %v5696 = vadd.f32 %v5051, %v1453
        %v5697 = vadd.f32 %v5691, %v5694
        %v5698 = vxor.u32 %v5697, 2147483648
        %v5699 = vmul.f32 %v5698, 1.442695
        %v5700 = vpow.pop %v5699
        %v5701 = vadd.f32 %v5700, 1.0
        %v5702 = vrcp.pop %v5701
        %v5703 = vmul.f32 %v5701, %v5702
        %v5704 = vsub.f32 1.0, %v5703
        %v5705 = vmul.f32 %v5702, %v5704
        %v5706 = vadd.f32 %v5702, %v5705
        %vm5707 = vweird.f32 %v5701
        %vm5708 = vweird.f32 %v5702
        %vm5709 = vmor %vm5707, %vm5708
        %v5710 = vsel %vm5709, %v5702, %v5706
        %v5711 = vand.u32 2147483647, %v5701
        %vm5712 = vcmp.eq.f32.partialorder %v5711, 8.507059e+37
        %v5713 = vand.u32 %v5701, 2147483648
        %v5714 = vor.u32 1.1754944e-38, %v5713
        %v5715 = vsel %vm5712, %v5714, %v5710
        %v5716 = vmul.f32 1.0, %v5715
        %v5717 = vadd.f32 %v5692, %v5695
        %v5718 = vxor.u32 %v5717, 2147483648
        %v5719 = vmul.f32 %v5718, 1.442695
        %v5720 = vpow.pop %v5719
        %v5721 = vadd.f32 %v5720, 1.0
        %v5722 = vrcp.pop %v5721
        %v5723 = vmul.f32 %v5721, %v5722
        %v5724 = vsub.f32 1.0, %v5723
        %v5725 = vmul.f32 %v5722, %v5724
        %v5726 = vadd.f32 %v5722, %v5725
        %vm5727 = vweird.f32 %v5721
        %vm5728 = vweird.f32 %v5722
        %vm5729 = vmor %vm5727, %vm5728
        %v5730 = vsel %vm5729, %v5722, %v5726
        %v5731 = vand.u32 2147483647, %v5721
        %vm5732 = vcmp.eq.f32.partialorder %v5731, 8.507059e+37
        %v5733 = vand.u32 %v5721, 2147483648
        %v5734 = vor.u32 1.1754944e-38, %v5733
        %v5735 = vsel %vm5732, %v5734, %v5730
        %v5736 = vmul.f32 1.0, %v5735
        %v5737 = vmul.f32 %v5716, %v5696
        %v5738 = vadd.f32 %v5693, %v5737
        %v5739 = vtanh.pop %v5738
        %v5740 = vsub.f32 1.0, %v5736
        %v5741 = vmul.f32 %v5740, %v5739
        %v5742 = vmul.f32 %v5736, %v4895
        %v5743 = vadd.f32 %v5741, %v5742
        %v5745 = vrot.slane %v5743, 1
        %5747 = vst [vmem:[%s568 + $0x5] sm:$0x1] %v5743
        %5748 = vst [vmem:[%s568 + $0xd] sm:$0x1] %v5745
        %5749 = vst [vmem:[%s574 + $0x5] sm:$0x1] %v5378
        %5750 = vst [vmem:[%s574 + $0xd] sm:$0x1] %v5380
        %v5751 = vld [vmem:[%s506 + $0x6] sm:$0x1]
        %v5752 = vld [vmem:[%s506 + $0xe] sm:$0x1]
        %s5753 = scalar_lea.vmem %s513, 6 [#allocation4]
        %v5754 = vld [vmem:[%s5753] ss:$8 sm:$0x3]
        %s5755 = scalar_lea.vmem %s513, 22 [#allocation4]
        %v5756 = vld [vmem:[%s5755] ss:$8 sm:$0x3]
        %v5757 = vld [vmem:[%s6] sm:$0xff]
        %v5758 = vld [vmem:[%s6 + $0x8] sm:$0xff]
        %v5759 = vld [vmem:[%s6 + $0x10] sm:$0xff]
        %v5760 = vld [vmem:[%s6 + $0x18] sm:$0xff]
        %v5761 = vld [vmem:[%s6 + $0x20] sm:$0xff]
        %v5762 = vld [vmem:[%s6 + $0x28] sm:$0xff]
        %v5763 = vld [vmem:[%s6 + $0x30] sm:$0xff]
        %v5764 = vld [vmem:[%s6 + $0x38] sm:$0xff]
        %v5765 = vld [vmem:[%s6 + $0x40] sm:$0xff]
        %v5766 = vld [vmem:[%s6 + $0x48] sm:$0xff]
        %v5767 = vld [vmem:[%s6 + $0x50] sm:$0xff]
        %v5768 = vld [vmem:[%s6 + $0x58] sm:$0xff]
        %v5769 = vld [vmem:[%s6 + $0x60] sm:$0xff]
        %v5770 = vld [vmem:[%s6 + $0x68] sm:$0xff]
        %v5771 = vld [vmem:[%s6 + $0x70] sm:$0xff]
        %v5772 = vld [vmem:[%s6 + $0x78] sm:$0xff]
        %v5773 = vld [vmem:[%s6 + $0x80] sm:$0xff]
        %v5774 = vld [vmem:[%s6 + $0x88] sm:$0xff]
        %v5775 = vld [vmem:[%s6 + $0x90] sm:$0xff]
        %v5776 = vld [vmem:[%s6 + $0x98] sm:$0xff]
        %v5777 = vld [vmem:[%s6 + $0xa0] sm:$0xff]
        %v5778 = vld [vmem:[%s6 + $0xa8] sm:$0xff]
        %v5779 = vld [vmem:[%s6 + $0xb0] sm:$0xff]
        %v5780 = vld [vmem:[%s6 + $0xb8] sm:$0xff]
        %v5781 = vld [vmem:[%s6 + $0xc0] sm:$0xff]
        %v5782 = vld [vmem:[%s6 + $0xc8] sm:$0xff]
        %v5783 = vld [vmem:[%s6 + $0xd0] sm:$0xff]
        %v5784 = vld [vmem:[%s6 + $0xd8] sm:$0xff]
        %v5785 = vld [vmem:[%s6 + $0xe0] sm:$0xff]
        %v5786 = vld [vmem:[%s6 + $0xe8] sm:$0xff]
        %v5787 = vld [vmem:[%s6 + $0xf0] sm:$0xff]
        %v5788 = vld [vmem:[%s6 + $0xf8] sm:$0xff]
        %v5789 = vld [vmem:[%s6 + $0x100] sm:$0xff]
        %v5790 = vld [vmem:[%s6 + $0x108] sm:$0xff]
        %v5791 = vld [vmem:[%s6 + $0x110] sm:$0xff]
        %v5792 = vld [vmem:[%s6 + $0x118] sm:$0xff]
        %v5793 = vld [vmem:[%s6 + $0x120] sm:$0xff]
        %v5794 = vld [vmem:[%s6 + $0x128] sm:$0xff]
        %v5795 = vld [vmem:[%s6 + $0x130] sm:$0xff]
        %v5796 = vld [vmem:[%s6 + $0x138] sm:$0xff]
        %v5797 = vld [vmem:[%s6 + $0x140] sm:$0xff]
        %v5798 = vld [vmem:[%s6 + $0x148] sm:$0xff]
        %v5799 = vld [vmem:[%s6 + $0x150] sm:$0xff]
        %v5800 = vld [vmem:[%s6 + $0x158] sm:$0xff]
        %v5801 = vld [vmem:[%s6 + $0x160] sm:$0xff]
        %v5802 = vld [vmem:[%s6 + $0x168] sm:$0xff]
        %v5803 = vld [vmem:[%s6 + $0x170] sm:$0xff]
        %v5804 = vld [vmem:[%s6 + $0x178] sm:$0xff]
        %v5805 = vld [vmem:[%s6 + $0x180] sm:$0xff]
        %v5806 = vld [vmem:[%s6 + $0x188] sm:$0xff]
        %v5807 = vld [vmem:[%s6 + $0x190] sm:$0xff]
        %v5808 = vld [vmem:[%s6 + $0x198] sm:$0xff]
        %v5809 = vld [vmem:[%s6 + $0x1a0] sm:$0xff]
        %v5810 = vld [vmem:[%s6 + $0x1a8] sm:$0xff]
        %v5811 = vld [vmem:[%s6 + $0x1b0] sm:$0xff]
        %v5812 = vld [vmem:[%s6 + $0x1b8] sm:$0xff]
        %v5813 = vld [vmem:[%s6 + $0x1c0] sm:$0xff]
        %v5814 = vld [vmem:[%s6 + $0x1c8] sm:$0xff]
        %v5815 = vld [vmem:[%s6 + $0x1d0] sm:$0xff]
        %v5816 = vld [vmem:[%s6 + $0x1d8] sm:$0xff]
        %v5817 = vld [vmem:[%s6 + $0x1e0] sm:$0xff]
        %v5818 = vld [vmem:[%s6 + $0x1e8] sm:$0xff]
        %v5819 = vld [vmem:[%s6 + $0x1f0] sm:$0xff]
        %v5820 = vld [vmem:[%s6 + $0x1f8] sm:$0xff]
        %5821 = vmatpush.msra.mxu0 %v5817
        %5822 = vmatpush.msra.mxu0 %v5813
        %5823 = vmatpush.msra.mxu0 %v5809
        %5824 = vmatpush.msra.mxu0 %v5805
        %5825 = vmatpush.msra.mxu0 %v5801
        %5826 = vmatpush.msra.mxu0 %v5797
        %5827 = vmatpush.msra.mxu0 %v5793
        %5828 = vmatpush.msra.mxu0 %v5789
        %5829 = vmatpush.msra.mxu0 %v5785
        %5830 = vmatpush.msra.mxu0 %v5781
        %5831 = vmatpush.msra.mxu0 %v5777
        %5832 = vmatpush.msra.mxu0 %v5773
        %5833 = vmatpush.msra.mxu0 %v5769
        %5834 = vmatpush.msra.mxu0 %v5765
        %5835 = vmatpush.msra.mxu0 %v5761
        %5836 = vmatpush.msra.mxu0 %v5757
        %5837 = vmatmul.f32.gmra.mxu0 %v5743
        %v5838 = vpop.f32.mrf.mxu0
        %v5839 = vadd.f32 0.0, %v5838
        %5840 = vdwg.mxu0
        %5841 = vmatpush.msra.mxu0 %v5818
        %5842 = vmatpush.msra.mxu0 %v5814
        %5843 = vmatpush.msra.mxu0 %v5810
        %5844 = vmatpush.msra.mxu0 %v5806
        %5845 = vmatpush.msra.mxu0 %v5802
        %5846 = vmatpush.msra.mxu0 %v5798
        %5847 = vmatpush.msra.mxu0 %v5794
        %5848 = vmatpush.msra.mxu0 %v5790
        %5849 = vmatpush.msra.mxu0 %v5786
        %5850 = vmatpush.msra.mxu0 %v5782
        %5851 = vmatpush.msra.mxu0 %v5778
        %5852 = vmatpush.msra.mxu0 %v5774
        %5853 = vmatpush.msra.mxu0 %v5770
        %5854 = vmatpush.msra.mxu0 %v5766
        %5855 = vmatpush.msra.mxu0 %v5762
        %5856 = vmatpush.msra.mxu0 %v5758
        %5857 = vmatmul.f32.gmra.mxu0 %v5743
        %v5858 = vpop.f32.mrf.mxu0
        %v5859 = vadd.f32 0.0, %v5858
        %5860 = vdwg.mxu0
        %5861 = vmatpush.msra.mxu0 %v5819
        %5862 = vmatpush.msra.mxu0 %v5815
        %5863 = vmatpush.msra.mxu0 %v5811
        %5864 = vmatpush.msra.mxu0 %v5807
        %5865 = vmatpush.msra.mxu0 %v5803
        %5866 = vmatpush.msra.mxu0 %v5799
        %5867 = vmatpush.msra.mxu0 %v5795
        %5868 = vmatpush.msra.mxu0 %v5791
        %5869 = vmatpush.msra.mxu0 %v5787
        %5870 = vmatpush.msra.mxu0 %v5783
        %5871 = vmatpush.msra.mxu0 %v5779
        %5872 = vmatpush.msra.mxu0 %v5775
        %5873 = vmatpush.msra.mxu0 %v5771
        %5874 = vmatpush.msra.mxu0 %v5767
        %5875 = vmatpush.msra.mxu0 %v5763
        %5876 = vmatpush.msra.mxu0 %v5759
        %5877 = vmatmul.f32.gmra.mxu0 %v5743
        %v5878 = vpop.f32.mrf.mxu0
        %v5879 = vadd.f32 0.0, %v5878
        %5880 = vdwg.mxu0
        %5881 = vmatpush.msra.mxu0 %v5820
        %5882 = vmatpush.msra.mxu0 %v5816
        %5883 = vmatpush.msra.mxu0 %v5812
        %5884 = vmatpush.msra.mxu0 %v5808
        %5885 = vmatpush.msra.mxu0 %v5804
        %5886 = vmatpush.msra.mxu0 %v5800
        %5887 = vmatpush.msra.mxu0 %v5796
        %5888 = vmatpush.msra.mxu0 %v5792
        %5889 = vmatpush.msra.mxu0 %v5788
        %5890 = vmatpush.msra.mxu0 %v5784
        %5891 = vmatpush.msra.mxu0 %v5780
        %5892 = vmatpush.msra.mxu0 %v5776
        %5893 = vmatpush.msra.mxu0 %v5772
        %5894 = vmatpush.msra.mxu0 %v5768
        %5895 = vmatpush.msra.mxu0 %v5764
        %5896 = vmatpush.msra.mxu0 %v5760
        %5897 = vmatmul.f32.gmra.mxu0 %v5743
        %v5898 = vpop.f32.mrf.mxu0
        %v5899 = vadd.f32 0.0, %v5898
        %5900 = vdwg.mxu0
        %v5902 = vrot.slane %v5839, 1
        %v5904 = vadd.f32 %v5754, %v5839
        %v5905 = vadd.f32 %v5756, %v5902
        %v5906 = vld [vmem:[%s593] sm:$0xff]
        %v5907 = vld [vmem:[%s593 + $0x8] sm:$0xff]
        %v5908 = vld [vmem:[%s593 + $0x10] sm:$0xff]
        %v5909 = vld [vmem:[%s593 + $0x18] sm:$0xff]
        %v5910 = vld [vmem:[%s593 + $0x20] sm:$0xff]
        %v5911 = vld [vmem:[%s593 + $0x28] sm:$0xff]
        %v5912 = vld [vmem:[%s593 + $0x30] sm:$0xff]
        %v5913 = vld [vmem:[%s593 + $0x38] sm:$0xff]
        %v5914 = vld [vmem:[%s593 + $0x40] sm:$0xff]
        %v5915 = vld [vmem:[%s593 + $0x48] sm:$0xff]
        %v5916 = vld [vmem:[%s593 + $0x50] sm:$0xff]
        %v5917 = vld [vmem:[%s593 + $0x58] sm:$0xff]
        %v5918 = vld [vmem:[%s593 + $0x60] sm:$0xff]
        %v5919 = vld [vmem:[%s593 + $0x68] sm:$0xff]
        %v5920 = vld [vmem:[%s593 + $0x70] sm:$0xff]
        %v5921 = vld [vmem:[%s593 + $0x78] sm:$0xff]
        %v5922 = vld [vmem:[%s593 + $0x80] sm:$0xff]
        %v5923 = vld [vmem:[%s593 + $0x88] sm:$0xff]
        %v5924 = vld [vmem:[%s593 + $0x90] sm:$0xff]
        %v5925 = vld [vmem:[%s593 + $0x98] sm:$0xff]
        %v5926 = vld [vmem:[%s593 + $0xa0] sm:$0xff]
        %v5927 = vld [vmem:[%s593 + $0xa8] sm:$0xff]
        %v5928 = vld [vmem:[%s593 + $0xb0] sm:$0xff]
        %v5929 = vld [vmem:[%s593 + $0xb8] sm:$0xff]
        %v5930 = vld [vmem:[%s593 + $0xc0] sm:$0xff]
        %v5931 = vld [vmem:[%s593 + $0xc8] sm:$0xff]
        %v5932 = vld [vmem:[%s593 + $0xd0] sm:$0xff]
        %v5933 = vld [vmem:[%s593 + $0xd8] sm:$0xff]
        %v5934 = vld [vmem:[%s593 + $0xe0] sm:$0xff]
        %v5935 = vld [vmem:[%s593 + $0xe8] sm:$0xff]
        %v5936 = vld [vmem:[%s593 + $0xf0] sm:$0xff]
        %v5937 = vld [vmem:[%s593 + $0xf8] sm:$0xff]
        %v5940 = vperm.slane %v5904, 0
        %v5941 = vperm.slane %v5905, 0
        %v5944 = vadd.f32 %v5906, %v5940
        %v5945 = vadd.f32 %v5907, %v5940
        %v5946 = vadd.f32 %v5908, %v5940
        %v5947 = vadd.f32 %v5909, %v5940
        %v5948 = vadd.f32 %v5910, %v5940
        %v5949 = vadd.f32 %v5911, %v5940
        %v5950 = vadd.f32 %v5912, %v5940
        %v5951 = vadd.f32 %v5913, %v5940
        %v5952 = vadd.f32 %v5914, %v5940
        %v5953 = vadd.f32 %v5915, %v5940
        %v5954 = vadd.f32 %v5916, %v5940
        %v5955 = vadd.f32 %v5917, %v5940
        %v5956 = vadd.f32 %v5918, %v5940
        %v5957 = vadd.f32 %v5919, %v5940
        %v5958 = vadd.f32 %v5920, %v5940
        %v5959 = vadd.f32 %v5921, %v5940
        %v5960 = vadd.f32 %v5922, %v5941
        %v5961 = vadd.f32 %v5923, %v5941
        %v5962 = vadd.f32 %v5924, %v5941
        %v5963 = vadd.f32 %v5925, %v5941
        %v5964 = vadd.f32 %v5926, %v5941
        %v5965 = vadd.f32 %v5927, %v5941
        %v5966 = vadd.f32 %v5928, %v5941
        %v5967 = vadd.f32 %v5929, %v5941
        %v5968 = vadd.f32 %v5930, %v5941
        %v5969 = vadd.f32 %v5931, %v5941
        %v5970 = vadd.f32 %v5932, %v5941
        %v5971 = vadd.f32 %v5933, %v5941
        %v5972 = vadd.f32 %v5934, %v5941
        %v5973 = vadd.f32 %v5935, %v5941
        %v5974 = vadd.f32 %v5936, %v5941
        %v5975 = vadd.f32 %v5937, %v5941
        %v5976 = vtanh.pop %v5944
        %v5977 = vtanh.pop %v5945
        %v5978 = vtanh.pop %v5946
        %v5979 = vtanh.pop %v5947
        %v5980 = vtanh.pop %v5948
        %v5981 = vtanh.pop %v5949
        %v5982 = vtanh.pop %v5950
        %v5983 = vtanh.pop %v5951
        %v5984 = vtanh.pop %v5952
        %v5985 = vtanh.pop %v5953
        %v5986 = vtanh.pop %v5954
        %v5987 = vtanh.pop %v5955
        %v5988 = vtanh.pop %v5956
        %v5989 = vtanh.pop %v5957
        %v5990 = vtanh.pop %v5958
        %v5991 = vtanh.pop %v5959
        %v5992 = vtanh.pop %v5960
        %v5993 = vtanh.pop %v5961
        %v5994 = vtanh.pop %v5962
        %v5995 = vtanh.pop %v5963
        %v5996 = vtanh.pop %v5964
        %v5997 = vtanh.pop %v5965
        %v5998 = vtanh.pop %v5966
        %v5999 = vtanh.pop %v5967
        %v6000 = vtanh.pop %v5968
        %v6001 = vtanh.pop %v5969
        %v6002 = vtanh.pop %v5970
        %v6003 = vtanh.pop %v5971
        %v6004 = vtanh.pop %v5972
        %v6005 = vtanh.pop %v5973
        %v6006 = vtanh.pop %v5974
        %v6007 = vtanh.pop %v5975
        %v6008 = vmul.f32 %v5976, %v864
        %v6009 = vmul.f32 %v5977, %v864
        %v6010 = vmul.f32 %v5978, %v864
        %v6011 = vmul.f32 %v5979, %v864
        %v6012 = vmul.f32 %v5980, %v864
        %v6013 = vmul.f32 %v5981, %v864
        %v6014 = vmul.f32 %v5982, %v864
        %v6015 = vmul.f32 %v5983, %v864
        %v6016 = vmul.f32 %v5984, %v864
        %v6017 = vmul.f32 %v5985, %v864
        %v6018 = vmul.f32 %v5986, %v864
        %v6019 = vmul.f32 %v5987, %v864
        %v6020 = vmul.f32 %v5988, %v864
        %v6021 = vmul.f32 %v5989, %v864
        %v6022 = vmul.f32 %v5990, %v864
        %v6023 = vmul.f32 %v5991, %v864
        %v6024 = vmul.f32 %v5992, %v864
        %v6025 = vmul.f32 %v5993, %v864
        %v6026 = vmul.f32 %v5994, %v864
        %v6027 = vmul.f32 %v5995, %v864
        %v6028 = vmul.f32 %v5996, %v864
        %v6029 = vmul.f32 %v5997, %v864
        %v6030 = vmul.f32 %v5998, %v864
        %v6031 = vmul.f32 %v5999, %v864
        %v6032 = vmul.f32 %v6000, %v864
        %v6033 = vmul.f32 %v6001, %v864
        %v6034 = vmul.f32 %v6002, %v864
        %v6035 = vmul.f32 %v6003, %v864
        %v6036 = vmul.f32 %v6004, %v864
        %v6037 = vmul.f32 %v6005, %v864
        %v6038 = vmul.f32 %v6006, %v864
        %v6039 = vmul.f32 %v6007, %v864
        %6040 = vadd.xlane.f32.xlu0 %v6008
        %v6041 = vpop.xlane.xlu0 %6040
        %6042 = vadd.xlane.f32.xlu0 %v6009
        %v6043 = vpop.xlane.xlu0 %6042
        %6044 = vadd.xlane.f32.xlu0 %v6010
        %v6045 = vpop.xlane.xlu0 %6044
        %6046 = vadd.xlane.f32.xlu0 %v6011
        %v6047 = vpop.xlane.xlu0 %6046
        %6048 = vadd.xlane.f32.xlu0 %v6012
        %v6049 = vpop.xlane.xlu0 %6048
        %6050 = vadd.xlane.f32.xlu0 %v6013
        %v6051 = vpop.xlane.xlu0 %6050
        %6052 = vadd.xlane.f32.xlu0 %v6014
        %v6053 = vpop.xlane.xlu0 %6052
        %6054 = vadd.xlane.f32.xlu0 %v6015
        %v6055 = vpop.xlane.xlu0 %6054
        %6056 = vadd.xlane.f32.xlu0 %v6016
        %v6057 = vpop.xlane.xlu0 %6056
        %6058 = vadd.xlane.f32.xlu0 %v6017
        %v6059 = vpop.xlane.xlu0 %6058
        %6060 = vadd.xlane.f32.xlu0 %v6018
        %v6061 = vpop.xlane.xlu0 %6060
        %6062 = vadd.xlane.f32.xlu0 %v6019
        %v6063 = vpop.xlane.xlu0 %6062
        %6064 = vadd.xlane.f32.xlu0 %v6020
        %v6065 = vpop.xlane.xlu0 %6064
        %6066 = vadd.xlane.f32.xlu0 %v6021
        %v6067 = vpop.xlane.xlu0 %6066
        %6068 = vadd.xlane.f32.xlu0 %v6022
        %v6069 = vpop.xlane.xlu0 %6068
        %6070 = vadd.xlane.f32.xlu0 %v6023
        %v6071 = vpop.xlane.xlu0 %6070
        %6072 = vadd.xlane.f32.xlu0 %v6024
        %v6073 = vpop.xlane.xlu0 %6072
        %6074 = vadd.xlane.f32.xlu0 %v6025
        %v6075 = vpop.xlane.xlu0 %6074
        %6076 = vadd.xlane.f32.xlu0 %v6026
        %v6077 = vpop.xlane.xlu0 %6076
        %6078 = vadd.xlane.f32.xlu0 %v6027
        %v6079 = vpop.xlane.xlu0 %6078
        %6080 = vadd.xlane.f32.xlu0 %v6028
        %v6081 = vpop.xlane.xlu0 %6080
        %6082 = vadd.xlane.f32.xlu0 %v6029
        %v6083 = vpop.xlane.xlu0 %6082
        %6084 = vadd.xlane.f32.xlu0 %v6030
        %v6085 = vpop.xlane.xlu0 %6084
        %6086 = vadd.xlane.f32.xlu0 %v6031
        %v6087 = vpop.xlane.xlu0 %6086
        %6088 = vadd.xlane.f32.xlu0 %v6032
        %v6089 = vpop.xlane.xlu0 %6088
        %6090 = vadd.xlane.f32.xlu0 %v6033
        %v6091 = vpop.xlane.xlu0 %6090
        %6092 = vadd.xlane.f32.xlu0 %v6034
        %v6093 = vpop.xlane.xlu0 %6092
        %6094 = vadd.xlane.f32.xlu0 %v6035
        %v6095 = vpop.xlane.xlu0 %6094
        %6096 = vadd.xlane.f32.xlu0 %v6036
        %v6097 = vpop.xlane.xlu0 %6096
        %6098 = vadd.xlane.f32.xlu0 %v6037
        %v6099 = vpop.xlane.xlu0 %6098
        %6100 = vadd.xlane.f32.xlu0 %v6038
        %v6101 = vpop.xlane.xlu0 %6100
        %6102 = vadd.xlane.f32.xlu0 %v6039
        %v6103 = vpop.xlane.xlu0 %6102
        %v6136 = vperm.slane %v6041, %v995
        %v6137 = vperm.slane %v6043, %v997
        %v6138 = vsel %vm999, %v6137, %v6136
        %v6139 = vperm.slane %v6045, %v1001
        %v6140 = vsel %vm1003, %v6139, %v6138
        %v6141 = vperm.slane %v6047, %v1005
        %v6142 = vsel %vm1007, %v6141, %v6140
        %v6143 = vperm.slane %v6049, %v1009
        %v6144 = vsel %vm1011, %v6143, %v6142
        %v6145 = vperm.slane %v6051, %v1013
        %v6146 = vsel %vm1015, %v6145, %v6144
        %v6147 = vperm.slane %v6053, %v1017
        %v6148 = vsel %vm1019, %v6147, %v6146
        %v6149 = vperm.slane %v6055, %v1021
        %v6150 = vsel %vm1023, %v6149, %v6148
        %v6151 = vperm.slane %v6057, %v1025
        %v6152 = vsel %vm1027, %v6151, %v6150
        %v6153 = vperm.slane %v6059, %v1029
        %v6154 = vsel %vm1031, %v6153, %v6152
        %v6155 = vperm.slane %v6061, %v1033
        %v6156 = vsel %vm1035, %v6155, %v6154
        %v6157 = vperm.slane %v6063, %v1037
        %v6158 = vsel %vm1039, %v6157, %v6156
        %v6159 = vperm.slane %v6065, %v1041
        %v6160 = vsel %vm1043, %v6159, %v6158
        %v6161 = vperm.slane %v6067, %v1045
        %v6162 = vsel %vm1047, %v6161, %v6160
        %v6163 = vperm.slane %v6069, %v1049
        %v6164 = vsel %vm1051, %v6163, %v6162
        %v6165 = vperm.slane %v6071, %v1053
        %v6166 = vsel %vm1055, %v6165, %v6164
        %v6167 = vperm.slane %v6073, %v995
        %v6168 = vperm.slane %v6075, %v997
        %v6169 = vsel %vm999, %v6168, %v6167
        %v6170 = vperm.slane %v6077, %v1001
        %v6171 = vsel %vm1003, %v6170, %v6169
        %v6172 = vperm.slane %v6079, %v1005
        %v6173 = vsel %vm1007, %v6172, %v6171
        %v6174 = vperm.slane %v6081, %v1009
        %v6175 = vsel %vm1011, %v6174, %v6173
        %v6176 = vperm.slane %v6083, %v1013
        %v6177 = vsel %vm1015, %v6176, %v6175
        %v6178 = vperm.slane %v6085, %v1017
        %v6179 = vsel %vm1019, %v6178, %v6177
        %v6180 = vperm.slane %v6087, %v1021
        %v6181 = vsel %vm1023, %v6180, %v6179
        %v6182 = vperm.slane %v6089, %v1025
        %v6183 = vsel %vm1027, %v6182, %v6181
        %v6184 = vperm.slane %v6091, %v1029
        %v6185 = vsel %vm1031, %v6184, %v6183
        %v6186 = vperm.slane %v6093, %v1033
        %v6187 = vsel %vm1035, %v6186, %v6185
        %v6188 = vperm.slane %v6095, %v1037
        %v6189 = vsel %vm1039, %v6188, %v6187
        %v6190 = vperm.slane %v6097, %v1041
        %v6191 = vsel %vm1043, %v6190, %v6189
        %v6192 = vperm.slane %v6099, %v1045
        %v6193 = vsel %vm1047, %v6192, %v6191
        %v6194 = vperm.slane %v6101, %v1049
        %v6195 = vsel %vm1051, %v6194, %v6193
        %v6196 = vperm.slane %v6103, %v1053
        %v6197 = vsel %vm1055, %v6196, %v6195
        %v6198 = vsel %vm1088, %v6197, %v6166
        %v6200 = vsel %vm603, %v6198, -1e+30
        %v6201 = vsel %vm1092, %v6200, -inf
        %6202 = vmax.xlane.f32.xlu0 %v6201
        %v6203 = vpop.xlane.xlu0 %6202
        %v6204 = vsub.f32 %v6200, %v6203
        %v6205 = vmul.f32 %v6204, 1.442695
        %v6206 = vpow.pop %v6205
        %v6207 = vmul.f32 %v6206, %v602
        %v6208 = vsel %vm1092, %v6207, 0.0
        %6209 = vadd.xlane.f32.xlu0 %v6208
        %v6210 = vpop.xlane.xlu0 %6209
        %v6211 = vadd.f32 %v6210, 1e-13
        %v6212 = vrcp.pop %v6211
        %v6213 = vmul.f32 %v6211, %v6212
        %v6214 = vsub.f32 1.0, %v6213
        %v6215 = vmul.f32 %v6212, %v6214
        %v6216 = vadd.f32 %v6212, %v6215
        %vm6217 = vweird.f32 %v6211
        %vm6218 = vweird.f32 %v6212
        %vm6219 = vmor %vm6217, %vm6218
        %v6220 = vsel %vm6219, %v6212, %v6216
        %v6221 = vand.u32 2147483647, %v6211
        %vm6222 = vcmp.eq.f32.partialorder %v6221, 8.507059e+37
        %v6223 = vand.u32 %v6211, 2147483648
        %v6224 = vor.u32 1.1754944e-38, %v6223
        %v6225 = vsel %vm6222, %v6224, %v6220
        %v6226 = vmul.f32 %v6207, %v6225
        %v6228 = vrot.slane %v6226, 1
        %v6230 = vld [vmem:[%s582] sm:$0xff]
        %v6231 = vld [vmem:[%s582 + $0x8] sm:$0xff]
        %v6232 = vld [vmem:[%s582 + $0x10] sm:$0xff]
        %v6233 = vld [vmem:[%s582 + $0x18] sm:$0xff]
        %v6234 = vld [vmem:[%s582 + $0x20] sm:$0xff]
        %v6235 = vld [vmem:[%s582 + $0x28] sm:$0xff]
        %v6236 = vld [vmem:[%s582 + $0x30] sm:$0xff]
        %v6237 = vld [vmem:[%s582 + $0x38] sm:$0xff]
        %v6238 = vld [vmem:[%s582 + $0x40] sm:$0xff]
        %v6239 = vld [vmem:[%s582 + $0x48] sm:$0xff]
        %v6240 = vld [vmem:[%s582 + $0x50] sm:$0xff]
        %v6241 = vld [vmem:[%s582 + $0x58] sm:$0xff]
        %v6242 = vld [vmem:[%s582 + $0x60] sm:$0xff]
        %v6243 = vld [vmem:[%s582 + $0x68] sm:$0xff]
        %v6244 = vld [vmem:[%s582 + $0x70] sm:$0xff]
        %v6245 = vld [vmem:[%s582 + $0x78] sm:$0xff]
        %v6246 = vld [vmem:[%s582 + $0x80] sm:$0xff]
        %v6247 = vld [vmem:[%s582 + $0x88] sm:$0xff]
        %v6248 = vld [vmem:[%s582 + $0x90] sm:$0xff]
        %v6249 = vld [vmem:[%s582 + $0x98] sm:$0xff]
        %v6250 = vld [vmem:[%s582 + $0xa0] sm:$0xff]
        %v6251 = vld [vmem:[%s582 + $0xa8] sm:$0xff]
        %v6252 = vld [vmem:[%s582 + $0xb0] sm:$0xff]
        %v6253 = vld [vmem:[%s582 + $0xb8] sm:$0xff]
        %v6254 = vld [vmem:[%s582 + $0xc0] sm:$0xff]
        %v6255 = vld [vmem:[%s582 + $0xc8] sm:$0xff]
        %v6256 = vld [vmem:[%s582 + $0xd0] sm:$0xff]
        %v6257 = vld [vmem:[%s582 + $0xd8] sm:$0xff]
        %v6258 = vld [vmem:[%s582 + $0xe0] sm:$0xff]
        %v6259 = vld [vmem:[%s582 + $0xe8] sm:$0xff]
        %v6260 = vld [vmem:[%s582 + $0xf0] sm:$0xff]
        %v6261 = vld [vmem:[%s582 + $0xf8] sm:$0xff]
        %6262 = vmatpush.msra.mxu0 %v6245
        %6263 = vmatpush.msra.mxu0 %v6244
        %6264 = vmatpush.msra.mxu0 %v6243
        %6265 = vmatpush.msra.mxu0 %v6242
        %6266 = vmatpush.msra.mxu0 %v6241
        %6267 = vmatpush.msra.mxu0 %v6240
        %6268 = vmatpush.msra.mxu0 %v6239
        %6269 = vmatpush.msra.mxu0 %v6238
        %6270 = vmatpush.msra.mxu0 %v6237
        %6271 = vmatpush.msra.mxu0 %v6236
        %6272 = vmatpush.msra.mxu0 %v6235
        %6273 = vmatpush.msra.mxu0 %v6234
        %6274 = vmatpush.msra.mxu0 %v6233
        %6275 = vmatpush.msra.mxu0 %v6232
        %6276 = vmatpush.msra.mxu0 %v6231
        %6277 = vmatpush.msra.mxu0 %v6230
        %6278 = vmatmul.f32.gmra.mxu0 %v6226
        %v6279 = vpop.f32.mrf.mxu0
        %v6280 = vadd.f32 0.0, %v6279
        %6281 = vdwg.mxu0
        %6282 = vmatpush.msra.mxu0 %v6261
        %6283 = vmatpush.msra.mxu0 %v6260
        %6284 = vmatpush.msra.mxu0 %v6259
        %6285 = vmatpush.msra.mxu0 %v6258
        %6286 = vmatpush.msra.mxu0 %v6257
        %6287 = vmatpush.msra.mxu0 %v6256
        %6288 = vmatpush.msra.mxu0 %v6255
        %6289 = vmatpush.msra.mxu0 %v6254
        %6290 = vmatpush.msra.mxu0 %v6253
        %6291 = vmatpush.msra.mxu0 %v6252
        %6292 = vmatpush.msra.mxu0 %v6251
        %6293 = vmatpush.msra.mxu0 %v6250
        %6294 = vmatpush.msra.mxu0 %v6249
        %6295 = vmatpush.msra.mxu0 %v6248
        %6296 = vmatpush.msra.mxu0 %v6247
        %6297 = vmatpush.msra.mxu0 %v6246
        %6298 = vmatmul.f32.gmra.mxu0 %v6228
        %v6299 = vpop.f32.mrf.mxu0
        %v6300 = vadd.f32 0.0, %v6299
        %6301 = vdwg.mxu0
        %v6302 = vld [vmem:[%s7] sm:$0xff]
        %v6303 = vld [vmem:[%s7 + $0x8] sm:$0xff]
        %v6306 = vrot.slane %v6300, 7
        %v6307 = vsel %vm1088, %v6306, %v6280
        %v6308 = vsel %vm1200, %v6307, 0
        %6310 = vmatpush.msra.mxu0 0.0
        %6311 = vmatpush.msra.mxu0 0.0
        %6312 = vmatpush.msra.mxu0 0.0
        %6313 = vmatpush.msra.mxu0 0.0
        %6314 = vmatpush.msra.mxu0 0.0
        %6315 = vmatpush.msra.mxu0 0.0
        %6316 = vmatpush.msra.mxu0 0.0
        %6317 = vmatpush.msra.mxu0 0.0
        %6318 = vmatpush.msra.mxu0 0.0
        %6319 = vmatpush.msra.mxu0 0.0
        %6320 = vmatpush.msra.mxu0 0.0
        %6321 = vmatpush.msra.mxu0 0.0
        %6322 = vmatpush.msra.mxu0 0.0
        %6323 = vmatpush.msra.mxu0 0.0
        %6324 = vmatpush.msra.mxu0 %v6303
        %6325 = vmatpush.msra.mxu0 %v6302
        %6326 = vmatmul.f32.gmra.mxu0 %v6308
        %v6327 = vpop.f32.mrf.mxu0
        %v6328 = vadd.f32 0.0, %v6327
        %6329 = vdwg.mxu0
        %v6332 = vrot.slane %v5754, 1
        %v6333 = vrot.slane %v5756, 1
        %v6337 = vrot.slane %v6328, 1
        %v6339 = vadd.f32 %v6332, %v6328
        %v6340 = vadd.f32 %v6333, %v6337
        %v6341 = vxor.u32 %v6339, 2147483648
        %v6342 = vxor.u32 %v6340, 2147483648
        %v6343 = vmul.f32 %v6341, 1.442695
        %v6344 = vpow.pop %v6343
        %v6345 = vmul.f32 %v6342, 1.442695
        %v6346 = vpow.pop %v6345
        %v6347 = vadd.f32 %v6344, 1.0
        %v6348 = vadd.f32 %v6346, 1.0
        %v6349 = vrcp.pop %v6347
        %v6350 = vmul.f32 %v6347, %v6349
        %v6351 = vsub.f32 1.0, %v6350
        %v6352 = vmul.f32 %v6349, %v6351
        %v6353 = vadd.f32 %v6349, %v6352
        %vm6354 = vweird.f32 %v6347
        %vm6355 = vweird.f32 %v6349
        %vm6356 = vmor %vm6354, %vm6355
        %v6357 = vsel %vm6356, %v6349, %v6353
        %v6358 = vand.u32 2147483647, %v6347
        %vm6359 = vcmp.eq.f32.partialorder %v6358, 8.507059e+37
        %v6360 = vand.u32 %v6347, 2147483648
        %v6361 = vor.u32 1.1754944e-38, %v6360
        %v6362 = vsel %vm6359, %v6361, %v6357
        %v6363 = vmul.f32 1.0, %v6362
        %v6364 = vrcp.pop %v6348
        %v6365 = vmul.f32 %v6348, %v6364
        %v6366 = vsub.f32 1.0, %v6365
        %v6367 = vmul.f32 %v6364, %v6366
        %v6368 = vadd.f32 %v6364, %v6367
        %vm6369 = vweird.f32 %v6348
        %vm6370 = vweird.f32 %v6364
        %vm6371 = vmor %vm6369, %vm6370
        %v6372 = vsel %vm6371, %v6364, %v6368
        %v6373 = vand.u32 2147483647, %v6348
        %vm6374 = vcmp.eq.f32.partialorder %v6373, 8.507059e+37
        %v6375 = vand.u32 %v6348, 2147483648
        %v6376 = vor.u32 1.1754944e-38, %v6375
        %v6377 = vsel %vm6374, %v6376, %v6372
        %v6378 = vmul.f32 1.0, %v6377
        %v6379 = vmul.f32 %v6363, %v5751
        %v6380 = vmul.f32 %v6378, %v5752
        %6381 = vrot.lane.b32.xlu0 %v6280, 16
        %v6382 = vpop.permute.xlu0 %6381
        %6383 = vrot.lane.b32.xlu0 %v6300, 16
        %v6384 = vpop.permute.xlu0 %6383
        %v6387 = vmul.f32 %v6363, %v6382
        %v6388 = vmul.f32 %v6378, %v6384
        %v6389 = vld [vmem:[%s8] sm:$0xff]
        %v6390 = vld [vmem:[%s8 + $0x8] sm:$0xff]
        %v6391 = vld [vmem:[%s8 + $0x10] sm:$0xff]
        %v6392 = vld [vmem:[%s8 + $0x18] sm:$0xff]
        %v6393 = vld [vmem:[%s8 + $0x20] sm:$0xff]
        %v6394 = vld [vmem:[%s8 + $0x28] sm:$0xff]
        %v6395 = vld [vmem:[%s9] sm:$0xff]
        %v6396 = vld [vmem:[%s9 + $0x8] sm:$0xff]
        %v6397 = vld [vmem:[%s9 + $0x10] sm:$0xff]
        %v6398 = vld [vmem:[%s9 + $0x18] sm:$0xff]
        %v6399 = vld [vmem:[%s9 + $0x20] sm:$0xff]
        %v6400 = vld [vmem:[%s9 + $0x28] sm:$0xff]
        %6403 = vst [vmem:[#allocation1] ss:$9 sm:$0xff] %v6387
        %s6404 = scalar_lea.vmem [#allocation1], 1
        %6405 = vst [vmem:[%s6404] ss:$9 sm:$0xff] %v6388
        %v6406 = vld [vmem:[#allocation1] sm:$0xff]
        %6407 = vrot.lane.b32.xlu0 %v6406, 112
        %v6408 = vpop.permute.xlu0 %6407
        %v6409 = vsel %vm1200, %v6408, 0
        %6411 = vmatpush.msra.mxu0 0.0
        %6412 = vmatpush.msra.mxu0 0.0
        %6413 = vmatpush.msra.mxu0 0.0
        %6414 = vmatpush.msra.mxu0 0.0
        %6415 = vmatpush.msra.mxu0 0.0
        %6416 = vmatpush.msra.mxu0 0.0
        %6417 = vmatpush.msra.mxu0 0.0
        %6418 = vmatpush.msra.mxu0 0.0
        %6419 = vmatpush.msra.mxu0 0.0
        %6420 = vmatpush.msra.mxu0 0.0
        %6421 = vmatpush.msra.mxu0 0.0
        %6422 = vmatpush.msra.mxu0 0.0
        %6423 = vmatpush.msra.mxu0 0.0
        %6424 = vmatpush.msra.mxu0 0.0
        %6425 = vmatpush.msra.mxu0 %v6398
        %6426 = vmatpush.msra.mxu0 %v6395
        %6427 = vmatmul.f32.gmra.mxu0 %v6409
        %v6428 = vpop.f32.mrf.mxu0
        %v6429 = vadd.f32 0.0, %v6428
        %6430 = vdwg.mxu0
        %6431 = vmatpush.msra.mxu0 0.0
        %6432 = vmatpush.msra.mxu0 0.0
        %6433 = vmatpush.msra.mxu0 0.0
        %6434 = vmatpush.msra.mxu0 0.0
        %6435 = vmatpush.msra.mxu0 0.0
        %6436 = vmatpush.msra.mxu0 0.0
        %6437 = vmatpush.msra.mxu0 0.0
        %6438 = vmatpush.msra.mxu0 0.0
        %6439 = vmatpush.msra.mxu0 0.0
        %6440 = vmatpush.msra.mxu0 0.0
        %6441 = vmatpush.msra.mxu0 0.0
        %6442 = vmatpush.msra.mxu0 0.0
        %6443 = vmatpush.msra.mxu0 0.0
        %6444 = vmatpush.msra.mxu0 0.0
        %6445 = vmatpush.msra.mxu0 %v6399
        %6446 = vmatpush.msra.mxu0 %v6396
        %6447 = vmatmul.f32.gmra.mxu0 %v6409
        %v6448 = vpop.f32.mrf.mxu0
        %v6449 = vadd.f32 0.0, %v6448
        %6450 = vdwg.mxu0
        %6451 = vmatpush.msra.mxu0 0.0
        %6452 = vmatpush.msra.mxu0 0.0
        %6453 = vmatpush.msra.mxu0 0.0
        %6454 = vmatpush.msra.mxu0 0.0
        %6455 = vmatpush.msra.mxu0 0.0
        %6456 = vmatpush.msra.mxu0 0.0
        %6457 = vmatpush.msra.mxu0 0.0
        %6458 = vmatpush.msra.mxu0 0.0
        %6459 = vmatpush.msra.mxu0 0.0
        %6460 = vmatpush.msra.mxu0 0.0
        %6461 = vmatpush.msra.mxu0 0.0
        %6462 = vmatpush.msra.mxu0 0.0
        %6463 = vmatpush.msra.mxu0 0.0
        %6464 = vmatpush.msra.mxu0 0.0
        %6465 = vmatpush.msra.mxu0 %v6400
        %6466 = vmatpush.msra.mxu0 %v6397
        %6467 = vmatmul.f32.gmra.mxu0 %v6409
        %v6468 = vpop.f32.mrf.mxu0
        %v6469 = vadd.f32 0.0, %v6468
        %6470 = vdwg.mxu0
        %6473 = vst [vmem:[#allocation1] ss:$9 sm:$0xff] %v6379
        %s6474 = scalar_lea.vmem [#allocation1], 1
        %6475 = vst [vmem:[%s6474] ss:$9 sm:$0xff] %v6380
        %v6476 = vld [vmem:[#allocation1] sm:$0xff]
        %v6477 = vsel %vm1200, %v6476, 0
        %6479 = vmatpush.msra.mxu0 0.0
        %6480 = vmatpush.msra.mxu0 0.0
        %6481 = vmatpush.msra.mxu0 0.0
        %6482 = vmatpush.msra.mxu0 0.0
        %6483 = vmatpush.msra.mxu0 0.0
        %6484 = vmatpush.msra.mxu0 0.0
        %6485 = vmatpush.msra.mxu0 0.0
        %6486 = vmatpush.msra.mxu0 0.0
        %6487 = vmatpush.msra.mxu0 0.0
        %6488 = vmatpush.msra.mxu0 0.0
        %6489 = vmatpush.msra.mxu0 0.0
        %6490 = vmatpush.msra.mxu0 0.0
        %6491 = vmatpush.msra.mxu0 0.0
        %6492 = vmatpush.msra.mxu0 0.0
        %6493 = vmatpush.msra.mxu0 %v6392
        %6494 = vmatpush.msra.mxu0 %v6389
        %6495 = vmatmul.f32.gmra.mxu0 %v6477
        %v6496 = vpop.f32.mrf.mxu0
        %v6497 = vadd.f32 %v6429, %v6496
        %6498 = vdwg.mxu0
        %6499 = vmatpush.msra.mxu0 0.0
        %6500 = vmatpush.msra.mxu0 0.0
        %6501 = vmatpush.msra.mxu0 0.0
        %6502 = vmatpush.msra.mxu0 0.0
        %6503 = vmatpush.msra.mxu0 0.0
        %6504 = vmatpush.msra.mxu0 0.0
        %6505 = vmatpush.msra.mxu0 0.0
        %6506 = vmatpush.msra.mxu0 0.0
        %6507 = vmatpush.msra.mxu0 0.0
        %6508 = vmatpush.msra.mxu0 0.0
        %6509 = vmatpush.msra.mxu0 0.0
        %6510 = vmatpush.msra.mxu0 0.0
        %6511 = vmatpush.msra.mxu0 0.0
        %6512 = vmatpush.msra.mxu0 0.0
        %6513 = vmatpush.msra.mxu0 %v6393
        %6514 = vmatpush.msra.mxu0 %v6390
        %6515 = vmatmul.f32.gmra.mxu0 %v6477
        %v6516 = vpop.f32.mrf.mxu0
        %v6517 = vadd.f32 %v6449, %v6516
        %6518 = vdwg.mxu0
        %6519 = vmatpush.msra.mxu0 0.0
        %6520 = vmatpush.msra.mxu0 0.0
        %6521 = vmatpush.msra.mxu0 0.0
        %6522 = vmatpush.msra.mxu0 0.0
        %6523 = vmatpush.msra.mxu0 0.0
        %6524 = vmatpush.msra.mxu0 0.0
        %6525 = vmatpush.msra.mxu0 0.0
        %6526 = vmatpush.msra.mxu0 0.0
        %6527 = vmatpush.msra.mxu0 0.0
        %6528 = vmatpush.msra.mxu0 0.0
        %6529 = vmatpush.msra.mxu0 0.0
        %6530 = vmatpush.msra.mxu0 0.0
        %6531 = vmatpush.msra.mxu0 0.0
        %6532 = vmatpush.msra.mxu0 0.0
        %6533 = vmatpush.msra.mxu0 %v6394
        %6534 = vmatpush.msra.mxu0 %v6391
        %6535 = vmatmul.f32.gmra.mxu0 %v6477
        %v6536 = vpop.f32.mrf.mxu0
        %v6537 = vadd.f32 %v6469, %v6536
        %6538 = vdwg.mxu0
        %v6539 = vadd.f32 %v6497, %v1439
        %v6540 = vadd.f32 %v6517, %v1440
        %v6541 = vadd.f32 %v6537, %v1441
        %v6542 = vadd.f32 %v5859, %v1451
        %v6543 = vadd.f32 %v5879, %v1452
        %v6544 = vadd.f32 %v5899, %v1453
        %v6545 = vadd.f32 %v6539, %v6542
        %v6546 = vxor.u32 %v6545, 2147483648
        %v6547 = vmul.f32 %v6546, 1.442695
        %v6548 = vpow.pop %v6547
        %v6549 = vadd.f32 %v6548, 1.0
        %v6550 = vrcp.pop %v6549
        %v6551 = vmul.f32 %v6549, %v6550
        %v6552 = vsub.f32 1.0, %v6551
        %v6553 = vmul.f32 %v6550, %v6552
        %v6554 = vadd.f32 %v6550, %v6553
        %vm6555 = vweird.f32 %v6549
        %vm6556 = vweird.f32 %v6550
        %vm6557 = vmor %vm6555, %vm6556
        %v6558 = vsel %vm6557, %v6550, %v6554
        %v6559 = vand.u32 2147483647, %v6549
        %vm6560 = vcmp.eq.f32.partialorder %v6559, 8.507059e+37
        %v6561 = vand.u32 %v6549, 2147483648
        %v6562 = vor.u32 1.1754944e-38, %v6561
        %v6563 = vsel %vm6560, %v6562, %v6558
        %v6564 = vmul.f32 1.0, %v6563
        %v6565 = vadd.f32 %v6540, %v6543
        %v6566 = vxor.u32 %v6565, 2147483648
        %v6567 = vmul.f32 %v6566, 1.442695
        %v6568 = vpow.pop %v6567
        %v6569 = vadd.f32 %v6568, 1.0
        %v6570 = vrcp.pop %v6569
        %v6571 = vmul.f32 %v6569, %v6570
        %v6572 = vsub.f32 1.0, %v6571
        %v6573 = vmul.f32 %v6570, %v6572
        %v6574 = vadd.f32 %v6570, %v6573
        %vm6575 = vweird.f32 %v6569
        %vm6576 = vweird.f32 %v6570
        %vm6577 = vmor %vm6575, %vm6576
        %v6578 = vsel %vm6577, %v6570, %v6574
        %v6579 = vand.u32 2147483647, %v6569
        %vm6580 = vcmp.eq.f32.partialorder %v6579, 8.507059e+37
        %v6581 = vand.u32 %v6569, 2147483648
        %v6582 = vor.u32 1.1754944e-38, %v6581
        %v6583 = vsel %vm6580, %v6582, %v6578
        %v6584 = vmul.f32 1.0, %v6583
        %v6585 = vmul.f32 %v6564, %v6544
        %v6586 = vadd.f32 %v6541, %v6585
        %v6587 = vtanh.pop %v6586
        %v6588 = vsub.f32 1.0, %v6584
        %v6589 = vmul.f32 %v6588, %v6587
        %v6590 = vmul.f32 %v6584, %v5743
        %v6591 = vadd.f32 %v6589, %v6590
        %v6593 = vrot.slane %v6591, 1
        %6595 = vst [vmem:[%s568 + $0x6] sm:$0x1] %v6591
        %6596 = vst [vmem:[%s568 + $0xe] sm:$0x1] %v6593
        %6597 = vst [vmem:[%s574 + $0x6] sm:$0x1] %v6226
        %6598 = vst [vmem:[%s574 + $0xe] sm:$0x1] %v6228
        %v6599 = vld [vmem:[%s506 + $0x7] sm:$0x1]
        %v6600 = vld [vmem:[%s506 + $0xf] sm:$0x1]
        %s6601 = scalar_lea.vmem %s513, 7 [#allocation4]
        %v6602 = vld [vmem:[%s6601] ss:$8 sm:$0x3]
        %s6603 = scalar_lea.vmem %s513, 23 [#allocation4]
        %v6604 = vld [vmem:[%s6603] ss:$8 sm:$0x3]
        %v6605 = vld [vmem:[%s6] sm:$0xff]
        %v6606 = vld [vmem:[%s6 + $0x8] sm:$0xff]
        %v6607 = vld [vmem:[%s6 + $0x10] sm:$0xff]
        %v6608 = vld [vmem:[%s6 + $0x18] sm:$0xff]
        %v6609 = vld [vmem:[%s6 + $0x20] sm:$0xff]
        %v6610 = vld [vmem:[%s6 + $0x28] sm:$0xff]
        %v6611 = vld [vmem:[%s6 + $0x30] sm:$0xff]
        %v6612 = vld [vmem:[%s6 + $0x38] sm:$0xff]
        %v6613 = vld [vmem:[%s6 + $0x40] sm:$0xff]
        %v6614 = vld [vmem:[%s6 + $0x48] sm:$0xff]
        %v6615 = vld [vmem:[%s6 + $0x50] sm:$0xff]
        %v6616 = vld [vmem:[%s6 + $0x58] sm:$0xff]
        %v6617 = vld [vmem:[%s6 + $0x60] sm:$0xff]
        %v6618 = vld [vmem:[%s6 + $0x68] sm:$0xff]
        %v6619 = vld [vmem:[%s6 + $0x70] sm:$0xff]
        %v6620 = vld [vmem:[%s6 + $0x78] sm:$0xff]
        %v6621 = vld [vmem:[%s6 + $0x80] sm:$0xff]
        %v6622 = vld [vmem:[%s6 + $0x88] sm:$0xff]
        %v6623 = vld [vmem:[%s6 + $0x90] sm:$0xff]
        %v6624 = vld [vmem:[%s6 + $0x98] sm:$0xff]
        %v6625 = vld [vmem:[%s6 + $0xa0] sm:$0xff]
        %v6626 = vld [vmem:[%s6 + $0xa8] sm:$0xff]
        %v6627 = vld [vmem:[%s6 + $0xb0] sm:$0xff]
        %v6628 = vld [vmem:[%s6 + $0xb8] sm:$0xff]
        %v6629 = vld [vmem:[%s6 + $0xc0] sm:$0xff]
        %v6630 = vld [vmem:[%s6 + $0xc8] sm:$0xff]
        %v6631 = vld [vmem:[%s6 + $0xd0] sm:$0xff]
        %v6632 = vld [vmem:[%s6 + $0xd8] sm:$0xff]
        %v6633 = vld [vmem:[%s6 + $0xe0] sm:$0xff]
        %v6634 = vld [vmem:[%s6 + $0xe8] sm:$0xff]
        %v6635 = vld [vmem:[%s6 + $0xf0] sm:$0xff]
        %v6636 = vld [vmem:[%s6 + $0xf8] sm:$0xff]
        %v6637 = vld [vmem:[%s6 + $0x100] sm:$0xff]
        %v6638 = vld [vmem:[%s6 + $0x108] sm:$0xff]
        %v6639 = vld [vmem:[%s6 + $0x110] sm:$0xff]
        %v6640 = vld [vmem:[%s6 + $0x118] sm:$0xff]
        %v6641 = vld [vmem:[%s6 + $0x120] sm:$0xff]
        %v6642 = vld [vmem:[%s6 + $0x128] sm:$0xff]
        %v6643 = vld [vmem:[%s6 + $0x130] sm:$0xff]
        %v6644 = vld [vmem:[%s6 + $0x138] sm:$0xff]
        %v6645 = vld [vmem:[%s6 + $0x140] sm:$0xff]
        %v6646 = vld [vmem:[%s6 + $0x148] sm:$0xff]
        %v6647 = vld [vmem:[%s6 + $0x150] sm:$0xff]
        %v6648 = vld [vmem:[%s6 + $0x158] sm:$0xff]
        %v6649 = vld [vmem:[%s6 + $0x160] sm:$0xff]
        %v6650 = vld [vmem:[%s6 + $0x168] sm:$0xff]
        %v6651 = vld [vmem:[%s6 + $0x170] sm:$0xff]
        %v6652 = vld [vmem:[%s6 + $0x178] sm:$0xff]
        %v6653 = vld [vmem:[%s6 + $0x180] sm:$0xff]
        %v6654 = vld [vmem:[%s6 + $0x188] sm:$0xff]
        %v6655 = vld [vmem:[%s6 + $0x190] sm:$0xff]
        %v6656 = vld [vmem:[%s6 + $0x198] sm:$0xff]
        %v6657 = vld [vmem:[%s6 + $0x1a0] sm:$0xff]
        %v6658 = vld [vmem:[%s6 + $0x1a8] sm:$0xff]
        %v6659 = vld [vmem:[%s6 + $0x1b0] sm:$0xff]
        %v6660 = vld [vmem:[%s6 + $0x1b8] sm:$0xff]
        %v6661 = vld [vmem:[%s6 + $0x1c0] sm:$0xff]
        %v6662 = vld [vmem:[%s6 + $0x1c8] sm:$0xff]
        %v6663 = vld [vmem:[%s6 + $0x1d0] sm:$0xff]
        %v6664 = vld [vmem:[%s6 + $0x1d8] sm:$0xff]
        %v6665 = vld [vmem:[%s6 + $0x1e0] sm:$0xff]
        %v6666 = vld [vmem:[%s6 + $0x1e8] sm:$0xff]
        %v6667 = vld [vmem:[%s6 + $0x1f0] sm:$0xff]
        %v6668 = vld [vmem:[%s6 + $0x1f8] sm:$0xff]
        %6669 = vmatpush.msra.mxu0 %v6665
        %6670 = vmatpush.msra.mxu0 %v6661
        %6671 = vmatpush.msra.mxu0 %v6657
        %6672 = vmatpush.msra.mxu0 %v6653
        %6673 = vmatpush.msra.mxu0 %v6649
        %6674 = vmatpush.msra.mxu0 %v6645
        %6675 = vmatpush.msra.mxu0 %v6641
        %6676 = vmatpush.msra.mxu0 %v6637
        %6677 = vmatpush.msra.mxu0 %v6633
        %6678 = vmatpush.msra.mxu0 %v6629
        %6679 = vmatpush.msra.mxu0 %v6625
        %6680 = vmatpush.msra.mxu0 %v6621
        %6681 = vmatpush.msra.mxu0 %v6617
        %6682 = vmatpush.msra.mxu0 %v6613
        %6683 = vmatpush.msra.mxu0 %v6609
        %6684 = vmatpush.msra.mxu0 %v6605
        %6685 = vmatmul.f32.gmra.mxu0 %v6591
        %v6686 = vpop.f32.mrf.mxu0
        %v6687 = vadd.f32 0.0, %v6686
        %6688 = vdwg.mxu0
        %6689 = vmatpush.msra.mxu0 %v6666
        %6690 = vmatpush.msra.mxu0 %v6662
        %6691 = vmatpush.msra.mxu0 %v6658
        %6692 = vmatpush.msra.mxu0 %v6654
        %6693 = vmatpush.msra.mxu0 %v6650
        %6694 = vmatpush.msra.mxu0 %v6646
        %6695 = vmatpush.msra.mxu0 %v6642
        %6696 = vmatpush.msra.mxu0 %v6638
        %6697 = vmatpush.msra.mxu0 %v6634
        %6698 = vmatpush.msra.mxu0 %v6630
        %6699 = vmatpush.msra.mxu0 %v6626
        %6700 = vmatpush.msra.mxu0 %v6622
        %6701 = vmatpush.msra.mxu0 %v6618
        %6702 = vmatpush.msra.mxu0 %v6614
        %6703 = vmatpush.msra.mxu0 %v6610
        %6704 = vmatpush.msra.mxu0 %v6606
        %6705 = vmatmul.f32.gmra.mxu0 %v6591
        %v6706 = vpop.f32.mrf.mxu0
        %v6707 = vadd.f32 0.0, %v6706
        %6708 = vdwg.mxu0
        %6709 = vmatpush.msra.mxu0 %v6667
        %6710 = vmatpush.msra.mxu0 %v6663
        %6711 = vmatpush.msra.mxu0 %v6659
        %6712 = vmatpush.msra.mxu0 %v6655
        %6713 = vmatpush.msra.mxu0 %v6651
        %6714 = vmatpush.msra.mxu0 %v6647
        %6715 = vmatpush.msra.mxu0 %v6643
        %6716 = vmatpush.msra.mxu0 %v6639
        %6717 = vmatpush.msra.mxu0 %v6635
        %6718 = vmatpush.msra.mxu0 %v6631
        %6719 = vmatpush.msra.mxu0 %v6627
        %6720 = vmatpush.msra.mxu0 %v6623
        %6721 = vmatpush.msra.mxu0 %v6619
        %6722 = vmatpush.msra.mxu0 %v6615
        %6723 = vmatpush.msra.mxu0 %v6611
        %6724 = vmatpush.msra.mxu0 %v6607
        %6725 = vmatmul.f32.gmra.mxu0 %v6591
        %v6726 = vpop.f32.mrf.mxu0
        %v6727 = vadd.f32 0.0, %v6726
        %6728 = vdwg.mxu0
        %6729 = vmatpush.msra.mxu0 %v6668
        %6730 = vmatpush.msra.mxu0 %v6664
        %6731 = vmatpush.msra.mxu0 %v6660
        %6732 = vmatpush.msra.mxu0 %v6656
        %6733 = vmatpush.msra.mxu0 %v6652
        %6734 = vmatpush.msra.mxu0 %v6648
        %6735 = vmatpush.msra.mxu0 %v6644
        %6736 = vmatpush.msra.mxu0 %v6640
        %6737 = vmatpush.msra.mxu0 %v6636
        %6738 = vmatpush.msra.mxu0 %v6632
        %6739 = vmatpush.msra.mxu0 %v6628
        %6740 = vmatpush.msra.mxu0 %v6624
        %6741 = vmatpush.msra.mxu0 %v6620
        %6742 = vmatpush.msra.mxu0 %v6616
        %6743 = vmatpush.msra.mxu0 %v6612
        %6744 = vmatpush.msra.mxu0 %v6608
        %6745 = vmatmul.f32.gmra.mxu0 %v6591
        %v6746 = vpop.f32.mrf.mxu0
        %v6747 = vadd.f32 0.0, %v6746
        %6748 = vdwg.mxu0
        %v6750 = vrot.slane %v6687, 1
        %v6752 = vadd.f32 %v6602, %v6687
        %v6753 = vadd.f32 %v6604, %v6750
        %v6754 = vld [vmem:[%s593] sm:$0xff]
        %v6755 = vld [vmem:[%s593 + $0x8] sm:$0xff]
        %v6756 = vld [vmem:[%s593 + $0x10] sm:$0xff]
        %v6757 = vld [vmem:[%s593 + $0x18] sm:$0xff]
        %v6758 = vld [vmem:[%s593 + $0x20] sm:$0xff]
        %v6759 = vld [vmem:[%s593 + $0x28] sm:$0xff]
        %v6760 = vld [vmem:[%s593 + $0x30] sm:$0xff]
        %v6761 = vld [vmem:[%s593 + $0x38] sm:$0xff]
        %v6762 = vld [vmem:[%s593 + $0x40] sm:$0xff]
        %v6763 = vld [vmem:[%s593 + $0x48] sm:$0xff]
        %v6764 = vld [vmem:[%s593 + $0x50] sm:$0xff]
        %v6765 = vld [vmem:[%s593 + $0x58] sm:$0xff]
        %v6766 = vld [vmem:[%s593 + $0x60] sm:$0xff]
        %v6767 = vld [vmem:[%s593 + $0x68] sm:$0xff]
        %v6768 = vld [vmem:[%s593 + $0x70] sm:$0xff]
        %v6769 = vld [vmem:[%s593 + $0x78] sm:$0xff]
        %v6770 = vld [vmem:[%s593 + $0x80] sm:$0xff]
        %v6771 = vld [vmem:[%s593 + $0x88] sm:$0xff]
        %v6772 = vld [vmem:[%s593 + $0x90] sm:$0xff]
        %v6773 = vld [vmem:[%s593 + $0x98] sm:$0xff]
        %v6774 = vld [vmem:[%s593 + $0xa0] sm:$0xff]
        %v6775 = vld [vmem:[%s593 + $0xa8] sm:$0xff]
        %v6776 = vld [vmem:[%s593 + $0xb0] sm:$0xff]
        %v6777 = vld [vmem:[%s593 + $0xb8] sm:$0xff]
        %v6778 = vld [vmem:[%s593 + $0xc0] sm:$0xff]
        %v6779 = vld [vmem:[%s593 + $0xc8] sm:$0xff]
        %v6780 = vld [vmem:[%s593 + $0xd0] sm:$0xff]
        %v6781 = vld [vmem:[%s593 + $0xd8] sm:$0xff]
        %v6782 = vld [vmem:[%s593 + $0xe0] sm:$0xff]
        %v6783 = vld [vmem:[%s593 + $0xe8] sm:$0xff]
        %v6784 = vld [vmem:[%s593 + $0xf0] sm:$0xff]
        %v6785 = vld [vmem:[%s593 + $0xf8] sm:$0xff]
        %v6788 = vperm.slane %v6752, 0
        %v6789 = vperm.slane %v6753, 0
        %v6792 = vadd.f32 %v6754, %v6788
        %v6793 = vadd.f32 %v6755, %v6788
        %v6794 = vadd.f32 %v6756, %v6788
        %v6795 = vadd.f32 %v6757, %v6788
        %v6796 = vadd.f32 %v6758, %v6788
        %v6797 = vadd.f32 %v6759, %v6788
        %v6798 = vadd.f32 %v6760, %v6788
        %v6799 = vadd.f32 %v6761, %v6788
        %v6800 = vadd.f32 %v6762, %v6788
        %v6801 = vadd.f32 %v6763, %v6788
        %v6802 = vadd.f32 %v6764, %v6788
        %v6803 = vadd.f32 %v6765, %v6788
        %v6804 = vadd.f32 %v6766, %v6788
        %v6805 = vadd.f32 %v6767, %v6788
        %v6806 = vadd.f32 %v6768, %v6788
        %v6807 = vadd.f32 %v6769, %v6788
        %v6808 = vadd.f32 %v6770, %v6789
        %v6809 = vadd.f32 %v6771, %v6789
        %v6810 = vadd.f32 %v6772, %v6789
        %v6811 = vadd.f32 %v6773, %v6789
        %v6812 = vadd.f32 %v6774, %v6789
        %v6813 = vadd.f32 %v6775, %v6789
        %v6814 = vadd.f32 %v6776, %v6789
        %v6815 = vadd.f32 %v6777, %v6789
        %v6816 = vadd.f32 %v6778, %v6789
        %v6817 = vadd.f32 %v6779, %v6789
        %v6818 = vadd.f32 %v6780, %v6789
        %v6819 = vadd.f32 %v6781, %v6789
        %v6820 = vadd.f32 %v6782, %v6789
        %v6821 = vadd.f32 %v6783, %v6789
        %v6822 = vadd.f32 %v6784, %v6789
        %v6823 = vadd.f32 %v6785, %v6789
        %v6824 = vtanh.pop %v6792
        %v6825 = vtanh.pop %v6793
        %v6826 = vtanh.pop %v6794
        %v6827 = vtanh.pop %v6795
        %v6828 = vtanh.pop %v6796
        %v6829 = vtanh.pop %v6797
        %v6830 = vtanh.pop %v6798
        %v6831 = vtanh.pop %v6799
        %v6832 = vtanh.pop %v6800
        %v6833 = vtanh.pop %v6801
        %v6834 = vtanh.pop %v6802
        %v6835 = vtanh.pop %v6803
        %v6836 = vtanh.pop %v6804
        %v6837 = vtanh.pop %v6805
        %v6838 = vtanh.pop %v6806
        %v6839 = vtanh.pop %v6807
        %v6840 = vtanh.pop %v6808
        %v6841 = vtanh.pop %v6809
        %v6842 = vtanh.pop %v6810
        %v6843 = vtanh.pop %v6811
        %v6844 = vtanh.pop %v6812
        %v6845 = vtanh.pop %v6813
        %v6846 = vtanh.pop %v6814
        %v6847 = vtanh.pop %v6815
        %v6848 = vtanh.pop %v6816
        %v6849 = vtanh.pop %v6817
        %v6850 = vtanh.pop %v6818
        %v6851 = vtanh.pop %v6819
        %v6852 = vtanh.pop %v6820
        %v6853 = vtanh.pop %v6821
        %v6854 = vtanh.pop %v6822
        %v6855 = vtanh.pop %v6823
        %v6856 = vmul.f32 %v6824, %v864
        %v6857 = vmul.f32 %v6825, %v864
        %v6858 = vmul.f32 %v6826, %v864
        %v6859 = vmul.f32 %v6827, %v864
        %v6860 = vmul.f32 %v6828, %v864
        %v6861 = vmul.f32 %v6829, %v864
        %v6862 = vmul.f32 %v6830, %v864
        %v6863 = vmul.f32 %v6831, %v864
        %v6864 = vmul.f32 %v6832, %v864
        %v6865 = vmul.f32 %v6833, %v864
        %v6866 = vmul.f32 %v6834, %v864
        %v6867 = vmul.f32 %v6835, %v864
        %v6868 = vmul.f32 %v6836, %v864
        %v6869 = vmul.f32 %v6837, %v864
        %v6870 = vmul.f32 %v6838, %v864
        %v6871 = vmul.f32 %v6839, %v864
        %v6872 = vmul.f32 %v6840, %v864
        %v6873 = vmul.f32 %v6841, %v864
        %v6874 = vmul.f32 %v6842, %v864
        %v6875 = vmul.f32 %v6843, %v864
        %v6876 = vmul.f32 %v6844, %v864
        %v6877 = vmul.f32 %v6845, %v864
        %v6878 = vmul.f32 %v6846, %v864
        %v6879 = vmul.f32 %v6847, %v864
        %v6880 = vmul.f32 %v6848, %v864
        %v6881 = vmul.f32 %v6849, %v864
        %v6882 = vmul.f32 %v6850, %v864
        %v6883 = vmul.f32 %v6851, %v864
        %v6884 = vmul.f32 %v6852, %v864
        %v6885 = vmul.f32 %v6853, %v864
        %v6886 = vmul.f32 %v6854, %v864
        %v6887 = vmul.f32 %v6855, %v864
        %6888 = vadd.xlane.f32.xlu0 %v6856
        %v6889 = vpop.xlane.xlu0 %6888
        %6890 = vadd.xlane.f32.xlu0 %v6857
        %v6891 = vpop.xlane.xlu0 %6890
        %6892 = vadd.xlane.f32.xlu0 %v6858
        %v6893 = vpop.xlane.xlu0 %6892
        %6894 = vadd.xlane.f32.xlu0 %v6859
        %v6895 = vpop.xlane.xlu0 %6894
        %6896 = vadd.xlane.f32.xlu0 %v6860
        %v6897 = vpop.xlane.xlu0 %6896
        %6898 = vadd.xlane.f32.xlu0 %v6861
        %v6899 = vpop.xlane.xlu0 %6898
        %6900 = vadd.xlane.f32.xlu0 %v6862
        %v6901 = vpop.xlane.xlu0 %6900
        %6902 = vadd.xlane.f32.xlu0 %v6863
        %v6903 = vpop.xlane.xlu0 %6902
        %6904 = vadd.xlane.f32.xlu0 %v6864
        %v6905 = vpop.xlane.xlu0 %6904
        %6906 = vadd.xlane.f32.xlu0 %v6865
        %v6907 = vpop.xlane.xlu0 %6906
        %6908 = vadd.xlane.f32.xlu0 %v6866
        %v6909 = vpop.xlane.xlu0 %6908
        %6910 = vadd.xlane.f32.xlu0 %v6867
        %v6911 = vpop.xlane.xlu0 %6910
        %6912 = vadd.xlane.f32.xlu0 %v6868
        %v6913 = vpop.xlane.xlu0 %6912
        %6914 = vadd.xlane.f32.xlu0 %v6869
        %v6915 = vpop.xlane.xlu0 %6914
        %6916 = vadd.xlane.f32.xlu0 %v6870
        %v6917 = vpop.xlane.xlu0 %6916
        %6918 = vadd.xlane.f32.xlu0 %v6871
        %v6919 = vpop.xlane.xlu0 %6918
        %6920 = vadd.xlane.f32.xlu0 %v6872
        %v6921 = vpop.xlane.xlu0 %6920
        %6922 = vadd.xlane.f32.xlu0 %v6873
        %v6923 = vpop.xlane.xlu0 %6922
        %6924 = vadd.xlane.f32.xlu0 %v6874
        %v6925 = vpop.xlane.xlu0 %6924
        %6926 = vadd.xlane.f32.xlu0 %v6875
        %v6927 = vpop.xlane.xlu0 %6926
        %6928 = vadd.xlane.f32.xlu0 %v6876
        %v6929 = vpop.xlane.xlu0 %6928
        %6930 = vadd.xlane.f32.xlu0 %v6877
        %v6931 = vpop.xlane.xlu0 %6930
        %6932 = vadd.xlane.f32.xlu0 %v6878
        %v6933 = vpop.xlane.xlu0 %6932
        %6934 = vadd.xlane.f32.xlu0 %v6879
        %v6935 = vpop.xlane.xlu0 %6934
        %6936 = vadd.xlane.f32.xlu0 %v6880
        %v6937 = vpop.xlane.xlu0 %6936
        %6938 = vadd.xlane.f32.xlu0 %v6881
        %v6939 = vpop.xlane.xlu0 %6938
        %6940 = vadd.xlane.f32.xlu0 %v6882
        %v6941 = vpop.xlane.xlu0 %6940
        %6942 = vadd.xlane.f32.xlu0 %v6883
        %v6943 = vpop.xlane.xlu0 %6942
        %6944 = vadd.xlane.f32.xlu0 %v6884
        %v6945 = vpop.xlane.xlu0 %6944
        %6946 = vadd.xlane.f32.xlu0 %v6885
        %v6947 = vpop.xlane.xlu0 %6946
        %6948 = vadd.xlane.f32.xlu0 %v6886
        %v6949 = vpop.xlane.xlu0 %6948
        %6950 = vadd.xlane.f32.xlu0 %v6887
        %v6951 = vpop.xlane.xlu0 %6950
        %v6984 = vperm.slane %v6889, %v995
        %v6985 = vperm.slane %v6891, %v997
        %v6986 = vsel %vm999, %v6985, %v6984
        %v6987 = vperm.slane %v6893, %v1001
        %v6988 = vsel %vm1003, %v6987, %v6986
        %v6989 = vperm.slane %v6895, %v1005
        %v6990 = vsel %vm1007, %v6989, %v6988
        %v6991 = vperm.slane %v6897, %v1009
        %v6992 = vsel %vm1011, %v6991, %v6990
        %v6993 = vperm.slane %v6899, %v1013
        %v6994 = vsel %vm1015, %v6993, %v6992
        %v6995 = vperm.slane %v6901, %v1017
        %v6996 = vsel %vm1019, %v6995, %v6994
        %v6997 = vperm.slane %v6903, %v1021
        %v6998 = vsel %vm1023, %v6997, %v6996
        %v6999 = vperm.slane %v6905, %v1025
        %v7000 = vsel %vm1027, %v6999, %v6998
        %v7001 = vperm.slane %v6907, %v1029
        %v7002 = vsel %vm1031, %v7001, %v7000
        %v7003 = vperm.slane %v6909, %v1033
        %v7004 = vsel %vm1035, %v7003, %v7002
        %v7005 = vperm.slane %v6911, %v1037
        %v7006 = vsel %vm1039, %v7005, %v7004
        %v7007 = vperm.slane %v6913, %v1041
        %v7008 = vsel %vm1043, %v7007, %v7006
        %v7009 = vperm.slane %v6915, %v1045
        %v7010 = vsel %vm1047, %v7009, %v7008
        %v7011 = vperm.slane %v6917, %v1049
        %v7012 = vsel %vm1051, %v7011, %v7010
        %v7013 = vperm.slane %v6919, %v1053
        %v7014 = vsel %vm1055, %v7013, %v7012
        %v7015 = vperm.slane %v6921, %v995
        %v7016 = vperm.slane %v6923, %v997
        %v7017 = vsel %vm999, %v7016, %v7015
        %v7018 = vperm.slane %v6925, %v1001
        %v7019 = vsel %vm1003, %v7018, %v7017
        %v7020 = vperm.slane %v6927, %v1005
        %v7021 = vsel %vm1007, %v7020, %v7019
        %v7022 = vperm.slane %v6929, %v1009
        %v7023 = vsel %vm1011, %v7022, %v7021
        %v7024 = vperm.slane %v6931, %v1013
        %v7025 = vsel %vm1015, %v7024, %v7023
        %v7026 = vperm.slane %v6933, %v1017
        %v7027 = vsel %vm1019, %v7026, %v7025
        %v7028 = vperm.slane %v6935, %v1021
        %v7029 = vsel %vm1023, %v7028, %v7027
        %v7030 = vperm.slane %v6937, %v1025
        %v7031 = vsel %vm1027, %v7030, %v7029
        %v7032 = vperm.slane %v6939, %v1029
        %v7033 = vsel %vm1031, %v7032, %v7031
        %v7034 = vperm.slane %v6941, %v1033
        %v7035 = vsel %vm1035, %v7034, %v7033
        %v7036 = vperm.slane %v6943, %v1037
        %v7037 = vsel %vm1039, %v7036, %v7035
        %v7038 = vperm.slane %v6945, %v1041
        %v7039 = vsel %vm1043, %v7038, %v7037
        %v7040 = vperm.slane %v6947, %v1045
        %v7041 = vsel %vm1047, %v7040, %v7039
        %v7042 = vperm.slane %v6949, %v1049
        %v7043 = vsel %vm1051, %v7042, %v7041
        %v7044 = vperm.slane %v6951, %v1053
        %v7045 = vsel %vm1055, %v7044, %v7043
        %v7046 = vsel %vm1088, %v7045, %v7014
        %v7048 = vsel %vm603, %v7046, -1e+30
        %v7049 = vsel %vm1092, %v7048, -inf
        %7050 = vmax.xlane.f32.xlu0 %v7049
        %v7051 = vpop.xlane.xlu0 %7050
        %v7052 = vsub.f32 %v7048, %v7051
        %v7053 = vmul.f32 %v7052, 1.442695
        %v7054 = vpow.pop %v7053
        %v7055 = vmul.f32 %v7054, %v602
        %v7056 = vsel %vm1092, %v7055, 0.0
        %7057 = vadd.xlane.f32.xlu0 %v7056
        %v7058 = vpop.xlane.xlu0 %7057
        %v7059 = vadd.f32 %v7058, 1e-13
        %v7060 = vrcp.pop %v7059
        %v7061 = vmul.f32 %v7059, %v7060
        %v7062 = vsub.f32 1.0, %v7061
        %v7063 = vmul.f32 %v7060, %v7062
        %v7064 = vadd.f32 %v7060, %v7063
        %vm7065 = vweird.f32 %v7059
        %vm7066 = vweird.f32 %v7060
        %vm7067 = vmor %vm7065, %vm7066
        %v7068 = vsel %vm7067, %v7060, %v7064
        %v7069 = vand.u32 2147483647, %v7059
        %vm7070 = vcmp.eq.f32.partialorder %v7069, 8.507059e+37
        %v7071 = vand.u32 %v7059, 2147483648
        %v7072 = vor.u32 1.1754944e-38, %v7071
        %v7073 = vsel %vm7070, %v7072, %v7068
        %v7074 = vmul.f32 %v7055, %v7073
        %v7076 = vrot.slane %v7074, 1
        %v7078 = vld [vmem:[%s582] sm:$0xff]
        %v7079 = vld [vmem:[%s582 + $0x8] sm:$0xff]
        %v7080 = vld [vmem:[%s582 + $0x10] sm:$0xff]
        %v7081 = vld [vmem:[%s582 + $0x18] sm:$0xff]
        %v7082 = vld [vmem:[%s582 + $0x20] sm:$0xff]
        %v7083 = vld [vmem:[%s582 + $0x28] sm:$0xff]
        %v7084 = vld [vmem:[%s582 + $0x30] sm:$0xff]
        %v7085 = vld [vmem:[%s582 + $0x38] sm:$0xff]
        %v7086 = vld [vmem:[%s582 + $0x40] sm:$0xff]
        %v7087 = vld [vmem:[%s582 + $0x48] sm:$0xff]
        %v7088 = vld [vmem:[%s582 + $0x50] sm:$0xff]
        %v7089 = vld [vmem:[%s582 + $0x58] sm:$0xff]
        %v7090 = vld [vmem:[%s582 + $0x60] sm:$0xff]
        %v7091 = vld [vmem:[%s582 + $0x68] sm:$0xff]
        %v7092 = vld [vmem:[%s582 + $0x70] sm:$0xff]
        %v7093 = vld [vmem:[%s582 + $0x78] sm:$0xff]
        %v7094 = vld [vmem:[%s582 + $0x80] sm:$0xff]
        %v7095 = vld [vmem:[%s582 + $0x88] sm:$0xff]
        %v7096 = vld [vmem:[%s582 + $0x90] sm:$0xff]
        %v7097 = vld [vmem:[%s582 + $0x98] sm:$0xff]
        %v7098 = vld [vmem:[%s582 + $0xa0] sm:$0xff]
        %v7099 = vld [vmem:[%s582 + $0xa8] sm:$0xff]
        %v7100 = vld [vmem:[%s582 + $0xb0] sm:$0xff]
        %v7101 = vld [vmem:[%s582 + $0xb8] sm:$0xff]
        %v7102 = vld [vmem:[%s582 + $0xc0] sm:$0xff]
        %v7103 = vld [vmem:[%s582 + $0xc8] sm:$0xff]
        %v7104 = vld [vmem:[%s582 + $0xd0] sm:$0xff]
        %v7105 = vld [vmem:[%s582 + $0xd8] sm:$0xff]
        %v7106 = vld [vmem:[%s582 + $0xe0] sm:$0xff]
        %v7107 = vld [vmem:[%s582 + $0xe8] sm:$0xff]
        %v7108 = vld [vmem:[%s582 + $0xf0] sm:$0xff]
        %v7109 = vld [vmem:[%s582 + $0xf8] sm:$0xff]
        %7110 = vmatpush.msra.mxu0 %v7093
        %7111 = vmatpush.msra.mxu0 %v7092
        %7112 = vmatpush.msra.mxu0 %v7091
        %7113 = vmatpush.msra.mxu0 %v7090
        %7114 = vmatpush.msra.mxu0 %v7089
        %7115 = vmatpush.msra.mxu0 %v7088
        %7116 = vmatpush.msra.mxu0 %v7087
        %7117 = vmatpush.msra.mxu0 %v7086
        %7118 = vmatpush.msra.mxu0 %v7085
        %7119 = vmatpush.msra.mxu0 %v7084
        %7120 = vmatpush.msra.mxu0 %v7083
        %7121 = vmatpush.msra.mxu0 %v7082
        %7122 = vmatpush.msra.mxu0 %v7081
        %7123 = vmatpush.msra.mxu0 %v7080
        %7124 = vmatpush.msra.mxu0 %v7079
        %7125 = vmatpush.msra.mxu0 %v7078
        %7126 = vmatmul.f32.gmra.mxu0 %v7074
        %v7127 = vpop.f32.mrf.mxu0
        %v7128 = vadd.f32 0.0, %v7127
        %7129 = vdwg.mxu0
        %7130 = vmatpush.msra.mxu0 %v7109
        %7131 = vmatpush.msra.mxu0 %v7108
        %7132 = vmatpush.msra.mxu0 %v7107
        %7133 = vmatpush.msra.mxu0 %v7106
        %7134 = vmatpush.msra.mxu0 %v7105
        %7135 = vmatpush.msra.mxu0 %v7104
        %7136 = vmatpush.msra.mxu0 %v7103
        %7137 = vmatpush.msra.mxu0 %v7102
        %7138 = vmatpush.msra.mxu0 %v7101
        %7139 = vmatpush.msra.mxu0 %v7100
        %7140 = vmatpush.msra.mxu0 %v7099
        %7141 = vmatpush.msra.mxu0 %v7098
        %7142 = vmatpush.msra.mxu0 %v7097
        %7143 = vmatpush.msra.mxu0 %v7096
        %7144 = vmatpush.msra.mxu0 %v7095
        %7145 = vmatpush.msra.mxu0 %v7094
        %7146 = vmatmul.f32.gmra.mxu0 %v7076
        %v7147 = vpop.f32.mrf.mxu0
        %v7148 = vadd.f32 0.0, %v7147
        %7149 = vdwg.mxu0
        %v7150 = vld [vmem:[%s7] sm:$0xff]
        %v7151 = vld [vmem:[%s7 + $0x8] sm:$0xff]
        %v7154 = vrot.slane %v7148, 7
        %v7155 = vsel %vm1088, %v7154, %v7128
        %v7156 = vsel %vm1200, %v7155, 0
        %7158 = vmatpush.msra.mxu0 0.0
        %7159 = vmatpush.msra.mxu0 0.0
        %7160 = vmatpush.msra.mxu0 0.0
        %7161 = vmatpush.msra.mxu0 0.0
        %7162 = vmatpush.msra.mxu0 0.0
        %7163 = vmatpush.msra.mxu0 0.0
        %7164 = vmatpush.msra.mxu0 0.0
        %7165 = vmatpush.msra.mxu0 0.0
        %7166 = vmatpush.msra.mxu0 0.0
        %7167 = vmatpush.msra.mxu0 0.0
        %7168 = vmatpush.msra.mxu0 0.0
        %7169 = vmatpush.msra.mxu0 0.0
        %7170 = vmatpush.msra.mxu0 0.0
        %7171 = vmatpush.msra.mxu0 0.0
        %7172 = vmatpush.msra.mxu0 %v7151
        %7173 = vmatpush.msra.mxu0 %v7150
        %7174 = vmatmul.f32.gmra.mxu0 %v7156
        %v7175 = vpop.f32.mrf.mxu0
        %v7176 = vadd.f32 0.0, %v7175
        %7177 = vdwg.mxu0
        %v7180 = vrot.slane %v6602, 1
        %v7181 = vrot.slane %v6604, 1
        %v7185 = vrot.slane %v7176, 1
        %v7187 = vadd.f32 %v7180, %v7176
        %v7188 = vadd.f32 %v7181, %v7185
        %v7189 = vxor.u32 %v7187, 2147483648
        %v7190 = vxor.u32 %v7188, 2147483648
        %v7191 = vmul.f32 %v7189, 1.442695
        %v7192 = vpow.pop %v7191
        %v7193 = vmul.f32 %v7190, 1.442695
        %v7194 = vpow.pop %v7193
        %v7195 = vadd.f32 %v7192, 1.0
        %v7196 = vadd.f32 %v7194, 1.0
        %v7197 = vrcp.pop %v7195
        %v7198 = vmul.f32 %v7195, %v7197
        %v7199 = vsub.f32 1.0, %v7198
        %v7200 = vmul.f32 %v7197, %v7199
        %v7201 = vadd.f32 %v7197, %v7200
        %vm7202 = vweird.f32 %v7195
        %vm7203 = vweird.f32 %v7197
        %vm7204 = vmor %vm7202, %vm7203
        %v7205 = vsel %vm7204, %v7197, %v7201
        %v7206 = vand.u32 2147483647, %v7195
        %vm7207 = vcmp.eq.f32.partialorder %v7206, 8.507059e+37
        %v7208 = vand.u32 %v7195, 2147483648
        %v7209 = vor.u32 1.1754944e-38, %v7208
        %v7210 = vsel %vm7207, %v7209, %v7205
        %v7211 = vmul.f32 1.0, %v7210
        %v7212 = vrcp.pop %v7196
        %v7213 = vmul.f32 %v7196, %v7212
        %v7214 = vsub.f32 1.0, %v7213
        %v7215 = vmul.f32 %v7212, %v7214
        %v7216 = vadd.f32 %v7212, %v7215
        %vm7217 = vweird.f32 %v7196
        %vm7218 = vweird.f32 %v7212
        %vm7219 = vmor %vm7217, %vm7218
        %v7220 = vsel %vm7219, %v7212, %v7216
        %v7221 = vand.u32 2147483647, %v7196
        %vm7222 = vcmp.eq.f32.partialorder %v7221, 8.507059e+37
        %v7223 = vand.u32 %v7196, 2147483648
        %v7224 = vor.u32 1.1754944e-38, %v7223
        %v7225 = vsel %vm7222, %v7224, %v7220
        %v7226 = vmul.f32 1.0, %v7225
        %v7227 = vmul.f32 %v7211, %v6599
        %v7228 = vmul.f32 %v7226, %v6600
        %7229 = vrot.lane.b32.xlu0 %v7128, 16
        %v7230 = vpop.permute.xlu0 %7229
        %7231 = vrot.lane.b32.xlu0 %v7148, 16
        %v7232 = vpop.permute.xlu0 %7231
        %v7235 = vmul.f32 %v7211, %v7230
        %v7236 = vmul.f32 %v7226, %v7232
        %v7237 = vld [vmem:[%s8] sm:$0xff]
        %v7238 = vld [vmem:[%s8 + $0x8] sm:$0xff]
        %v7239 = vld [vmem:[%s8 + $0x10] sm:$0xff]
        %v7240 = vld [vmem:[%s8 + $0x18] sm:$0xff]
        %v7241 = vld [vmem:[%s8 + $0x20] sm:$0xff]
        %v7242 = vld [vmem:[%s8 + $0x28] sm:$0xff]
        %v7243 = vld [vmem:[%s9] sm:$0xff]
        %v7244 = vld [vmem:[%s9 + $0x8] sm:$0xff]
        %v7245 = vld [vmem:[%s9 + $0x10] sm:$0xff]
        %v7246 = vld [vmem:[%s9 + $0x18] sm:$0xff]
        %v7247 = vld [vmem:[%s9 + $0x20] sm:$0xff]
        %v7248 = vld [vmem:[%s9 + $0x28] sm:$0xff]
        %7251 = vst [vmem:[#allocation1] ss:$9 sm:$0xff] %v7235
        %s7252 = scalar_lea.vmem [#allocation1], 1
        %7253 = vst [vmem:[%s7252] ss:$9 sm:$0xff] %v7236
        %v7254 = vld [vmem:[#allocation1] sm:$0xff]
        %7255 = vrot.lane.b32.xlu0 %v7254, 112
        %v7256 = vpop.permute.xlu0 %7255
        %v7257 = vsel %vm1200, %v7256, 0
        %7259 = vmatpush.msra.mxu0 0.0
        %7260 = vmatpush.msra.mxu0 0.0
        %7261 = vmatpush.msra.mxu0 0.0
        %7262 = vmatpush.msra.mxu0 0.0
        %7263 = vmatpush.msra.mxu0 0.0
        %7264 = vmatpush.msra.mxu0 0.0
        %7265 = vmatpush.msra.mxu0 0.0
        %7266 = vmatpush.msra.mxu0 0.0
        %7267 = vmatpush.msra.mxu0 0.0
        %7268 = vmatpush.msra.mxu0 0.0
        %7269 = vmatpush.msra.mxu0 0.0
        %7270 = vmatpush.msra.mxu0 0.0
        %7271 = vmatpush.msra.mxu0 0.0
        %7272 = vmatpush.msra.mxu0 0.0
        %7273 = vmatpush.msra.mxu0 %v7246
        %7274 = vmatpush.msra.mxu0 %v7243
        %7275 = vmatmul.f32.gmra.mxu0 %v7257
        %v7276 = vpop.f32.mrf.mxu0
        %v7277 = vadd.f32 0.0, %v7276
        %7278 = vdwg.mxu0
        %7279 = vmatpush.msra.mxu0 0.0
        %7280 = vmatpush.msra.mxu0 0.0
        %7281 = vmatpush.msra.mxu0 0.0
        %7282 = vmatpush.msra.mxu0 0.0
        %7283 = vmatpush.msra.mxu0 0.0
        %7284 = vmatpush.msra.mxu0 0.0
        %7285 = vmatpush.msra.mxu0 0.0
        %7286 = vmatpush.msra.mxu0 0.0
        %7287 = vmatpush.msra.mxu0 0.0
        %7288 = vmatpush.msra.mxu0 0.0
        %7289 = vmatpush.msra.mxu0 0.0
        %7290 = vmatpush.msra.mxu0 0.0
        %7291 = vmatpush.msra.mxu0 0.0
        %7292 = vmatpush.msra.mxu0 0.0
        %7293 = vmatpush.msra.mxu0 %v7247
        %7294 = vmatpush.msra.mxu0 %v7244
        %7295 = vmatmul.f32.gmra.mxu0 %v7257
        %v7296 = vpop.f32.mrf.mxu0
        %v7297 = vadd.f32 0.0, %v7296
        %7298 = vdwg.mxu0
        %7299 = vmatpush.msra.mxu0 0.0
        %7300 = vmatpush.msra.mxu0 0.0
        %7301 = vmatpush.msra.mxu0 0.0
        %7302 = vmatpush.msra.mxu0 0.0
        %7303 = vmatpush.msra.mxu0 0.0
        %7304 = vmatpush.msra.mxu0 0.0
        %7305 = vmatpush.msra.mxu0 0.0
        %7306 = vmatpush.msra.mxu0 0.0
        %7307 = vmatpush.msra.mxu0 0.0
        %7308 = vmatpush.msra.mxu0 0.0
        %7309 = vmatpush.msra.mxu0 0.0
        %7310 = vmatpush.msra.mxu0 0.0
        %7311 = vmatpush.msra.mxu0 0.0
        %7312 = vmatpush.msra.mxu0 0.0
        %7313 = vmatpush.msra.mxu0 %v7248
        %7314 = vmatpush.msra.mxu0 %v7245
        %7315 = vmatmul.f32.gmra.mxu0 %v7257
        %v7316 = vpop.f32.mrf.mxu0
        %v7317 = vadd.f32 0.0, %v7316
        %7318 = vdwg.mxu0
        %7321 = vst [vmem:[#allocation1] ss:$9 sm:$0xff] %v7227
        %s7322 = scalar_lea.vmem [#allocation1], 1
        %7323 = vst [vmem:[%s7322] ss:$9 sm:$0xff] %v7228
        %v7324 = vld [vmem:[#allocation1] sm:$0xff]
        %v7325 = vsel %vm1200, %v7324, 0
        %7327 = vmatpush.msra.mxu0 0.0
        %7328 = vmatpush.msra.mxu0 0.0
        %7329 = vmatpush.msra.mxu0 0.0
        %7330 = vmatpush.msra.mxu0 0.0
        %7331 = vmatpush.msra.mxu0 0.0
        %7332 = vmatpush.msra.mxu0 0.0
        %7333 = vmatpush.msra.mxu0 0.0
        %7334 = vmatpush.msra.mxu0 0.0
        %7335 = vmatpush.msra.mxu0 0.0
        %7336 = vmatpush.msra.mxu0 0.0
        %7337 = vmatpush.msra.mxu0 0.0
        %7338 = vmatpush.msra.mxu0 0.0
        %7339 = vmatpush.msra.mxu0 0.0
        %7340 = vmatpush.msra.mxu0 0.0
        %7341 = vmatpush.msra.mxu0 %v7240
        %7342 = vmatpush.msra.mxu0 %v7237
        %7343 = vmatmul.f32.gmra.mxu0 %v7325
        %v7344 = vpop.f32.mrf.mxu0
        %v7345 = vadd.f32 %v7277, %v7344
        %7346 = vdwg.mxu0
        %7347 = vmatpush.msra.mxu0 0.0
        %7348 = vmatpush.msra.mxu0 0.0
        %7349 = vmatpush.msra.mxu0 0.0
        %7350 = vmatpush.msra.mxu0 0.0
        %7351 = vmatpush.msra.mxu0 0.0
        %7352 = vmatpush.msra.mxu0 0.0
        %7353 = vmatpush.msra.mxu0 0.0
        %7354 = vmatpush.msra.mxu0 0.0
        %7355 = vmatpush.msra.mxu0 0.0
        %7356 = vmatpush.msra.mxu0 0.0
        %7357 = vmatpush.msra.mxu0 0.0
        %7358 = vmatpush.msra.mxu0 0.0
        %7359 = vmatpush.msra.mxu0 0.0
        %7360 = vmatpush.msra.mxu0 0.0
        %7361 = vmatpush.msra.mxu0 %v7241
        %7362 = vmatpush.msra.mxu0 %v7238
        %7363 = vmatmul.f32.gmra.mxu0 %v7325
        %v7364 = vpop.f32.mrf.mxu0
        %v7365 = vadd.f32 %v7297, %v7364
        %7366 = vdwg.mxu0
        %7367 = vmatpush.msra.mxu0 0.0
        %7368 = vmatpush.msra.mxu0 0.0
        %7369 = vmatpush.msra.mxu0 0.0
        %7370 = vmatpush.msra.mxu0 0.0
        %7371 = vmatpush.msra.mxu0 0.0
        %7372 = vmatpush.msra.mxu0 0.0
        %7373 = vmatpush.msra.mxu0 0.0
        %7374 = vmatpush.msra.mxu0 0.0
        %7375 = vmatpush.msra.mxu0 0.0
        %7376 = vmatpush.msra.mxu0 0.0
        %7377 = vmatpush.msra.mxu0 0.0
        %7378 = vmatpush.msra.mxu0 0.0
        %7379 = vmatpush.msra.mxu0 0.0
        %7380 = vmatpush.msra.mxu0 0.0
        %7381 = vmatpush.msra.mxu0 %v7242
        %7382 = vmatpush.msra.mxu0 %v7239
        %7383 = vmatmul.f32.gmra.mxu0 %v7325
        %v7384 = vpop.f32.mrf.mxu0
        %v7385 = vadd.f32 %v7317, %v7384
        %7386 = vdwg.mxu0
        %v7387 = vadd.f32 %v7345, %v1439
        %v7388 = vadd.f32 %v7365, %v1440
        %v7389 = vadd.f32 %v7385, %v1441
        %v7390 = vadd.f32 %v6707, %v1451
        %v7391 = vadd.f32 %v6727, %v1452
        %v7392 = vadd.f32 %v6747, %v1453
        %v7393 = vadd.f32 %v7387, %v7390
        %v7394 = vxor.u32 %v7393, 2147483648
        %v7395 = vmul.f32 %v7394, 1.442695
        %v7396 = vpow.pop %v7395
        %v7397 = vadd.f32 %v7396, 1.0
        %v7398 = vrcp.pop %v7397
        %v7399 = vmul.f32 %v7397, %v7398
        %v7400 = vsub.f32 1.0, %v7399
        %v7401 = vmul.f32 %v7398, %v7400
        %v7402 = vadd.f32 %v7398, %v7401
        %vm7403 = vweird.f32 %v7397
        %vm7404 = vweird.f32 %v7398
        %vm7405 = vmor %vm7403, %vm7404
        %v7406 = vsel %vm7405, %v7398, %v7402
        %v7407 = vand.u32 2147483647, %v7397
        %vm7408 = vcmp.eq.f32.partialorder %v7407, 8.507059e+37
        %v7409 = vand.u32 %v7397, 2147483648
        %v7410 = vor.u32 1.1754944e-38, %v7409
        %v7411 = vsel %vm7408, %v7410, %v7406
        %v7412 = vmul.f32 1.0, %v7411
        %v7413 = vadd.f32 %v7388, %v7391
        %v7414 = vxor.u32 %v7413, 2147483648
        %v7415 = vmul.f32 %v7414, 1.442695
        %v7416 = vpow.pop %v7415
        %v7417 = vadd.f32 %v7416, 1.0
        %v7418 = vrcp.pop %v7417
        %v7419 = vmul.f32 %v7417, %v7418
        %v7420 = vsub.f32 1.0, %v7419
        %v7421 = vmul.f32 %v7418, %v7420
        %v7422 = vadd.f32 %v7418, %v7421
        %vm7423 = vweird.f32 %v7417
        %vm7424 = vweird.f32 %v7418
        %vm7425 = vmor %vm7423, %vm7424
        %v7426 = vsel %vm7425, %v7418, %v7422
        %v7427 = vand.u32 2147483647, %v7417
        %vm7428 = vcmp.eq.f32.partialorder %v7427, 8.507059e+37
        %v7429 = vand.u32 %v7417, 2147483648
        %v7430 = vor.u32 1.1754944e-38, %v7429
        %v7431 = vsel %vm7428, %v7430, %v7426
        %v7432 = vmul.f32 1.0, %v7431
        %v7433 = vmul.f32 %v7412, %v7392
        %v7434 = vadd.f32 %v7389, %v7433
        %v7435 = vtanh.pop %v7434
        %v7436 = vsub.f32 1.0, %v7432
        %v7437 = vmul.f32 %v7436, %v7435
        %v7438 = vmul.f32 %v7432, %v6591
        %v7439 = vadd.f32 %v7437, %v7438
        %v7441 = vrot.slane %v7439, 1
        %7443 = vst [vmem:[%s568 + $0x7] sm:$0x1] %v7439
        %7444 = vst [vmem:[%s568 + $0xf] sm:$0x1] %v7441
        %7445 = vst [vmem:[%s574 + $0x7] sm:$0x1] %v7074
        %7446 = vst [vmem:[%s574 + $0xf] sm:$0x1] %v7076
        %7447 = vst [vmem:[#allocation2] sm:$0x3] %v7439
        %s7448 = sand.u32 %s306, 1
        %s7449 = sand.u32 %s306, 1
        %s7450 = smul.addr %s7449, 16
        %s7451 = scalar_lea.vmem [#allocation5], %s7450
        %s7452 = sand.u32 %s334, 1
        %s7453 = sand.u32 %s334, 1
        %s7454 = smul.addr %s7453, 16
        %s7455 = scalar_lea.vmem [#allocation6], %s7454
        // Predicated region
        $region130: #{match_attention_forward.1} parent=116 // pred_check
          %p7456 = pneg %p316
        $region131: #{match_attention_forward.1} parent=116 // pred_check_branch
          %7458 = sbr.rel (%p7456) target = $region133
        $region132: #{match_attention_forward.1} parent=116 // pred_region
          %s7459 = smul.u32 2, %s28
          %s7460 = smul.addr %s7459, 2
          %s7461 = sadd.s32 %s29, %s7460
          %s7462 = smul.addr %s7461, 8
          %s7463 = scalar_lea.vmem %s11, %s7462
          // Predicated region
          $region134: #{match_attention_forward.1} parent=132 // pred_check
            _
          $region135: #{match_attention_forward.1} parent=132 // pred_check_branch
            %7465 = sbr.rel (0) target = $region137
          $region136: #{match_attention_forward.1} parent=132 // pred_region
            // Predicated region
            $region138: #{match_attention_forward.1} parent=136 // pred_check
              _
            $region139: #{match_attention_forward.1} parent=136 // pred_check_branch
              %7467 = sbr.rel (0) target = $region141
            $region140: #{match_attention_forward.1} parent=136 // pred_region
              // Predicated region
              $region153: #{match_attention_forward.1} parent=140 // pred_check
                _
              $region154: #{match_attention_forward.1} parent=140 // pred_check_branch
                %7485 = sbr.rel (0) target = $region156
              $region155: #{match_attention_forward.1} parent=140 // pred_region
                loop: start=0, step=1, limit=1
                $region157: #{match_attention_forward.1} parent=155 // loop_pre_header
                  _
                $region158: #{match_attention_forward.1} parent=155 // loop_header
                  %s7487 = sphi 0, %s7491
                  %p7488 = scmp.ge.s32.totalorder %s7487, 1
                  %s7492 = sphi %s7451, %s7451
                  %s7493 = sphi %s7463, %s7463
                $region159: #{match_attention_forward.1} parent=155 // loop_header_branch
                  %7490 = sbr.rel (%p7488) target = $region163
                $region160: #{match_attention_forward.1} parent=155 // loop_body
                  %v7494 = vld [vmem:[%s7492] sm:$0xff]
                  %7495 = vst [vmem:[%s7493] sm:$0xff] %v7494
                  %v7496 = vld [vmem:[%s7492 + $0x8] sm:$0xff]
                  %7497 = vst [vmem:[%s7493 + $0x10] sm:$0xff] %v7496
                $region161: #{match_attention_forward.1} parent=155 // loop_footer
                  %s7491 = sadd.s32 1, %s7487
                $region162: #{match_attention_forward.1} parent=155 // loop_footer_branch
                  %7486 = sbr.rel target = $region158
                $region163: #{match_attention_forward.1} parent=155 // loop_exit
                  _
              $region156: #{match_attention_forward.1} parent=140 // pred_fallthru
                _
              // Predicated region
              $region164: #{match_attention_forward.1} parent=140 // pred_check
                _
              $region165: #{match_attention_forward.1} parent=140 // pred_check_branch
                %7499 = sbr.rel target = $region167
              $region166: #{match_attention_forward.1} parent=140 // pred_region
                _
              $region167: #{match_attention_forward.1} parent=140 // pred_fallthru
                _
            $region141: #{match_attention_forward.1} parent=136 // pred_fallthru
              _
            // Predicated region
            $region142: #{match_attention_forward.1} parent=136 // pred_check
              _
            $region143: #{match_attention_forward.1} parent=136 // pred_check_branch
              %7469 = sbr.rel target = $region145
            $region144: #{match_attention_forward.1} parent=136 // pred_region
              %s7471 = ssub.s32 256, 1
              loop: start=0, step=1, limit=1
              $region146: #{match_attention_forward.1} parent=144 // loop_pre_header
                _
              $region147: #{match_attention_forward.1} parent=144 // loop_header
                %s7473 = sphi 0, %s7477
                %p7474 = scmp.ge.s32.totalorder %s7473, 1
                %s7478 = sphi %s7451, %s7451
                %s7479 = sphi %s7463, %s7463
              $region148: #{match_attention_forward.1} parent=144 // loop_header_branch
                %7476 = sbr.rel (%p7474) target = $region152
              $region149: #{match_attention_forward.1} parent=144 // loop_body
                %v7480 = vld [vmem:[%s7478] sm:%s7471]
                %7481 = vst [vmem:[%s7479] sm:%s7471] %v7480
                %v7482 = vld [vmem:[%s7478 + $0x8] sm:%s7471]
                %7483 = vst [vmem:[%s7479 + $0x10] sm:%s7471] %v7482
              $region150: #{match_attention_forward.1} parent=144 // loop_footer
                %s7477 = sadd.s32 1, %s7473
              $region151: #{match_attention_forward.1} parent=144 // loop_footer_branch
                %7472 = sbr.rel target = $region147
              $region152: #{match_attention_forward.1} parent=144 // loop_exit
                _
            $region145: #{match_attention_forward.1} parent=136 // pred_fallthru
              _
          $region137: #{match_attention_forward.1} parent=132 // pred_fallthru
            _
          %7500 = vnop
        $region133: #{match_attention_forward.1} parent=116 // pred_fallthru
          _
        // Predicated region
        $region168: #{match_attention_forward.1} parent=116 // pred_check
          %p7501 = pneg %p344
        $region169: #{match_attention_forward.1} parent=116 // pred_check_branch
          %7503 = sbr.rel (%p7501) target = $region171
        $region170: #{match_attention_forward.1} parent=116 // pred_region
          %s7504 = smul.u32 2, %s28
          %s7505 = smul.addr %s7504, 2
          %s7506 = sadd.s32 %s29, %s7505
          %s7507 = smul.addr %s7506, 8
          %s7508 = scalar_lea.vmem %s12, %s7507
          // Predicated region
          $region172: #{match_attention_forward.1} parent=170 // pred_check
            _
          $region173: #{match_attention_forward.1} parent=170 // pred_check_branch
            %7510 = sbr.rel (0) target = $region175
          $region174: #{match_attention_forward.1} parent=170 // pred_region
            // Predicated region
            $region176: #{match_attention_forward.1} parent=174 // pred_check
              _
            $region177: #{match_attention_forward.1} parent=174 // pred_check_branch
              %7512 = sbr.rel (0) target = $region179
            $region178: #{match_attention_forward.1} parent=174 // pred_region
              // Predicated region
              $region191: #{match_attention_forward.1} parent=178 // pred_check
                _
              $region192: #{match_attention_forward.1} parent=178 // pred_check_branch
                %7530 = sbr.rel (0) target = $region194
              $region193: #{match_attention_forward.1} parent=178 // pred_region
                loop: start=0, step=1, limit=1
                $region195: #{match_attention_forward.1} parent=193 // loop_pre_header
                  _
                $region196: #{match_attention_forward.1} parent=193 // loop_header
                  %s7532 = sphi 0, %s7536
                  %p7533 = scmp.ge.s32.totalorder %s7532, 1
                  %s7537 = sphi %s7455, %s7455
                  %s7538 = sphi %s7508, %s7508
                $region197: #{match_attention_forward.1} parent=193 // loop_header_branch
                  %7535 = sbr.rel (%p7533) target = $region201
                $region198: #{match_attention_forward.1} parent=193 // loop_body
                  %v7539 = vld [vmem:[%s7537] sm:$0xff]
                  %7540 = vst [vmem:[%s7538] sm:$0xff] %v7539
                  %v7541 = vld [vmem:[%s7537 + $0x8] sm:$0xff]
                  %7542 = vst [vmem:[%s7538 + $0x10] sm:$0xff] %v7541
                $region199: #{match_attention_forward.1} parent=193 // loop_footer
                  %s7536 = sadd.s32 1, %s7532
                $region200: #{match_attention_forward.1} parent=193 // loop_footer_branch
                  %7531 = sbr.rel target = $region196
                $region201: #{match_attention_forward.1} parent=193 // loop_exit
                  _
              $region194: #{match_attention_forward.1} parent=178 // pred_fallthru
                _
              // Predicated region
              $region202: #{match_attention_forward.1} parent=178 // pred_check
                _
              $region203: #{match_attention_forward.1} parent=178 // pred_check_branch
                %7544 = sbr.rel target = $region205
              $region204: #{match_attention_forward.1} parent=178 // pred_region
                _
              $region205: #{match_attention_forward.1} parent=178 // pred_fallthru
                _
            $region179: #{match_attention_forward.1} parent=174 // pred_fallthru
              _
            // Predicated region
            $region180: #{match_attention_forward.1} parent=174 // pred_check
              _
            $region181: #{match_attention_forward.1} parent=174 // pred_check_branch
              %7514 = sbr.rel target = $region183
            $region182: #{match_attention_forward.1} parent=174 // pred_region
              %s7516 = ssub.s32 256, 1
              loop: start=0, step=1, limit=1
              $region184: #{match_attention_forward.1} parent=182 // loop_pre_header
                _
              $region185: #{match_attention_forward.1} parent=182 // loop_header
                %s7518 = sphi 0, %s7522
                %p7519 = scmp.ge.s32.totalorder %s7518, 1
                %s7523 = sphi %s7455, %s7455
                %s7524 = sphi %s7508, %s7508
              $region186: #{match_attention_forward.1} parent=182 // loop_header_branch
                %7521 = sbr.rel (%p7519) target = $region190
              $region187: #{match_attention_forward.1} parent=182 // loop_body
                %v7525 = vld [vmem:[%s7523] sm:%s7516]
                %7526 = vst [vmem:[%s7524] sm:%s7516] %v7525
                %v7527 = vld [vmem:[%s7523 + $0x8] sm:%s7516]
                %7528 = vst [vmem:[%s7524 + $0x10] sm:%s7516] %v7527
              $region188: #{match_attention_forward.1} parent=182 // loop_footer
                %s7522 = sadd.s32 1, %s7518
              $region189: #{match_attention_forward.1} parent=182 // loop_footer_branch
                %7517 = sbr.rel target = $region185
              $region190: #{match_attention_forward.1} parent=182 // loop_exit
                _
            $region183: #{match_attention_forward.1} parent=174 // pred_fallthru
              _
          $region175: #{match_attention_forward.1} parent=170 // pred_fallthru
            _
          %7545 = vnop
        $region171: #{match_attention_forward.1} parent=116 // pred_fallthru
          _
      $region117: #{match_attention_forward.1} parent=5 // pred_fallthru
        _
      %p7546 = scmp.le.s32.totalorder 2, %s19
      // Predicated region
      $region206: #{match_attention_forward.1} parent=5 // pred_check
        %p7547 = pneg %p7546
      $region207: #{match_attention_forward.1} parent=5 // pred_check_branch
        %7549 = sbr.rel (%p7547) target = $region209
      $region208: #{match_attention_forward.1} parent=5 // pred_region
        %s7550 = ssub.s32 %s19, 2
        // Predicated region
        $region210: #{match_attention_forward.1} parent=208 // pred_check
          %p7551 = pneg %p322
        $region211: #{match_attention_forward.1} parent=208 // pred_check_branch
          %7553 = sbr.rel (%p7551) target = $region213
        $region212: #{match_attention_forward.1} parent=208 // pred_region
          %s7554 = sand.u32 %s307, 1
          %s7555 = sand.u32 %s307, 1
          %s7556 = smul.addr %s7555, 16
          %s7557 = scalar_lea.vmem [#allocation5], %s7556
        $region213: #{match_attention_forward.1} parent=208 // pred_fallthru
          _
        // Predicated region
        $region214: #{match_attention_forward.1} parent=208 // pred_check
          %p7558 = pneg %p350
        $region215: #{match_attention_forward.1} parent=208 // pred_check_branch
          %7560 = sbr.rel (%p7558) target = $region217
        $region216: #{match_attention_forward.1} parent=208 // pred_region
          %s7561 = sand.u32 %s335, 1
          %s7562 = sand.u32 %s335, 1
          %s7563 = smul.addr %s7562, 16
          %s7564 = scalar_lea.vmem [#allocation6], %s7563
        $region217: #{match_attention_forward.1} parent=208 // pred_fallthru
          _
      $region209: #{match_attention_forward.1} parent=5 // pred_fallthru
        _
    $region6: #{match_attention_forward.1} parent=1 // loop_footer
      %s23 = sadd.s32 1, %s19
    $region7: #{match_attention_forward.1} parent=1 // loop_footer_branch
      %18 = sbr.rel target = $region3
    $region8: #{match_attention_forward.1} parent=1 // loop_exit
      _

</llo_original>
